<compile_context>
chip_gen: v5e
topology: v5e:2x2
jax: 0.10.0
libtpu: 0.0.40
codegen_flags: <defaults>
</compile_context>

<pallas_src>
import functools

import jax
import jax.numpy as jnp
from jax.experimental import pallas as pl
from jax.experimental.pallas import tpu as pltpu

PAD = 0


# ----------------------------------------------------------------------------
# Pallas kernel: full encoder (all layers, both directions) in one invocation.
# ----------------------------------------------------------------------------
def gru_encoder_kernel(x_ref, m_ref, wih_ref, whh_ref, bi_ref, bhn_ref,
                       out_ref, hlast_ref, act_ref):
    L, _, Din, G = wih_ref.shape          # G = 3H, gate order r | z | n (torch)
    H = bhn_ref.shape[-1]
    B = hlast_ref.shape[2]
    TB = x_ref.shape[0]
    T = TB // B

    mask = m_ref[...]                     # (T*B, 1)
    inv_mask = 1.0 - mask                 # hoisted once (JAX does not CSE broadcasts)

    # If the embedding dim exceeded 2H, the deep-layer W_ih rows past 2H are zero; the
    # matching act columns must not be NaN garbage, so zero them once.
    if Din > 2 * H:
        act_ref[:, pl.ds(2 * H, Din - 2 * H)] = jnp.zeros((TB, Din - 2 * H), jnp.float32)

    def cell(gi_t, gh_t, bhn_d, h_d, m_t, im_t):
        # gi_t already contains b_ih + b_hr/b_hz (folded in the wrapper); gh_t is raw h@Whh.
        rz = jax.nn.sigmoid(gi_t[:, :2 * H] + gh_t[:, :2 * H])      # one EUP push for r,z
        r, z = rz[:, :H], rz[:, H:]
        n = jnp.tanh(gi_t[:, 2 * H:] + r * (gh_t[:, 2 * H:] + bhn_d))
        h_new = n + z * (h_d - n)                                   # == (1-z)*n + z*h
        o = m_t * h_new                                             # zero padded outputs
        return o + im_t * h_d, o                                    # freeze h past length

    for l in range(L):
        inp = x_ref[...] if l == 0 else act_ref[...]                # (T*B, Din)

        # Hoisted fused input projection: ONE matmul per direction, off the serial path.
        gi_f = jnp.dot(inp, wih_ref[l, 0], preferred_element_type=jnp.float32) + bi_ref[l, 0]
        gi_b = jnp.dot(inp, wih_ref[l, 1], preferred_element_type=jnp.float32) + bi_ref[l, 1]
        bhn_f = bhn_ref[l, 0]                                       # (1, H)
        bhn_b = bhn_ref[l, 1]
        whh_l = whh_ref[l]                                          # (2H, 6H) block-diag

        # Last layer writes the concatenated [fwd|bwd] output directly; earlier layers
        # overwrite the activation scratch (gi already holds everything x-dependent).
        dst = out_ref if l == L - 1 else act_ref

        h = jnp.zeros((B, 2 * H), jnp.float32)                      # [h_fwd | h_bwd]
        # TODO(synk): nonzero initial state (forward(state=...)) unsupported; the in-kernel
        #             time reversal of the backward direction relies on h0 == 0.

        # Static, fully-unrolled time loop (T is small). fwd processes t=i, bwd t=T-1-i;
        # the two directions share one block-diagonal recurrence matmul per step.
        for i in range(T):
            tf, tb = i, T - 1 - i
            gh = jnp.dot(h, whh_l, preferred_element_type=jnp.float32)   # (B, 6H)
            h_f, o_f = cell(gi_f[tf * B:(tf + 1) * B], gh[:, :G], bhn_f,
                            h[:, :H], mask[tf * B:(tf + 1) * B],
                            inv_mask[tf * B:(tf + 1) * B])
            h_b, o_b = cell(gi_b[tb * B:(tb + 1) * B], gh[:, G:], bhn_b,
                            h[:, H:], mask[tb * B:(tb + 1) * B],
                            inv_mask[tb * B:(tb + 1) * B])
            h = jnp.concatenate([h_f, h_b], axis=1)
            dst[pl.ds(tf * B, B), pl.ds(0, H)] = o_f
            dst[pl.ds(tb * B, B), pl.ds(H, H)] = o_b

        hlast_ref[l, 0] = h[:, :H]     # forward  h_n (frozen at last valid step)
        hlast_ref[l, 1] = h[:, H:]     # backward h_n (value after processing t=0)


def run_gru_encoder(x2d, mask2d, wih, whh_bd, bias_i, bhn, *, B):
    TB, Din = x2d.shape
    L = wih.shape[0]
    H = bhn.shape[-1]

    in_specs = [
        pl.BlockSpec((TB, Din), lambda i: (0, 0)),              # x (flattened, padded)
        pl.BlockSpec((TB, 1), lambda i: (0, 0)),                # mask
        pl.BlockSpec((L, 2, Din, 3 * H), lambda i: (0, 0, 0, 0)),   # fused W_ih^T
        pl.BlockSpec((L, 2 * H, 6 * H), lambda i: (0, 0, 0)),       # block-diag W_hh^T
        pl.BlockSpec((L, 2, 1, 3 * H), lambda i: (0, 0, 0, 0)),     # b_ih + b_hh[r,z]
        pl.BlockSpec((L, 2, 1, H), lambda i: (0, 0, 0, 0)),         # b_hn
    ]
    out_specs = [
        pl.BlockSpec((TB, 2 * H), lambda i: (0, 0)),            # last-layer [fwd|bwd] output
        pl.BlockSpec((L, 2, B, H), lambda i: (0, 0, 0, 0)),     # h_n per layer/direction
    ]

    out2d, hlast = pl.pallas_call(
        gru_encoder_kernel,
        out_shape=(jax.ShapeDtypeStruct((TB, 2 * H), jnp.float32),
                   jax.ShapeDtypeStruct((L, 2, B, H), jnp.float32)),
        grid_spec=pltpu.PrefetchScalarGridSpec(
            num_scalar_prefetch=0,
            grid=(1,),
            in_specs=in_specs,
            out_specs=out_specs,
            scratch_shapes=[pltpu.VMEM((TB, Din), jnp.float32)],  # inter-layer activation
        ),
        compiler_params=pltpu.CompilerParams(
            dimension_semantics=("arbitrary",)),
    )(x2d, mask2d, wih, whh_bd, bias_i, bhn)
    return out2d, hlast


# ----------------------------------------------------------------------------
# Parameter construction (mirrors nn.GRU shapes; gates fused, biases pre-folded,
# hidden weights block-diagonalized so both directions share one recurrence matmul)
# ----------------------------------------------------------------------------
def make_gru_params(key, embedding_size, hidden_size, num_layers):
    H = hidden_size
    bound = 1.0 / (hidden_size ** 0.5)
    Din = max(embedding_size, 2 * H)

    wih_all, whh_bd_all, bi_all, bhn_all = [], [], [], []
    for layer in range(num_layers):
        d_in = embedding_size if layer == 0 else 2 * H
        wih_dirs, whh_dirs, bi_dirs, bhn_dirs = [], [], [], []
        for _ in range(2):  # fwd, bwd
            key, k1, k2, k3, k4 = jax.random.split(key, 5)
            w_ih = jax.random.uniform(k1, (3 * H, d_in), jnp.float32, -bound, bound)
            w_hh = jax.random.uniform(k2, (3 * H, H), jnp.float32, -bound, bound)
            b_ih = jax.random.uniform(k3, (3 * H,), jnp.float32, -bound, bound)
            b_hh = jax.random.uniform(k4, (3 * H,), jnp.float32, -bound, bound)

            wih_t = jnp.pad(w_ih.T, ((0, Din - d_in), (0, 0)))      # (Din, 3H), r|z|n
            wih_dirs.append(wih_t)
            whh_dirs.append(w_hh.T)                                  # (H, 3H)
            # fold b_hr, b_hz into the hoisted projection bias; b_hn stays separate
            bi = b_ih + jnp.concatenate([b_hh[:2 * H], jnp.zeros((H,), jnp.float32)])
            bi_dirs.append(bi.reshape(1, 3 * H))
            bhn_dirs.append(b_hh[2 * H:].reshape(1, H))

        wih_all.append(jnp.stack(wih_dirs))                          # (2, Din, 3H)
        bd = jnp.zeros((2 * H, 6 * H), jnp.float32)
        bd = bd.at[:H, :3 * H].set(whh_dirs[0])
        bd = bd.at[H:, 3 * H:].set(whh_dirs[1])
        whh_bd_all.append(bd)                                        # (2H, 6H) block-diag
        bi_all.append(jnp.stack(bi_dirs))                            # (2, 1, 3H)
        bhn_all.append(jnp.stack(bhn_dirs))                          # (2, 1, H)

    return dict(
        wih=jnp.stack(wih_all),          # (L, 2, Din, 3H)
        whh_bd=jnp.stack(whh_bd_all),    # (L, 2H, 6H)
        bias_i=jnp.stack(bi_all),        # (L, 2, 1, 3H)
        bhn=jnp.stack(bhn_all),          # (L, 2, 1, H)
    )


# ----------------------------------------------------------------------------
# Full GRUEncoder forward (glue in plain JAX, everything recurrent in one kernel)
# ----------------------------------------------------------------------------
def gru_encoder_forward(src, emb_weight, params, hidden_size, num_layers):
    B, T = src.shape
    H = hidden_size
    # NOTE: assumes padding is strictly trailing (matches pack_padded_sequence usage).
    lengths = jnp.sum((src != PAD).astype(jnp.int32), axis=1)        # (B,)

    embedded = jnp.take(emb_weight, src, axis=0).astype(jnp.float32)  # (B, T, E)
    # embedding_dropout: identity in eval mode.

    E = embedded.shape[-1]
    Din = params["wih"].shape[2]
    x = jnp.transpose(embedded, (1, 0, 2))                           # (T, B, E) time-major
    if Din > E:
        x = jnp.pad(x, ((0, 0), (0, 0), (0, Din - E)))
    x2d = x.reshape(T * B, Din)

    t_idx = jnp.arange(T)
    mask = (t_idx[:, None] < lengths[None, :]).astype(jnp.float32)   # (T, B)
    mask2d = mask.reshape(T * B, 1)

    out2d, hlast = run_gru_encoder(x2d, mask2d, params["wih"], params["whh_bd"],
                                   params["bias_i"], params["bhn"], B=B)

    outputs = out2d.reshape(T, B, 2 * H).transpose(1, 0, 2)          # (B, T, 2H)
    state = hlast.reshape(2 * num_layers, B, H)                      # layer-major, fwd/bwd
    return outputs, state


if __name__ == "__main__":
    SRC_VOCAB = 50
    EMB = 32
    HID = 32
    LAYERS = 4
    B, T = 2, 8

    key = jax.random.PRNGKey(0)
    key, k_emb, k_gru, k_src = jax.random.split(key, 4)

    # Embedding table with padding_idx=0 zeroed.
    emb_weight = jax.random.normal(k_emb, (SRC_VOCAB, EMB), jnp.float32)
    emb_weight = emb_weight.at[0].set(0.0)

    params = make_gru_params(k_gru, EMB, HID, LAYERS)

    # Token ids with trailing padding (lengths 8 and 5).
    src = jax.random.randint(k_src, (B, T), 1, SRC_VOCAB, dtype=jnp.int32)
    src = src.at[1, 5:].set(PAD)

    fwd = functools.partial(gru_encoder_forward,
                            emb_weight=emb_weight,
                            params=params,
                            hidden_size=HID,
                            num_layers=LAYERS)
    outputs, state = jax.jit(fwd)(src)
    jax.block_until_ready((outputs, state))

    assert outputs.shape == (B, T, 2 * HID), outputs.shape
    assert state.shape == (2 * LAYERS, B, HID), state.shape
    print("KERNEL_OK")
</pallas_src>

<mosaic_0001>
module attributes {stable_mosaic.version = 11 : i64} {
  func.func @gru_encoder_kernel(%arg0: i32, %arg1: memref<16x64xf32, #tpu.memory_space<vmem>>, %arg2: memref<16x1xf32, #tpu.memory_space<vmem>>, %arg3: memref<4x2x64x96xf32, #tpu.memory_space<vmem>>, %arg4: memref<4x64x192xf32, #tpu.memory_space<vmem>>, %arg5: memref<4x2x1x96xf32, #tpu.memory_space<vmem>>, %arg6: memref<4x2x1x32xf32, #tpu.memory_space<vmem>>, %arg7: memref<16x64xf32, #tpu.memory_space<vmem>>, %arg8: memref<4x2x2x32xf32, #tpu.memory_space<vmem>>, %arg9: memref<16x64xf32, #tpu.memory_space<vmem>>) attributes {dimension_semantics = [#tpu.dimension_semantics<arbitrary>], iteration_bounds = array<i64: 1>, scalar_prefetch = 0 : i64, scratch_operands = 1 : i64, tpu.core_type = #tpu.core_type<tc>, window_params = [{pipeline_mode = #tpu.pipeline_mode<synchronous>, transform_indices = @transform_0, window_bounds = array<i64: 16, 64>}, {pipeline_mode = #tpu.pipeline_mode<synchronous>, transform_indices = @transform_1, window_bounds = array<i64: 16, 1>}, {pipeline_mode = #tpu.pipeline_mode<synchronous>, transform_indices = @transform_2, window_bounds = array<i64: 4, 2, 64, 96>}, {pipeline_mode = #tpu.pipeline_mode<synchronous>, transform_indices = @transform_3, window_bounds = array<i64: 4, 64, 192>}, {pipeline_mode = #tpu.pipeline_mode<synchronous>, transform_indices = @transform_4, window_bounds = array<i64: 4, 2, 1, 96>}, {pipeline_mode = #tpu.pipeline_mode<synchronous>, transform_indices = @transform_5, window_bounds = array<i64: 4, 2, 1, 32>}, {pipeline_mode = #tpu.pipeline_mode<synchronous>, transform_indices = @transform_6, window_bounds = array<i64: 16, 64>}, {pipeline_mode = #tpu.pipeline_mode<synchronous>, transform_indices = @transform_7, window_bounds = array<i64: 4, 2, 2, 32>}]} {
    %c0 = arith.constant 0 : index
    %c0_0 = arith.constant 0 : index
    %0 = vector.load %arg2[%c0, %c0_0] : memref<16x1xf32, #tpu.memory_space<vmem>>, vector<16x1xf32>
    %cst = arith.constant 1.000000e+00 : f32
    %1 = vector.broadcast %cst : f32 to vector<16x1xf32>
    %2 = arith.subf %1, %0 : vector<16x1xf32>
    %c0_1 = arith.constant 0 : index
    %c0_2 = arith.constant 0 : index
    %3 = vector.load %arg1[%c0_1, %c0_2] : memref<16x64xf32, #tpu.memory_space<vmem>>, vector<16x64xf32>
    %c0_3 = arith.constant 0 : index
    %c0_4 = arith.constant 0 : index
    %c0_5 = arith.constant 0 : index
    %c0_6 = arith.constant 0 : index
    %4 = vector.load %arg3[%c0_3, %c0_4, %c0_5, %c0_6] : memref<4x2x64x96xf32, #tpu.memory_space<vmem>>, vector<1x1x64x96xf32>
    %5 = vector.shape_cast %4 : vector<1x1x64x96xf32> to vector<64x96xf32>
    %cst_7 = arith.constant dense<0.000000e+00> : vector<16x96xf32>
    %6 = tpu.matmul %3, %5, %cst_7 {dimension_numbers = #tpu.dot_dimension_numbers<[1], [0], [0], [1], [0, 0, 1, 1], [], []>} : vector<16x64xf32>, vector<64x96xf32>, vector<16x96xf32> -> vector<16x96xf32>
    %c0_8 = arith.constant 0 : index
    %c0_9 = arith.constant 0 : index
    %c0_10 = arith.constant 0 : index
    %c0_11 = arith.constant 0 : index
    %7 = vector.load %arg5[%c0_8, %c0_9, %c0_10, %c0_11] : memref<4x2x1x96xf32, #tpu.memory_space<vmem>>, vector<1x1x1x96xf32>
    %8 = vector.shape_cast %7 : vector<1x1x1x96xf32> to vector<1x96xf32>
    %9 = vector.broadcast %8 : vector<1x96xf32> to vector<16x96xf32>
    %10 = arith.addf %6, %9 : vector<16x96xf32>
    %c0_12 = arith.constant 0 : index
    %c1 = arith.constant 1 : index
    %c0_13 = arith.constant 0 : index
    %c0_14 = arith.constant 0 : index
    %11 = vector.load %arg3[%c0_12, %c1, %c0_13, %c0_14] : memref<4x2x64x96xf32, #tpu.memory_space<vmem>>, vector<1x1x64x96xf32>
    %12 = vector.shape_cast %11 : vector<1x1x64x96xf32> to vector<64x96xf32>
    %cst_15 = arith.constant dense<0.000000e+00> : vector<16x96xf32>
    %13 = tpu.matmul %3, %12, %cst_15 {dimension_numbers = #tpu.dot_dimension_numbers<[1], [0], [0], [1], [0, 0, 1, 1], [], []>} : vector<16x64xf32>, vector<64x96xf32>, vector<16x96xf32> -> vector<16x96xf32>
    %c0_16 = arith.constant 0 : index
    %c1_17 = arith.constant 1 : index
    %c0_18 = arith.constant 0 : index
    %c0_19 = arith.constant 0 : index
    %14 = vector.load %arg5[%c0_16, %c1_17, %c0_18, %c0_19] : memref<4x2x1x96xf32, #tpu.memory_space<vmem>>, vector<1x1x1x96xf32>
    %15 = vector.shape_cast %14 : vector<1x1x1x96xf32> to vector<1x96xf32>
    %16 = vector.broadcast %15 : vector<1x96xf32> to vector<16x96xf32>
    %17 = arith.addf %13, %16 : vector<16x96xf32>
    %c0_20 = arith.constant 0 : index
    %c0_21 = arith.constant 0 : index
    %c0_22 = arith.constant 0 : index
    %c0_23 = arith.constant 0 : index
    %18 = vector.load %arg6[%c0_20, %c0_21, %c0_22, %c0_23] : memref<4x2x1x32xf32, #tpu.memory_space<vmem>>, vector<1x1x1x32xf32>
    %19 = vector.shape_cast %18 : vector<1x1x1x32xf32> to vector<1x32xf32>
    %c0_24 = arith.constant 0 : index
    %c1_25 = arith.constant 1 : index
    %c0_26 = arith.constant 0 : index
    %c0_27 = arith.constant 0 : index
    %20 = vector.load %arg6[%c0_24, %c1_25, %c0_26, %c0_27] : memref<4x2x1x32xf32, #tpu.memory_space<vmem>>, vector<1x1x1x32xf32>
    %21 = vector.shape_cast %20 : vector<1x1x1x32xf32> to vector<1x32xf32>
    %c0_28 = arith.constant 0 : index
    %c0_29 = arith.constant 0 : index
    %c0_30 = arith.constant 0 : index
    %22 = vector.load %arg4[%c0_28, %c0_29, %c0_30] : memref<4x64x192xf32, #tpu.memory_space<vmem>>, vector<1x64x192xf32>
    %23 = vector.shape_cast %22 : vector<1x64x192xf32> to vector<64x192xf32>
    %cst_31 = arith.constant 0.000000e+00 : f32
    %24 = vector.broadcast %cst_31 : f32 to vector<2x64xf32>
    %cst_32 = arith.constant dense<0.000000e+00> : vector<2x192xf32>
    %25 = tpu.matmul %24, %23, %cst_32 {dimension_numbers = #tpu.dot_dimension_numbers<[1], [0], [0], [1], [0, 0, 1, 1], [], []>} : vector<2x64xf32>, vector<64x192xf32>, vector<2x192xf32> -> vector<2x192xf32>
    %26 = vector.extract_strided_slice %10 {offsets = [0, 0], sizes = [2, 96], strides = [1, 1]} : vector<16x96xf32> to vector<2x96xf32>
    %27 = vector.extract_strided_slice %25 {offsets = [0, 0], sizes = [2, 96], strides = [1, 1]} : vector<2x192xf32> to vector<2x96xf32>
    %28 = vector.extract_strided_slice %24 {offsets = [0, 0], sizes = [2, 32], strides = [1, 1]} : vector<2x64xf32> to vector<2x32xf32>
    %29 = vector.extract_strided_slice %0 {offsets = [0, 0], sizes = [2, 1], strides = [1, 1]} : vector<16x1xf32> to vector<2x1xf32>
    %30 = vector.extract_strided_slice %2 {offsets = [0, 0], sizes = [2, 1], strides = [1, 1]} : vector<16x1xf32> to vector<2x1xf32>
    %31 = vector.extract_strided_slice %26 {offsets = [0, 0], sizes = [2, 64], strides = [1, 1]} : vector<2x96xf32> to vector<2x64xf32>
    %32 = vector.extract_strided_slice %27 {offsets = [0, 0], sizes = [2, 64], strides = [1, 1]} : vector<2x96xf32> to vector<2x64xf32>
    %33 = arith.addf %31, %32 : vector<2x64xf32>
    %34 = arith.negf %33 : vector<2x64xf32>
    %35 = math.exp %34 : vector<2x64xf32>
    %cst_33 = arith.constant 1.000000e+00 : f32
    %36 = vector.broadcast %cst_33 : f32 to vector<2x64xf32>
    %37 = arith.addf %36, %35 : vector<2x64xf32>
    %38 = arith.divf %36, %37 : vector<2x64xf32>
    %39 = vector.extract_strided_slice %38 {offsets = [0, 0], sizes = [2, 32], strides = [1, 1]} : vector<2x64xf32> to vector<2x32xf32>
    %40 = vector.extract_strided_slice %38 {offsets = [0, 32], sizes = [2, 32], strides = [1, 1]} : vector<2x64xf32> to vector<2x32xf32>
    %41 = vector.extract_strided_slice %26 {offsets = [0, 64], sizes = [2, 32], strides = [1, 1]} : vector<2x96xf32> to vector<2x32xf32>
    %42 = vector.extract_strided_slice %27 {offsets = [0, 64], sizes = [2, 32], strides = [1, 1]} : vector<2x96xf32> to vector<2x32xf32>
    %43 = vector.broadcast %19 : vector<1x32xf32> to vector<2x32xf32>
    %44 = arith.addf %42, %43 : vector<2x32xf32>
    %45 = arith.mulf %39, %44 : vector<2x32xf32>
    %46 = arith.addf %41, %45 : vector<2x32xf32>
    %47 = math.tanh %46 : vector<2x32xf32>
    %48 = arith.subf %28, %47 : vector<2x32xf32>
    %49 = arith.mulf %40, %48 : vector<2x32xf32>
    %50 = arith.addf %47, %49 : vector<2x32xf32>
    %51 = vector.broadcast %29 : vector<2x1xf32> to vector<2x32xf32>
    %52 = arith.mulf %51, %50 : vector<2x32xf32>
    %53 = vector.broadcast %30 : vector<2x1xf32> to vector<2x32xf32>
    %54 = arith.mulf %53, %28 : vector<2x32xf32>
    %55 = arith.addf %52, %54 : vector<2x32xf32>
    %56 = vector.extract_strided_slice %17 {offsets = [14, 0], sizes = [2, 96], strides = [1, 1]} : vector<16x96xf32> to vector<2x96xf32>
    %57 = vector.extract_strided_slice %25 {offsets = [0, 96], sizes = [2, 96], strides = [1, 1]} : vector<2x192xf32> to vector<2x96xf32>
    %58 = vector.extract_strided_slice %24 {offsets = [0, 32], sizes = [2, 32], strides = [1, 1]} : vector<2x64xf32> to vector<2x32xf32>
    %59 = vector.extract_strided_slice %0 {offsets = [14, 0], sizes = [2, 1], strides = [1, 1]} : vector<16x1xf32> to vector<2x1xf32>
    %60 = vector.extract_strided_slice %2 {offsets = [14, 0], sizes = [2, 1], strides = [1, 1]} : vector<16x1xf32> to vector<2x1xf32>
    %61 = vector.extract_strided_slice %56 {offsets = [0, 0], sizes = [2, 64], strides = [1, 1]} : vector<2x96xf32> to vector<2x64xf32>
    %62 = vector.extract_strided_slice %57 {offsets = [0, 0], sizes = [2, 64], strides = [1, 1]} : vector<2x96xf32> to vector<2x64xf32>
    %63 = arith.addf %61, %62 : vector<2x64xf32>
    %64 = arith.negf %63 : vector<2x64xf32>
    %65 = math.exp %64 : vector<2x64xf32>
    %cst_34 = arith.constant 1.000000e+00 : f32
    %66 = vector.broadcast %cst_34 : f32 to vector<2x64xf32>
    %67 = arith.addf %66, %65 : vector<2x64xf32>
    %68 = arith.divf %66, %67 : vector<2x64xf32>
    %69 = vector.extract_strided_slice %68 {offsets = [0, 0], sizes = [2, 32], strides = [1, 1]} : vector<2x64xf32> to vector<2x32xf32>
    %70 = vector.extract_strided_slice %68 {offsets = [0, 32], sizes = [2, 32], strides = [1, 1]} : vector<2x64xf32> to vector<2x32xf32>
    %71 = vector.extract_strided_slice %56 {offsets = [0, 64], sizes = [2, 32], strides = [1, 1]} : vector<2x96xf32> to vector<2x32xf32>
    %72 = vector.extract_strided_slice %57 {offsets = [0, 64], sizes = [2, 32], strides = [1, 1]} : vector<2x96xf32> to vector<2x32xf32>
    %73 = vector.broadcast %21 : vector<1x32xf32> to vector<2x32xf32>
    %74 = arith.addf %72, %73 : vector<2x32xf32>
    %75 = arith.mulf %69, %74 : vector<2x32xf32>
    %76 = arith.addf %71, %75 : vector<2x32xf32>
    %77 = math.tanh %76 : vector<2x32xf32>
    %78 = arith.subf %58, %77 : vector<2x32xf32>
    %79 = arith.mulf %70, %78 : vector<2x32xf32>
    %80 = arith.addf %77, %79 : vector<2x32xf32>
    %81 = vector.broadcast %59 : vector<2x1xf32> to vector<2x32xf32>
    %82 = arith.mulf %81, %80 : vector<2x32xf32>
    %83 = vector.broadcast %60 : vector<2x1xf32> to vector<2x32xf32>
    %84 = arith.mulf %83, %58 : vector<2x32xf32>
    %85 = arith.addf %82, %84 : vector<2x32xf32>
    %86 = tpu.concatenate %55, %85 in 1 : vector<2x32xf32>, vector<2x32xf32> -> vector<2x64xf32>
    %c0_35 = arith.constant 0 : index
    %c0_36 = arith.constant 0 : index
    %87 = vector.load %arg9[%c0_35, %c0_36] : memref<16x64xf32, #tpu.memory_space<vmem>>, vector<2x32xf32>
    tpu.vector_store %arg9[%c0_35, %c0_36], %52 {strides = array<i32>} : memref<16x64xf32, #tpu.memory_space<vmem>>, vector<2x32xf32>,
    %c14 = arith.constant 14 : index
    %c32 = arith.constant 32 : index
    %88 = vector.load %arg9[%c14, %c32] : memref<16x64xf32, #tpu.memory_space<vmem>>, vector<2x32xf32>
    tpu.vector_store %arg9[%c14, %c32], %82 {strides = array<i32>} : memref<16x64xf32, #tpu.memory_space<vmem>>, vector<2x32xf32>,
    %cst_37 = arith.constant dense<0.000000e+00> : vector<2x192xf32>
    %89 = tpu.matmul %86, %23, %cst_37 {dimension_numbers = #tpu.dot_dimension_numbers<[1], [0], [0], [1], [0, 0, 1, 1], [], []>} : vector<2x64xf32>, vector<64x192xf32>, vector<2x192xf32> -> vector<2x192xf32>
    %90 = vector.extract_strided_slice %10 {offsets = [2, 0], sizes = [2, 96], strides = [1, 1]} : vector<16x96xf32> to vector<2x96xf32>
    %91 = vector.extract_strided_slice %89 {offsets = [0, 0], sizes = [2, 96], strides = [1, 1]} : vector<2x192xf32> to vector<2x96xf32>
    %92 = vector.extract_strided_slice %86 {offsets = [0, 0], sizes = [2, 32], strides = [1, 1]} : vector<2x64xf32> to vector<2x32xf32>
    %93 = vector.extract_strided_slice %0 {offsets = [2, 0], sizes = [2, 1], strides = [1, 1]} : vector<16x1xf32> to vector<2x1xf32>
    %94 = vector.extract_strided_slice %2 {offsets = [2, 0], sizes = [2, 1], strides = [1, 1]} : vector<16x1xf32> to vector<2x1xf32>
    %95 = vector.extract_strided_slice %90 {offsets = [0, 0], sizes = [2, 64], strides = [1, 1]} : vector<2x96xf32> to vector<2x64xf32>
    %96 = vector.extract_strided_slice %91 {offsets = [0, 0], sizes = [2, 64], strides = [1, 1]} : vector<2x96xf32> to vector<2x64xf32>
    %97 = arith.addf %95, %96 : vector<2x64xf32>
    %98 = arith.negf %97 : vector<2x64xf32>
    %99 = math.exp %98 : vector<2x64xf32>
    %cst_38 = arith.constant 1.000000e+00 : f32
    %100 = vector.broadcast %cst_38 : f32 to vector<2x64xf32>
    %101 = arith.addf %100, %99 : vector<2x64xf32>
    %102 = arith.divf %100, %101 : vector<2x64xf32>
    %103 = vector.extract_strided_slice %102 {offsets = [0, 0], sizes = [2, 32], strides = [1, 1]} : vector<2x64xf32> to vector<2x32xf32>
    %104 = vector.extract_strided_slice %102 {offsets = [0, 32], sizes = [2, 32], strides = [1, 1]} : vector<2x64xf32> to vector<2x32xf32>
    %105 = vector.extract_strided_slice %90 {offsets = [0, 64], sizes = [2, 32], strides = [1, 1]} : vector<2x96xf32> to vector<2x32xf32>
    %106 = vector.extract_strided_slice %91 {offsets = [0, 64], sizes = [2, 32], strides = [1, 1]} : vector<2x96xf32> to vector<2x32xf32>
    %107 = vector.broadcast %19 : vector<1x32xf32> to vector<2x32xf32>
    %108 = arith.addf %106, %107 : vector<2x32xf32>
    %109 = arith.mulf %103, %108 : vector<2x32xf32>
    %110 = arith.addf %105, %109 : vector<2x32xf32>
    %111 = math.tanh %110 : vector<2x32xf32>
    %112 = arith.subf %92, %111 : vector<2x32xf32>
    %113 = arith.mulf %104, %112 : vector<2x32xf32>
    %114 = arith.addf %111, %113 : vector<2x32xf32>
    %115 = vector.broadcast %93 : vector<2x1xf32> to vector<2x32xf32>
    %116 = arith.mulf %115, %114 : vector<2x32xf32>
    %117 = vector.broadcast %94 : vector<2x1xf32> to vector<2x32xf32>
    %118 = arith.mulf %117, %92 : vector<2x32xf32>
    %119 = arith.addf %116, %118 : vector<2x32xf32>
    %120 = vector.extract_strided_slice %17 {offsets = [12, 0], sizes = [2, 96], strides = [1, 1]} : vector<16x96xf32> to vector<2x96xf32>
    %121 = vector.extract_strided_slice %89 {offsets = [0, 96], sizes = [2, 96], strides = [1, 1]} : vector<2x192xf32> to vector<2x96xf32>
    %122 = vector.extract_strided_slice %86 {offsets = [0, 32], sizes = [2, 32], strides = [1, 1]} : vector<2x64xf32> to vector<2x32xf32>
    %123 = vector.extract_strided_slice %0 {offsets = [12, 0], sizes = [2, 1], strides = [1, 1]} : vector<16x1xf32> to vector<2x1xf32>
    %124 = vector.extract_strided_slice %2 {offsets = [12, 0], sizes = [2, 1], strides = [1, 1]} : vector<16x1xf32> to vector<2x1xf32>
    %125 = vector.extract_strided_slice %120 {offsets = [0, 0], sizes = [2, 64], strides = [1, 1]} : vector<2x96xf32> to vector<2x64xf32>
    %126 = vector.extract_strided_slice %121 {offsets = [0, 0], sizes = [2, 64], strides = [1, 1]} : vector<2x96xf32> to vector<2x64xf32>
    %127 = arith.addf %125, %126 : vector<2x64xf32>
    %128 = arith.negf %127 : vector<2x64xf32>
    %129 = math.exp %128 : vector<2x64xf32>
    %cst_39 = arith.constant 1.000000e+00 : f32
    %130 = vector.broadcast %cst_39 : f32 to vector<2x64xf32>
    %131 = arith.addf %130, %129 : vector<2x64xf32>
    %132 = arith.divf %130, %131 : vector<2x64xf32>
    %133 = vector.extract_strided_slice %132 {offsets = [0, 0], sizes = [2, 32], strides = [1, 1]} : vector<2x64xf32> to vector<2x32xf32>
    %134 = vector.extract_strided_slice %132 {offsets = [0, 32], sizes = [2, 32], strides = [1, 1]} : vector<2x64xf32> to vector<2x32xf32>
    %135 = vector.extract_strided_slice %120 {offsets = [0, 64], sizes = [2, 32], strides = [1, 1]} : vector<2x96xf32> to vector<2x32xf32>
    %136 = vector.extract_strided_slice %121 {offsets = [0, 64], sizes = [2, 32], strides = [1, 1]} : vector<2x96xf32> to vector<2x32xf32>
    %137 = vector.broadcast %21 : vector<1x32xf32> to vector<2x32xf32>
    %138 = arith.addf %136, %137 : vector<2x32xf32>
    %139 = arith.mulf %133, %138 : vector<2x32xf32>
    %140 = arith.addf %135, %139 : vector<2x32xf32>
    %141 = math.tanh %140 : vector<2x32xf32>
    %142 = arith.subf %122, %141 : vector<2x32xf32>
    %143 = arith.mulf %134, %142 : vector<2x32xf32>
    %144 = arith.addf %141, %143 : vector<2x32xf32>
    %145 = vector.broadcast %123 : vector<2x1xf32> to vector<2x32xf32>
    %146 = arith.mulf %145, %144 : vector<2x32xf32>
    %147 = vector.broadcast %124 : vector<2x1xf32> to vector<2x32xf32>
    %148 = arith.mulf %147, %122 : vector<2x32xf32>
    %149 = arith.addf %146, %148 : vector<2x32xf32>
    %150 = tpu.concatenate %119, %149 in 1 : vector<2x32xf32>, vector<2x32xf32> -> vector<2x64xf32>
    %c2 = arith.constant 2 : index
    %c0_40 = arith.constant 0 : index
    %151 = vector.load %arg9[%c2, %c0_40] : memref<16x64xf32, #tpu.memory_space<vmem>>, vector<2x32xf32>
    tpu.vector_store %arg9[%c2, %c0_40], %116 {strides = array<i32>} : memref<16x64xf32, #tpu.memory_space<vmem>>, vector<2x32xf32>,
    %c12 = arith.constant 12 : index
    %c32_41 = arith.constant 32 : index
    %152 = vector.load %arg9[%c12, %c32_41] : memref<16x64xf32, #tpu.memory_space<vmem>>, vector<2x32xf32>
    tpu.vector_store %arg9[%c12, %c32_41], %146 {strides = array<i32>} : memref<16x64xf32, #tpu.memory_space<vmem>>, vector<2x32xf32>,
    %cst_42 = arith.constant dense<0.000000e+00> : vector<2x192xf32>
    %153 = tpu.matmul %150, %23, %cst_42 {dimension_numbers = #tpu.dot_dimension_numbers<[1], [0], [0], [1], [0, 0, 1, 1], [], []>} : vector<2x64xf32>, vector<64x192xf32>, vector<2x192xf32> -> vector<2x192xf32>
    %154 = vector.extract_strided_slice %10 {offsets = [4, 0], sizes = [2, 96], strides = [1, 1]} : vector<16x96xf32> to vector<2x96xf32>
    %155 = vector.extract_strided_slice %153 {offsets = [0, 0], sizes = [2, 96], strides = [1, 1]} : vector<2x192xf32> to vector<2x96xf32>
    %156 = vector.extract_strided_slice %150 {offsets = [0, 0], sizes = [2, 32], strides = [1, 1]} : vector<2x64xf32> to vector<2x32xf32>
    %157 = vector.extract_strided_slice %0 {offsets = [4, 0], sizes = [2, 1], strides = [1, 1]} : vector<16x1xf32> to vector<2x1xf32>
    %158 = vector.extract_strided_slice %2 {offsets = [4, 0], sizes = [2, 1], strides = [1, 1]} : vector<16x1xf32> to vector<2x1xf32>
    %159 = vector.extract_strided_slice %154 {offsets = [0, 0], sizes = [2, 64], strides = [1, 1]} : vector<2x96xf32> to vector<2x64xf32>
    %160 = vector.extract_strided_slice %155 {offsets = [0, 0], sizes = [2, 64], strides = [1, 1]} : vector<2x96xf32> to vector<2x64xf32>
    %161 = arith.addf %159, %160 : vector<2x64xf32>
    %162 = arith.negf %161 : vector<2x64xf32>
    %163 = math.exp %162 : vector<2x64xf32>
    %cst_43 = arith.constant 1.000000e+00 : f32
    %164 = vector.broadcast %cst_43 : f32 to vector<2x64xf32>
    %165 = arith.addf %164, %163 : vector<2x64xf32>
    %166 = arith.divf %164, %165 : vector<2x64xf32>
    %167 = vector.extract_strided_slice %166 {offsets = [0, 0], sizes = [2, 32], strides = [1, 1]} : vector<2x64xf32> to vector<2x32xf32>
    %168 = vector.extract_strided_slice %166 {offsets = [0, 32], sizes = [2, 32], strides = [1, 1]} : vector<2x64xf32> to vector<2x32xf32>
    %169 = vector.extract_strided_slice %154 {offsets = [0, 64], sizes = [2, 32], strides = [1, 1]} : vector<2x96xf32> to vector<2x32xf32>
    %170 = vector.extract_strided_slice %155 {offsets = [0, 64], sizes = [2, 32], strides = [1, 1]} : vector<2x96xf32> to vector<2x32xf32>
    %171 = vector.broadcast %19 : vector<1x32xf32> to vector<2x32xf32>
    %172 = arith.addf %170, %171 : vector<2x32xf32>
    %173 = arith.mulf %167, %172 : vector<2x32xf32>
    %174 = arith.addf %169, %173 : vector<2x32xf32>
    %175 = math.tanh %174 : vector<2x32xf32>
    %176 = arith.subf %156, %175 : vector<2x32xf32>
    %177 = arith.mulf %168, %176 : vector<2x32xf32>
    %178 = arith.addf %175, %177 : vector<2x32xf32>
    %179 = vector.broadcast %157 : vector<2x1xf32> to vector<2x32xf32>
    %180 = arith.mulf %179, %178 : vector<2x32xf32>
    %181 = vector.broadcast %158 : vector<2x1xf32> to vector<2x32xf32>
    %182 = arith.mulf %181, %156 : vector<2x32xf32>
    %183 = arith.addf %180, %182 : vector<2x32xf32>
    %184 = vector.extract_strided_slice %17 {offsets = [10, 0], sizes = [2, 96], strides = [1, 1]} : vector<16x96xf32> to vector<2x96xf32>
    %185 = vector.extract_strided_slice %153 {offsets = [0, 96], sizes = [2, 96], strides = [1, 1]} : vector<2x192xf32> to vector<2x96xf32>
    %186 = vector.extract_strided_slice %150 {offsets = [0, 32], sizes = [2, 32], strides = [1, 1]} : vector<2x64xf32> to vector<2x32xf32>
    %187 = vector.extract_strided_slice %0 {offsets = [10, 0], sizes = [2, 1], strides = [1, 1]} : vector<16x1xf32> to vector<2x1xf32>
    %188 = vector.extract_strided_slice %2 {offsets = [10, 0], sizes = [2, 1], strides = [1, 1]} : vector<16x1xf32> to vector<2x1xf32>
    %189 = vector.extract_strided_slice %184 {offsets = [0, 0], sizes = [2, 64], strides = [1, 1]} : vector<2x96xf32> to vector<2x64xf32>
    %190 = vector.extract_strided_slice %185 {offsets = [0, 0], sizes = [2, 64], strides = [1, 1]} : vector<2x96xf32> to vector<2x64xf32>
    %191 = arith.addf %189, %190 : vector<2x64xf32>
    %192 = arith.negf %191 : vector<2x64xf32>
    %193 = math.exp %192 : vector<2x64xf32>
    %cst_44 = arith.constant 1.000000e+00 : f32
    %194 = vector.broadcast %cst_44 : f32 to vector<2x64xf32>
    %195 = arith.addf %194, %193 : vector<2x64xf32>
    %196 = arith.divf %194, %195 : vector<2x64xf32>
    %197 = vector.extract_strided_slice %196 {offsets = [0, 0], sizes = [2, 32], strides = [1, 1]} : vector<2x64xf32> to vector<2x32xf32>
    %198 = vector.extract_strided_slice %196 {offsets = [0, 32], sizes = [2, 32], strides = [1, 1]} : vector<2x64xf32> to vector<2x32xf32>
    %199 = vector.extract_strided_slice %184 {offsets = [0, 64], sizes = [2, 32], strides = [1, 1]} : vector<2x96xf32> to vector<2x32xf32>
    %200 = vector.extract_strided_slice %185 {offsets = [0, 64], sizes = [2, 32], strides = [1, 1]} : vector<2x96xf32> to vector<2x32xf32>
    %201 = vector.broadcast %21 : vector<1x32xf32> to vector<2x32xf32>
    %202 = arith.addf %200, %201 : vector<2x32xf32>
    %203 = arith.mulf %197, %202 : vector<2x32xf32>
    %204 = arith.addf %199, %203 : vector<2x32xf32>
    %205 = math.tanh %204 : vector<2x32xf32>
    %206 = arith.subf %186, %205 : vector<2x32xf32>
    %207 = arith.mulf %198, %206 : vector<2x32xf32>
    %208 = arith.addf %205, %207 : vector<2x32xf32>
    %209 = vector.broadcast %187 : vector<2x1xf32> to vector<2x32xf32>
    %210 = arith.mulf %209, %208 : vector<2x32xf32>
    %211 = vector.broadcast %188 : vector<2x1xf32> to vector<2x32xf32>
    %212 = arith.mulf %211, %186 : vector<2x32xf32>
    %213 = arith.addf %210, %212 : vector<2x32xf32>
    %214 = tpu.concatenate %183, %213 in 1 : vector<2x32xf32>, vector<2x32xf32> -> vector<2x64xf32>
    %c4 = arith.constant 4 : index
    %c0_45 = arith.constant 0 : index
    %215 = vector.load %arg9[%c4, %c0_45] : memref<16x64xf32, #tpu.memory_space<vmem>>, vector<2x32xf32>
    tpu.vector_store %arg9[%c4, %c0_45], %180 {strides = array<i32>} : memref<16x64xf32, #tpu.memory_space<vmem>>, vector<2x32xf32>,
    %c10 = arith.constant 10 : index
    %c32_46 = arith.constant 32 : index
    %216 = vector.load %arg9[%c10, %c32_46] : memref<16x64xf32, #tpu.memory_space<vmem>>, vector<2x32xf32>
    tpu.vector_store %arg9[%c10, %c32_46], %210 {strides = array<i32>} : memref<16x64xf32, #tpu.memory_space<vmem>>, vector<2x32xf32>,
    %cst_47 = arith.constant dense<0.000000e+00> : vector<2x192xf32>
    %217 = tpu.matmul %214, %23, %cst_47 {dimension_numbers = #tpu.dot_dimension_numbers<[1], [0], [0], [1], [0, 0, 1, 1], [], []>} : vector<2x64xf32>, vector<64x192xf32>, vector<2x192xf32> -> vector<2x192xf32>
    %218 = vector.extract_strided_slice %10 {offsets = [6, 0], sizes = [2, 96], strides = [1, 1]} : vector<16x96xf32> to vector<2x96xf32>
    %219 = vector.extract_strided_slice %217 {offsets = [0, 0], sizes = [2, 96], strides = [1, 1]} : vector<2x192xf32> to vector<2x96xf32>
    %220 = vector.extract_strided_slice %214 {offsets = [0, 0], sizes = [2, 32], strides = [1, 1]} : vector<2x64xf32> to vector<2x32xf32>
    %221 = vector.extract_strided_slice %0 {offsets = [6, 0], sizes = [2, 1], strides = [1, 1]} : vector<16x1xf32> to vector<2x1xf32>
    %222 = vector.extract_strided_slice %2 {offsets = [6, 0], sizes = [2, 1], strides = [1, 1]} : vector<16x1xf32> to vector<2x1xf32>
    %223 = vector.extract_strided_slice %218 {offsets = [0, 0], sizes = [2, 64], strides = [1, 1]} : vector<2x96xf32> to vector<2x64xf32>
    %224 = vector.extract_strided_slice %219 {offsets = [0, 0], sizes = [2, 64], strides = [1, 1]} : vector<2x96xf32> to vector<2x64xf32>
    %225 = arith.addf %223, %224 : vector<2x64xf32>
    %226 = arith.negf %225 : vector<2x64xf32>
    %227 = math.exp %226 : vector<2x64xf32>
    %cst_48 = arith.constant 1.000000e+00 : f32
    %228 = vector.broadcast %cst_48 : f32 to vector<2x64xf32>
    %229 = arith.addf %228, %227 : vector<2x64xf32>
    %230 = arith.divf %228, %229 : vector<2x64xf32>
    %231 = vector.extract_strided_slice %230 {offsets = [0, 0], sizes = [2, 32], strides = [1, 1]} : vector<2x64xf32> to vector<2x32xf32>
    %232 = vector.extract_strided_slice %230 {offsets = [0, 32], sizes = [2, 32], strides = [1, 1]} : vector<2x64xf32> to vector<2x32xf32>
    %233 = vector.extract_strided_slice %218 {offsets = [0, 64], sizes = [2, 32], strides = [1, 1]} : vector<2x96xf32> to vector<2x32xf32>
    %234 = vector.extract_strided_slice %219 {offsets = [0, 64], sizes = [2, 32], strides = [1, 1]} : vector<2x96xf32> to vector<2x32xf32>
    %235 = vector.broadcast %19 : vector<1x32xf32> to vector<2x32xf32>
    %236 = arith.addf %234, %235 : vector<2x32xf32>
    %237 = arith.mulf %231, %236 : vector<2x32xf32>
    %238 = arith.addf %233, %237 : vector<2x32xf32>
    %239 = math.tanh %238 : vector<2x32xf32>
    %240 = arith.subf %220, %239 : vector<2x32xf32>
    %241 = arith.mulf %232, %240 : vector<2x32xf32>
    %242 = arith.addf %239, %241 : vector<2x32xf32>
    %243 = vector.broadcast %221 : vector<2x1xf32> to vector<2x32xf32>
    %244 = arith.mulf %243, %242 : vector<2x32xf32>
    %245 = vector.broadcast %222 : vector<2x1xf32> to vector<2x32xf32>
    %246 = arith.mulf %245, %220 : vector<2x32xf32>
    %247 = arith.addf %244, %246 : vector<2x32xf32>
    %248 = vector.extract_strided_slice %17 {offsets = [8, 0], sizes = [2, 96], strides = [1, 1]} : vector<16x96xf32> to vector<2x96xf32>
    %249 = vector.extract_strided_slice %217 {offsets = [0, 96], sizes = [2, 96], strides = [1, 1]} : vector<2x192xf32> to vector<2x96xf32>
    %250 = vector.extract_strided_slice %214 {offsets = [0, 32], sizes = [2, 32], strides = [1, 1]} : vector<2x64xf32> to vector<2x32xf32>
    %251 = vector.extract_strided_slice %0 {offsets = [8, 0], sizes = [2, 1], strides = [1, 1]} : vector<16x1xf32> to vector<2x1xf32>
    %252 = vector.extract_strided_slice %2 {offsets = [8, 0], sizes = [2, 1], strides = [1, 1]} : vector<16x1xf32> to vector<2x1xf32>
    %253 = vector.extract_strided_slice %248 {offsets = [0, 0], sizes = [2, 64], strides = [1, 1]} : vector<2x96xf32> to vector<2x64xf32>
    %254 = vector.extract_strided_slice %249 {offsets = [0, 0], sizes = [2, 64], strides = [1, 1]} : vector<2x96xf32> to vector<2x64xf32>
    %255 = arith.addf %253, %254 : vector<2x64xf32>
    %256 = arith.negf %255 : vector<2x64xf32>
    %257 = math.exp %256 : vector<2x64xf32>
    %cst_49 = arith.constant 1.000000e+00 : f32
    %258 = vector.broadcast %cst_49 : f32 to vector<2x64xf32>
    %259 = arith.addf %258, %257 : vector<2x64xf32>
    %260 = arith.divf %258, %259 : vector<2x64xf32>
    %261 = vector.extract_strided_slice %260 {offsets = [0, 0], sizes = [2, 32], strides = [1, 1]} : vector<2x64xf32> to vector<2x32xf32>
    %262 = vector.extract_strided_slice %260 {offsets = [0, 32], sizes = [2, 32], strides = [1, 1]} : vector<2x64xf32> to vector<2x32xf32>
    %263 = vector.extract_strided_slice %248 {offsets = [0, 64], sizes = [2, 32], strides = [1, 1]} : vector<2x96xf32> to vector<2x32xf32>
    %264 = vector.extract_strided_slice %249 {offsets = [0, 64], sizes = [2, 32], strides = [1, 1]} : vector<2x96xf32> to vector<2x32xf32>
    %265 = vector.broadcast %21 : vector<1x32xf32> to vector<2x32xf32>
    %266 = arith.addf %264, %265 : vector<2x32xf32>
    %267 = arith.mulf %261, %266 : vector<2x32xf32>
    %268 = arith.addf %263, %267 : vector<2x32xf32>
    %269 = math.tanh %268 : vector<2x32xf32>
    %270 = arith.subf %250, %269 : vector<2x32xf32>
    %271 = arith.mulf %262, %270 : vector<2x32xf32>
    %272 = arith.addf %269, %271 : vector<2x32xf32>
    %273 = vector.broadcast %251 : vector<2x1xf32> to vector<2x32xf32>
    %274 = arith.mulf %273, %272 : vector<2x32xf32>
    %275 = vector.broadcast %252 : vector<2x1xf32> to vector<2x32xf32>
    %276 = arith.mulf %275, %250 : vector<2x32xf32>
    %277 = arith.addf %274, %276 : vector<2x32xf32>
    %278 = tpu.concatenate %247, %277 in 1 : vector<2x32xf32>, vector<2x32xf32> -> vector<2x64xf32>
    %c6 = arith.constant 6 : index
    %c0_50 = arith.constant 0 : index
    %279 = vector.load %arg9[%c6, %c0_50] : memref<16x64xf32, #tpu.memory_space<vmem>>, vector<2x32xf32>
    tpu.vector_store %arg9[%c6, %c0_50], %244 {strides = array<i32>} : memref<16x64xf32, #tpu.memory_space<vmem>>, vector<2x32xf32>,
    %c8 = arith.constant 8 : index
    %c32_51 = arith.constant 32 : index
    %280 = vector.load %arg9[%c8, %c32_51] : memref<16x64xf32, #tpu.memory_space<vmem>>, vector<2x32xf32>
    tpu.vector_store %arg9[%c8, %c32_51], %274 {strides = array<i32>} : memref<16x64xf32, #tpu.memory_space<vmem>>, vector<2x32xf32>,
    %cst_52 = arith.constant dense<0.000000e+00> : vector<2x192xf32>
    %281 = tpu.matmul %278, %23, %cst_52 {dimension_numbers = #tpu.dot_dimension_numbers<[1], [0], [0], [1], [0, 0, 1, 1], [], []>} : vector<2x64xf32>, vector<64x192xf32>, vector<2x192xf32> -> vector<2x192xf32>
    %282 = vector.extract_strided_slice %10 {offsets = [8, 0], sizes = [2, 96], strides = [1, 1]} : vector<16x96xf32> to vector<2x96xf32>
    %283 = vector.extract_strided_slice %281 {offsets = [0, 0], sizes = [2, 96], strides = [1, 1]} : vector<2x192xf32> to vector<2x96xf32>
    %284 = vector.extract_strided_slice %278 {offsets = [0, 0], sizes = [2, 32], strides = [1, 1]} : vector<2x64xf32> to vector<2x32xf32>
    %285 = vector.extract_strided_slice %0 {offsets = [8, 0], sizes = [2, 1], strides = [1, 1]} : vector<16x1xf32> to vector<2x1xf32>
    %286 = vector.extract_strided_slice %2 {offsets = [8, 0], sizes = [2, 1], strides = [1, 1]} : vector<16x1xf32> to vector<2x1xf32>
    %287 = vector.extract_strided_slice %282 {offsets = [0, 0], sizes = [2, 64], strides = [1, 1]} : vector<2x96xf32> to vector<2x64xf32>
    %288 = vector.extract_strided_slice %283 {offsets = [0, 0], sizes = [2, 64], strides = [1, 1]} : vector<2x96xf32> to vector<2x64xf32>
    %289 = arith.addf %287, %288 : vector<2x64xf32>
    %290 = arith.negf %289 : vector<2x64xf32>
    %291 = math.exp %290 : vector<2x64xf32>
    %cst_53 = arith.constant 1.000000e+00 : f32
    %292 = vector.broadcast %cst_53 : f32 to vector<2x64xf32>
    %293 = arith.addf %292, %291 : vector<2x64xf32>
    %294 = arith.divf %292, %293 : vector<2x64xf32>
    %295 = vector.extract_strided_slice %294 {offsets = [0, 0], sizes = [2, 32], strides = [1, 1]} : vector<2x64xf32> to vector<2x32xf32>
    %296 = vector.extract_strided_slice %294 {offsets = [0, 32], sizes = [2, 32], strides = [1, 1]} : vector<2x64xf32> to vector<2x32xf32>
    %297 = vector.extract_strided_slice %282 {offsets = [0, 64], sizes = [2, 32], strides = [1, 1]} : vector<2x96xf32> to vector<2x32xf32>
    %298 = vector.extract_strided_slice %283 {offsets = [0, 64], sizes = [2, 32], strides = [1, 1]} : vector<2x96xf32> to vector<2x32xf32>
    %299 = vector.broadcast %19 : vector<1x32xf32> to vector<2x32xf32>
    %300 = arith.addf %298, %299 : vector<2x32xf32>
    %301 = arith.mulf %295, %300 : vector<2x32xf32>
    %302 = arith.addf %297, %301 : vector<2x32xf32>
    %303 = math.tanh %302 : vector<2x32xf32>
    %304 = arith.subf %284, %303 : vector<2x32xf32>
    %305 = arith.mulf %296, %304 : vector<2x32xf32>
    %306 = arith.addf %303, %305 : vector<2x32xf32>
    %307 = vector.broadcast %285 : vector<2x1xf32> to vector<2x32xf32>
    %308 = arith.mulf %307, %306 : vector<2x32xf32>
    %309 = vector.broadcast %286 : vector<2x1xf32> to vector<2x32xf32>
    %310 = arith.mulf %309, %284 : vector<2x32xf32>
    %311 = arith.addf %308, %310 : vector<2x32xf32>
    %312 = vector.extract_strided_slice %17 {offsets = [6, 0], sizes = [2, 96], strides = [1, 1]} : vector<16x96xf32> to vector<2x96xf32>
    %313 = vector.extract_strided_slice %281 {offsets = [0, 96], sizes = [2, 96], strides = [1, 1]} : vector<2x192xf32> to vector<2x96xf32>
    %314 = vector.extract_strided_slice %278 {offsets = [0, 32], sizes = [2, 32], strides = [1, 1]} : vector<2x64xf32> to vector<2x32xf32>
    %315 = vector.extract_strided_slice %0 {offsets = [6, 0], sizes = [2, 1], strides = [1, 1]} : vector<16x1xf32> to vector<2x1xf32>
    %316 = vector.extract_strided_slice %2 {offsets = [6, 0], sizes = [2, 1], strides = [1, 1]} : vector<16x1xf32> to vector<2x1xf32>
    %317 = vector.extract_strided_slice %312 {offsets = [0, 0], sizes = [2, 64], strides = [1, 1]} : vector<2x96xf32> to vector<2x64xf32>
    %318 = vector.extract_strided_slice %313 {offsets = [0, 0], sizes = [2, 64], strides = [1, 1]} : vector<2x96xf32> to vector<2x64xf32>
    %319 = arith.addf %317, %318 : vector<2x64xf32>
    %320 = arith.negf %319 : vector<2x64xf32>
    %321 = math.exp %320 : vector<2x64xf32>
    %cst_54 = arith.constant 1.000000e+00 : f32
    %322 = vector.broadcast %cst_54 : f32 to vector<2x64xf32>
    %323 = arith.addf %322, %321 : vector<2x64xf32>
    %324 = arith.divf %322, %323 : vector<2x64xf32>
    %325 = vector.extract_strided_slice %324 {offsets = [0, 0], sizes = [2, 32], strides = [1, 1]} : vector<2x64xf32> to vector<2x32xf32>
    %326 = vector.extract_strided_slice %324 {offsets = [0, 32], sizes = [2, 32], strides = [1, 1]} : vector<2x64xf32> to vector<2x32xf32>
    %327 = vector.extract_strided_slice %312 {offsets = [0, 64], sizes = [2, 32], strides = [1, 1]} : vector<2x96xf32> to vector<2x32xf32>
    %328 = vector.extract_strided_slice %313 {offsets = [0, 64], sizes = [2, 32], strides = [1, 1]} : vector<2x96xf32> to vector<2x32xf32>
    %329 = vector.broadcast %21 : vector<1x32xf32> to vector<2x32xf32>
    %330 = arith.addf %328, %329 : vector<2x32xf32>
    %331 = arith.mulf %325, %330 : vector<2x32xf32>
    %332 = arith.addf %327, %331 : vector<2x32xf32>
    %333 = math.tanh %332 : vector<2x32xf32>
    %334 = arith.subf %314, %333 : vector<2x32xf32>
    %335 = arith.mulf %326, %334 : vector<2x32xf32>
    %336 = arith.addf %333, %335 : vector<2x32xf32>
    %337 = vector.broadcast %315 : vector<2x1xf32> to vector<2x32xf32>
    %338 = arith.mulf %337, %336 : vector<2x32xf32>
    %339 = vector.broadcast %316 : vector<2x1xf32> to vector<2x32xf32>
    %340 = arith.mulf %339, %314 : vector<2x32xf32>
    %341 = arith.addf %338, %340 : vector<2x32xf32>
    %342 = tpu.concatenate %311, %341 in 1 : vector<2x32xf32>, vector<2x32xf32> -> vector<2x64xf32>
    %c8_55 = arith.constant 8 : index
    %c0_56 = arith.constant 0 : index
    %343 = vector.load %arg9[%c8_55, %c0_56] : memref<16x64xf32, #tpu.memory_space<vmem>>, vector<2x32xf32>
    tpu.vector_store %arg9[%c8_55, %c0_56], %308 {strides = array<i32>} : memref<16x64xf32, #tpu.memory_space<vmem>>, vector<2x32xf32>,
    %c6_57 = arith.constant 6 : index
    %c32_58 = arith.constant 32 : index
    %344 = vector.load %arg9[%c6_57, %c32_58] : memref<16x64xf32, #tpu.memory_space<vmem>>, vector<2x32xf32>
    tpu.vector_store %arg9[%c6_57, %c32_58], %338 {strides = array<i32>} : memref<16x64xf32, #tpu.memory_space<vmem>>, vector<2x32xf32>,
    %cst_59 = arith.constant dense<0.000000e+00> : vector<2x192xf32>
    %345 = tpu.matmul %342, %23, %cst_59 {dimension_numbers = #tpu.dot_dimension_numbers<[1], [0], [0], [1], [0, 0, 1, 1], [], []>} : vector<2x64xf32>, vector<64x192xf32>, vector<2x192xf32> -> vector<2x192xf32>
    %346 = vector.extract_strided_slice %10 {offsets = [10, 0], sizes = [2, 96], strides = [1, 1]} : vector<16x96xf32> to vector<2x96xf32>
    %347 = vector.extract_strided_slice %345 {offsets = [0, 0], sizes = [2, 96], strides = [1, 1]} : vector<2x192xf32> to vector<2x96xf32>
    %348 = vector.extract_strided_slice %342 {offsets = [0, 0], sizes = [2, 32], strides = [1, 1]} : vector<2x64xf32> to vector<2x32xf32>
    %349 = vector.extract_strided_slice %0 {offsets = [10, 0], sizes = [2, 1], strides = [1, 1]} : vector<16x1xf32> to vector<2x1xf32>
    %350 = vector.extract_strided_slice %2 {offsets = [10, 0], sizes = [2, 1], strides = [1, 1]} : vector<16x1xf32> to vector<2x1xf32>
    %351 = vector.extract_strided_slice %346 {offsets = [0, 0], sizes = [2, 64], strides = [1, 1]} : vector<2x96xf32> to vector<2x64xf32>
    %352 = vector.extract_strided_slice %347 {offsets = [0, 0], sizes = [2, 64], strides = [1, 1]} : vector<2x96xf32> to vector<2x64xf32>
    %353 = arith.addf %351, %352 : vector<2x64xf32>
    %354 = arith.negf %353 : vector<2x64xf32>
    %355 = math.exp %354 : vector<2x64xf32>
    %cst_60 = arith.constant 1.000000e+00 : f32
    %356 = vector.broadcast %cst_60 : f32 to vector<2x64xf32>
    %357 = arith.addf %356, %355 : vector<2x64xf32>
    %358 = arith.divf %356, %357 : vector<2x64xf32>
    %359 = vector.extract_strided_slice %358 {offsets = [0, 0], sizes = [2, 32], strides = [1, 1]} : vector<2x64xf32> to vector<2x32xf32>
    %360 = vector.extract_strided_slice %358 {offsets = [0, 32], sizes = [2, 32], strides = [1, 1]} : vector<2x64xf32> to vector<2x32xf32>
    %361 = vector.extract_strided_slice %346 {offsets = [0, 64], sizes = [2, 32], strides = [1, 1]} : vector<2x96xf32> to vector<2x32xf32>
    %362 = vector.extract_strided_slice %347 {offsets = [0, 64], sizes = [2, 32], strides = [1, 1]} : vector<2x96xf32> to vector<2x32xf32>
    %363 = vector.broadcast %19 : vector<1x32xf32> to vector<2x32xf32>
    %364 = arith.addf %362, %363 : vector<2x32xf32>
    %365 = arith.mulf %359, %364 : vector<2x32xf32>
    %366 = arith.addf %361, %365 : vector<2x32xf32>
    %367 = math.tanh %366 : vector<2x32xf32>
    %368 = arith.subf %348, %367 : vector<2x32xf32>
    %369 = arith.mulf %360, %368 : vector<2x32xf32>
    %370 = arith.addf %367, %369 : vector<2x32xf32>
    %371 = vector.broadcast %349 : vector<2x1xf32> to vector<2x32xf32>
    %372 = arith.mulf %371, %370 : vector<2x32xf32>
    %373 = vector.broadcast %350 : vector<2x1xf32> to vector<2x32xf32>
    %374 = arith.mulf %373, %348 : vector<2x32xf32>
    %375 = arith.addf %372, %374 : vector<2x32xf32>
    %376 = vector.extract_strided_slice %17 {offsets = [4, 0], sizes = [2, 96], strides = [1, 1]} : vector<16x96xf32> to vector<2x96xf32>
    %377 = vector.extract_strided_slice %345 {offsets = [0, 96], sizes = [2, 96], strides = [1, 1]} : vector<2x192xf32> to vector<2x96xf32>
    %378 = vector.extract_strided_slice %342 {offsets = [0, 32], sizes = [2, 32], strides = [1, 1]} : vector<2x64xf32> to vector<2x32xf32>
    %379 = vector.extract_strided_slice %0 {offsets = [4, 0], sizes = [2, 1], strides = [1, 1]} : vector<16x1xf32> to vector<2x1xf32>
    %380 = vector.extract_strided_slice %2 {offsets = [4, 0], sizes = [2, 1], strides = [1, 1]} : vector<16x1xf32> to vector<2x1xf32>
    %381 = vector.extract_strided_slice %376 {offsets = [0, 0], sizes = [2, 64], strides = [1, 1]} : vector<2x96xf32> to vector<2x64xf32>
    %382 = vector.extract_strided_slice %377 {offsets = [0, 0], sizes = [2, 64], strides = [1, 1]} : vector<2x96xf32> to vector<2x64xf32>
    %383 = arith.addf %381, %382 : vector<2x64xf32>
    %384 = arith.negf %383 : vector<2x64xf32>
    %385 = math.exp %384 : vector<2x64xf32>
    %cst_61 = arith.constant 1.000000e+00 : f32
    %386 = vector.broadcast %cst_61 : f32 to vector<2x64xf32>
    %387 = arith.addf %386, %385 : vector<2x64xf32>
    %388 = arith.divf %386, %387 : vector<2x64xf32>
    %389 = vector.extract_strided_slice %388 {offsets = [0, 0], sizes = [2, 32], strides = [1, 1]} : vector<2x64xf32> to vector<2x32xf32>
    %390 = vector.extract_strided_slice %388 {offsets = [0, 32], sizes = [2, 32], strides = [1, 1]} : vector<2x64xf32> to vector<2x32xf32>
    %391 = vector.extract_strided_slice %376 {offsets = [0, 64], sizes = [2, 32], strides = [1, 1]} : vector<2x96xf32> to vector<2x32xf32>
    %392 = vector.extract_strided_slice %377 {offsets = [0, 64], sizes = [2, 32], strides = [1, 1]} : vector<2x96xf32> to vector<2x32xf32>
    %393 = vector.broadcast %21 : vector<1x32xf32> to vector<2x32xf32>
    %394 = arith.addf %392, %393 : vector<2x32xf32>
    %395 = arith.mulf %389, %394 : vector<2x32xf32>
    %396 = arith.addf %391, %395 : vector<2x32xf32>
    %397 = math.tanh %396 : vector<2x32xf32>
    %398 = arith.subf %378, %397 : vector<2x32xf32>
    %399 = arith.mulf %390, %398 : vector<2x32xf32>
    %400 = arith.addf %397, %399 : vector<2x32xf32>
    %401 = vector.broadcast %379 : vector<2x1xf32> to vector<2x32xf32>
    %402 = arith.mulf %401, %400 : vector<2x32xf32>
    %403 = vector.broadcast %380 : vector<2x1xf32> to vector<2x32xf32>
    %404 = arith.mulf %403, %378 : vector<2x32xf32>
    %405 = arith.addf %402, %404 : vector<2x32xf32>
    %406 = tpu.concatenate %375, %405 in 1 : vector<2x32xf32>, vector<2x32xf32> -> vector<2x64xf32>
    %c10_62 = arith.constant 10 : index
    %c0_63 = arith.constant 0 : index
    %407 = vector.load %arg9[%c10_62, %c0_63] : memref<16x64xf32, #tpu.memory_space<vmem>>, vector<2x32xf32>
    tpu.vector_store %arg9[%c10_62, %c0_63], %372 {strides = array<i32>} : memref<16x64xf32, #tpu.memory_space<vmem>>, vector<2x32xf32>,
    %c4_64 = arith.constant 4 : index
    %c32_65 = arith.constant 32 : index
    %408 = vector.load %arg9[%c4_64, %c32_65] : memref<16x64xf32, #tpu.memory_space<vmem>>, vector<2x32xf32>
    tpu.vector_store %arg9[%c4_64, %c32_65], %402 {strides = array<i32>} : memref<16x64xf32, #tpu.memory_space<vmem>>, vector<2x32xf32>,
    %cst_66 = arith.constant dense<0.000000e+00> : vector<2x192xf32>
    %409 = tpu.matmul %406, %23, %cst_66 {dimension_numbers = #tpu.dot_dimension_numbers<[1], [0], [0], [1], [0, 0, 1, 1], [], []>} : vector<2x64xf32>, vector<64x192xf32>, vector<2x192xf32> -> vector<2x192xf32>
    %410 = vector.extract_strided_slice %10 {offsets = [12, 0], sizes = [2, 96], strides = [1, 1]} : vector<16x96xf32> to vector<2x96xf32>
    %411 = vector.extract_strided_slice %409 {offsets = [0, 0], sizes = [2, 96], strides = [1, 1]} : vector<2x192xf32> to vector<2x96xf32>
    %412 = vector.extract_strided_slice %406 {offsets = [0, 0], sizes = [2, 32], strides = [1, 1]} : vector<2x64xf32> to vector<2x32xf32>
    %413 = vector.extract_strided_slice %0 {offsets = [12, 0], sizes = [2, 1], strides = [1, 1]} : vector<16x1xf32> to vector<2x1xf32>
    %414 = vector.extract_strided_slice %2 {offsets = [12, 0], sizes = [2, 1], strides = [1, 1]} : vector<16x1xf32> to vector<2x1xf32>
    %415 = vector.extract_strided_slice %410 {offsets = [0, 0], sizes = [2, 64], strides = [1, 1]} : vector<2x96xf32> to vector<2x64xf32>
    %416 = vector.extract_strided_slice %411 {offsets = [0, 0], sizes = [2, 64], strides = [1, 1]} : vector<2x96xf32> to vector<2x64xf32>
    %417 = arith.addf %415, %416 : vector<2x64xf32>
    %418 = arith.negf %417 : vector<2x64xf32>
    %419 = math.exp %418 : vector<2x64xf32>
    %cst_67 = arith.constant 1.000000e+00 : f32
    %420 = vector.broadcast %cst_67 : f32 to vector<2x64xf32>
    %421 = arith.addf %420, %419 : vector<2x64xf32>
    %422 = arith.divf %420, %421 : vector<2x64xf32>
    %423 = vector.extract_strided_slice %422 {offsets = [0, 0], sizes = [2, 32], strides = [1, 1]} : vector<2x64xf32> to vector<2x32xf32>
    %424 = vector.extract_strided_slice %422 {offsets = [0, 32], sizes = [2, 32], strides = [1, 1]} : vector<2x64xf32> to vector<2x32xf32>
    %425 = vector.extract_strided_slice %410 {offsets = [0, 64], sizes = [2, 32], strides = [1, 1]} : vector<2x96xf32> to vector<2x32xf32>
    %426 = vector.extract_strided_slice %411 {offsets = [0, 64], sizes = [2, 32], strides = [1, 1]} : vector<2x96xf32> to vector<2x32xf32>
    %427 = vector.broadcast %19 : vector<1x32xf32> to vector<2x32xf32>
    %428 = arith.addf %426, %427 : vector<2x32xf32>
    %429 = arith.mulf %423, %428 : vector<2x32xf32>
    %430 = arith.addf %425, %429 : vector<2x32xf32>
    %431 = math.tanh %430 : vector<2x32xf32>
    %432 = arith.subf %412, %431 : vector<2x32xf32>
    %433 = arith.mulf %424, %432 : vector<2x32xf32>
    %434 = arith.addf %431, %433 : vector<2x32xf32>
    %435 = vector.broadcast %413 : vector<2x1xf32> to vector<2x32xf32>
    %436 = arith.mulf %435, %434 : vector<2x32xf32>
    %437 = vector.broadcast %414 : vector<2x1xf32> to vector<2x32xf32>
    %438 = arith.mulf %437, %412 : vector<2x32xf32>
    %439 = arith.addf %436, %438 : vector<2x32xf32>
    %440 = vector.extract_strided_slice %17 {offsets = [2, 0], sizes = [2, 96], strides = [1, 1]} : vector<16x96xf32> to vector<2x96xf32>
    %441 = vector.extract_strided_slice %409 {offsets = [0, 96], sizes = [2, 96], strides = [1, 1]} : vector<2x192xf32> to vector<2x96xf32>
    %442 = vector.extract_strided_slice %406 {offsets = [0, 32], sizes = [2, 32], strides = [1, 1]} : vector<2x64xf32> to vector<2x32xf32>
    %443 = vector.extract_strided_slice %0 {offsets = [2, 0], sizes = [2, 1], strides = [1, 1]} : vector<16x1xf32> to vector<2x1xf32>
    %444 = vector.extract_strided_slice %2 {offsets = [2, 0], sizes = [2, 1], strides = [1, 1]} : vector<16x1xf32> to vector<2x1xf32>
    %445 = vector.extract_strided_slice %440 {offsets = [0, 0], sizes = [2, 64], strides = [1, 1]} : vector<2x96xf32> to vector<2x64xf32>
    %446 = vector.extract_strided_slice %441 {offsets = [0, 0], sizes = [2, 64], strides = [1, 1]} : vector<2x96xf32> to vector<2x64xf32>
    %447 = arith.addf %445, %446 : vector<2x64xf32>
    %448 = arith.negf %447 : vector<2x64xf32>
    %449 = math.exp %448 : vector<2x64xf32>
    %cst_68 = arith.constant 1.000000e+00 : f32
    %450 = vector.broadcast %cst_68 : f32 to vector<2x64xf32>
    %451 = arith.addf %450, %449 : vector<2x64xf32>
    %452 = arith.divf %450, %451 : vector<2x64xf32>
    %453 = vector.extract_strided_slice %452 {offsets = [0, 0], sizes = [2, 32], strides = [1, 1]} : vector<2x64xf32> to vector<2x32xf32>
    %454 = vector.extract_strided_slice %452 {offsets = [0, 32], sizes = [2, 32], strides = [1, 1]} : vector<2x64xf32> to vector<2x32xf32>
    %455 = vector.extract_strided_slice %440 {offsets = [0, 64], sizes = [2, 32], strides = [1, 1]} : vector<2x96xf32> to vector<2x32xf32>
    %456 = vector.extract_strided_slice %441 {offsets = [0, 64], sizes = [2, 32], strides = [1, 1]} : vector<2x96xf32> to vector<2x32xf32>
    %457 = vector.broadcast %21 : vector<1x32xf32> to vector<2x32xf32>
    %458 = arith.addf %456, %457 : vector<2x32xf32>
    %459 = arith.mulf %453, %458 : vector<2x32xf32>
    %460 = arith.addf %455, %459 : vector<2x32xf32>
    %461 = math.tanh %460 : vector<2x32xf32>
    %462 = arith.subf %442, %461 : vector<2x32xf32>
    %463 = arith.mulf %454, %462 : vector<2x32xf32>
    %464 = arith.addf %461, %463 : vector<2x32xf32>
    %465 = vector.broadcast %443 : vector<2x1xf32> to vector<2x32xf32>
    %466 = arith.mulf %465, %464 : vector<2x32xf32>
    %467 = vector.broadcast %444 : vector<2x1xf32> to vector<2x32xf32>
    %468 = arith.mulf %467, %442 : vector<2x32xf32>
    %469 = arith.addf %466, %468 : vector<2x32xf32>
    %470 = tpu.concatenate %439, %469 in 1 : vector<2x32xf32>, vector<2x32xf32> -> vector<2x64xf32>
    %c12_69 = arith.constant 12 : index
    %c0_70 = arith.constant 0 : index
    %471 = vector.load %arg9[%c12_69, %c0_70] : memref<16x64xf32, #tpu.memory_space<vmem>>, vector<2x32xf32>
    tpu.vector_store %arg9[%c12_69, %c0_70], %436 {strides = array<i32>} : memref<16x64xf32, #tpu.memory_space<vmem>>, vector<2x32xf32>,
    %c2_71 = arith.constant 2 : index
    %c32_72 = arith.constant 32 : index
    %472 = vector.load %arg9[%c2_71, %c32_72] : memref<16x64xf32, #tpu.memory_space<vmem>>, vector<2x32xf32>
    tpu.vector_store %arg9[%c2_71, %c32_72], %466 {strides = array<i32>} : memref<16x64xf32, #tpu.memory_space<vmem>>, vector<2x32xf32>,
    %cst_73 = arith.constant dense<0.000000e+00> : vector<2x192xf32>
    %473 = tpu.matmul %470, %23, %cst_73 {dimension_numbers = #tpu.dot_dimension_numbers<[1], [0], [0], [1], [0, 0, 1, 1], [], []>} : vector<2x64xf32>, vector<64x192xf32>, vector<2x192xf32> -> vector<2x192xf32>
    %474 = vector.extract_strided_slice %10 {offsets = [14, 0], sizes = [2, 96], strides = [1, 1]} : vector<16x96xf32> to vector<2x96xf32>
    %475 = vector.extract_strided_slice %473 {offsets = [0, 0], sizes = [2, 96], strides = [1, 1]} : vector<2x192xf32> to vector<2x96xf32>
    %476 = vector.extract_strided_slice %470 {offsets = [0, 0], sizes = [2, 32], strides = [1, 1]} : vector<2x64xf32> to vector<2x32xf32>
    %477 = vector.extract_strided_slice %0 {offsets = [14, 0], sizes = [2, 1], strides = [1, 1]} : vector<16x1xf32> to vector<2x1xf32>
    %478 = vector.extract_strided_slice %2 {offsets = [14, 0], sizes = [2, 1], strides = [1, 1]} : vector<16x1xf32> to vector<2x1xf32>
    %479 = vector.extract_strided_slice %474 {offsets = [0, 0], sizes = [2, 64], strides = [1, 1]} : vector<2x96xf32> to vector<2x64xf32>
    %480 = vector.extract_strided_slice %475 {offsets = [0, 0], sizes = [2, 64], strides = [1, 1]} : vector<2x96xf32> to vector<2x64xf32>
    %481 = arith.addf %479, %480 : vector<2x64xf32>
    %482 = arith.negf %481 : vector<2x64xf32>
    %483 = math.exp %482 : vector<2x64xf32>
    %cst_74 = arith.constant 1.000000e+00 : f32
    %484 = vector.broadcast %cst_74 : f32 to vector<2x64xf32>
    %485 = arith.addf %484, %483 : vector<2x64xf32>
    %486 = arith.divf %484, %485 : vector<2x64xf32>
    %487 = vector.extract_strided_slice %486 {offsets = [0, 0], sizes = [2, 32], strides = [1, 1]} : vector<2x64xf32> to vector<2x32xf32>
    %488 = vector.extract_strided_slice %486 {offsets = [0, 32], sizes = [2, 32], strides = [1, 1]} : vector<2x64xf32> to vector<2x32xf32>
    %489 = vector.extract_strided_slice %474 {offsets = [0, 64], sizes = [2, 32], strides = [1, 1]} : vector<2x96xf32> to vector<2x32xf32>
    %490 = vector.extract_strided_slice %475 {offsets = [0, 64], sizes = [2, 32], strides = [1, 1]} : vector<2x96xf32> to vector<2x32xf32>
    %491 = vector.broadcast %19 : vector<1x32xf32> to vector<2x32xf32>
    %492 = arith.addf %490, %491 : vector<2x32xf32>
    %493 = arith.mulf %487, %492 : vector<2x32xf32>
    %494 = arith.addf %489, %493 : vector<2x32xf32>
    %495 = math.tanh %494 : vector<2x32xf32>
    %496 = arith.subf %476, %495 : vector<2x32xf32>
    %497 = arith.mulf %488, %496 : vector<2x32xf32>
    %498 = arith.addf %495, %497 : vector<2x32xf32>
    %499 = vector.broadcast %477 : vector<2x1xf32> to vector<2x32xf32>
    %500 = arith.mulf %499, %498 : vector<2x32xf32>
    %501 = vector.broadcast %478 : vector<2x1xf32> to vector<2x32xf32>
    %502 = arith.mulf %501, %476 : vector<2x32xf32>
    %503 = arith.addf %500, %502 : vector<2x32xf32>
    %504 = vector.extract_strided_slice %17 {offsets = [0, 0], sizes = [2, 96], strides = [1, 1]} : vector<16x96xf32> to vector<2x96xf32>
    %505 = vector.extract_strided_slice %473 {offsets = [0, 96], sizes = [2, 96], strides = [1, 1]} : vector<2x192xf32> to vector<2x96xf32>
    %506 = vector.extract_strided_slice %470 {offsets = [0, 32], sizes = [2, 32], strides = [1, 1]} : vector<2x64xf32> to vector<2x32xf32>
    %507 = vector.extract_strided_slice %0 {offsets = [0, 0], sizes = [2, 1], strides = [1, 1]} : vector<16x1xf32> to vector<2x1xf32>
    %508 = vector.extract_strided_slice %2 {offsets = [0, 0], sizes = [2, 1], strides = [1, 1]} : vector<16x1xf32> to vector<2x1xf32>
    %509 = vector.extract_strided_slice %504 {offsets = [0, 0], sizes = [2, 64], strides = [1, 1]} : vector<2x96xf32> to vector<2x64xf32>
    %510 = vector.extract_strided_slice %505 {offsets = [0, 0], sizes = [2, 64], strides = [1, 1]} : vector<2x96xf32> to vector<2x64xf32>
    %511 = arith.addf %509, %510 : vector<2x64xf32>
    %512 = arith.negf %511 : vector<2x64xf32>
    %513 = math.exp %512 : vector<2x64xf32>
    %cst_75 = arith.constant 1.000000e+00 : f32
    %514 = vector.broadcast %cst_75 : f32 to vector<2x64xf32>
    %515 = arith.addf %514, %513 : vector<2x64xf32>
    %516 = arith.divf %514, %515 : vector<2x64xf32>
    %517 = vector.extract_strided_slice %516 {offsets = [0, 0], sizes = [2, 32], strides = [1, 1]} : vector<2x64xf32> to vector<2x32xf32>
    %518 = vector.extract_strided_slice %516 {offsets = [0, 32], sizes = [2, 32], strides = [1, 1]} : vector<2x64xf32> to vector<2x32xf32>
    %519 = vector.extract_strided_slice %504 {offsets = [0, 64], sizes = [2, 32], strides = [1, 1]} : vector<2x96xf32> to vector<2x32xf32>
    %520 = vector.extract_strided_slice %505 {offsets = [0, 64], sizes = [2, 32], strides = [1, 1]} : vector<2x96xf32> to vector<2x32xf32>
    %521 = vector.broadcast %21 : vector<1x32xf32> to vector<2x32xf32>
    %522 = arith.addf %520, %521 : vector<2x32xf32>
    %523 = arith.mulf %517, %522 : vector<2x32xf32>
    %524 = arith.addf %519, %523 : vector<2x32xf32>
    %525 = math.tanh %524 : vector<2x32xf32>
    %526 = arith.subf %506, %525 : vector<2x32xf32>
    %527 = arith.mulf %518, %526 : vector<2x32xf32>
    %528 = arith.addf %525, %527 : vector<2x32xf32>
    %529 = vector.broadcast %507 : vector<2x1xf32> to vector<2x32xf32>
    %530 = arith.mulf %529, %528 : vector<2x32xf32>
    %531 = vector.broadcast %508 : vector<2x1xf32> to vector<2x32xf32>
    %532 = arith.mulf %531, %506 : vector<2x32xf32>
    %533 = arith.addf %530, %532 : vector<2x32xf32>
    %534 = tpu.concatenate %503, %533 in 1 : vector<2x32xf32>, vector<2x32xf32> -> vector<2x64xf32>
    %c14_76 = arith.constant 14 : index
    %c0_77 = arith.constant 0 : index
    %535 = vector.load %arg9[%c14_76, %c0_77] : memref<16x64xf32, #tpu.memory_space<vmem>>, vector<2x32xf32>
    tpu.vector_store %arg9[%c14_76, %c0_77], %500 {strides = array<i32>} : memref<16x64xf32, #tpu.memory_space<vmem>>, vector<2x32xf32>,
    %c0_78 = arith.constant 0 : index
    %c32_79 = arith.constant 32 : index
    %536 = vector.load %arg9[%c0_78, %c32_79] : memref<16x64xf32, #tpu.memory_space<vmem>>, vector<2x32xf32>
    tpu.vector_store %arg9[%c0_78, %c32_79], %530 {strides = array<i32>} : memref<16x64xf32, #tpu.memory_space<vmem>>, vector<2x32xf32>,
    %537 = vector.extract_strided_slice %534 {offsets = [0, 0], sizes = [2, 32], strides = [1, 1]} : vector<2x64xf32> to vector<2x32xf32>
    %c0_80 = arith.constant 0 : index
    %c0_81 = arith.constant 0 : index
    %c0_82 = arith.constant 0 : index
    %c0_83 = arith.constant 0 : index
    %538 = vector.load %arg8[%c0_80, %c0_81, %c0_82, %c0_83] : memref<4x2x2x32xf32, #tpu.memory_space<vmem>>, vector<1x1x2x32xf32>
    %539 = vector.shape_cast %538 : vector<1x1x2x32xf32> to vector<2x32xf32>
    %540 = vector.shape_cast %537 : vector<2x32xf32> to vector<1x1x2x32xf32>
    tpu.vector_store %arg8[%c0_80, %c0_81, %c0_82, %c0_83], %540 {strides = array<i32>} : memref<4x2x2x32xf32, #tpu.memory_space<vmem>>, vector<1x1x2x32xf32>,
    %541 = vector.extract_strided_slice %534 {offsets = [0, 32], sizes = [2, 32], strides = [1, 1]} : vector<2x64xf32> to vector<2x32xf32>
    %c0_84 = arith.constant 0 : index
    %c1_85 = arith.constant 1 : index
    %c0_86 = arith.constant 0 : index
    %c0_87 = arith.constant 0 : index
    %542 = vector.load %arg8[%c0_84, %c1_85, %c0_86, %c0_87] : memref<4x2x2x32xf32, #tpu.memory_space<vmem>>, vector<1x1x2x32xf32>
    %543 = vector.shape_cast %542 : vector<1x1x2x32xf32> to vector<2x32xf32>
    %544 = vector.shape_cast %541 : vector<2x32xf32> to vector<1x1x2x32xf32>
    tpu.vector_store %arg8[%c0_84, %c1_85, %c0_86, %c0_87], %544 {strides = array<i32>} : memref<4x2x2x32xf32, #tpu.memory_space<vmem>>, vector<1x1x2x32xf32>,
    %c0_88 = arith.constant 0 : index
    %c0_89 = arith.constant 0 : index
    %545 = vector.load %arg9[%c0_88, %c0_89] : memref<16x64xf32, #tpu.memory_space<vmem>>, vector<16x64xf32>
    %c1_90 = arith.constant 1 : index
    %c0_91 = arith.constant 0 : index
    %c0_92 = arith.constant 0 : index
    %c0_93 = arith.constant 0 : index
    %546 = vector.load %arg3[%c1_90, %c0_91, %c0_92, %c0_93] : memref<4x2x64x96xf32, #tpu.memory_space<vmem>>, vector<1x1x64x96xf32>
    %547 = vector.shape_cast %546 : vector<1x1x64x96xf32> to vector<64x96xf32>
    %cst_94 = arith.constant dense<0.000000e+00> : vector<16x96xf32>
    %548 = tpu.matmul %545, %547, %cst_94 {dimension_numbers = #tpu.dot_dimension_numbers<[1], [0], [0], [1], [0, 0, 1, 1], [], []>} : vector<16x64xf32>, vector<64x96xf32>, vector<16x96xf32> -> vector<16x96xf32>
    %c1_95 = arith.constant 1 : index
    %c0_96 = arith.constant 0 : index
    %c0_97 = arith.constant 0 : index
    %c0_98 = arith.constant 0 : index
    %549 = vector.load %arg5[%c1_95, %c0_96, %c0_97, %c0_98] : memref<4x2x1x96xf32, #tpu.memory_space<vmem>>, vector<1x1x1x96xf32>
    %550 = vector.shape_cast %549 : vector<1x1x1x96xf32> to vector<1x96xf32>
    %551 = vector.broadcast %550 : vector<1x96xf32> to vector<16x96xf32>
    %552 = arith.addf %548, %551 : vector<16x96xf32>
    %c1_99 = arith.constant 1 : index
    %c1_100 = arith.constant 1 : index
    %c0_101 = arith.constant 0 : index
    %c0_102 = arith.constant 0 : index
    %553 = vector.load %arg3[%c1_99, %c1_100, %c0_101, %c0_102] : memref<4x2x64x96xf32, #tpu.memory_space<vmem>>, vector<1x1x64x96xf32>
    %554 = vector.shape_cast %553 : vector<1x1x64x96xf32> to vector<64x96xf32>
    %cst_103 = arith.constant dense<0.000000e+00> : vector<16x96xf32>
    %555 = tpu.matmul %545, %554, %cst_103 {dimension_numbers = #tpu.dot_dimension_numbers<[1], [0], [0], [1], [0, 0, 1, 1], [], []>} : vector<16x64xf32>, vector<64x96xf32>, vector<16x96xf32> -> vector<16x96xf32>
    %c1_104 = arith.constant 1 : index
    %c1_105 = arith.constant 1 : index
    %c0_106 = arith.constant 0 : index
    %c0_107 = arith.constant 0 : index
    %556 = vector.load %arg5[%c1_104, %c1_105, %c0_106, %c0_107] : memref<4x2x1x96xf32, #tpu.memory_space<vmem>>, vector<1x1x1x96xf32>
    %557 = vector.shape_cast %556 : vector<1x1x1x96xf32> to vector<1x96xf32>
    %558 = vector.broadcast %557 : vector<1x96xf32> to vector<16x96xf32>
    %559 = arith.addf %555, %558 : vector<16x96xf32>
    %c1_108 = arith.constant 1 : index
    %c0_109 = arith.constant 0 : index
    %c0_110 = arith.constant 0 : index
    %c0_111 = arith.constant 0 : index
    %560 = vector.load %arg6[%c1_108, %c0_109, %c0_110, %c0_111] : memref<4x2x1x32xf32, #tpu.memory_space<vmem>>, vector<1x1x1x32xf32>
    %561 = vector.shape_cast %560 : vector<1x1x1x32xf32> to vector<1x32xf32>
    %c1_112 = arith.constant 1 : index
    %c1_113 = arith.constant 1 : index
    %c0_114 = arith.constant 0 : index
    %c0_115 = arith.constant 0 : index
    %562 = vector.load %arg6[%c1_112, %c1_113, %c0_114, %c0_115] : memref<4x2x1x32xf32, #tpu.memory_space<vmem>>, vector<1x1x1x32xf32>
    %563 = vector.shape_cast %562 : vector<1x1x1x32xf32> to vector<1x32xf32>
    %c1_116 = arith.constant 1 : index
    %c0_117 = arith.constant 0 : index
    %c0_118 = arith.constant 0 : index
    %564 = vector.load %arg4[%c1_116, %c0_117, %c0_118] : memref<4x64x192xf32, #tpu.memory_space<vmem>>, vector<1x64x192xf32>
    %565 = vector.shape_cast %564 : vector<1x64x192xf32> to vector<64x192xf32>
    %cst_119 = arith.constant 0.000000e+00 : f32
    %566 = vector.broadcast %cst_119 : f32 to vector<2x64xf32>
    %cst_120 = arith.constant dense<0.000000e+00> : vector<2x192xf32>
    %567 = tpu.matmul %566, %565, %cst_120 {dimension_numbers = #tpu.dot_dimension_numbers<[1], [0], [0], [1], [0, 0, 1, 1], [], []>} : vector<2x64xf32>, vector<64x192xf32>, vector<2x192xf32> -> vector<2x192xf32>
    %568 = vector.extract_strided_slice %552 {offsets = [0, 0], sizes = [2, 96], strides = [1, 1]} : vector<16x96xf32> to vector<2x96xf32>
    %569 = vector.extract_strided_slice %567 {offsets = [0, 0], sizes = [2, 96], strides = [1, 1]} : vector<2x192xf32> to vector<2x96xf32>
    %570 = vector.extract_strided_slice %566 {offsets = [0, 0], sizes = [2, 32], strides = [1, 1]} : vector<2x64xf32> to vector<2x32xf32>
    %571 = vector.extract_strided_slice %0 {offsets = [0, 0], sizes = [2, 1], strides = [1, 1]} : vector<16x1xf32> to vector<2x1xf32>
    %572 = vector.extract_strided_slice %2 {offsets = [0, 0], sizes = [2, 1], strides = [1, 1]} : vector<16x1xf32> to vector<2x1xf32>
    %573 = vector.extract_strided_slice %568 {offsets = [0, 0], sizes = [2, 64], strides = [1, 1]} : vector<2x96xf32> to vector<2x64xf32>
    %574 = vector.extract_strided_slice %569 {offsets = [0, 0], sizes = [2, 64], strides = [1, 1]} : vector<2x96xf32> to vector<2x64xf32>
    %575 = arith.addf %573, %574 : vector<2x64xf32>
    %576 = arith.negf %575 : vector<2x64xf32>
    %577 = math.exp %576 : vector<2x64xf32>
    %cst_121 = arith.constant 1.000000e+00 : f32
    %578 = vector.broadcast %cst_121 : f32 to vector<2x64xf32>
    %579 = arith.addf %578, %577 : vector<2x64xf32>
    %580 = arith.divf %578, %579 : vector<2x64xf32>
    %581 = vector.extract_strided_slice %580 {offsets = [0, 0], sizes = [2, 32], strides = [1, 1]} : vector<2x64xf32> to vector<2x32xf32>
    %582 = vector.extract_strided_slice %580 {offsets = [0, 32], sizes = [2, 32], strides = [1, 1]} : vector<2x64xf32> to vector<2x32xf32>
    %583 = vector.extract_strided_slice %568 {offsets = [0, 64], sizes = [2, 32], strides = [1, 1]} : vector<2x96xf32> to vector<2x32xf32>
    %584 = vector.extract_strided_slice %569 {offsets = [0, 64], sizes = [2, 32], strides = [1, 1]} : vector<2x96xf32> to vector<2x32xf32>
    %585 = vector.broadcast %561 : vector<1x32xf32> to vector<2x32xf32>
    %586 = arith.addf %584, %585 : vector<2x32xf32>
    %587 = arith.mulf %581, %586 : vector<2x32xf32>
    %588 = arith.addf %583, %587 : vector<2x32xf32>
    %589 = math.tanh %588 : vector<2x32xf32>
    %590 = arith.subf %570, %589 : vector<2x32xf32>
    %591 = arith.mulf %582, %590 : vector<2x32xf32>
    %592 = arith.addf %589, %591 : vector<2x32xf32>
    %593 = vector.broadcast %571 : vector<2x1xf32> to vector<2x32xf32>
    %594 = arith.mulf %593, %592 : vector<2x32xf32>
    %595 = vector.broadcast %572 : vector<2x1xf32> to vector<2x32xf32>
    %596 = arith.mulf %595, %570 : vector<2x32xf32>
    %597 = arith.addf %594, %596 : vector<2x32xf32>
    %598 = vector.extract_strided_slice %559 {offsets = [14, 0], sizes = [2, 96], strides = [1, 1]} : vector<16x96xf32> to vector<2x96xf32>
    %599 = vector.extract_strided_slice %567 {offsets = [0, 96], sizes = [2, 96], strides = [1, 1]} : vector<2x192xf32> to vector<2x96xf32>
    %600 = vector.extract_strided_slice %566 {offsets = [0, 32], sizes = [2, 32], strides = [1, 1]} : vector<2x64xf32> to vector<2x32xf32>
    %601 = vector.extract_strided_slice %0 {offsets = [14, 0], sizes = [2, 1], strides = [1, 1]} : vector<16x1xf32> to vector<2x1xf32>
    %602 = vector.extract_strided_slice %2 {offsets = [14, 0], sizes = [2, 1], strides = [1, 1]} : vector<16x1xf32> to vector<2x1xf32>
    %603 = vector.extract_strided_slice %598 {offsets = [0, 0], sizes = [2, 64], strides = [1, 1]} : vector<2x96xf32> to vector<2x64xf32>
    %604 = vector.extract_strided_slice %599 {offsets = [0, 0], sizes = [2, 64], strides = [1, 1]} : vector<2x96xf32> to vector<2x64xf32>
    %605 = arith.addf %603, %604 : vector<2x64xf32>
    %606 = arith.negf %605 : vector<2x64xf32>
    %607 = math.exp %606 : vector<2x64xf32>
    %cst_122 = arith.constant 1.000000e+00 : f32
    %608 = vector.broadcast %cst_122 : f32 to vector<2x64xf32>
    %609 = arith.addf %608, %607 : vector<2x64xf32>
    %610 = arith.divf %608, %609 : vector<2x64xf32>
    %611 = vector.extract_strided_slice %610 {offsets = [0, 0], sizes = [2, 32], strides = [1, 1]} : vector<2x64xf32> to vector<2x32xf32>
    %612 = vector.extract_strided_slice %610 {offsets = [0, 32], sizes = [2, 32], strides = [1, 1]} : vector<2x64xf32> to vector<2x32xf32>
    %613 = vector.extract_strided_slice %598 {offsets = [0, 64], sizes = [2, 32], strides = [1, 1]} : vector<2x96xf32> to vector<2x32xf32>
    %614 = vector.extract_strided_slice %599 {offsets = [0, 64], sizes = [2, 32], strides = [1, 1]} : vector<2x96xf32> to vector<2x32xf32>
    %615 = vector.broadcast %563 : vector<1x32xf32> to vector<2x32xf32>
    %616 = arith.addf %614, %615 : vector<2x32xf32>
    %617 = arith.mulf %611, %616 : vector<2x32xf32>
    %618 = arith.addf %613, %617 : vector<2x32xf32>
    %619 = math.tanh %618 : vector<2x32xf32>
    %620 = arith.subf %600, %619 : vector<2x32xf32>
    %621 = arith.mulf %612, %620 : vector<2x32xf32>
    %622 = arith.addf %619, %621 : vector<2x32xf32>
    %623 = vector.broadcast %601 : vector<2x1xf32> to vector<2x32xf32>
    %624 = arith.mulf %623, %622 : vector<2x32xf32>
    %625 = vector.broadcast %602 : vector<2x1xf32> to vector<2x32xf32>
    %626 = arith.mulf %625, %600 : vector<2x32xf32>
    %627 = arith.addf %624, %626 : vector<2x32xf32>
    %628 = tpu.concatenate %597, %627 in 1 : vector<2x32xf32>, vector<2x32xf32> -> vector<2x64xf32>
    %c0_123 = arith.constant 0 : index
    %c0_124 = arith.constant 0 : index
    %629 = vector.load %arg9[%c0_123, %c0_124] : memref<16x64xf32, #tpu.memory_space<vmem>>, vector<2x32xf32>
    tpu.vector_store %arg9[%c0_123, %c0_124], %594 {strides = array<i32>} : memref<16x64xf32, #tpu.memory_space<vmem>>, vector<2x32xf32>,
    %c14_125 = arith.constant 14 : index
    %c32_126 = arith.constant 32 : index
    %630 = vector.load %arg9[%c14_125, %c32_126] : memref<16x64xf32, #tpu.memory_space<vmem>>, vector<2x32xf32>
    tpu.vector_store %arg9[%c14_125, %c32_126], %624 {strides = array<i32>} : memref<16x64xf32, #tpu.memory_space<vmem>>, vector<2x32xf32>,
    %cst_127 = arith.constant dense<0.000000e+00> : vector<2x192xf32>
    %631 = tpu.matmul %628, %565, %cst_127 {dimension_numbers = #tpu.dot_dimension_numbers<[1], [0], [0], [1], [0, 0, 1, 1], [], []>} : vector<2x64xf32>, vector<64x192xf32>, vector<2x192xf32> -> vector<2x192xf32>
    %632 = vector.extract_strided_slice %552 {offsets = [2, 0], sizes = [2, 96], strides = [1, 1]} : vector<16x96xf32> to vector<2x96xf32>
    %633 = vector.extract_strided_slice %631 {offsets = [0, 0], sizes = [2, 96], strides = [1, 1]} : vector<2x192xf32> to vector<2x96xf32>
    %634 = vector.extract_strided_slice %628 {offsets = [0, 0], sizes = [2, 32], strides = [1, 1]} : vector<2x64xf32> to vector<2x32xf32>
    %635 = vector.extract_strided_slice %0 {offsets = [2, 0], sizes = [2, 1], strides = [1, 1]} : vector<16x1xf32> to vector<2x1xf32>
    %636 = vector.extract_strided_slice %2 {offsets = [2, 0], sizes = [2, 1], strides = [1, 1]} : vector<16x1xf32> to vector<2x1xf32>
    %637 = vector.extract_strided_slice %632 {offsets = [0, 0], sizes = [2, 64], strides = [1, 1]} : vector<2x96xf32> to vector<2x64xf32>
    %638 = vector.extract_strided_slice %633 {offsets = [0, 0], sizes = [2, 64], strides = [1, 1]} : vector<2x96xf32> to vector<2x64xf32>
    %639 = arith.addf %637, %638 : vector<2x64xf32>
    %640 = arith.negf %639 : vector<2x64xf32>
    %641 = math.exp %640 : vector<2x64xf32>
    %cst_128 = arith.constant 1.000000e+00 : f32
    %642 = vector.broadcast %cst_128 : f32 to vector<2x64xf32>
    %643 = arith.addf %642, %641 : vector<2x64xf32>
    %644 = arith.divf %642, %643 : vector<2x64xf32>
    %645 = vector.extract_strided_slice %644 {offsets = [0, 0], sizes = [2, 32], strides = [1, 1]} : vector<2x64xf32> to vector<2x32xf32>
    %646 = vector.extract_strided_slice %644 {offsets = [0, 32], sizes = [2, 32], strides = [1, 1]} : vector<2x64xf32> to vector<2x32xf32>
    %647 = vector.extract_strided_slice %632 {offsets = [0, 64], sizes = [2, 32], strides = [1, 1]} : vector<2x96xf32> to vector<2x32xf32>
    %648 = vector.extract_strided_slice %633 {offsets = [0, 64], sizes = [2, 32], strides = [1, 1]} : vector<2x96xf32> to vector<2x32xf32>
    %649 = vector.broadcast %561 : vector<1x32xf32> to vector<2x32xf32>
    %650 = arith.addf %648, %649 : vector<2x32xf32>
    %651 = arith.mulf %645, %650 : vector<2x32xf32>
    %652 = arith.addf %647, %651 : vector<2x32xf32>
    %653 = math.tanh %652 : vector<2x32xf32>
    %654 = arith.subf %634, %653 : vector<2x32xf32>
    %655 = arith.mulf %646, %654 : vector<2x32xf32>
    %656 = arith.addf %653, %655 : vector<2x32xf32>
    %657 = vector.broadcast %635 : vector<2x1xf32> to vector<2x32xf32>
    %658 = arith.mulf %657, %656 : vector<2x32xf32>
    %659 = vector.broadcast %636 : vector<2x1xf32> to vector<2x32xf32>
    %660 = arith.mulf %659, %634 : vector<2x32xf32>
    %661 = arith.addf %658, %660 : vector<2x32xf32>
    %662 = vector.extract_strided_slice %559 {offsets = [12, 0], sizes = [2, 96], strides = [1, 1]} : vector<16x96xf32> to vector<2x96xf32>
    %663 = vector.extract_strided_slice %631 {offsets = [0, 96], sizes = [2, 96], strides = [1, 1]} : vector<2x192xf32> to vector<2x96xf32>
    %664 = vector.extract_strided_slice %628 {offsets = [0, 32], sizes = [2, 32], strides = [1, 1]} : vector<2x64xf32> to vector<2x32xf32>
    %665 = vector.extract_strided_slice %0 {offsets = [12, 0], sizes = [2, 1], strides = [1, 1]} : vector<16x1xf32> to vector<2x1xf32>
    %666 = vector.extract_strided_slice %2 {offsets = [12, 0], sizes = [2, 1], strides = [1, 1]} : vector<16x1xf32> to vector<2x1xf32>
    %667 = vector.extract_strided_slice %662 {offsets = [0, 0], sizes = [2, 64], strides = [1, 1]} : vector<2x96xf32> to vector<2x64xf32>
    %668 = vector.extract_strided_slice %663 {offsets = [0, 0], sizes = [2, 64], strides = [1, 1]} : vector<2x96xf32> to vector<2x64xf32>
    %669 = arith.addf %667, %668 : vector<2x64xf32>
    %670 = arith.negf %669 : vector<2x64xf32>
    %671 = math.exp %670 : vector<2x64xf32>
    %cst_129 = arith.constant 1.000000e+00 : f32
    %672 = vector.broadcast %cst_129 : f32 to vector<2x64xf32>
    %673 = arith.addf %672, %671 : vector<2x64xf32>
    %674 = arith.divf %672, %673 : vector<2x64xf32>
    %675 = vector.extract_strided_slice %674 {offsets = [0, 0], sizes = [2, 32], strides = [1, 1]} : vector<2x64xf32> to vector<2x32xf32>
    %676 = vector.extract_strided_slice %674 {offsets = [0, 32], sizes = [2, 32], strides = [1, 1]} : vector<2x64xf32> to vector<2x32xf32>
    %677 = vector.extract_strided_slice %662 {offsets = [0, 64], sizes = [2, 32], strides = [1, 1]} : vector<2x96xf32> to vector<2x32xf32>
    %678 = vector.extract_strided_slice %663 {offsets = [0, 64], sizes = [2, 32], strides = [1, 1]} : vector<2x96xf32> to vector<2x32xf32>
    %679 = vector.broadcast %563 : vector<1x32xf32> to vector<2x32xf32>
    %680 = arith.addf %678, %679 : vector<2x32xf32>
    %681 = arith.mulf %675, %680 : vector<2x32xf32>
    %682 = arith.addf %677, %681 : vector<2x32xf32>
    %683 = math.tanh %682 : vector<2x32xf32>
    %684 = arith.subf %664, %683 : vector<2x32xf32>
    %685 = arith.mulf %676, %684 : vector<2x32xf32>
    %686 = arith.addf %683, %685 : vector<2x32xf32>
    %687 = vector.broadcast %665 : vector<2x1xf32> to vector<2x32xf32>
    %688 = arith.mulf %687, %686 : vector<2x32xf32>
    %689 = vector.broadcast %666 : vector<2x1xf32> to vector<2x32xf32>
    %690 = arith.mulf %689, %664 : vector<2x32xf32>
    %691 = arith.addf %688, %690 : vector<2x32xf32>
    %692 = tpu.concatenate %661, %691 in 1 : vector<2x32xf32>, vector<2x32xf32> -> vector<2x64xf32>
    %c2_130 = arith.constant 2 : index
    %c0_131 = arith.constant 0 : index
    %693 = vector.load %arg9[%c2_130, %c0_131] : memref<16x64xf32, #tpu.memory_space<vmem>>, vector<2x32xf32>
    tpu.vector_store %arg9[%c2_130, %c0_131], %658 {strides = array<i32>} : memref<16x64xf32, #tpu.memory_space<vmem>>, vector<2x32xf32>,
    %c12_132 = arith.constant 12 : index
    %c32_133 = arith.constant 32 : index
    %694 = vector.load %arg9[%c12_132, %c32_133] : memref<16x64xf32, #tpu.memory_space<vmem>>, vector<2x32xf32>
    tpu.vector_store %arg9[%c12_132, %c32_133], %688 {strides = array<i32>} : memref<16x64xf32, #tpu.memory_space<vmem>>, vector<2x32xf32>,
    %cst_134 = arith.constant dense<0.000000e+00> : vector<2x192xf32>
    %695 = tpu.matmul %692, %565, %cst_134 {dimension_numbers = #tpu.dot_dimension_numbers<[1], [0], [0], [1], [0, 0, 1, 1], [], []>} : vector<2x64xf32>, vector<64x192xf32>, vector<2x192xf32> -> vector<2x192xf32>
    %696 = vector.extract_strided_slice %552 {offsets = [4, 0], sizes = [2, 96], strides = [1, 1]} : vector<16x96xf32> to vector<2x96xf32>
    %697 = vector.extract_strided_slice %695 {offsets = [0, 0], sizes = [2, 96], strides = [1, 1]} : vector<2x192xf32> to vector<2x96xf32>
    %698 = vector.extract_strided_slice %692 {offsets = [0, 0], sizes = [2, 32], strides = [1, 1]} : vector<2x64xf32> to vector<2x32xf32>
    %699 = vector.extract_strided_slice %0 {offsets = [4, 0], sizes = [2, 1], strides = [1, 1]} : vector<16x1xf32> to vector<2x1xf32>
    %700 = vector.extract_strided_slice %2 {offsets = [4, 0], sizes = [2, 1], strides = [1, 1]} : vector<16x1xf32> to vector<2x1xf32>
    %701 = vector.extract_strided_slice %696 {offsets = [0, 0], sizes = [2, 64], strides = [1, 1]} : vector<2x96xf32> to vector<2x64xf32>
    %702 = vector.extract_strided_slice %697 {offsets = [0, 0], sizes = [2, 64], strides = [1, 1]} : vector<2x96xf32> to vector<2x64xf32>
    %703 = arith.addf %701, %702 : vector<2x64xf32>
    %704 = arith.negf %703 : vector<2x64xf32>
    %705 = math.exp %704 : vector<2x64xf32>
    %cst_135 = arith.constant 1.000000e+00 : f32
    %706 = vector.broadcast %cst_135 : f32 to vector<2x64xf32>
    %707 = arith.addf %706, %705 : vector<2x64xf32>
    %708 = arith.divf %706, %707 : vector<2x64xf32>
    %709 = vector.extract_strided_slice %708 {offsets = [0, 0], sizes = [2, 32], strides = [1, 1]} : vector<2x64xf32> to vector<2x32xf32>
    %710 = vector.extract_strided_slice %708 {offsets = [0, 32], sizes = [2, 32], strides = [1, 1]} : vector<2x64xf32> to vector<2x32xf32>
    %711 = vector.extract_strided_slice %696 {offsets = [0, 64], sizes = [2, 32], strides = [1, 1]} : vector<2x96xf32> to vector<2x32xf32>
    %712 = vector.extract_strided_slice %697 {offsets = [0, 64], sizes = [2, 32], strides = [1, 1]} : vector<2x96xf32> to vector<2x32xf32>
    %713 = vector.broadcast %561 : vector<1x32xf32> to vector<2x32xf32>
    %714 = arith.addf %712, %713 : vector<2x32xf32>
    %715 = arith.mulf %709, %714 : vector<2x32xf32>
    %716 = arith.addf %711, %715 : vector<2x32xf32>
    %717 = math.tanh %716 : vector<2x32xf32>
    %718 = arith.subf %698, %717 : vector<2x32xf32>
    %719 = arith.mulf %710, %718 : vector<2x32xf32>
    %720 = arith.addf %717, %719 : vector<2x32xf32>
    %721 = vector.broadcast %699 : vector<2x1xf32> to vector<2x32xf32>
    %722 = arith.mulf %721, %720 : vector<2x32xf32>
    %723 = vector.broadcast %700 : vector<2x1xf32> to vector<2x32xf32>
    %724 = arith.mulf %723, %698 : vector<2x32xf32>
    %725 = arith.addf %722, %724 : vector<2x32xf32>
    %726 = vector.extract_strided_slice %559 {offsets = [10, 0], sizes = [2, 96], strides = [1, 1]} : vector<16x96xf32> to vector<2x96xf32>
    %727 = vector.extract_strided_slice %695 {offsets = [0, 96], sizes = [2, 96], strides = [1, 1]} : vector<2x192xf32> to vector<2x96xf32>
    %728 = vector.extract_strided_slice %692 {offsets = [0, 32], sizes = [2, 32], strides = [1, 1]} : vector<2x64xf32> to vector<2x32xf32>
    %729 = vector.extract_strided_slice %0 {offsets = [10, 0], sizes = [2, 1], strides = [1, 1]} : vector<16x1xf32> to vector<2x1xf32>
    %730 = vector.extract_strided_slice %2 {offsets = [10, 0], sizes = [2, 1], strides = [1, 1]} : vector<16x1xf32> to vector<2x1xf32>
    %731 = vector.extract_strided_slice %726 {offsets = [0, 0], sizes = [2, 64], strides = [1, 1]} : vector<2x96xf32> to vector<2x64xf32>
    %732 = vector.extract_strided_slice %727 {offsets = [0, 0], sizes = [2, 64], strides = [1, 1]} : vector<2x96xf32> to vector<2x64xf32>
    %733 = arith.addf %731, %732 : vector<2x64xf32>
    %734 = arith.negf %733 : vector<2x64xf32>
    %735 = math.exp %734 : vector<2x64xf32>
    %cst_136 = arith.constant 1.000000e+00 : f32
    %736 = vector.broadcast %cst_136 : f32 to vector<2x64xf32>
    %737 = arith.addf %736, %735 : vector<2x64xf32>
    %738 = arith.divf %736, %737 : vector<2x64xf32>
    %739 = vector.extract_strided_slice %738 {offsets = [0, 0], sizes = [2, 32], strides = [1, 1]} : vector<2x64xf32> to vector<2x32xf32>
    %740 = vector.extract_strided_slice %738 {offsets = [0, 32], sizes = [2, 32], strides = [1, 1]} : vector<2x64xf32> to vector<2x32xf32>
    %741 = vector.extract_strided_slice %726 {offsets = [0, 64], sizes = [2, 32], strides = [1, 1]} : vector<2x96xf32> to vector<2x32xf32>
    %742 = vector.extract_strided_slice %727 {offsets = [0, 64], sizes = [2, 32], strides = [1, 1]} : vector<2x96xf32> to vector<2x32xf32>
    %743 = vector.broadcast %563 : vector<1x32xf32> to vector<2x32xf32>
    %744 = arith.addf %742, %743 : vector<2x32xf32>
    %745 = arith.mulf %739, %744 : vector<2x32xf32>
    %746 = arith.addf %741, %745 : vector<2x32xf32>
    %747 = math.tanh %746 : vector<2x32xf32>
    %748 = arith.subf %728, %747 : vector<2x32xf32>
    %749 = arith.mulf %740, %748 : vector<2x32xf32>
    %750 = arith.addf %747, %749 : vector<2x32xf32>
    %751 = vector.broadcast %729 : vector<2x1xf32> to vector<2x32xf32>
    %752 = arith.mulf %751, %750 : vector<2x32xf32>
    %753 = vector.broadcast %730 : vector<2x1xf32> to vector<2x32xf32>
    %754 = arith.mulf %753, %728 : vector<2x32xf32>
    %755 = arith.addf %752, %754 : vector<2x32xf32>
    %756 = tpu.concatenate %725, %755 in 1 : vector<2x32xf32>, vector<2x32xf32> -> vector<2x64xf32>
    %c4_137 = arith.constant 4 : index
    %c0_138 = arith.constant 0 : index
    %757 = vector.load %arg9[%c4_137, %c0_138] : memref<16x64xf32, #tpu.memory_space<vmem>>, vector<2x32xf32>
    tpu.vector_store %arg9[%c4_137, %c0_138], %722 {strides = array<i32>} : memref<16x64xf32, #tpu.memory_space<vmem>>, vector<2x32xf32>,
    %c10_139 = arith.constant 10 : index
    %c32_140 = arith.constant 32 : index
    %758 = vector.load %arg9[%c10_139, %c32_140] : memref<16x64xf32, #tpu.memory_space<vmem>>, vector<2x32xf32>
    tpu.vector_store %arg9[%c10_139, %c32_140], %752 {strides = array<i32>} : memref<16x64xf32, #tpu.memory_space<vmem>>, vector<2x32xf32>,
    %cst_141 = arith.constant dense<0.000000e+00> : vector<2x192xf32>
    %759 = tpu.matmul %756, %565, %cst_141 {dimension_numbers = #tpu.dot_dimension_numbers<[1], [0], [0], [1], [0, 0, 1, 1], [], []>} : vector<2x64xf32>, vector<64x192xf32>, vector<2x192xf32> -> vector<2x192xf32>
    %760 = vector.extract_strided_slice %552 {offsets = [6, 0], sizes = [2, 96], strides = [1, 1]} : vector<16x96xf32> to vector<2x96xf32>
    %761 = vector.extract_strided_slice %759 {offsets = [0, 0], sizes = [2, 96], strides = [1, 1]} : vector<2x192xf32> to vector<2x96xf32>
    %762 = vector.extract_strided_slice %756 {offsets = [0, 0], sizes = [2, 32], strides = [1, 1]} : vector<2x64xf32> to vector<2x32xf32>
    %763 = vector.extract_strided_slice %0 {offsets = [6, 0], sizes = [2, 1], strides = [1, 1]} : vector<16x1xf32> to vector<2x1xf32>
    %764 = vector.extract_strided_slice %2 {offsets = [6, 0], sizes = [2, 1], strides = [1, 1]} : vector<16x1xf32> to vector<2x1xf32>
    %765 = vector.extract_strided_slice %760 {offsets = [0, 0], sizes = [2, 64], strides = [1, 1]} : vector<2x96xf32> to vector<2x64xf32>
    %766 = vector.extract_strided_slice %761 {offsets = [0, 0], sizes = [2, 64], strides = [1, 1]} : vector<2x96xf32> to vector<2x64xf32>
    %767 = arith.addf %765, %766 : vector<2x64xf32>
    %768 = arith.negf %767 : vector<2x64xf32>
    %769 = math.exp %768 : vector<2x64xf32>
    %cst_142 = arith.constant 1.000000e+00 : f32
    %770 = vector.broadcast %cst_142 : f32 to vector<2x64xf32>
    %771 = arith.addf %770, %769 : vector<2x64xf32>
    %772 = arith.divf %770, %771 : vector<2x64xf32>
    %773 = vector.extract_strided_slice %772 {offsets = [0, 0], sizes = [2, 32], strides = [1, 1]} : vector<2x64xf32> to vector<2x32xf32>
    %774 = vector.extract_strided_slice %772 {offsets = [0, 32], sizes = [2, 32], strides = [1, 1]} : vector<2x64xf32> to vector<2x32xf32>
    %775 = vector.extract_strided_slice %760 {offsets = [0, 64], sizes = [2, 32], strides = [1, 1]} : vector<2x96xf32> to vector<2x32xf32>
    %776 = vector.extract_strided_slice %761 {offsets = [0, 64], sizes = [2, 32], strides = [1, 1]} : vector<2x96xf32> to vector<2x32xf32>
    %777 = vector.broadcast %561 : vector<1x32xf32> to vector<2x32xf32>
    %778 = arith.addf %776, %777 : vector<2x32xf32>
    %779 = arith.mulf %773, %778 : vector<2x32xf32>
    %780 = arith.addf %775, %779 : vector<2x32xf32>
    %781 = math.tanh %780 : vector<2x32xf32>
    %782 = arith.subf %762, %781 : vector<2x32xf32>
    %783 = arith.mulf %774, %782 : vector<2x32xf32>
    %784 = arith.addf %781, %783 : vector<2x32xf32>
    %785 = vector.broadcast %763 : vector<2x1xf32> to vector<2x32xf32>
    %786 = arith.mulf %785, %784 : vector<2x32xf32>
    %787 = vector.broadcast %764 : vector<2x1xf32> to vector<2x32xf32>
    %788 = arith.mulf %787, %762 : vector<2x32xf32>
    %789 = arith.addf %786, %788 : vector<2x32xf32>
    %790 = vector.extract_strided_slice %559 {offsets = [8, 0], sizes = [2, 96], strides = [1, 1]} : vector<16x96xf32> to vector<2x96xf32>
    %791 = vector.extract_strided_slice %759 {offsets = [0, 96], sizes = [2, 96], strides = [1, 1]} : vector<2x192xf32> to vector<2x96xf32>
    %792 = vector.extract_strided_slice %756 {offsets = [0, 32], sizes = [2, 32], strides = [1, 1]} : vector<2x64xf32> to vector<2x32xf32>
    %793 = vector.extract_strided_slice %0 {offsets = [8, 0], sizes = [2, 1], strides = [1, 1]} : vector<16x1xf32> to vector<2x1xf32>
    %794 = vector.extract_strided_slice %2 {offsets = [8, 0], sizes = [2, 1], strides = [1, 1]} : vector<16x1xf32> to vector<2x1xf32>
    %795 = vector.extract_strided_slice %790 {offsets = [0, 0], sizes = [2, 64], strides = [1, 1]} : vector<2x96xf32> to vector<2x64xf32>
    %796 = vector.extract_strided_slice %791 {offsets = [0, 0], sizes = [2, 64], strides = [1, 1]} : vector<2x96xf32> to vector<2x64xf32>
    %797 = arith.addf %795, %796 : vector<2x64xf32>
    %798 = arith.negf %797 : vector<2x64xf32>
    %799 = math.exp %798 : vector<2x64xf32>
    %cst_143 = arith.constant 1.000000e+00 : f32
    %800 = vector.broadcast %cst_143 : f32 to vector<2x64xf32>
    %801 = arith.addf %800, %799 : vector<2x64xf32>
    %802 = arith.divf %800, %801 : vector<2x64xf32>
    %803 = vector.extract_strided_slice %802 {offsets = [0, 0], sizes = [2, 32], strides = [1, 1]} : vector<2x64xf32> to vector<2x32xf32>
    %804 = vector.extract_strided_slice %802 {offsets = [0, 32], sizes = [2, 32], strides = [1, 1]} : vector<2x64xf32> to vector<2x32xf32>
    %805 = vector.extract_strided_slice %790 {offsets = [0, 64], sizes = [2, 32], strides = [1, 1]} : vector<2x96xf32> to vector<2x32xf32>
    %806 = vector.extract_strided_slice %791 {offsets = [0, 64], sizes = [2, 32], strides = [1, 1]} : vector<2x96xf32> to vector<2x32xf32>
    %807 = vector.broadcast %563 : vector<1x32xf32> to vector<2x32xf32>
    %808 = arith.addf %806, %807 : vector<2x32xf32>
    %809 = arith.mulf %803, %808 : vector<2x32xf32>
    %810 = arith.addf %805, %809 : vector<2x32xf32>
    %811 = math.tanh %810 : vector<2x32xf32>
    %812 = arith.subf %792, %811 : vector<2x32xf32>
    %813 = arith.mulf %804, %812 : vector<2x32xf32>
    %814 = arith.addf %811, %813 : vector<2x32xf32>
    %815 = vector.broadcast %793 : vector<2x1xf32> to vector<2x32xf32>
    %816 = arith.mulf %815, %814 : vector<2x32xf32>
    %817 = vector.broadcast %794 : vector<2x1xf32> to vector<2x32xf32>
    %818 = arith.mulf %817, %792 : vector<2x32xf32>
    %819 = arith.addf %816, %818 : vector<2x32xf32>
    %820 = tpu.concatenate %789, %819 in 1 : vector<2x32xf32>, vector<2x32xf32> -> vector<2x64xf32>
    %c6_144 = arith.constant 6 : index
    %c0_145 = arith.constant 0 : index
    %821 = vector.load %arg9[%c6_144, %c0_145] : memref<16x64xf32, #tpu.memory_space<vmem>>, vector<2x32xf32>
    tpu.vector_store %arg9[%c6_144, %c0_145], %786 {strides = array<i32>} : memref<16x64xf32, #tpu.memory_space<vmem>>, vector<2x32xf32>,
    %c8_146 = arith.constant 8 : index
    %c32_147 = arith.constant 32 : index
    %822 = vector.load %arg9[%c8_146, %c32_147] : memref<16x64xf32, #tpu.memory_space<vmem>>, vector<2x32xf32>
    tpu.vector_store %arg9[%c8_146, %c32_147], %816 {strides = array<i32>} : memref<16x64xf32, #tpu.memory_space<vmem>>, vector<2x32xf32>,
    %cst_148 = arith.constant dense<0.000000e+00> : vector<2x192xf32>
    %823 = tpu.matmul %820, %565, %cst_148 {dimension_numbers = #tpu.dot_dimension_numbers<[1], [0], [0], [1], [0, 0, 1, 1], [], []>} : vector<2x64xf32>, vector<64x192xf32>, vector<2x192xf32> -> vector<2x192xf32>
    %824 = vector.extract_strided_slice %552 {offsets = [8, 0], sizes = [2, 96], strides = [1, 1]} : vector<16x96xf32> to vector<2x96xf32>
    %825 = vector.extract_strided_slice %823 {offsets = [0, 0], sizes = [2, 96], strides = [1, 1]} : vector<2x192xf32> to vector<2x96xf32>
    %826 = vector.extract_strided_slice %820 {offsets = [0, 0], sizes = [2, 32], strides = [1, 1]} : vector<2x64xf32> to vector<2x32xf32>
    %827 = vector.extract_strided_slice %0 {offsets = [8, 0], sizes = [2, 1], strides = [1, 1]} : vector<16x1xf32> to vector<2x1xf32>
    %828 = vector.extract_strided_slice %2 {offsets = [8, 0], sizes = [2, 1], strides = [1, 1]} : vector<16x1xf32> to vector<2x1xf32>
    %829 = vector.extract_strided_slice %824 {offsets = [0, 0], sizes = [2, 64], strides = [1, 1]} : vector<2x96xf32> to vector<2x64xf32>
    %830 = vector.extract_strided_slice %825 {offsets = [0, 0], sizes = [2, 64], strides = [1, 1]} : vector<2x96xf32> to vector<2x64xf32>
    %831 = arith.addf %829, %830 : vector<2x64xf32>
    %832 = arith.negf %831 : vector<2x64xf32>
    %833 = math.exp %832 : vector<2x64xf32>
    %cst_149 = arith.constant 1.000000e+00 : f32
    %834 = vector.broadcast %cst_149 : f32 to vector<2x64xf32>
    %835 = arith.addf %834, %833 : vector<2x64xf32>
    %836 = arith.divf %834, %835 : vector<2x64xf32>
    %837 = vector.extract_strided_slice %836 {offsets = [0, 0], sizes = [2, 32], strides = [1, 1]} : vector<2x64xf32> to vector<2x32xf32>
    %838 = vector.extract_strided_slice %836 {offsets = [0, 32], sizes = [2, 32], strides = [1, 1]} : vector<2x64xf32> to vector<2x32xf32>
    %839 = vector.extract_strided_slice %824 {offsets = [0, 64], sizes = [2, 32], strides = [1, 1]} : vector<2x96xf32> to vector<2x32xf32>
    %840 = vector.extract_strided_slice %825 {offsets = [0, 64], sizes = [2, 32], strides = [1, 1]} : vector<2x96xf32> to vector<2x32xf32>
    %841 = vector.broadcast %561 : vector<1x32xf32> to vector<2x32xf32>
    %842 = arith.addf %840, %841 : vector<2x32xf32>
    %843 = arith.mulf %837, %842 : vector<2x32xf32>
    %844 = arith.addf %839, %843 : vector<2x32xf32>
    %845 = math.tanh %844 : vector<2x32xf32>
    %846 = arith.subf %826, %845 : vector<2x32xf32>
    %847 = arith.mulf %838, %846 : vector<2x32xf32>
    %848 = arith.addf %845, %847 : vector<2x32xf32>
    %849 = vector.broadcast %827 : vector<2x1xf32> to vector<2x32xf32>
    %850 = arith.mulf %849, %848 : vector<2x32xf32>
    %851 = vector.broadcast %828 : vector<2x1xf32> to vector<2x32xf32>
    %852 = arith.mulf %851, %826 : vector<2x32xf32>
    %853 = arith.addf %850, %852 : vector<2x32xf32>
    %854 = vector.extract_strided_slice %559 {offsets = [6, 0], sizes = [2, 96], strides = [1, 1]} : vector<16x96xf32> to vector<2x96xf32>
    %855 = vector.extract_strided_slice %823 {offsets = [0, 96], sizes = [2, 96], strides = [1, 1]} : vector<2x192xf32> to vector<2x96xf32>
    %856 = vector.extract_strided_slice %820 {offsets = [0, 32], sizes = [2, 32], strides = [1, 1]} : vector<2x64xf32> to vector<2x32xf32>
    %857 = vector.extract_strided_slice %0 {offsets = [6, 0], sizes = [2, 1], strides = [1, 1]} : vector<16x1xf32> to vector<2x1xf32>
    %858 = vector.extract_strided_slice %2 {offsets = [6, 0], sizes = [2, 1], strides = [1, 1]} : vector<16x1xf32> to vector<2x1xf32>
    %859 = vector.extract_strided_slice %854 {offsets = [0, 0], sizes = [2, 64], strides = [1, 1]} : vector<2x96xf32> to vector<2x64xf32>
    %860 = vector.extract_strided_slice %855 {offsets = [0, 0], sizes = [2, 64], strides = [1, 1]} : vector<2x96xf32> to vector<2x64xf32>
    %861 = arith.addf %859, %860 : vector<2x64xf32>
    %862 = arith.negf %861 : vector<2x64xf32>
    %863 = math.exp %862 : vector<2x64xf32>
    %cst_150 = arith.constant 1.000000e+00 : f32
    %864 = vector.broadcast %cst_150 : f32 to vector<2x64xf32>
    %865 = arith.addf %864, %863 : vector<2x64xf32>
    %866 = arith.divf %864, %865 : vector<2x64xf32>
    %867 = vector.extract_strided_slice %866 {offsets = [0, 0], sizes = [2, 32], strides = [1, 1]} : vector<2x64xf32> to vector<2x32xf32>
    %868 = vector.extract_strided_slice %866 {offsets = [0, 32], sizes = [2, 32], strides = [1, 1]} : vector<2x64xf32> to vector<2x32xf32>
    %869 = vector.extract_strided_slice %854 {offsets = [0, 64], sizes = [2, 32], strides = [1, 1]} : vector<2x96xf32> to vector<2x32xf32>
    %870 = vector.extract_strided_slice %855 {offsets = [0, 64], sizes = [2, 32], strides = [1, 1]} : vector<2x96xf32> to vector<2x32xf32>
    %871 = vector.broadcast %563 : vector<1x32xf32> to vector<2x32xf32>
    %872 = arith.addf %870, %871 : vector<2x32xf32>
    %873 = arith.mulf %867, %872 : vector<2x32xf32>
    %874 = arith.addf %869, %873 : vector<2x32xf32>
    %875 = math.tanh %874 : vector<2x32xf32>
    %876 = arith.subf %856, %875 : vector<2x32xf32>
    %877 = arith.mulf %868, %876 : vector<2x32xf32>
    %878 = arith.addf %875, %877 : vector<2x32xf32>
    %879 = vector.broadcast %857 : vector<2x1xf32> to vector<2x32xf32>
    %880 = arith.mulf %879, %878 : vector<2x32xf32>
    %881 = vector.broadcast %858 : vector<2x1xf32> to vector<2x32xf32>
    %882 = arith.mulf %881, %856 : vector<2x32xf32>
    %883 = arith.addf %880, %882 : vector<2x32xf32>
    %884 = tpu.concatenate %853, %883 in 1 : vector<2x32xf32>, vector<2x32xf32> -> vector<2x64xf32>
    %c8_151 = arith.constant 8 : index
    %c0_152 = arith.constant 0 : index
    %885 = vector.load %arg9[%c8_151, %c0_152] : memref<16x64xf32, #tpu.memory_space<vmem>>, vector<2x32xf32>
    tpu.vector_store %arg9[%c8_151, %c0_152], %850 {strides = array<i32>} : memref<16x64xf32, #tpu.memory_space<vmem>>, vector<2x32xf32>,
    %c6_153 = arith.constant 6 : index
    %c32_154 = arith.constant 32 : index
    %886 = vector.load %arg9[%c6_153, %c32_154] : memref<16x64xf32, #tpu.memory_space<vmem>>, vector<2x32xf32>
    tpu.vector_store %arg9[%c6_153, %c32_154], %880 {strides = array<i32>} : memref<16x64xf32, #tpu.memory_space<vmem>>, vector<2x32xf32>,
    %cst_155 = arith.constant dense<0.000000e+00> : vector<2x192xf32>
    %887 = tpu.matmul %884, %565, %cst_155 {dimension_numbers = #tpu.dot_dimension_numbers<[1], [0], [0], [1], [0, 0, 1, 1], [], []>} : vector<2x64xf32>, vector<64x192xf32>, vector<2x192xf32> -> vector<2x192xf32>
    %888 = vector.extract_strided_slice %552 {offsets = [10, 0], sizes = [2, 96], strides = [1, 1]} : vector<16x96xf32> to vector<2x96xf32>
    %889 = vector.extract_strided_slice %887 {offsets = [0, 0], sizes = [2, 96], strides = [1, 1]} : vector<2x192xf32> to vector<2x96xf32>
    %890 = vector.extract_strided_slice %884 {offsets = [0, 0], sizes = [2, 32], strides = [1, 1]} : vector<2x64xf32> to vector<2x32xf32>
    %891 = vector.extract_strided_slice %0 {offsets = [10, 0], sizes = [2, 1], strides = [1, 1]} : vector<16x1xf32> to vector<2x1xf32>
    %892 = vector.extract_strided_slice %2 {offsets = [10, 0], sizes = [2, 1], strides = [1, 1]} : vector<16x1xf32> to vector<2x1xf32>
    %893 = vector.extract_strided_slice %888 {offsets = [0, 0], sizes = [2, 64], strides = [1, 1]} : vector<2x96xf32> to vector<2x64xf32>
    %894 = vector.extract_strided_slice %889 {offsets = [0, 0], sizes = [2, 64], strides = [1, 1]} : vector<2x96xf32> to vector<2x64xf32>
    %895 = arith.addf %893, %894 : vector<2x64xf32>
    %896 = arith.negf %895 : vector<2x64xf32>
    %897 = math.exp %896 : vector<2x64xf32>
    %cst_156 = arith.constant 1.000000e+00 : f32
    %898 = vector.broadcast %cst_156 : f32 to vector<2x64xf32>
    %899 = arith.addf %898, %897 : vector<2x64xf32>
    %900 = arith.divf %898, %899 : vector<2x64xf32>
    %901 = vector.extract_strided_slice %900 {offsets = [0, 0], sizes = [2, 32], strides = [1, 1]} : vector<2x64xf32> to vector<2x32xf32>
    %902 = vector.extract_strided_slice %900 {offsets = [0, 32], sizes = [2, 32], strides = [1, 1]} : vector<2x64xf32> to vector<2x32xf32>
    %903 = vector.extract_strided_slice %888 {offsets = [0, 64], sizes = [2, 32], strides = [1, 1]} : vector<2x96xf32> to vector<2x32xf32>
    %904 = vector.extract_strided_slice %889 {offsets = [0, 64], sizes = [2, 32], strides = [1, 1]} : vector<2x96xf32> to vector<2x32xf32>
    %905 = vector.broadcast %561 : vector<1x32xf32> to vector<2x32xf32>
    %906 = arith.addf %904, %905 : vector<2x32xf32>
    %907 = arith.mulf %901, %906 : vector<2x32xf32>
    %908 = arith.addf %903, %907 : vector<2x32xf32>
    %909 = math.tanh %908 : vector<2x32xf32>
    %910 = arith.subf %890, %909 : vector<2x32xf32>
    %911 = arith.mulf %902, %910 : vector<2x32xf32>
    %912 = arith.addf %909, %911 : vector<2x32xf32>
    %913 = vector.broadcast %891 : vector<2x1xf32> to vector<2x32xf32>
    %914 = arith.mulf %913, %912 : vector<2x32xf32>
    %915 = vector.broadcast %892 : vector<2x1xf32> to vector<2x32xf32>
    %916 = arith.mulf %915, %890 : vector<2x32xf32>
    %917 = arith.addf %914, %916 : vector<2x32xf32>
    %918 = vector.extract_strided_slice %559 {offsets = [4, 0], sizes = [2, 96], strides = [1, 1]} : vector<16x96xf32> to vector<2x96xf32>
    %919 = vector.extract_strided_slice %887 {offsets = [0, 96], sizes = [2, 96], strides = [1, 1]} : vector<2x192xf32> to vector<2x96xf32>
    %920 = vector.extract_strided_slice %884 {offsets = [0, 32], sizes = [2, 32], strides = [1, 1]} : vector<2x64xf32> to vector<2x32xf32>
    %921 = vector.extract_strided_slice %0 {offsets = [4, 0], sizes = [2, 1], strides = [1, 1]} : vector<16x1xf32> to vector<2x1xf32>
    %922 = vector.extract_strided_slice %2 {offsets = [4, 0], sizes = [2, 1], strides = [1, 1]} : vector<16x1xf32> to vector<2x1xf32>
    %923 = vector.extract_strided_slice %918 {offsets = [0, 0], sizes = [2, 64], strides = [1, 1]} : vector<2x96xf32> to vector<2x64xf32>
    %924 = vector.extract_strided_slice %919 {offsets = [0, 0], sizes = [2, 64], strides = [1, 1]} : vector<2x96xf32> to vector<2x64xf32>
    %925 = arith.addf %923, %924 : vector<2x64xf32>
    %926 = arith.negf %925 : vector<2x64xf32>
    %927 = math.exp %926 : vector<2x64xf32>
    %cst_157 = arith.constant 1.000000e+00 : f32
    %928 = vector.broadcast %cst_157 : f32 to vector<2x64xf32>
    %929 = arith.addf %928, %927 : vector<2x64xf32>
    %930 = arith.divf %928, %929 : vector<2x64xf32>
    %931 = vector.extract_strided_slice %930 {offsets = [0, 0], sizes = [2, 32], strides = [1, 1]} : vector<2x64xf32> to vector<2x32xf32>
    %932 = vector.extract_strided_slice %930 {offsets = [0, 32], sizes = [2, 32], strides = [1, 1]} : vector<2x64xf32> to vector<2x32xf32>
    %933 = vector.extract_strided_slice %918 {offsets = [0, 64], sizes = [2, 32], strides = [1, 1]} : vector<2x96xf32> to vector<2x32xf32>
    %934 = vector.extract_strided_slice %919 {offsets = [0, 64], sizes = [2, 32], strides = [1, 1]} : vector<2x96xf32> to vector<2x32xf32>
    %935 = vector.broadcast %563 : vector<1x32xf32> to vector<2x32xf32>
    %936 = arith.addf %934, %935 : vector<2x32xf32>
    %937 = arith.mulf %931, %936 : vector<2x32xf32>
    %938 = arith.addf %933, %937 : vector<2x32xf32>
    %939 = math.tanh %938 : vector<2x32xf32>
    %940 = arith.subf %920, %939 : vector<2x32xf32>
    %941 = arith.mulf %932, %940 : vector<2x32xf32>
    %942 = arith.addf %939, %941 : vector<2x32xf32>
    %943 = vector.broadcast %921 : vector<2x1xf32> to vector<2x32xf32>
    %944 = arith.mulf %943, %942 : vector<2x32xf32>
    %945 = vector.broadcast %922 : vector<2x1xf32> to vector<2x32xf32>
    %946 = arith.mulf %945, %920 : vector<2x32xf32>
    %947 = arith.addf %944, %946 : vector<2x32xf32>
    %948 = tpu.concatenate %917, %947 in 1 : vector<2x32xf32>, vector<2x32xf32> -> vector<2x64xf32>
    %c10_158 = arith.constant 10 : index
    %c0_159 = arith.constant 0 : index
    %949 = vector.load %arg9[%c10_158, %c0_159] : memref<16x64xf32, #tpu.memory_space<vmem>>, vector<2x32xf32>
    tpu.vector_store %arg9[%c10_158, %c0_159], %914 {strides = array<i32>} : memref<16x64xf32, #tpu.memory_space<vmem>>, vector<2x32xf32>,
    %c4_160 = arith.constant 4 : index
    %c32_161 = arith.constant 32 : index
    %950 = vector.load %arg9[%c4_160, %c32_161] : memref<16x64xf32, #tpu.memory_space<vmem>>, vector<2x32xf32>
    tpu.vector_store %arg9[%c4_160, %c32_161], %944 {strides = array<i32>} : memref<16x64xf32, #tpu.memory_space<vmem>>, vector<2x32xf32>,
    %cst_162 = arith.constant dense<0.000000e+00> : vector<2x192xf32>
    %951 = tpu.matmul %948, %565, %cst_162 {dimension_numbers = #tpu.dot_dimension_numbers<[1], [0], [0], [1], [0, 0, 1, 1], [], []>} : vector<2x64xf32>, vector<64x192xf32>, vector<2x192xf32> -> vector<2x192xf32>
    %952 = vector.extract_strided_slice %552 {offsets = [12, 0], sizes = [2, 96], strides = [1, 1]} : vector<16x96xf32> to vector<2x96xf32>
    %953 = vector.extract_strided_slice %951 {offsets = [0, 0], sizes = [2, 96], strides = [1, 1]} : vector<2x192xf32> to vector<2x96xf32>
    %954 = vector.extract_strided_slice %948 {offsets = [0, 0], sizes = [2, 32], strides = [1, 1]} : vector<2x64xf32> to vector<2x32xf32>
    %955 = vector.extract_strided_slice %0 {offsets = [12, 0], sizes = [2, 1], strides = [1, 1]} : vector<16x1xf32> to vector<2x1xf32>
    %956 = vector.extract_strided_slice %2 {offsets = [12, 0], sizes = [2, 1], strides = [1, 1]} : vector<16x1xf32> to vector<2x1xf32>
    %957 = vector.extract_strided_slice %952 {offsets = [0, 0], sizes = [2, 64], strides = [1, 1]} : vector<2x96xf32> to vector<2x64xf32>
    %958 = vector.extract_strided_slice %953 {offsets = [0, 0], sizes = [2, 64], strides = [1, 1]} : vector<2x96xf32> to vector<2x64xf32>
    %959 = arith.addf %957, %958 : vector<2x64xf32>
    %960 = arith.negf %959 : vector<2x64xf32>
    %961 = math.exp %960 : vector<2x64xf32>
    %cst_163 = arith.constant 1.000000e+00 : f32
    %962 = vector.broadcast %cst_163 : f32 to vector<2x64xf32>
    %963 = arith.addf %962, %961 : vector<2x64xf32>
    %964 = arith.divf %962, %963 : vector<2x64xf32>
    %965 = vector.extract_strided_slice %964 {offsets = [0, 0], sizes = [2, 32], strides = [1, 1]} : vector<2x64xf32> to vector<2x32xf32>
    %966 = vector.extract_strided_slice %964 {offsets = [0, 32], sizes = [2, 32], strides = [1, 1]} : vector<2x64xf32> to vector<2x32xf32>
    %967 = vector.extract_strided_slice %952 {offsets = [0, 64], sizes = [2, 32], strides = [1, 1]} : vector<2x96xf32> to vector<2x32xf32>
    %968 = vector.extract_strided_slice %953 {offsets = [0, 64], sizes = [2, 32], strides = [1, 1]} : vector<2x96xf32> to vector<2x32xf32>
    %969 = vector.broadcast %561 : vector<1x32xf32> to vector<2x32xf32>
    %970 = arith.addf %968, %969 : vector<2x32xf32>
    %971 = arith.mulf %965, %970 : vector<2x32xf32>
    %972 = arith.addf %967, %971 : vector<2x32xf32>
    %973 = math.tanh %972 : vector<2x32xf32>
    %974 = arith.subf %954, %973 : vector<2x32xf32>
    %975 = arith.mulf %966, %974 : vector<2x32xf32>
    %976 = arith.addf %973, %975 : vector<2x32xf32>
    %977 = vector.broadcast %955 : vector<2x1xf32> to vector<2x32xf32>
    %978 = arith.mulf %977, %976 : vector<2x32xf32>
    %979 = vector.broadcast %956 : vector<2x1xf32> to vector<2x32xf32>
    %980 = arith.mulf %979, %954 : vector<2x32xf32>
    %981 = arith.addf %978, %980 : vector<2x32xf32>
    %982 = vector.extract_strided_slice %559 {offsets = [2, 0], sizes = [2, 96], strides = [1, 1]} : vector<16x96xf32> to vector<2x96xf32>
    %983 = vector.extract_strided_slice %951 {offsets = [0, 96], sizes = [2, 96], strides = [1, 1]} : vector<2x192xf32> to vector<2x96xf32>
    %984 = vector.extract_strided_slice %948 {offsets = [0, 32], sizes = [2, 32], strides = [1, 1]} : vector<2x64xf32> to vector<2x32xf32>
    %985 = vector.extract_strided_slice %0 {offsets = [2, 0], sizes = [2, 1], strides = [1, 1]} : vector<16x1xf32> to vector<2x1xf32>
    %986 = vector.extract_strided_slice %2 {offsets = [2, 0], sizes = [2, 1], strides = [1, 1]} : vector<16x1xf32> to vector<2x1xf32>
    %987 = vector.extract_strided_slice %982 {offsets = [0, 0], sizes = [2, 64], strides = [1, 1]} : vector<2x96xf32> to vector<2x64xf32>
    %988 = vector.extract_strided_slice %983 {offsets = [0, 0], sizes = [2, 64], strides = [1, 1]} : vector<2x96xf32> to vector<2x64xf32>
    %989 = arith.addf %987, %988 : vector<2x64xf32>
    %990 = arith.negf %989 : vector<2x64xf32>
    %991 = math.exp %990 : vector<2x64xf32>
    %cst_164 = arith.constant 1.000000e+00 : f32
    %992 = vector.broadcast %cst_164 : f32 to vector<2x64xf32>
    %993 = arith.addf %992, %991 : vector<2x64xf32>
    %994 = arith.divf %992, %993 : vector<2x64xf32>
    %995 = vector.extract_strided_slice %994 {offsets = [0, 0], sizes = [2, 32], strides = [1, 1]} : vector<2x64xf32> to vector<2x32xf32>
    %996 = vector.extract_strided_slice %994 {offsets = [0, 32], sizes = [2, 32], strides = [1, 1]} : vector<2x64xf32> to vector<2x32xf32>
    %997 = vector.extract_strided_slice %982 {offsets = [0, 64], sizes = [2, 32], strides = [1, 1]} : vector<2x96xf32> to vector<2x32xf32>
    %998 = vector.extract_strided_slice %983 {offsets = [0, 64], sizes = [2, 32], strides = [1, 1]} : vector<2x96xf32> to vector<2x32xf32>
    %999 = vector.broadcast %563 : vector<1x32xf32> to vector<2x32xf32>
    %1000 = arith.addf %998, %999 : vector<2x32xf32>
    %1001 = arith.mulf %995, %1000 : vector<2x32xf32>
    %1002 = arith.addf %997, %1001 : vector<2x32xf32>
    %1003 = math.tanh %1002 : vector<2x32xf32>
    %1004 = arith.subf %984, %1003 : vector<2x32xf32>
    %1005 = arith.mulf %996, %1004 : vector<2x32xf32>
    %1006 = arith.addf %1003, %1005 : vector<2x32xf32>
    %1007 = vector.broadcast %985 : vector<2x1xf32> to vector<2x32xf32>
    %1008 = arith.mulf %1007, %1006 : vector<2x32xf32>
    %1009 = vector.broadcast %986 : vector<2x1xf32> to vector<2x32xf32>
    %1010 = arith.mulf %1009, %984 : vector<2x32xf32>
    %1011 = arith.addf %1008, %1010 : vector<2x32xf32>
    %1012 = tpu.concatenate %981, %1011 in 1 : vector<2x32xf32>, vector<2x32xf32> -> vector<2x64xf32>
    %c12_165 = arith.constant 12 : index
    %c0_166 = arith.constant 0 : index
    %1013 = vector.load %arg9[%c12_165, %c0_166] : memref<16x64xf32, #tpu.memory_space<vmem>>, vector<2x32xf32>
    tpu.vector_store %arg9[%c12_165, %c0_166], %978 {strides = array<i32>} : memref<16x64xf32, #tpu.memory_space<vmem>>, vector<2x32xf32>,
    %c2_167 = arith.constant 2 : index
    %c32_168 = arith.constant 32 : index
    %1014 = vector.load %arg9[%c2_167, %c32_168] : memref<16x64xf32, #tpu.memory_space<vmem>>, vector<2x32xf32>
    tpu.vector_store %arg9[%c2_167, %c32_168], %1008 {strides = array<i32>} : memref<16x64xf32, #tpu.memory_space<vmem>>, vector<2x32xf32>,
    %cst_169 = arith.constant dense<0.000000e+00> : vector<2x192xf32>
    %1015 = tpu.matmul %1012, %565, %cst_169 {dimension_numbers = #tpu.dot_dimension_numbers<[1], [0], [0], [1], [0, 0, 1, 1], [], []>} : vector<2x64xf32>, vector<64x192xf32>, vector<2x192xf32> -> vector<2x192xf32>
    %1016 = vector.extract_strided_slice %552 {offsets = [14, 0], sizes = [2, 96], strides = [1, 1]} : vector<16x96xf32> to vector<2x96xf32>
    %1017 = vector.extract_strided_slice %1015 {offsets = [0, 0], sizes = [2, 96], strides = [1, 1]} : vector<2x192xf32> to vector<2x96xf32>
    %1018 = vector.extract_strided_slice %1012 {offsets = [0, 0], sizes = [2, 32], strides = [1, 1]} : vector<2x64xf32> to vector<2x32xf32>
    %1019 = vector.extract_strided_slice %0 {offsets = [14, 0], sizes = [2, 1], strides = [1, 1]} : vector<16x1xf32> to vector<2x1xf32>
    %1020 = vector.extract_strided_slice %2 {offsets = [14, 0], sizes = [2, 1], strides = [1, 1]} : vector<16x1xf32> to vector<2x1xf32>
    %1021 = vector.extract_strided_slice %1016 {offsets = [0, 0], sizes = [2, 64], strides = [1, 1]} : vector<2x96xf32> to vector<2x64xf32>
    %1022 = vector.extract_strided_slice %1017 {offsets = [0, 0], sizes = [2, 64], strides = [1, 1]} : vector<2x96xf32> to vector<2x64xf32>
    %1023 = arith.addf %1021, %1022 : vector<2x64xf32>
    %1024 = arith.negf %1023 : vector<2x64xf32>
    %1025 = math.exp %1024 : vector<2x64xf32>
    %cst_170 = arith.constant 1.000000e+00 : f32
    %1026 = vector.broadcast %cst_170 : f32 to vector<2x64xf32>
    %1027 = arith.addf %1026, %1025 : vector<2x64xf32>
    %1028 = arith.divf %1026, %1027 : vector<2x64xf32>
    %1029 = vector.extract_strided_slice %1028 {offsets = [0, 0], sizes = [2, 32], strides = [1, 1]} : vector<2x64xf32> to vector<2x32xf32>
    %1030 = vector.extract_strided_slice %1028 {offsets = [0, 32], sizes = [2, 32], strides = [1, 1]} : vector<2x64xf32> to vector<2x32xf32>
    %1031 = vector.extract_strided_slice %1016 {offsets = [0, 64], sizes = [2, 32], strides = [1, 1]} : vector<2x96xf32> to vector<2x32xf32>
    %1032 = vector.extract_strided_slice %1017 {offsets = [0, 64], sizes = [2, 32], strides = [1, 1]} : vector<2x96xf32> to vector<2x32xf32>
    %1033 = vector.broadcast %561 : vector<1x32xf32> to vector<2x32xf32>
    %1034 = arith.addf %1032, %1033 : vector<2x32xf32>
    %1035 = arith.mulf %1029, %1034 : vector<2x32xf32>
    %1036 = arith.addf %1031, %1035 : vector<2x32xf32>
    %1037 = math.tanh %1036 : vector<2x32xf32>
    %1038 = arith.subf %1018, %1037 : vector<2x32xf32>
    %1039 = arith.mulf %1030, %1038 : vector<2x32xf32>
    %1040 = arith.addf %1037, %1039 : vector<2x32xf32>
    %1041 = vector.broadcast %1019 : vector<2x1xf32> to vector<2x32xf32>
    %1042 = arith.mulf %1041, %1040 : vector<2x32xf32>
    %1043 = vector.broadcast %1020 : vector<2x1xf32> to vector<2x32xf32>
    %1044 = arith.mulf %1043, %1018 : vector<2x32xf32>
    %1045 = arith.addf %1042, %1044 : vector<2x32xf32>
    %1046 = vector.extract_strided_slice %559 {offsets = [0, 0], sizes = [2, 96], strides = [1, 1]} : vector<16x96xf32> to vector<2x96xf32>
    %1047 = vector.extract_strided_slice %1015 {offsets = [0, 96], sizes = [2, 96], strides = [1, 1]} : vector<2x192xf32> to vector<2x96xf32>
    %1048 = vector.extract_strided_slice %1012 {offsets = [0, 32], sizes = [2, 32], strides = [1, 1]} : vector<2x64xf32> to vector<2x32xf32>
    %1049 = vector.extract_strided_slice %0 {offsets = [0, 0], sizes = [2, 1], strides = [1, 1]} : vector<16x1xf32> to vector<2x1xf32>
    %1050 = vector.extract_strided_slice %2 {offsets = [0, 0], sizes = [2, 1], strides = [1, 1]} : vector<16x1xf32> to vector<2x1xf32>
    %1051 = vector.extract_strided_slice %1046 {offsets = [0, 0], sizes = [2, 64], strides = [1, 1]} : vector<2x96xf32> to vector<2x64xf32>
    %1052 = vector.extract_strided_slice %1047 {offsets = [0, 0], sizes = [2, 64], strides = [1, 1]} : vector<2x96xf32> to vector<2x64xf32>
    %1053 = arith.addf %1051, %1052 : vector<2x64xf32>
    %1054 = arith.negf %1053 : vector<2x64xf32>
    %1055 = math.exp %1054 : vector<2x64xf32>
    %cst_171 = arith.constant 1.000000e+00 : f32
    %1056 = vector.broadcast %cst_171 : f32 to vector<2x64xf32>
    %1057 = arith.addf %1056, %1055 : vector<2x64xf32>
    %1058 = arith.divf %1056, %1057 : vector<2x64xf32>
    %1059 = vector.extract_strided_slice %1058 {offsets = [0, 0], sizes = [2, 32], strides = [1, 1]} : vector<2x64xf32> to vector<2x32xf32>
    %1060 = vector.extract_strided_slice %1058 {offsets = [0, 32], sizes = [2, 32], strides = [1, 1]} : vector<2x64xf32> to vector<2x32xf32>
    %1061 = vector.extract_strided_slice %1046 {offsets = [0, 64], sizes = [2, 32], strides = [1, 1]} : vector<2x96xf32> to vector<2x32xf32>
    %1062 = vector.extract_strided_slice %1047 {offsets = [0, 64], sizes = [2, 32], strides = [1, 1]} : vector<2x96xf32> to vector<2x32xf32>
    %1063 = vector.broadcast %563 : vector<1x32xf32> to vector<2x32xf32>
    %1064 = arith.addf %1062, %1063 : vector<2x32xf32>
    %1065 = arith.mulf %1059, %1064 : vector<2x32xf32>
    %1066 = arith.addf %1061, %1065 : vector<2x32xf32>
    %1067 = math.tanh %1066 : vector<2x32xf32>
    %1068 = arith.subf %1048, %1067 : vector<2x32xf32>
    %1069 = arith.mulf %1060, %1068 : vector<2x32xf32>
    %1070 = arith.addf %1067, %1069 : vector<2x32xf32>
    %1071 = vector.broadcast %1049 : vector<2x1xf32> to vector<2x32xf32>
    %1072 = arith.mulf %1071, %1070 : vector<2x32xf32>
    %1073 = vector.broadcast %1050 : vector<2x1xf32> to vector<2x32xf32>
    %1074 = arith.mulf %1073, %1048 : vector<2x32xf32>
    %1075 = arith.addf %1072, %1074 : vector<2x32xf32>
    %1076 = tpu.concatenate %1045, %1075 in 1 : vector<2x32xf32>, vector<2x32xf32> -> vector<2x64xf32>
    %c14_172 = arith.constant 14 : index
    %c0_173 = arith.constant 0 : index
    %1077 = vector.load %arg9[%c14_172, %c0_173] : memref<16x64xf32, #tpu.memory_space<vmem>>, vector<2x32xf32>
    tpu.vector_store %arg9[%c14_172, %c0_173], %1042 {strides = array<i32>} : memref<16x64xf32, #tpu.memory_space<vmem>>, vector<2x32xf32>,
    %c0_174 = arith.constant 0 : index
    %c32_175 = arith.constant 32 : index
    %1078 = vector.load %arg9[%c0_174, %c32_175] : memref<16x64xf32, #tpu.memory_space<vmem>>, vector<2x32xf32>
    tpu.vector_store %arg9[%c0_174, %c32_175], %1072 {strides = array<i32>} : memref<16x64xf32, #tpu.memory_space<vmem>>, vector<2x32xf32>,
    %1079 = vector.extract_strided_slice %1076 {offsets = [0, 0], sizes = [2, 32], strides = [1, 1]} : vector<2x64xf32> to vector<2x32xf32>
    %c1_176 = arith.constant 1 : index
    %c0_177 = arith.constant 0 : index
    %c0_178 = arith.constant 0 : index
    %c0_179 = arith.constant 0 : index
    %1080 = vector.load %arg8[%c1_176, %c0_177, %c0_178, %c0_179] : memref<4x2x2x32xf32, #tpu.memory_space<vmem>>, vector<1x1x2x32xf32>
    %1081 = vector.shape_cast %1080 : vector<1x1x2x32xf32> to vector<2x32xf32>
    %1082 = vector.shape_cast %1079 : vector<2x32xf32> to vector<1x1x2x32xf32>
    tpu.vector_store %arg8[%c1_176, %c0_177, %c0_178, %c0_179], %1082 {strides = array<i32>} : memref<4x2x2x32xf32, #tpu.memory_space<vmem>>, vector<1x1x2x32xf32>,
    %1083 = vector.extract_strided_slice %1076 {offsets = [0, 32], sizes = [2, 32], strides = [1, 1]} : vector<2x64xf32> to vector<2x32xf32>
    %c1_180 = arith.constant 1 : index
    %c1_181 = arith.constant 1 : index
    %c0_182 = arith.constant 0 : index
    %c0_183 = arith.constant 0 : index
    %1084 = vector.load %arg8[%c1_180, %c1_181, %c0_182, %c0_183] : memref<4x2x2x32xf32, #tpu.memory_space<vmem>>, vector<1x1x2x32xf32>
    %1085 = vector.shape_cast %1084 : vector<1x1x2x32xf32> to vector<2x32xf32>
    %1086 = vector.shape_cast %1083 : vector<2x32xf32> to vector<1x1x2x32xf32>
    tpu.vector_store %arg8[%c1_180, %c1_181, %c0_182, %c0_183], %1086 {strides = array<i32>} : memref<4x2x2x32xf32, #tpu.memory_space<vmem>>, vector<1x1x2x32xf32>,
    %c0_184 = arith.constant 0 : index
    %c0_185 = arith.constant 0 : index
    %1087 = vector.load %arg9[%c0_184, %c0_185] : memref<16x64xf32, #tpu.memory_space<vmem>>, vector<16x64xf32>
    %c2_186 = arith.constant 2 : index
    %c0_187 = arith.constant 0 : index
    %c0_188 = arith.constant 0 : index
    %c0_189 = arith.constant 0 : index
    %1088 = vector.load %arg3[%c2_186, %c0_187, %c0_188, %c0_189] : memref<4x2x64x96xf32, #tpu.memory_space<vmem>>, vector<1x1x64x96xf32>
    %1089 = vector.shape_cast %1088 : vector<1x1x64x96xf32> to vector<64x96xf32>
    %cst_190 = arith.constant dense<0.000000e+00> : vector<16x96xf32>
    %1090 = tpu.matmul %1087, %1089, %cst_190 {dimension_numbers = #tpu.dot_dimension_numbers<[1], [0], [0], [1], [0, 0, 1, 1], [], []>} : vector<16x64xf32>, vector<64x96xf32>, vector<16x96xf32> -> vector<16x96xf32>
    %c2_191 = arith.constant 2 : index
    %c0_192 = arith.constant 0 : index
    %c0_193 = arith.constant 0 : index
    %c0_194 = arith.constant 0 : index
    %1091 = vector.load %arg5[%c2_191, %c0_192, %c0_193, %c0_194] : memref<4x2x1x96xf32, #tpu.memory_space<vmem>>, vector<1x1x1x96xf32>
    %1092 = vector.shape_cast %1091 : vector<1x1x1x96xf32> to vector<1x96xf32>
    %1093 = vector.broadcast %1092 : vector<1x96xf32> to vector<16x96xf32>
    %1094 = arith.addf %1090, %1093 : vector<16x96xf32>
    %c2_195 = arith.constant 2 : index
    %c1_196 = arith.constant 1 : index
    %c0_197 = arith.constant 0 : index
    %c0_198 = arith.constant 0 : index
    %1095 = vector.load %arg3[%c2_195, %c1_196, %c0_197, %c0_198] : memref<4x2x64x96xf32, #tpu.memory_space<vmem>>, vector<1x1x64x96xf32>
    %1096 = vector.shape_cast %1095 : vector<1x1x64x96xf32> to vector<64x96xf32>
    %cst_199 = arith.constant dense<0.000000e+00> : vector<16x96xf32>
    %1097 = tpu.matmul %1087, %1096, %cst_199 {dimension_numbers = #tpu.dot_dimension_numbers<[1], [0], [0], [1], [0, 0, 1, 1], [], []>} : vector<16x64xf32>, vector<64x96xf32>, vector<16x96xf32> -> vector<16x96xf32>
    %c2_200 = arith.constant 2 : index
    %c1_201 = arith.constant 1 : index
    %c0_202 = arith.constant 0 : index
    %c0_203 = arith.constant 0 : index
    %1098 = vector.load %arg5[%c2_200, %c1_201, %c0_202, %c0_203] : memref<4x2x1x96xf32, #tpu.memory_space<vmem>>, vector<1x1x1x96xf32>
    %1099 = vector.shape_cast %1098 : vector<1x1x1x96xf32> to vector<1x96xf32>
    %1100 = vector.broadcast %1099 : vector<1x96xf32> to vector<16x96xf32>
    %1101 = arith.addf %1097, %1100 : vector<16x96xf32>
    %c2_204 = arith.constant 2 : index
    %c0_205 = arith.constant 0 : index
    %c0_206 = arith.constant 0 : index
    %c0_207 = arith.constant 0 : index
    %1102 = vector.load %arg6[%c2_204, %c0_205, %c0_206, %c0_207] : memref<4x2x1x32xf32, #tpu.memory_space<vmem>>, vector<1x1x1x32xf32>
    %1103 = vector.shape_cast %1102 : vector<1x1x1x32xf32> to vector<1x32xf32>
    %c2_208 = arith.constant 2 : index
    %c1_209 = arith.constant 1 : index
    %c0_210 = arith.constant 0 : index
    %c0_211 = arith.constant 0 : index
    %1104 = vector.load %arg6[%c2_208, %c1_209, %c0_210, %c0_211] : memref<4x2x1x32xf32, #tpu.memory_space<vmem>>, vector<1x1x1x32xf32>
    %1105 = vector.shape_cast %1104 : vector<1x1x1x32xf32> to vector<1x32xf32>
    %c2_212 = arith.constant 2 : index
    %c0_213 = arith.constant 0 : index
    %c0_214 = arith.constant 0 : index
    %1106 = vector.load %arg4[%c2_212, %c0_213, %c0_214] : memref<4x64x192xf32, #tpu.memory_space<vmem>>, vector<1x64x192xf32>
    %1107 = vector.shape_cast %1106 : vector<1x64x192xf32> to vector<64x192xf32>
    %cst_215 = arith.constant 0.000000e+00 : f32
    %1108 = vector.broadcast %cst_215 : f32 to vector<2x64xf32>
    %cst_216 = arith.constant dense<0.000000e+00> : vector<2x192xf32>
    %1109 = tpu.matmul %1108, %1107, %cst_216 {dimension_numbers = #tpu.dot_dimension_numbers<[1], [0], [0], [1], [0, 0, 1, 1], [], []>} : vector<2x64xf32>, vector<64x192xf32>, vector<2x192xf32> -> vector<2x192xf32>
    %1110 = vector.extract_strided_slice %1094 {offsets = [0, 0], sizes = [2, 96], strides = [1, 1]} : vector<16x96xf32> to vector<2x96xf32>
    %1111 = vector.extract_strided_slice %1109 {offsets = [0, 0], sizes = [2, 96], strides = [1, 1]} : vector<2x192xf32> to vector<2x96xf32>
    %1112 = vector.extract_strided_slice %1108 {offsets = [0, 0], sizes = [2, 32], strides = [1, 1]} : vector<2x64xf32> to vector<2x32xf32>
    %1113 = vector.extract_strided_slice %0 {offsets = [0, 0], sizes = [2, 1], strides = [1, 1]} : vector<16x1xf32> to vector<2x1xf32>
    %1114 = vector.extract_strided_slice %2 {offsets = [0, 0], sizes = [2, 1], strides = [1, 1]} : vector<16x1xf32> to vector<2x1xf32>
    %1115 = vector.extract_strided_slice %1110 {offsets = [0, 0], sizes = [2, 64], strides = [1, 1]} : vector<2x96xf32> to vector<2x64xf32>
    %1116 = vector.extract_strided_slice %1111 {offsets = [0, 0], sizes = [2, 64], strides = [1, 1]} : vector<2x96xf32> to vector<2x64xf32>
    %1117 = arith.addf %1115, %1116 : vector<2x64xf32>
    %1118 = arith.negf %1117 : vector<2x64xf32>
    %1119 = math.exp %1118 : vector<2x64xf32>
    %cst_217 = arith.constant 1.000000e+00 : f32
    %1120 = vector.broadcast %cst_217 : f32 to vector<2x64xf32>
    %1121 = arith.addf %1120, %1119 : vector<2x64xf32>
    %1122 = arith.divf %1120, %1121 : vector<2x64xf32>
    %1123 = vector.extract_strided_slice %1122 {offsets = [0, 0], sizes = [2, 32], strides = [1, 1]} : vector<2x64xf32> to vector<2x32xf32>
    %1124 = vector.extract_strided_slice %1122 {offsets = [0, 32], sizes = [2, 32], strides = [1, 1]} : vector<2x64xf32> to vector<2x32xf32>
    %1125 = vector.extract_strided_slice %1110 {offsets = [0, 64], sizes = [2, 32], strides = [1, 1]} : vector<2x96xf32> to vector<2x32xf32>
    %1126 = vector.extract_strided_slice %1111 {offsets = [0, 64], sizes = [2, 32], strides = [1, 1]} : vector<2x96xf32> to vector<2x32xf32>
    %1127 = vector.broadcast %1103 : vector<1x32xf32> to vector<2x32xf32>
    %1128 = arith.addf %1126, %1127 : vector<2x32xf32>
    %1129 = arith.mulf %1123, %1128 : vector<2x32xf32>
    %1130 = arith.addf %1125, %1129 : vector<2x32xf32>
    %1131 = math.tanh %1130 : vector<2x32xf32>
    %1132 = arith.subf %1112, %1131 : vector<2x32xf32>
    %1133 = arith.mulf %1124, %1132 : vector<2x32xf32>
    %1134 = arith.addf %1131, %1133 : vector<2x32xf32>
    %1135 = vector.broadcast %1113 : vector<2x1xf32> to vector<2x32xf32>
    %1136 = arith.mulf %1135, %1134 : vector<2x32xf32>
    %1137 = vector.broadcast %1114 : vector<2x1xf32> to vector<2x32xf32>
    %1138 = arith.mulf %1137, %1112 : vector<2x32xf32>
    %1139 = arith.addf %1136, %1138 : vector<2x32xf32>
    %1140 = vector.extract_strided_slice %1101 {offsets = [14, 0], sizes = [2, 96], strides = [1, 1]} : vector<16x96xf32> to vector<2x96xf32>
    %1141 = vector.extract_strided_slice %1109 {offsets = [0, 96], sizes = [2, 96], strides = [1, 1]} : vector<2x192xf32> to vector<2x96xf32>
    %1142 = vector.extract_strided_slice %1108 {offsets = [0, 32], sizes = [2, 32], strides = [1, 1]} : vector<2x64xf32> to vector<2x32xf32>
    %1143 = vector.extract_strided_slice %0 {offsets = [14, 0], sizes = [2, 1], strides = [1, 1]} : vector<16x1xf32> to vector<2x1xf32>
    %1144 = vector.extract_strided_slice %2 {offsets = [14, 0], sizes = [2, 1], strides = [1, 1]} : vector<16x1xf32> to vector<2x1xf32>
    %1145 = vector.extract_strided_slice %1140 {offsets = [0, 0], sizes = [2, 64], strides = [1, 1]} : vector<2x96xf32> to vector<2x64xf32>
    %1146 = vector.extract_strided_slice %1141 {offsets = [0, 0], sizes = [2, 64], strides = [1, 1]} : vector<2x96xf32> to vector<2x64xf32>
    %1147 = arith.addf %1145, %1146 : vector<2x64xf32>
    %1148 = arith.negf %1147 : vector<2x64xf32>
    %1149 = math.exp %1148 : vector<2x64xf32>
    %cst_218 = arith.constant 1.000000e+00 : f32
    %1150 = vector.broadcast %cst_218 : f32 to vector<2x64xf32>
    %1151 = arith.addf %1150, %1149 : vector<2x64xf32>
    %1152 = arith.divf %1150, %1151 : vector<2x64xf32>
    %1153 = vector.extract_strided_slice %1152 {offsets = [0, 0], sizes = [2, 32], strides = [1, 1]} : vector<2x64xf32> to vector<2x32xf32>
    %1154 = vector.extract_strided_slice %1152 {offsets = [0, 32], sizes = [2, 32], strides = [1, 1]} : vector<2x64xf32> to vector<2x32xf32>
    %1155 = vector.extract_strided_slice %1140 {offsets = [0, 64], sizes = [2, 32], strides = [1, 1]} : vector<2x96xf32> to vector<2x32xf32>
    %1156 = vector.extract_strided_slice %1141 {offsets = [0, 64], sizes = [2, 32], strides = [1, 1]} : vector<2x96xf32> to vector<2x32xf32>
    %1157 = vector.broadcast %1105 : vector<1x32xf32> to vector<2x32xf32>
    %1158 = arith.addf %1156, %1157 : vector<2x32xf32>
    %1159 = arith.mulf %1153, %1158 : vector<2x32xf32>
    %1160 = arith.addf %1155, %1159 : vector<2x32xf32>
    %1161 = math.tanh %1160 : vector<2x32xf32>
    %1162 = arith.subf %1142, %1161 : vector<2x32xf32>
    %1163 = arith.mulf %1154, %1162 : vector<2x32xf32>
    %1164 = arith.addf %1161, %1163 : vector<2x32xf32>
    %1165 = vector.broadcast %1143 : vector<2x1xf32> to vector<2x32xf32>
    %1166 = arith.mulf %1165, %1164 : vector<2x32xf32>
    %1167 = vector.broadcast %1144 : vector<2x1xf32> to vector<2x32xf32>
    %1168 = arith.mulf %1167, %1142 : vector<2x32xf32>
    %1169 = arith.addf %1166, %1168 : vector<2x32xf32>
    %1170 = tpu.concatenate %1139, %1169 in 1 : vector<2x32xf32>, vector<2x32xf32> -> vector<2x64xf32>
    %c0_219 = arith.constant 0 : index
    %c0_220 = arith.constant 0 : index
    %1171 = vector.load %arg9[%c0_219, %c0_220] : memref<16x64xf32, #tpu.memory_space<vmem>>, vector<2x32xf32>
    tpu.vector_store %arg9[%c0_219, %c0_220], %1136 {strides = array<i32>} : memref<16x64xf32, #tpu.memory_space<vmem>>, vector<2x32xf32>,
    %c14_221 = arith.constant 14 : index
    %c32_222 = arith.constant 32 : index
    %1172 = vector.load %arg9[%c14_221, %c32_222] : memref<16x64xf32, #tpu.memory_space<vmem>>, vector<2x32xf32>
    tpu.vector_store %arg9[%c14_221, %c32_222], %1166 {strides = array<i32>} : memref<16x64xf32, #tpu.memory_space<vmem>>, vector<2x32xf32>,
    %cst_223 = arith.constant dense<0.000000e+00> : vector<2x192xf32>
    %1173 = tpu.matmul %1170, %1107, %cst_223 {dimension_numbers = #tpu.dot_dimension_numbers<[1], [0], [0], [1], [0, 0, 1, 1], [], []>} : vector<2x64xf32>, vector<64x192xf32>, vector<2x192xf32> -> vector<2x192xf32>
    %1174 = vector.extract_strided_slice %1094 {offsets = [2, 0], sizes = [2, 96], strides = [1, 1]} : vector<16x96xf32> to vector<2x96xf32>
    %1175 = vector.extract_strided_slice %1173 {offsets = [0, 0], sizes = [2, 96], strides = [1, 1]} : vector<2x192xf32> to vector<2x96xf32>
    %1176 = vector.extract_strided_slice %1170 {offsets = [0, 0], sizes = [2, 32], strides = [1, 1]} : vector<2x64xf32> to vector<2x32xf32>
    %1177 = vector.extract_strided_slice %0 {offsets = [2, 0], sizes = [2, 1], strides = [1, 1]} : vector<16x1xf32> to vector<2x1xf32>
    %1178 = vector.extract_strided_slice %2 {offsets = [2, 0], sizes = [2, 1], strides = [1, 1]} : vector<16x1xf32> to vector<2x1xf32>
    %1179 = vector.extract_strided_slice %1174 {offsets = [0, 0], sizes = [2, 64], strides = [1, 1]} : vector<2x96xf32> to vector<2x64xf32>
    %1180 = vector.extract_strided_slice %1175 {offsets = [0, 0], sizes = [2, 64], strides = [1, 1]} : vector<2x96xf32> to vector<2x64xf32>
    %1181 = arith.addf %1179, %1180 : vector<2x64xf32>
    %1182 = arith.negf %1181 : vector<2x64xf32>
    %1183 = math.exp %1182 : vector<2x64xf32>
    %cst_224 = arith.constant 1.000000e+00 : f32
    %1184 = vector.broadcast %cst_224 : f32 to vector<2x64xf32>
    %1185 = arith.addf %1184, %1183 : vector<2x64xf32>
    %1186 = arith.divf %1184, %1185 : vector<2x64xf32>
    %1187 = vector.extract_strided_slice %1186 {offsets = [0, 0], sizes = [2, 32], strides = [1, 1]} : vector<2x64xf32> to vector<2x32xf32>
    %1188 = vector.extract_strided_slice %1186 {offsets = [0, 32], sizes = [2, 32], strides = [1, 1]} : vector<2x64xf32> to vector<2x32xf32>
    %1189 = vector.extract_strided_slice %1174 {offsets = [0, 64], sizes = [2, 32], strides = [1, 1]} : vector<2x96xf32> to vector<2x32xf32>
    %1190 = vector.extract_strided_slice %1175 {offsets = [0, 64], sizes = [2, 32], strides = [1, 1]} : vector<2x96xf32> to vector<2x32xf32>
    %1191 = vector.broadcast %1103 : vector<1x32xf32> to vector<2x32xf32>
    %1192 = arith.addf %1190, %1191 : vector<2x32xf32>
    %1193 = arith.mulf %1187, %1192 : vector<2x32xf32>
    %1194 = arith.addf %1189, %1193 : vector<2x32xf32>
    %1195 = math.tanh %1194 : vector<2x32xf32>
    %1196 = arith.subf %1176, %1195 : vector<2x32xf32>
    %1197 = arith.mulf %1188, %1196 : vector<2x32xf32>
    %1198 = arith.addf %1195, %1197 : vector<2x32xf32>
    %1199 = vector.broadcast %1177 : vector<2x1xf32> to vector<2x32xf32>
    %1200 = arith.mulf %1199, %1198 : vector<2x32xf32>
    %1201 = vector.broadcast %1178 : vector<2x1xf32> to vector<2x32xf32>
    %1202 = arith.mulf %1201, %1176 : vector<2x32xf32>
    %1203 = arith.addf %1200, %1202 : vector<2x32xf32>
    %1204 = vector.extract_strided_slice %1101 {offsets = [12, 0], sizes = [2, 96], strides = [1, 1]} : vector<16x96xf32> to vector<2x96xf32>
    %1205 = vector.extract_strided_slice %1173 {offsets = [0, 96], sizes = [2, 96], strides = [1, 1]} : vector<2x192xf32> to vector<2x96xf32>
    %1206 = vector.extract_strided_slice %1170 {offsets = [0, 32], sizes = [2, 32], strides = [1, 1]} : vector<2x64xf32> to vector<2x32xf32>
    %1207 = vector.extract_strided_slice %0 {offsets = [12, 0], sizes = [2, 1], strides = [1, 1]} : vector<16x1xf32> to vector<2x1xf32>
    %1208 = vector.extract_strided_slice %2 {offsets = [12, 0], sizes = [2, 1], strides = [1, 1]} : vector<16x1xf32> to vector<2x1xf32>
    %1209 = vector.extract_strided_slice %1204 {offsets = [0, 0], sizes = [2, 64], strides = [1, 1]} : vector<2x96xf32> to vector<2x64xf32>
    %1210 = vector.extract_strided_slice %1205 {offsets = [0, 0], sizes = [2, 64], strides = [1, 1]} : vector<2x96xf32> to vector<2x64xf32>
    %1211 = arith.addf %1209, %1210 : vector<2x64xf32>
    %1212 = arith.negf %1211 : vector<2x64xf32>
    %1213 = math.exp %1212 : vector<2x64xf32>
    %cst_225 = arith.constant 1.000000e+00 : f32
    %1214 = vector.broadcast %cst_225 : f32 to vector<2x64xf32>
    %1215 = arith.addf %1214, %1213 : vector<2x64xf32>
    %1216 = arith.divf %1214, %1215 : vector<2x64xf32>
    %1217 = vector.extract_strided_slice %1216 {offsets = [0, 0], sizes = [2, 32], strides = [1, 1]} : vector<2x64xf32> to vector<2x32xf32>
    %1218 = vector.extract_strided_slice %1216 {offsets = [0, 32], sizes = [2, 32], strides = [1, 1]} : vector<2x64xf32> to vector<2x32xf32>
    %1219 = vector.extract_strided_slice %1204 {offsets = [0, 64], sizes = [2, 32], strides = [1, 1]} : vector<2x96xf32> to vector<2x32xf32>
    %1220 = vector.extract_strided_slice %1205 {offsets = [0, 64], sizes = [2, 32], strides = [1, 1]} : vector<2x96xf32> to vector<2x32xf32>
    %1221 = vector.broadcast %1105 : vector<1x32xf32> to vector<2x32xf32>
    %1222 = arith.addf %1220, %1221 : vector<2x32xf32>
    %1223 = arith.mulf %1217, %1222 : vector<2x32xf32>
    %1224 = arith.addf %1219, %1223 : vector<2x32xf32>
    %1225 = math.tanh %1224 : vector<2x32xf32>
    %1226 = arith.subf %1206, %1225 : vector<2x32xf32>
    %1227 = arith.mulf %1218, %1226 : vector<2x32xf32>
    %1228 = arith.addf %1225, %1227 : vector<2x32xf32>
    %1229 = vector.broadcast %1207 : vector<2x1xf32> to vector<2x32xf32>
    %1230 = arith.mulf %1229, %1228 : vector<2x32xf32>
    %1231 = vector.broadcast %1208 : vector<2x1xf32> to vector<2x32xf32>
    %1232 = arith.mulf %1231, %1206 : vector<2x32xf32>
    %1233 = arith.addf %1230, %1232 : vector<2x32xf32>
    %1234 = tpu.concatenate %1203, %1233 in 1 : vector<2x32xf32>, vector<2x32xf32> -> vector<2x64xf32>
    %c2_226 = arith.constant 2 : index
    %c0_227 = arith.constant 0 : index
    %1235 = vector.load %arg9[%c2_226, %c0_227] : memref<16x64xf32, #tpu.memory_space<vmem>>, vector<2x32xf32>
    tpu.vector_store %arg9[%c2_226, %c0_227], %1200 {strides = array<i32>} : memref<16x64xf32, #tpu.memory_space<vmem>>, vector<2x32xf32>,
    %c12_228 = arith.constant 12 : index
    %c32_229 = arith.constant 32 : index
    %1236 = vector.load %arg9[%c12_228, %c32_229] : memref<16x64xf32, #tpu.memory_space<vmem>>, vector<2x32xf32>
    tpu.vector_store %arg9[%c12_228, %c32_229], %1230 {strides = array<i32>} : memref<16x64xf32, #tpu.memory_space<vmem>>, vector<2x32xf32>,
    %cst_230 = arith.constant dense<0.000000e+00> : vector<2x192xf32>
    %1237 = tpu.matmul %1234, %1107, %cst_230 {dimension_numbers = #tpu.dot_dimension_numbers<[1], [0], [0], [1], [0, 0, 1, 1], [], []>} : vector<2x64xf32>, vector<64x192xf32>, vector<2x192xf32> -> vector<2x192xf32>
    %1238 = vector.extract_strided_slice %1094 {offsets = [4, 0], sizes = [2, 96], strides = [1, 1]} : vector<16x96xf32> to vector<2x96xf32>
    %1239 = vector.extract_strided_slice %1237 {offsets = [0, 0], sizes = [2, 96], strides = [1, 1]} : vector<2x192xf32> to vector<2x96xf32>
    %1240 = vector.extract_strided_slice %1234 {offsets = [0, 0], sizes = [2, 32], strides = [1, 1]} : vector<2x64xf32> to vector<2x32xf32>
    %1241 = vector.extract_strided_slice %0 {offsets = [4, 0], sizes = [2, 1], strides = [1, 1]} : vector<16x1xf32> to vector<2x1xf32>
    %1242 = vector.extract_strided_slice %2 {offsets = [4, 0], sizes = [2, 1], strides = [1, 1]} : vector<16x1xf32> to vector<2x1xf32>
    %1243 = vector.extract_strided_slice %1238 {offsets = [0, 0], sizes = [2, 64], strides = [1, 1]} : vector<2x96xf32> to vector<2x64xf32>
    %1244 = vector.extract_strided_slice %1239 {offsets = [0, 0], sizes = [2, 64], strides = [1, 1]} : vector<2x96xf32> to vector<2x64xf32>
    %1245 = arith.addf %1243, %1244 : vector<2x64xf32>
    %1246 = arith.negf %1245 : vector<2x64xf32>
    %1247 = math.exp %1246 : vector<2x64xf32>
    %cst_231 = arith.constant 1.000000e+00 : f32
    %1248 = vector.broadcast %cst_231 : f32 to vector<2x64xf32>
    %1249 = arith.addf %1248, %1247 : vector<2x64xf32>
    %1250 = arith.divf %1248, %1249 : vector<2x64xf32>
    %1251 = vector.extract_strided_slice %1250 {offsets = [0, 0], sizes = [2, 32], strides = [1, 1]} : vector<2x64xf32> to vector<2x32xf32>
    %1252 = vector.extract_strided_slice %1250 {offsets = [0, 32], sizes = [2, 32], strides = [1, 1]} : vector<2x64xf32> to vector<2x32xf32>
    %1253 = vector.extract_strided_slice %1238 {offsets = [0, 64], sizes = [2, 32], strides = [1, 1]} : vector<2x96xf32> to vector<2x32xf32>
    %1254 = vector.extract_strided_slice %1239 {offsets = [0, 64], sizes = [2, 32], strides = [1, 1]} : vector<2x96xf32> to vector<2x32xf32>
    %1255 = vector.broadcast %1103 : vector<1x32xf32> to vector<2x32xf32>
    %1256 = arith.addf %1254, %1255 : vector<2x32xf32>
    %1257 = arith.mulf %1251, %1256 : vector<2x32xf32>
    %1258 = arith.addf %1253, %1257 : vector<2x32xf32>
    %1259 = math.tanh %1258 : vector<2x32xf32>
    %1260 = arith.subf %1240, %1259 : vector<2x32xf32>
    %1261 = arith.mulf %1252, %1260 : vector<2x32xf32>
    %1262 = arith.addf %1259, %1261 : vector<2x32xf32>
    %1263 = vector.broadcast %1241 : vector<2x1xf32> to vector<2x32xf32>
    %1264 = arith.mulf %1263, %1262 : vector<2x32xf32>
    %1265 = vector.broadcast %1242 : vector<2x1xf32> to vector<2x32xf32>
    %1266 = arith.mulf %1265, %1240 : vector<2x32xf32>
    %1267 = arith.addf %1264, %1266 : vector<2x32xf32>
    %1268 = vector.extract_strided_slice %1101 {offsets = [10, 0], sizes = [2, 96], strides = [1, 1]} : vector<16x96xf32> to vector<2x96xf32>
    %1269 = vector.extract_strided_slice %1237 {offsets = [0, 96], sizes = [2, 96], strides = [1, 1]} : vector<2x192xf32> to vector<2x96xf32>
    %1270 = vector.extract_strided_slice %1234 {offsets = [0, 32], sizes = [2, 32], strides = [1, 1]} : vector<2x64xf32> to vector<2x32xf32>
    %1271 = vector.extract_strided_slice %0 {offsets = [10, 0], sizes = [2, 1], strides = [1, 1]} : vector<16x1xf32> to vector<2x1xf32>
    %1272 = vector.extract_strided_slice %2 {offsets = [10, 0], sizes = [2, 1], strides = [1, 1]} : vector<16x1xf32> to vector<2x1xf32>
    %1273 = vector.extract_strided_slice %1268 {offsets = [0, 0], sizes = [2, 64], strides = [1, 1]} : vector<2x96xf32> to vector<2x64xf32>
    %1274 = vector.extract_strided_slice %1269 {offsets = [0, 0], sizes = [2, 64], strides = [1, 1]} : vector<2x96xf32> to vector<2x64xf32>
    %1275 = arith.addf %1273, %1274 : vector<2x64xf32>
    %1276 = arith.negf %1275 : vector<2x64xf32>
    %1277 = math.exp %1276 : vector<2x64xf32>
    %cst_232 = arith.constant 1.000000e+00 : f32
    %1278 = vector.broadcast %cst_232 : f32 to vector<2x64xf32>
    %1279 = arith.addf %1278, %1277 : vector<2x64xf32>
    %1280 = arith.divf %1278, %1279 : vector<2x64xf32>
    %1281 = vector.extract_strided_slice %1280 {offsets = [0, 0], sizes = [2, 32], strides = [1, 1]} : vector<2x64xf32> to vector<2x32xf32>
    %1282 = vector.extract_strided_slice %1280 {offsets = [0, 32], sizes = [2, 32], strides = [1, 1]} : vector<2x64xf32> to vector<2x32xf32>
    %1283 = vector.extract_strided_slice %1268 {offsets = [0, 64], sizes = [2, 32], strides = [1, 1]} : vector<2x96xf32> to vector<2x32xf32>
    %1284 = vector.extract_strided_slice %1269 {offsets = [0, 64], sizes = [2, 32], strides = [1, 1]} : vector<2x96xf32> to vector<2x32xf32>
    %1285 = vector.broadcast %1105 : vector<1x32xf32> to vector<2x32xf32>
    %1286 = arith.addf %1284, %1285 : vector<2x32xf32>
    %1287 = arith.mulf %1281, %1286 : vector<2x32xf32>
    %1288 = arith.addf %1283, %1287 : vector<2x32xf32>
    %1289 = math.tanh %1288 : vector<2x32xf32>
    %1290 = arith.subf %1270, %1289 : vector<2x32xf32>
    %1291 = arith.mulf %1282, %1290 : vector<2x32xf32>
    %1292 = arith.addf %1289, %1291 : vector<2x32xf32>
    %1293 = vector.broadcast %1271 : vector<2x1xf32> to vector<2x32xf32>
    %1294 = arith.mulf %1293, %1292 : vector<2x32xf32>
    %1295 = vector.broadcast %1272 : vector<2x1xf32> to vector<2x32xf32>
    %1296 = arith.mulf %1295, %1270 : vector<2x32xf32>
    %1297 = arith.addf %1294, %1296 : vector<2x32xf32>
    %1298 = tpu.concatenate %1267, %1297 in 1 : vector<2x32xf32>, vector<2x32xf32> -> vector<2x64xf32>
    %c4_233 = arith.constant 4 : index
    %c0_234 = arith.constant 0 : index
    %1299 = vector.load %arg9[%c4_233, %c0_234] : memref<16x64xf32, #tpu.memory_space<vmem>>, vector<2x32xf32>
    tpu.vector_store %arg9[%c4_233, %c0_234], %1264 {strides = array<i32>} : memref<16x64xf32, #tpu.memory_space<vmem>>, vector<2x32xf32>,
    %c10_235 = arith.constant 10 : index
    %c32_236 = arith.constant 32 : index
    %1300 = vector.load %arg9[%c10_235, %c32_236] : memref<16x64xf32, #tpu.memory_space<vmem>>, vector<2x32xf32>
    tpu.vector_store %arg9[%c10_235, %c32_236], %1294 {strides = array<i32>} : memref<16x64xf32, #tpu.memory_space<vmem>>, vector<2x32xf32>,
    %cst_237 = arith.constant dense<0.000000e+00> : vector<2x192xf32>
    %1301 = tpu.matmul %1298, %1107, %cst_237 {dimension_numbers = #tpu.dot_dimension_numbers<[1], [0], [0], [1], [0, 0, 1, 1], [], []>} : vector<2x64xf32>, vector<64x192xf32>, vector<2x192xf32> -> vector<2x192xf32>
    %1302 = vector.extract_strided_slice %1094 {offsets = [6, 0], sizes = [2, 96], strides = [1, 1]} : vector<16x96xf32> to vector<2x96xf32>
    %1303 = vector.extract_strided_slice %1301 {offsets = [0, 0], sizes = [2, 96], strides = [1, 1]} : vector<2x192xf32> to vector<2x96xf32>
    %1304 = vector.extract_strided_slice %1298 {offsets = [0, 0], sizes = [2, 32], strides = [1, 1]} : vector<2x64xf32> to vector<2x32xf32>
    %1305 = vector.extract_strided_slice %0 {offsets = [6, 0], sizes = [2, 1], strides = [1, 1]} : vector<16x1xf32> to vector<2x1xf32>
    %1306 = vector.extract_strided_slice %2 {offsets = [6, 0], sizes = [2, 1], strides = [1, 1]} : vector<16x1xf32> to vector<2x1xf32>
    %1307 = vector.extract_strided_slice %1302 {offsets = [0, 0], sizes = [2, 64], strides = [1, 1]} : vector<2x96xf32> to vector<2x64xf32>
    %1308 = vector.extract_strided_slice %1303 {offsets = [0, 0], sizes = [2, 64], strides = [1, 1]} : vector<2x96xf32> to vector<2x64xf32>
    %1309 = arith.addf %1307, %1308 : vector<2x64xf32>
    %1310 = arith.negf %1309 : vector<2x64xf32>
    %1311 = math.exp %1310 : vector<2x64xf32>
    %cst_238 = arith.constant 1.000000e+00 : f32
    %1312 = vector.broadcast %cst_238 : f32 to vector<2x64xf32>
    %1313 = arith.addf %1312, %1311 : vector<2x64xf32>
    %1314 = arith.divf %1312, %1313 : vector<2x64xf32>
    %1315 = vector.extract_strided_slice %1314 {offsets = [0, 0], sizes = [2, 32], strides = [1, 1]} : vector<2x64xf32> to vector<2x32xf32>
    %1316 = vector.extract_strided_slice %1314 {offsets = [0, 32], sizes = [2, 32], strides = [1, 1]} : vector<2x64xf32> to vector<2x32xf32>
    %1317 = vector.extract_strided_slice %1302 {offsets = [0, 64], sizes = [2, 32], strides = [1, 1]} : vector<2x96xf32> to vector<2x32xf32>
    %1318 = vector.extract_strided_slice %1303 {offsets = [0, 64], sizes = [2, 32], strides = [1, 1]} : vector<2x96xf32> to vector<2x32xf32>
    %1319 = vector.broadcast %1103 : vector<1x32xf32> to vector<2x32xf32>
    %1320 = arith.addf %1318, %1319 : vector<2x32xf32>
    %1321 = arith.mulf %1315, %1320 : vector<2x32xf32>
    %1322 = arith.addf %1317, %1321 : vector<2x32xf32>
    %1323 = math.tanh %1322 : vector<2x32xf32>
    %1324 = arith.subf %1304, %1323 : vector<2x32xf32>
    %1325 = arith.mulf %1316, %1324 : vector<2x32xf32>
    %1326 = arith.addf %1323, %1325 : vector<2x32xf32>
    %1327 = vector.broadcast %1305 : vector<2x1xf32> to vector<2x32xf32>
    %1328 = arith.mulf %1327, %1326 : vector<2x32xf32>
    %1329 = vector.broadcast %1306 : vector<2x1xf32> to vector<2x32xf32>
    %1330 = arith.mulf %1329, %1304 : vector<2x32xf32>
    %1331 = arith.addf %1328, %1330 : vector<2x32xf32>
    %1332 = vector.extract_strided_slice %1101 {offsets = [8, 0], sizes = [2, 96], strides = [1, 1]} : vector<16x96xf32> to vector<2x96xf32>
    %1333 = vector.extract_strided_slice %1301 {offsets = [0, 96], sizes = [2, 96], strides = [1, 1]} : vector<2x192xf32> to vector<2x96xf32>
    %1334 = vector.extract_strided_slice %1298 {offsets = [0, 32], sizes = [2, 32], strides = [1, 1]} : vector<2x64xf32> to vector<2x32xf32>
    %1335 = vector.extract_strided_slice %0 {offsets = [8, 0], sizes = [2, 1], strides = [1, 1]} : vector<16x1xf32> to vector<2x1xf32>
    %1336 = vector.extract_strided_slice %2 {offsets = [8, 0], sizes = [2, 1], strides = [1, 1]} : vector<16x1xf32> to vector<2x1xf32>
    %1337 = vector.extract_strided_slice %1332 {offsets = [0, 0], sizes = [2, 64], strides = [1, 1]} : vector<2x96xf32> to vector<2x64xf32>
    %1338 = vector.extract_strided_slice %1333 {offsets = [0, 0], sizes = [2, 64], strides = [1, 1]} : vector<2x96xf32> to vector<2x64xf32>
    %1339 = arith.addf %1337, %1338 : vector<2x64xf32>
    %1340 = arith.negf %1339 : vector<2x64xf32>
    %1341 = math.exp %1340 : vector<2x64xf32>
    %cst_239 = arith.constant 1.000000e+00 : f32
    %1342 = vector.broadcast %cst_239 : f32 to vector<2x64xf32>
    %1343 = arith.addf %1342, %1341 : vector<2x64xf32>
    %1344 = arith.divf %1342, %1343 : vector<2x64xf32>
    %1345 = vector.extract_strided_slice %1344 {offsets = [0, 0], sizes = [2, 32], strides = [1, 1]} : vector<2x64xf32> to vector<2x32xf32>
    %1346 = vector.extract_strided_slice %1344 {offsets = [0, 32], sizes = [2, 32], strides = [1, 1]} : vector<2x64xf32> to vector<2x32xf32>
    %1347 = vector.extract_strided_slice %1332 {offsets = [0, 64], sizes = [2, 32], strides = [1, 1]} : vector<2x96xf32> to vector<2x32xf32>
    %1348 = vector.extract_strided_slice %1333 {offsets = [0, 64], sizes = [2, 32], strides = [1, 1]} : vector<2x96xf32> to vector<2x32xf32>
    %1349 = vector.broadcast %1105 : vector<1x32xf32> to vector<2x32xf32>
    %1350 = arith.addf %1348, %1349 : vector<2x32xf32>
    %1351 = arith.mulf %1345, %1350 : vector<2x32xf32>
    %1352 = arith.addf %1347, %1351 : vector<2x32xf32>
    %1353 = math.tanh %1352 : vector<2x32xf32>
    %1354 = arith.subf %1334, %1353 : vector<2x32xf32>
    %1355 = arith.mulf %1346, %1354 : vector<2x32xf32>
    %1356 = arith.addf %1353, %1355 : vector<2x32xf32>
    %1357 = vector.broadcast %1335 : vector<2x1xf32> to vector<2x32xf32>
    %1358 = arith.mulf %1357, %1356 : vector<2x32xf32>
    %1359 = vector.broadcast %1336 : vector<2x1xf32> to vector<2x32xf32>
    %1360 = arith.mulf %1359, %1334 : vector<2x32xf32>
    %1361 = arith.addf %1358, %1360 : vector<2x32xf32>
    %1362 = tpu.concatenate %1331, %1361 in 1 : vector<2x32xf32>, vector<2x32xf32> -> vector<2x64xf32>
    %c6_240 = arith.constant 6 : index
    %c0_241 = arith.constant 0 : index
    %1363 = vector.load %arg9[%c6_240, %c0_241] : memref<16x64xf32, #tpu.memory_space<vmem>>, vector<2x32xf32>
    tpu.vector_store %arg9[%c6_240, %c0_241], %1328 {strides = array<i32>} : memref<16x64xf32, #tpu.memory_space<vmem>>, vector<2x32xf32>,
    %c8_242 = arith.constant 8 : index
    %c32_243 = arith.constant 32 : index
    %1364 = vector.load %arg9[%c8_242, %c32_243] : memref<16x64xf32, #tpu.memory_space<vmem>>, vector<2x32xf32>
    tpu.vector_store %arg9[%c8_242, %c32_243], %1358 {strides = array<i32>} : memref<16x64xf32, #tpu.memory_space<vmem>>, vector<2x32xf32>,
    %cst_244 = arith.constant dense<0.000000e+00> : vector<2x192xf32>
    %1365 = tpu.matmul %1362, %1107, %cst_244 {dimension_numbers = #tpu.dot_dimension_numbers<[1], [0], [0], [1], [0, 0, 1, 1], [], []>} : vector<2x64xf32>, vector<64x192xf32>, vector<2x192xf32> -> vector<2x192xf32>
    %1366 = vector.extract_strided_slice %1094 {offsets = [8, 0], sizes = [2, 96], strides = [1, 1]} : vector<16x96xf32> to vector<2x96xf32>
    %1367 = vector.extract_strided_slice %1365 {offsets = [0, 0], sizes = [2, 96], strides = [1, 1]} : vector<2x192xf32> to vector<2x96xf32>
    %1368 = vector.extract_strided_slice %1362 {offsets = [0, 0], sizes = [2, 32], strides = [1, 1]} : vector<2x64xf32> to vector<2x32xf32>
    %1369 = vector.extract_strided_slice %0 {offsets = [8, 0], sizes = [2, 1], strides = [1, 1]} : vector<16x1xf32> to vector<2x1xf32>
    %1370 = vector.extract_strided_slice %2 {offsets = [8, 0], sizes = [2, 1], strides = [1, 1]} : vector<16x1xf32> to vector<2x1xf32>
    %1371 = vector.extract_strided_slice %1366 {offsets = [0, 0], sizes = [2, 64], strides = [1, 1]} : vector<2x96xf32> to vector<2x64xf32>
    %1372 = vector.extract_strided_slice %1367 {offsets = [0, 0], sizes = [2, 64], strides = [1, 1]} : vector<2x96xf32> to vector<2x64xf32>
    %1373 = arith.addf %1371, %1372 : vector<2x64xf32>
    %1374 = arith.negf %1373 : vector<2x64xf32>
    %1375 = math.exp %1374 : vector<2x64xf32>
    %cst_245 = arith.constant 1.000000e+00 : f32
    %1376 = vector.broadcast %cst_245 : f32 to vector<2x64xf32>
    %1377 = arith.addf %1376, %1375 : vector<2x64xf32>
    %1378 = arith.divf %1376, %1377 : vector<2x64xf32>
    %1379 = vector.extract_strided_slice %1378 {offsets = [0, 0], sizes = [2, 32], strides = [1, 1]} : vector<2x64xf32> to vector<2x32xf32>
    %1380 = vector.extract_strided_slice %1378 {offsets = [0, 32], sizes = [2, 32], strides = [1, 1]} : vector<2x64xf32> to vector<2x32xf32>
    %1381 = vector.extract_strided_slice %1366 {offsets = [0, 64], sizes = [2, 32], strides = [1, 1]} : vector<2x96xf32> to vector<2x32xf32>
    %1382 = vector.extract_strided_slice %1367 {offsets = [0, 64], sizes = [2, 32], strides = [1, 1]} : vector<2x96xf32> to vector<2x32xf32>
    %1383 = vector.broadcast %1103 : vector<1x32xf32> to vector<2x32xf32>
    %1384 = arith.addf %1382, %1383 : vector<2x32xf32>
    %1385 = arith.mulf %1379, %1384 : vector<2x32xf32>
    %1386 = arith.addf %1381, %1385 : vector<2x32xf32>
    %1387 = math.tanh %1386 : vector<2x32xf32>
    %1388 = arith.subf %1368, %1387 : vector<2x32xf32>
    %1389 = arith.mulf %1380, %1388 : vector<2x32xf32>
    %1390 = arith.addf %1387, %1389 : vector<2x32xf32>
    %1391 = vector.broadcast %1369 : vector<2x1xf32> to vector<2x32xf32>
    %1392 = arith.mulf %1391, %1390 : vector<2x32xf32>
    %1393 = vector.broadcast %1370 : vector<2x1xf32> to vector<2x32xf32>
    %1394 = arith.mulf %1393, %1368 : vector<2x32xf32>
    %1395 = arith.addf %1392, %1394 : vector<2x32xf32>
    %1396 = vector.extract_strided_slice %1101 {offsets = [6, 0], sizes = [2, 96], strides = [1, 1]} : vector<16x96xf32> to vector<2x96xf32>
    %1397 = vector.extract_strided_slice %1365 {offsets = [0, 96], sizes = [2, 96], strides = [1, 1]} : vector<2x192xf32> to vector<2x96xf32>
    %1398 = vector.extract_strided_slice %1362 {offsets = [0, 32], sizes = [2, 32], strides = [1, 1]} : vector<2x64xf32> to vector<2x32xf32>
    %1399 = vector.extract_strided_slice %0 {offsets = [6, 0], sizes = [2, 1], strides = [1, 1]} : vector<16x1xf32> to vector<2x1xf32>
    %1400 = vector.extract_strided_slice %2 {offsets = [6, 0], sizes = [2, 1], strides = [1, 1]} : vector<16x1xf32> to vector<2x1xf32>
    %1401 = vector.extract_strided_slice %1396 {offsets = [0, 0], sizes = [2, 64], strides = [1, 1]} : vector<2x96xf32> to vector<2x64xf32>
    %1402 = vector.extract_strided_slice %1397 {offsets = [0, 0], sizes = [2, 64], strides = [1, 1]} : vector<2x96xf32> to vector<2x64xf32>
    %1403 = arith.addf %1401, %1402 : vector<2x64xf32>
    %1404 = arith.negf %1403 : vector<2x64xf32>
    %1405 = math.exp %1404 : vector<2x64xf32>
    %cst_246 = arith.constant 1.000000e+00 : f32
    %1406 = vector.broadcast %cst_246 : f32 to vector<2x64xf32>
    %1407 = arith.addf %1406, %1405 : vector<2x64xf32>
    %1408 = arith.divf %1406, %1407 : vector<2x64xf32>
    %1409 = vector.extract_strided_slice %1408 {offsets = [0, 0], sizes = [2, 32], strides = [1, 1]} : vector<2x64xf32> to vector<2x32xf32>
    %1410 = vector.extract_strided_slice %1408 {offsets = [0, 32], sizes = [2, 32], strides = [1, 1]} : vector<2x64xf32> to vector<2x32xf32>
    %1411 = vector.extract_strided_slice %1396 {offsets = [0, 64], sizes = [2, 32], strides = [1, 1]} : vector<2x96xf32> to vector<2x32xf32>
    %1412 = vector.extract_strided_slice %1397 {offsets = [0, 64], sizes = [2, 32], strides = [1, 1]} : vector<2x96xf32> to vector<2x32xf32>
    %1413 = vector.broadcast %1105 : vector<1x32xf32> to vector<2x32xf32>
    %1414 = arith.addf %1412, %1413 : vector<2x32xf32>
    %1415 = arith.mulf %1409, %1414 : vector<2x32xf32>
    %1416 = arith.addf %1411, %1415 : vector<2x32xf32>
    %1417 = math.tanh %1416 : vector<2x32xf32>
    %1418 = arith.subf %1398, %1417 : vector<2x32xf32>
    %1419 = arith.mulf %1410, %1418 : vector<2x32xf32>
    %1420 = arith.addf %1417, %1419 : vector<2x32xf32>
    %1421 = vector.broadcast %1399 : vector<2x1xf32> to vector<2x32xf32>
    %1422 = arith.mulf %1421, %1420 : vector<2x32xf32>
    %1423 = vector.broadcast %1400 : vector<2x1xf32> to vector<2x32xf32>
    %1424 = arith.mulf %1423, %1398 : vector<2x32xf32>
    %1425 = arith.addf %1422, %1424 : vector<2x32xf32>
    %1426 = tpu.concatenate %1395, %1425 in 1 : vector<2x32xf32>, vector<2x32xf32> -> vector<2x64xf32>
    %c8_247 = arith.constant 8 : index
    %c0_248 = arith.constant 0 : index
    %1427 = vector.load %arg9[%c8_247, %c0_248] : memref<16x64xf32, #tpu.memory_space<vmem>>, vector<2x32xf32>
    tpu.vector_store %arg9[%c8_247, %c0_248], %1392 {strides = array<i32>} : memref<16x64xf32, #tpu.memory_space<vmem>>, vector<2x32xf32>,
    %c6_249 = arith.constant 6 : index
    %c32_250 = arith.constant 32 : index
    %1428 = vector.load %arg9[%c6_249, %c32_250] : memref<16x64xf32, #tpu.memory_space<vmem>>, vector<2x32xf32>
    tpu.vector_store %arg9[%c6_249, %c32_250], %1422 {strides = array<i32>} : memref<16x64xf32, #tpu.memory_space<vmem>>, vector<2x32xf32>,
    %cst_251 = arith.constant dense<0.000000e+00> : vector<2x192xf32>
    %1429 = tpu.matmul %1426, %1107, %cst_251 {dimension_numbers = #tpu.dot_dimension_numbers<[1], [0], [0], [1], [0, 0, 1, 1], [], []>} : vector<2x64xf32>, vector<64x192xf32>, vector<2x192xf32> -> vector<2x192xf32>
    %1430 = vector.extract_strided_slice %1094 {offsets = [10, 0], sizes = [2, 96], strides = [1, 1]} : vector<16x96xf32> to vector<2x96xf32>
    %1431 = vector.extract_strided_slice %1429 {offsets = [0, 0], sizes = [2, 96], strides = [1, 1]} : vector<2x192xf32> to vector<2x96xf32>
    %1432 = vector.extract_strided_slice %1426 {offsets = [0, 0], sizes = [2, 32], strides = [1, 1]} : vector<2x64xf32> to vector<2x32xf32>
    %1433 = vector.extract_strided_slice %0 {offsets = [10, 0], sizes = [2, 1], strides = [1, 1]} : vector<16x1xf32> to vector<2x1xf32>
    %1434 = vector.extract_strided_slice %2 {offsets = [10, 0], sizes = [2, 1], strides = [1, 1]} : vector<16x1xf32> to vector<2x1xf32>
    %1435 = vector.extract_strided_slice %1430 {offsets = [0, 0], sizes = [2, 64], strides = [1, 1]} : vector<2x96xf32> to vector<2x64xf32>
    %1436 = vector.extract_strided_slice %1431 {offsets = [0, 0], sizes = [2, 64], strides = [1, 1]} : vector<2x96xf32> to vector<2x64xf32>
    %1437 = arith.addf %1435, %1436 : vector<2x64xf32>
    %1438 = arith.negf %1437 : vector<2x64xf32>
    %1439 = math.exp %1438 : vector<2x64xf32>
    %cst_252 = arith.constant 1.000000e+00 : f32
    %1440 = vector.broadcast %cst_252 : f32 to vector<2x64xf32>
    %1441 = arith.addf %1440, %1439 : vector<2x64xf32>
    %1442 = arith.divf %1440, %1441 : vector<2x64xf32>
    %1443 = vector.extract_strided_slice %1442 {offsets = [0, 0], sizes = [2, 32], strides = [1, 1]} : vector<2x64xf32> to vector<2x32xf32>
    %1444 = vector.extract_strided_slice %1442 {offsets = [0, 32], sizes = [2, 32], strides = [1, 1]} : vector<2x64xf32> to vector<2x32xf32>
    %1445 = vector.extract_strided_slice %1430 {offsets = [0, 64], sizes = [2, 32], strides = [1, 1]} : vector<2x96xf32> to vector<2x32xf32>
    %1446 = vector.extract_strided_slice %1431 {offsets = [0, 64], sizes = [2, 32], strides = [1, 1]} : vector<2x96xf32> to vector<2x32xf32>
    %1447 = vector.broadcast %1103 : vector<1x32xf32> to vector<2x32xf32>
    %1448 = arith.addf %1446, %1447 : vector<2x32xf32>
    %1449 = arith.mulf %1443, %1448 : vector<2x32xf32>
    %1450 = arith.addf %1445, %1449 : vector<2x32xf32>
    %1451 = math.tanh %1450 : vector<2x32xf32>
    %1452 = arith.subf %1432, %1451 : vector<2x32xf32>
    %1453 = arith.mulf %1444, %1452 : vector<2x32xf32>
    %1454 = arith.addf %1451, %1453 : vector<2x32xf32>
    %1455 = vector.broadcast %1433 : vector<2x1xf32> to vector<2x32xf32>
    %1456 = arith.mulf %1455, %1454 : vector<2x32xf32>
    %1457 = vector.broadcast %1434 : vector<2x1xf32> to vector<2x32xf32>
    %1458 = arith.mulf %1457, %1432 : vector<2x32xf32>
    %1459 = arith.addf %1456, %1458 : vector<2x32xf32>
    %1460 = vector.extract_strided_slice %1101 {offsets = [4, 0], sizes = [2, 96], strides = [1, 1]} : vector<16x96xf32> to vector<2x96xf32>
    %1461 = vector.extract_strided_slice %1429 {offsets = [0, 96], sizes = [2, 96], strides = [1, 1]} : vector<2x192xf32> to vector<2x96xf32>
    %1462 = vector.extract_strided_slice %1426 {offsets = [0, 32], sizes = [2, 32], strides = [1, 1]} : vector<2x64xf32> to vector<2x32xf32>
    %1463 = vector.extract_strided_slice %0 {offsets = [4, 0], sizes = [2, 1], strides = [1, 1]} : vector<16x1xf32> to vector<2x1xf32>
    %1464 = vector.extract_strided_slice %2 {offsets = [4, 0], sizes = [2, 1], strides = [1, 1]} : vector<16x1xf32> to vector<2x1xf32>
    %1465 = vector.extract_strided_slice %1460 {offsets = [0, 0], sizes = [2, 64], strides = [1, 1]} : vector<2x96xf32> to vector<2x64xf32>
    %1466 = vector.extract_strided_slice %1461 {offsets = [0, 0], sizes = [2, 64], strides = [1, 1]} : vector<2x96xf32> to vector<2x64xf32>
    %1467 = arith.addf %1465, %1466 : vector<2x64xf32>
    %1468 = arith.negf %1467 : vector<2x64xf32>
    %1469 = math.exp %1468 : vector<2x64xf32>
    %cst_253 = arith.constant 1.000000e+00 : f32
    %1470 = vector.broadcast %cst_253 : f32 to vector<2x64xf32>
    %1471 = arith.addf %1470, %1469 : vector<2x64xf32>
    %1472 = arith.divf %1470, %1471 : vector<2x64xf32>
    %1473 = vector.extract_strided_slice %1472 {offsets = [0, 0], sizes = [2, 32], strides = [1, 1]} : vector<2x64xf32> to vector<2x32xf32>
    %1474 = vector.extract_strided_slice %1472 {offsets = [0, 32], sizes = [2, 32], strides = [1, 1]} : vector<2x64xf32> to vector<2x32xf32>
    %1475 = vector.extract_strided_slice %1460 {offsets = [0, 64], sizes = [2, 32], strides = [1, 1]} : vector<2x96xf32> to vector<2x32xf32>
    %1476 = vector.extract_strided_slice %1461 {offsets = [0, 64], sizes = [2, 32], strides = [1, 1]} : vector<2x96xf32> to vector<2x32xf32>
    %1477 = vector.broadcast %1105 : vector<1x32xf32> to vector<2x32xf32>
    %1478 = arith.addf %1476, %1477 : vector<2x32xf32>
    %1479 = arith.mulf %1473, %1478 : vector<2x32xf32>
    %1480 = arith.addf %1475, %1479 : vector<2x32xf32>
    %1481 = math.tanh %1480 : vector<2x32xf32>
    %1482 = arith.subf %1462, %1481 : vector<2x32xf32>
    %1483 = arith.mulf %1474, %1482 : vector<2x32xf32>
    %1484 = arith.addf %1481, %1483 : vector<2x32xf32>
    %1485 = vector.broadcast %1463 : vector<2x1xf32> to vector<2x32xf32>
    %1486 = arith.mulf %1485, %1484 : vector<2x32xf32>
    %1487 = vector.broadcast %1464 : vector<2x1xf32> to vector<2x32xf32>
    %1488 = arith.mulf %1487, %1462 : vector<2x32xf32>
    %1489 = arith.addf %1486, %1488 : vector<2x32xf32>
    %1490 = tpu.concatenate %1459, %1489 in 1 : vector<2x32xf32>, vector<2x32xf32> -> vector<2x64xf32>
    %c10_254 = arith.constant 10 : index
    %c0_255 = arith.constant 0 : index
    %1491 = vector.load %arg9[%c10_254, %c0_255] : memref<16x64xf32, #tpu.memory_space<vmem>>, vector<2x32xf32>
    tpu.vector_store %arg9[%c10_254, %c0_255], %1456 {strides = array<i32>} : memref<16x64xf32, #tpu.memory_space<vmem>>, vector<2x32xf32>,
    %c4_256 = arith.constant 4 : index
    %c32_257 = arith.constant 32 : index
    %1492 = vector.load %arg9[%c4_256, %c32_257] : memref<16x64xf32, #tpu.memory_space<vmem>>, vector<2x32xf32>
    tpu.vector_store %arg9[%c4_256, %c32_257], %1486 {strides = array<i32>} : memref<16x64xf32, #tpu.memory_space<vmem>>, vector<2x32xf32>,
    %cst_258 = arith.constant dense<0.000000e+00> : vector<2x192xf32>
    %1493 = tpu.matmul %1490, %1107, %cst_258 {dimension_numbers = #tpu.dot_dimension_numbers<[1], [0], [0], [1], [0, 0, 1, 1], [], []>} : vector<2x64xf32>, vector<64x192xf32>, vector<2x192xf32> -> vector<2x192xf32>
    %1494 = vector.extract_strided_slice %1094 {offsets = [12, 0], sizes = [2, 96], strides = [1, 1]} : vector<16x96xf32> to vector<2x96xf32>
    %1495 = vector.extract_strided_slice %1493 {offsets = [0, 0], sizes = [2, 96], strides = [1, 1]} : vector<2x192xf32> to vector<2x96xf32>
    %1496 = vector.extract_strided_slice %1490 {offsets = [0, 0], sizes = [2, 32], strides = [1, 1]} : vector<2x64xf32> to vector<2x32xf32>
    %1497 = vector.extract_strided_slice %0 {offsets = [12, 0], sizes = [2, 1], strides = [1, 1]} : vector<16x1xf32> to vector<2x1xf32>
    %1498 = vector.extract_strided_slice %2 {offsets = [12, 0], sizes = [2, 1], strides = [1, 1]} : vector<16x1xf32> to vector<2x1xf32>
    %1499 = vector.extract_strided_slice %1494 {offsets = [0, 0], sizes = [2, 64], strides = [1, 1]} : vector<2x96xf32> to vector<2x64xf32>
    %1500 = vector.extract_strided_slice %1495 {offsets = [0, 0], sizes = [2, 64], strides = [1, 1]} : vector<2x96xf32> to vector<2x64xf32>
    %1501 = arith.addf %1499, %1500 : vector<2x64xf32>
    %1502 = arith.negf %1501 : vector<2x64xf32>
    %1503 = math.exp %1502 : vector<2x64xf32>
    %cst_259 = arith.constant 1.000000e+00 : f32
    %1504 = vector.broadcast %cst_259 : f32 to vector<2x64xf32>
    %1505 = arith.addf %1504, %1503 : vector<2x64xf32>
    %1506 = arith.divf %1504, %1505 : vector<2x64xf32>
    %1507 = vector.extract_strided_slice %1506 {offsets = [0, 0], sizes = [2, 32], strides = [1, 1]} : vector<2x64xf32> to vector<2x32xf32>
    %1508 = vector.extract_strided_slice %1506 {offsets = [0, 32], sizes = [2, 32], strides = [1, 1]} : vector<2x64xf32> to vector<2x32xf32>
    %1509 = vector.extract_strided_slice %1494 {offsets = [0, 64], sizes = [2, 32], strides = [1, 1]} : vector<2x96xf32> to vector<2x32xf32>
    %1510 = vector.extract_strided_slice %1495 {offsets = [0, 64], sizes = [2, 32], strides = [1, 1]} : vector<2x96xf32> to vector<2x32xf32>
    %1511 = vector.broadcast %1103 : vector<1x32xf32> to vector<2x32xf32>
    %1512 = arith.addf %1510, %1511 : vector<2x32xf32>
    %1513 = arith.mulf %1507, %1512 : vector<2x32xf32>
    %1514 = arith.addf %1509, %1513 : vector<2x32xf32>
    %1515 = math.tanh %1514 : vector<2x32xf32>
    %1516 = arith.subf %1496, %1515 : vector<2x32xf32>
    %1517 = arith.mulf %1508, %1516 : vector<2x32xf32>
    %1518 = arith.addf %1515, %1517 : vector<2x32xf32>
    %1519 = vector.broadcast %1497 : vector<2x1xf32> to vector<2x32xf32>
    %1520 = arith.mulf %1519, %1518 : vector<2x32xf32>
    %1521 = vector.broadcast %1498 : vector<2x1xf32> to vector<2x32xf32>
    %1522 = arith.mulf %1521, %1496 : vector<2x32xf32>
    %1523 = arith.addf %1520, %1522 : vector<2x32xf32>
    %1524 = vector.extract_strided_slice %1101 {offsets = [2, 0], sizes = [2, 96], strides = [1, 1]} : vector<16x96xf32> to vector<2x96xf32>
    %1525 = vector.extract_strided_slice %1493 {offsets = [0, 96], sizes = [2, 96], strides = [1, 1]} : vector<2x192xf32> to vector<2x96xf32>
    %1526 = vector.extract_strided_slice %1490 {offsets = [0, 32], sizes = [2, 32], strides = [1, 1]} : vector<2x64xf32> to vector<2x32xf32>
    %1527 = vector.extract_strided_slice %0 {offsets = [2, 0], sizes = [2, 1], strides = [1, 1]} : vector<16x1xf32> to vector<2x1xf32>
    %1528 = vector.extract_strided_slice %2 {offsets = [2, 0], sizes = [2, 1], strides = [1, 1]} : vector<16x1xf32> to vector<2x1xf32>
    %1529 = vector.extract_strided_slice %1524 {offsets = [0, 0], sizes = [2, 64], strides = [1, 1]} : vector<2x96xf32> to vector<2x64xf32>
    %1530 = vector.extract_strided_slice %1525 {offsets = [0, 0], sizes = [2, 64], strides = [1, 1]} : vector<2x96xf32> to vector<2x64xf32>
    %1531 = arith.addf %1529, %1530 : vector<2x64xf32>
    %1532 = arith.negf %1531 : vector<2x64xf32>
    %1533 = math.exp %1532 : vector<2x64xf32>
    %cst_260 = arith.constant 1.000000e+00 : f32
    %1534 = vector.broadcast %cst_260 : f32 to vector<2x64xf32>
    %1535 = arith.addf %1534, %1533 : vector<2x64xf32>
    %1536 = arith.divf %1534, %1535 : vector<2x64xf32>
    %1537 = vector.extract_strided_slice %1536 {offsets = [0, 0], sizes = [2, 32], strides = [1, 1]} : vector<2x64xf32> to vector<2x32xf32>
    %1538 = vector.extract_strided_slice %1536 {offsets = [0, 32], sizes = [2, 32], strides = [1, 1]} : vector<2x64xf32> to vector<2x32xf32>
    %1539 = vector.extract_strided_slice %1524 {offsets = [0, 64], sizes = [2, 32], strides = [1, 1]} : vector<2x96xf32> to vector<2x32xf32>
    %1540 = vector.extract_strided_slice %1525 {offsets = [0, 64], sizes = [2, 32], strides = [1, 1]} : vector<2x96xf32> to vector<2x32xf32>
    %1541 = vector.broadcast %1105 : vector<1x32xf32> to vector<2x32xf32>
    %1542 = arith.addf %1540, %1541 : vector<2x32xf32>
    %1543 = arith.mulf %1537, %1542 : vector<2x32xf32>
    %1544 = arith.addf %1539, %1543 : vector<2x32xf32>
    %1545 = math.tanh %1544 : vector<2x32xf32>
    %1546 = arith.subf %1526, %1545 : vector<2x32xf32>
    %1547 = arith.mulf %1538, %1546 : vector<2x32xf32>
    %1548 = arith.addf %1545, %1547 : vector<2x32xf32>
    %1549 = vector.broadcast %1527 : vector<2x1xf32> to vector<2x32xf32>
    %1550 = arith.mulf %1549, %1548 : vector<2x32xf32>
    %1551 = vector.broadcast %1528 : vector<2x1xf32> to vector<2x32xf32>
    %1552 = arith.mulf %1551, %1526 : vector<2x32xf32>
    %1553 = arith.addf %1550, %1552 : vector<2x32xf32>
    %1554 = tpu.concatenate %1523, %1553 in 1 : vector<2x32xf32>, vector<2x32xf32> -> vector<2x64xf32>
    %c12_261 = arith.constant 12 : index
    %c0_262 = arith.constant 0 : index
    %1555 = vector.load %arg9[%c12_261, %c0_262] : memref<16x64xf32, #tpu.memory_space<vmem>>, vector<2x32xf32>
    tpu.vector_store %arg9[%c12_261, %c0_262], %1520 {strides = array<i32>} : memref<16x64xf32, #tpu.memory_space<vmem>>, vector<2x32xf32>,
    %c2_263 = arith.constant 2 : index
    %c32_264 = arith.constant 32 : index
    %1556 = vector.load %arg9[%c2_263, %c32_264] : memref<16x64xf32, #tpu.memory_space<vmem>>, vector<2x32xf32>
    tpu.vector_store %arg9[%c2_263, %c32_264], %1550 {strides = array<i32>} : memref<16x64xf32, #tpu.memory_space<vmem>>, vector<2x32xf32>,
    %cst_265 = arith.constant dense<0.000000e+00> : vector<2x192xf32>
    %1557 = tpu.matmul %1554, %1107, %cst_265 {dimension_numbers = #tpu.dot_dimension_numbers<[1], [0], [0], [1], [0, 0, 1, 1], [], []>} : vector<2x64xf32>, vector<64x192xf32>, vector<2x192xf32> -> vector<2x192xf32>
    %1558 = vector.extract_strided_slice %1094 {offsets = [14, 0], sizes = [2, 96], strides = [1, 1]} : vector<16x96xf32> to vector<2x96xf32>
    %1559 = vector.extract_strided_slice %1557 {offsets = [0, 0], sizes = [2, 96], strides = [1, 1]} : vector<2x192xf32> to vector<2x96xf32>
    %1560 = vector.extract_strided_slice %1554 {offsets = [0, 0], sizes = [2, 32], strides = [1, 1]} : vector<2x64xf32> to vector<2x32xf32>
    %1561 = vector.extract_strided_slice %0 {offsets = [14, 0], sizes = [2, 1], strides = [1, 1]} : vector<16x1xf32> to vector<2x1xf32>
    %1562 = vector.extract_strided_slice %2 {offsets = [14, 0], sizes = [2, 1], strides = [1, 1]} : vector<16x1xf32> to vector<2x1xf32>
    %1563 = vector.extract_strided_slice %1558 {offsets = [0, 0], sizes = [2, 64], strides = [1, 1]} : vector<2x96xf32> to vector<2x64xf32>
    %1564 = vector.extract_strided_slice %1559 {offsets = [0, 0], sizes = [2, 64], strides = [1, 1]} : vector<2x96xf32> to vector<2x64xf32>
    %1565 = arith.addf %1563, %1564 : vector<2x64xf32>
    %1566 = arith.negf %1565 : vector<2x64xf32>
    %1567 = math.exp %1566 : vector<2x64xf32>
    %cst_266 = arith.constant 1.000000e+00 : f32
    %1568 = vector.broadcast %cst_266 : f32 to vector<2x64xf32>
    %1569 = arith.addf %1568, %1567 : vector<2x64xf32>
    %1570 = arith.divf %1568, %1569 : vector<2x64xf32>
    %1571 = vector.extract_strided_slice %1570 {offsets = [0, 0], sizes = [2, 32], strides = [1, 1]} : vector<2x64xf32> to vector<2x32xf32>
    %1572 = vector.extract_strided_slice %1570 {offsets = [0, 32], sizes = [2, 32], strides = [1, 1]} : vector<2x64xf32> to vector<2x32xf32>
    %1573 = vector.extract_strided_slice %1558 {offsets = [0, 64], sizes = [2, 32], strides = [1, 1]} : vector<2x96xf32> to vector<2x32xf32>
    %1574 = vector.extract_strided_slice %1559 {offsets = [0, 64], sizes = [2, 32], strides = [1, 1]} : vector<2x96xf32> to vector<2x32xf32>
    %1575 = vector.broadcast %1103 : vector<1x32xf32> to vector<2x32xf32>
    %1576 = arith.addf %1574, %1575 : vector<2x32xf32>
    %1577 = arith.mulf %1571, %1576 : vector<2x32xf32>
    %1578 = arith.addf %1573, %1577 : vector<2x32xf32>
    %1579 = math.tanh %1578 : vector<2x32xf32>
    %1580 = arith.subf %1560, %1579 : vector<2x32xf32>
    %1581 = arith.mulf %1572, %1580 : vector<2x32xf32>
    %1582 = arith.addf %1579, %1581 : vector<2x32xf32>
    %1583 = vector.broadcast %1561 : vector<2x1xf32> to vector<2x32xf32>
    %1584 = arith.mulf %1583, %1582 : vector<2x32xf32>
    %1585 = vector.broadcast %1562 : vector<2x1xf32> to vector<2x32xf32>
    %1586 = arith.mulf %1585, %1560 : vector<2x32xf32>
    %1587 = arith.addf %1584, %1586 : vector<2x32xf32>
    %1588 = vector.extract_strided_slice %1101 {offsets = [0, 0], sizes = [2, 96], strides = [1, 1]} : vector<16x96xf32> to vector<2x96xf32>
    %1589 = vector.extract_strided_slice %1557 {offsets = [0, 96], sizes = [2, 96], strides = [1, 1]} : vector<2x192xf32> to vector<2x96xf32>
    %1590 = vector.extract_strided_slice %1554 {offsets = [0, 32], sizes = [2, 32], strides = [1, 1]} : vector<2x64xf32> to vector<2x32xf32>
    %1591 = vector.extract_strided_slice %0 {offsets = [0, 0], sizes = [2, 1], strides = [1, 1]} : vector<16x1xf32> to vector<2x1xf32>
    %1592 = vector.extract_strided_slice %2 {offsets = [0, 0], sizes = [2, 1], strides = [1, 1]} : vector<16x1xf32> to vector<2x1xf32>
    %1593 = vector.extract_strided_slice %1588 {offsets = [0, 0], sizes = [2, 64], strides = [1, 1]} : vector<2x96xf32> to vector<2x64xf32>
    %1594 = vector.extract_strided_slice %1589 {offsets = [0, 0], sizes = [2, 64], strides = [1, 1]} : vector<2x96xf32> to vector<2x64xf32>
    %1595 = arith.addf %1593, %1594 : vector<2x64xf32>
    %1596 = arith.negf %1595 : vector<2x64xf32>
    %1597 = math.exp %1596 : vector<2x64xf32>
    %cst_267 = arith.constant 1.000000e+00 : f32
    %1598 = vector.broadcast %cst_267 : f32 to vector<2x64xf32>
    %1599 = arith.addf %1598, %1597 : vector<2x64xf32>
    %1600 = arith.divf %1598, %1599 : vector<2x64xf32>
    %1601 = vector.extract_strided_slice %1600 {offsets = [0, 0], sizes = [2, 32], strides = [1, 1]} : vector<2x64xf32> to vector<2x32xf32>
    %1602 = vector.extract_strided_slice %1600 {offsets = [0, 32], sizes = [2, 32], strides = [1, 1]} : vector<2x64xf32> to vector<2x32xf32>
    %1603 = vector.extract_strided_slice %1588 {offsets = [0, 64], sizes = [2, 32], strides = [1, 1]} : vector<2x96xf32> to vector<2x32xf32>
    %1604 = vector.extract_strided_slice %1589 {offsets = [0, 64], sizes = [2, 32], strides = [1, 1]} : vector<2x96xf32> to vector<2x32xf32>
    %1605 = vector.broadcast %1105 : vector<1x32xf32> to vector<2x32xf32>
    %1606 = arith.addf %1604, %1605 : vector<2x32xf32>
    %1607 = arith.mulf %1601, %1606 : vector<2x32xf32>
    %1608 = arith.addf %1603, %1607 : vector<2x32xf32>
    %1609 = math.tanh %1608 : vector<2x32xf32>
    %1610 = arith.subf %1590, %1609 : vector<2x32xf32>
    %1611 = arith.mulf %1602, %1610 : vector<2x32xf32>
    %1612 = arith.addf %1609, %1611 : vector<2x32xf32>
    %1613 = vector.broadcast %1591 : vector<2x1xf32> to vector<2x32xf32>
    %1614 = arith.mulf %1613, %1612 : vector<2x32xf32>
    %1615 = vector.broadcast %1592 : vector<2x1xf32> to vector<2x32xf32>
    %1616 = arith.mulf %1615, %1590 : vector<2x32xf32>
    %1617 = arith.addf %1614, %1616 : vector<2x32xf32>
    %1618 = tpu.concatenate %1587, %1617 in 1 : vector<2x32xf32>, vector<2x32xf32> -> vector<2x64xf32>
    %c14_268 = arith.constant 14 : index
    %c0_269 = arith.constant 0 : index
    %1619 = vector.load %arg9[%c14_268, %c0_269] : memref<16x64xf32, #tpu.memory_space<vmem>>, vector<2x32xf32>
    tpu.vector_store %arg9[%c14_268, %c0_269], %1584 {strides = array<i32>} : memref<16x64xf32, #tpu.memory_space<vmem>>, vector<2x32xf32>,
    %c0_270 = arith.constant 0 : index
    %c32_271 = arith.constant 32 : index
    %1620 = vector.load %arg9[%c0_270, %c32_271] : memref<16x64xf32, #tpu.memory_space<vmem>>, vector<2x32xf32>
    tpu.vector_store %arg9[%c0_270, %c32_271], %1614 {strides = array<i32>} : memref<16x64xf32, #tpu.memory_space<vmem>>, vector<2x32xf32>,
    %1621 = vector.extract_strided_slice %1618 {offsets = [0, 0], sizes = [2, 32], strides = [1, 1]} : vector<2x64xf32> to vector<2x32xf32>
    %c2_272 = arith.constant 2 : index
    %c0_273 = arith.constant 0 : index
    %c0_274 = arith.constant 0 : index
    %c0_275 = arith.constant 0 : index
    %1622 = vector.load %arg8[%c2_272, %c0_273, %c0_274, %c0_275] : memref<4x2x2x32xf32, #tpu.memory_space<vmem>>, vector<1x1x2x32xf32>
    %1623 = vector.shape_cast %1622 : vector<1x1x2x32xf32> to vector<2x32xf32>
    %1624 = vector.shape_cast %1621 : vector<2x32xf32> to vector<1x1x2x32xf32>
    tpu.vector_store %arg8[%c2_272, %c0_273, %c0_274, %c0_275], %1624 {strides = array<i32>} : memref<4x2x2x32xf32, #tpu.memory_space<vmem>>, vector<1x1x2x32xf32>,
    %1625 = vector.extract_strided_slice %1618 {offsets = [0, 32], sizes = [2, 32], strides = [1, 1]} : vector<2x64xf32> to vector<2x32xf32>
    %c2_276 = arith.constant 2 : index
    %c1_277 = arith.constant 1 : index
    %c0_278 = arith.constant 0 : index
    %c0_279 = arith.constant 0 : index
    %1626 = vector.load %arg8[%c2_276, %c1_277, %c0_278, %c0_279] : memref<4x2x2x32xf32, #tpu.memory_space<vmem>>, vector<1x1x2x32xf32>
    %1627 = vector.shape_cast %1626 : vector<1x1x2x32xf32> to vector<2x32xf32>
    %1628 = vector.shape_cast %1625 : vector<2x32xf32> to vector<1x1x2x32xf32>
    tpu.vector_store %arg8[%c2_276, %c1_277, %c0_278, %c0_279], %1628 {strides = array<i32>} : memref<4x2x2x32xf32, #tpu.memory_space<vmem>>, vector<1x1x2x32xf32>,
    %c0_280 = arith.constant 0 : index
    %c0_281 = arith.constant 0 : index
    %1629 = vector.load %arg9[%c0_280, %c0_281] : memref<16x64xf32, #tpu.memory_space<vmem>>, vector<16x64xf32>
    %c3 = arith.constant 3 : index
    %c0_282 = arith.constant 0 : index
    %c0_283 = arith.constant 0 : index
    %c0_284 = arith.constant 0 : index
    %1630 = vector.load %arg3[%c3, %c0_282, %c0_283, %c0_284] : memref<4x2x64x96xf32, #tpu.memory_space<vmem>>, vector<1x1x64x96xf32>
    %1631 = vector.shape_cast %1630 : vector<1x1x64x96xf32> to vector<64x96xf32>
    %cst_285 = arith.constant dense<0.000000e+00> : vector<16x96xf32>
    %1632 = tpu.matmul %1629, %1631, %cst_285 {dimension_numbers = #tpu.dot_dimension_numbers<[1], [0], [0], [1], [0, 0, 1, 1], [], []>} : vector<16x64xf32>, vector<64x96xf32>, vector<16x96xf32> -> vector<16x96xf32>
    %c3_286 = arith.constant 3 : index
    %c0_287 = arith.constant 0 : index
    %c0_288 = arith.constant 0 : index
    %c0_289 = arith.constant 0 : index
    %1633 = vector.load %arg5[%c3_286, %c0_287, %c0_288, %c0_289] : memref<4x2x1x96xf32, #tpu.memory_space<vmem>>, vector<1x1x1x96xf32>
    %1634 = vector.shape_cast %1633 : vector<1x1x1x96xf32> to vector<1x96xf32>
    %1635 = vector.broadcast %1634 : vector<1x96xf32> to vector<16x96xf32>
    %1636 = arith.addf %1632, %1635 : vector<16x96xf32>
    %c3_290 = arith.constant 3 : index
    %c1_291 = arith.constant 1 : index
    %c0_292 = arith.constant 0 : index
    %c0_293 = arith.constant 0 : index
    %1637 = vector.load %arg3[%c3_290, %c1_291, %c0_292, %c0_293] : memref<4x2x64x96xf32, #tpu.memory_space<vmem>>, vector<1x1x64x96xf32>
    %1638 = vector.shape_cast %1637 : vector<1x1x64x96xf32> to vector<64x96xf32>
    %cst_294 = arith.constant dense<0.000000e+00> : vector<16x96xf32>
    %1639 = tpu.matmul %1629, %1638, %cst_294 {dimension_numbers = #tpu.dot_dimension_numbers<[1], [0], [0], [1], [0, 0, 1, 1], [], []>} : vector<16x64xf32>, vector<64x96xf32>, vector<16x96xf32> -> vector<16x96xf32>
    %c3_295 = arith.constant 3 : index
    %c1_296 = arith.constant 1 : index
    %c0_297 = arith.constant 0 : index
    %c0_298 = arith.constant 0 : index
    %1640 = vector.load %arg5[%c3_295, %c1_296, %c0_297, %c0_298] : memref<4x2x1x96xf32, #tpu.memory_space<vmem>>, vector<1x1x1x96xf32>
    %1641 = vector.shape_cast %1640 : vector<1x1x1x96xf32> to vector<1x96xf32>
    %1642 = vector.broadcast %1641 : vector<1x96xf32> to vector<16x96xf32>
    %1643 = arith.addf %1639, %1642 : vector<16x96xf32>
    %c3_299 = arith.constant 3 : index
    %c0_300 = arith.constant 0 : index
    %c0_301 = arith.constant 0 : index
    %c0_302 = arith.constant 0 : index
    %1644 = vector.load %arg6[%c3_299, %c0_300, %c0_301, %c0_302] : memref<4x2x1x32xf32, #tpu.memory_space<vmem>>, vector<1x1x1x32xf32>
    %1645 = vector.shape_cast %1644 : vector<1x1x1x32xf32> to vector<1x32xf32>
    %c3_303 = arith.constant 3 : index
    %c1_304 = arith.constant 1 : index
    %c0_305 = arith.constant 0 : index
    %c0_306 = arith.constant 0 : index
    %1646 = vector.load %arg6[%c3_303, %c1_304, %c0_305, %c0_306] : memref<4x2x1x32xf32, #tpu.memory_space<vmem>>, vector<1x1x1x32xf32>
    %1647 = vector.shape_cast %1646 : vector<1x1x1x32xf32> to vector<1x32xf32>
    %c3_307 = arith.constant 3 : index
    %c0_308 = arith.constant 0 : index
    %c0_309 = arith.constant 0 : index
    %1648 = vector.load %arg4[%c3_307, %c0_308, %c0_309] : memref<4x64x192xf32, #tpu.memory_space<vmem>>, vector<1x64x192xf32>
    %1649 = vector.shape_cast %1648 : vector<1x64x192xf32> to vector<64x192xf32>
    %cst_310 = arith.constant 0.000000e+00 : f32
    %1650 = vector.broadcast %cst_310 : f32 to vector<2x64xf32>
    %cst_311 = arith.constant dense<0.000000e+00> : vector<2x192xf32>
    %1651 = tpu.matmul %1650, %1649, %cst_311 {dimension_numbers = #tpu.dot_dimension_numbers<[1], [0], [0], [1], [0, 0, 1, 1], [], []>} : vector<2x64xf32>, vector<64x192xf32>, vector<2x192xf32> -> vector<2x192xf32>
    %1652 = vector.extract_strided_slice %1636 {offsets = [0, 0], sizes = [2, 96], strides = [1, 1]} : vector<16x96xf32> to vector<2x96xf32>
    %1653 = vector.extract_strided_slice %1651 {offsets = [0, 0], sizes = [2, 96], strides = [1, 1]} : vector<2x192xf32> to vector<2x96xf32>
    %1654 = vector.extract_strided_slice %1650 {offsets = [0, 0], sizes = [2, 32], strides = [1, 1]} : vector<2x64xf32> to vector<2x32xf32>
    %1655 = vector.extract_strided_slice %0 {offsets = [0, 0], sizes = [2, 1], strides = [1, 1]} : vector<16x1xf32> to vector<2x1xf32>
    %1656 = vector.extract_strided_slice %2 {offsets = [0, 0], sizes = [2, 1], strides = [1, 1]} : vector<16x1xf32> to vector<2x1xf32>
    %1657 = vector.extract_strided_slice %1652 {offsets = [0, 0], sizes = [2, 64], strides = [1, 1]} : vector<2x96xf32> to vector<2x64xf32>
    %1658 = vector.extract_strided_slice %1653 {offsets = [0, 0], sizes = [2, 64], strides = [1, 1]} : vector<2x96xf32> to vector<2x64xf32>
    %1659 = arith.addf %1657, %1658 : vector<2x64xf32>
    %1660 = arith.negf %1659 : vector<2x64xf32>
    %1661 = math.exp %1660 : vector<2x64xf32>
    %cst_312 = arith.constant 1.000000e+00 : f32
    %1662 = vector.broadcast %cst_312 : f32 to vector<2x64xf32>
    %1663 = arith.addf %1662, %1661 : vector<2x64xf32>
    %1664 = arith.divf %1662, %1663 : vector<2x64xf32>
    %1665 = vector.extract_strided_slice %1664 {offsets = [0, 0], sizes = [2, 32], strides = [1, 1]} : vector<2x64xf32> to vector<2x32xf32>
    %1666 = vector.extract_strided_slice %1664 {offsets = [0, 32], sizes = [2, 32], strides = [1, 1]} : vector<2x64xf32> to vector<2x32xf32>
    %1667 = vector.extract_strided_slice %1652 {offsets = [0, 64], sizes = [2, 32], strides = [1, 1]} : vector<2x96xf32> to vector<2x32xf32>
    %1668 = vector.extract_strided_slice %1653 {offsets = [0, 64], sizes = [2, 32], strides = [1, 1]} : vector<2x96xf32> to vector<2x32xf32>
    %1669 = vector.broadcast %1645 : vector<1x32xf32> to vector<2x32xf32>
    %1670 = arith.addf %1668, %1669 : vector<2x32xf32>
    %1671 = arith.mulf %1665, %1670 : vector<2x32xf32>
    %1672 = arith.addf %1667, %1671 : vector<2x32xf32>
    %1673 = math.tanh %1672 : vector<2x32xf32>
    %1674 = arith.subf %1654, %1673 : vector<2x32xf32>
    %1675 = arith.mulf %1666, %1674 : vector<2x32xf32>
    %1676 = arith.addf %1673, %1675 : vector<2x32xf32>
    %1677 = vector.broadcast %1655 : vector<2x1xf32> to vector<2x32xf32>
    %1678 = arith.mulf %1677, %1676 : vector<2x32xf32>
    %1679 = vector.broadcast %1656 : vector<2x1xf32> to vector<2x32xf32>
    %1680 = arith.mulf %1679, %1654 : vector<2x32xf32>
    %1681 = arith.addf %1678, %1680 : vector<2x32xf32>
    %1682 = vector.extract_strided_slice %1643 {offsets = [14, 0], sizes = [2, 96], strides = [1, 1]} : vector<16x96xf32> to vector<2x96xf32>
    %1683 = vector.extract_strided_slice %1651 {offsets = [0, 96], sizes = [2, 96], strides = [1, 1]} : vector<2x192xf32> to vector<2x96xf32>
    %1684 = vector.extract_strided_slice %1650 {offsets = [0, 32], sizes = [2, 32], strides = [1, 1]} : vector<2x64xf32> to vector<2x32xf32>
    %1685 = vector.extract_strided_slice %0 {offsets = [14, 0], sizes = [2, 1], strides = [1, 1]} : vector<16x1xf32> to vector<2x1xf32>
    %1686 = vector.extract_strided_slice %2 {offsets = [14, 0], sizes = [2, 1], strides = [1, 1]} : vector<16x1xf32> to vector<2x1xf32>
    %1687 = vector.extract_strided_slice %1682 {offsets = [0, 0], sizes = [2, 64], strides = [1, 1]} : vector<2x96xf32> to vector<2x64xf32>
    %1688 = vector.extract_strided_slice %1683 {offsets = [0, 0], sizes = [2, 64], strides = [1, 1]} : vector<2x96xf32> to vector<2x64xf32>
    %1689 = arith.addf %1687, %1688 : vector<2x64xf32>
    %1690 = arith.negf %1689 : vector<2x64xf32>
    %1691 = math.exp %1690 : vector<2x64xf32>
    %cst_313 = arith.constant 1.000000e+00 : f32
    %1692 = vector.broadcast %cst_313 : f32 to vector<2x64xf32>
    %1693 = arith.addf %1692, %1691 : vector<2x64xf32>
    %1694 = arith.divf %1692, %1693 : vector<2x64xf32>
    %1695 = vector.extract_strided_slice %1694 {offsets = [0, 0], sizes = [2, 32], strides = [1, 1]} : vector<2x64xf32> to vector<2x32xf32>
    %1696 = vector.extract_strided_slice %1694 {offsets = [0, 32], sizes = [2, 32], strides = [1, 1]} : vector<2x64xf32> to vector<2x32xf32>
    %1697 = vector.extract_strided_slice %1682 {offsets = [0, 64], sizes = [2, 32], strides = [1, 1]} : vector<2x96xf32> to vector<2x32xf32>
    %1698 = vector.extract_strided_slice %1683 {offsets = [0, 64], sizes = [2, 32], strides = [1, 1]} : vector<2x96xf32> to vector<2x32xf32>
    %1699 = vector.broadcast %1647 : vector<1x32xf32> to vector<2x32xf32>
    %1700 = arith.addf %1698, %1699 : vector<2x32xf32>
    %1701 = arith.mulf %1695, %1700 : vector<2x32xf32>
    %1702 = arith.addf %1697, %1701 : vector<2x32xf32>
    %1703 = math.tanh %1702 : vector<2x32xf32>
    %1704 = arith.subf %1684, %1703 : vector<2x32xf32>
    %1705 = arith.mulf %1696, %1704 : vector<2x32xf32>
    %1706 = arith.addf %1703, %1705 : vector<2x32xf32>
    %1707 = vector.broadcast %1685 : vector<2x1xf32> to vector<2x32xf32>
    %1708 = arith.mulf %1707, %1706 : vector<2x32xf32>
    %1709 = vector.broadcast %1686 : vector<2x1xf32> to vector<2x32xf32>
    %1710 = arith.mulf %1709, %1684 : vector<2x32xf32>
    %1711 = arith.addf %1708, %1710 : vector<2x32xf32>
    %1712 = tpu.concatenate %1681, %1711 in 1 : vector<2x32xf32>, vector<2x32xf32> -> vector<2x64xf32>
    %c0_314 = arith.constant 0 : index
    %c0_315 = arith.constant 0 : index
    %1713 = vector.load %arg7[%c0_314, %c0_315] : memref<16x64xf32, #tpu.memory_space<vmem>>, vector<2x32xf32>
    tpu.vector_store %arg7[%c0_314, %c0_315], %1678 {strides = array<i32>} : memref<16x64xf32, #tpu.memory_space<vmem>>, vector<2x32xf32>,
    %c14_316 = arith.constant 14 : index
    %c32_317 = arith.constant 32 : index
    %1714 = vector.load %arg7[%c14_316, %c32_317] : memref<16x64xf32, #tpu.memory_space<vmem>>, vector<2x32xf32>
    tpu.vector_store %arg7[%c14_316, %c32_317], %1708 {strides = array<i32>} : memref<16x64xf32, #tpu.memory_space<vmem>>, vector<2x32xf32>,
    %cst_318 = arith.constant dense<0.000000e+00> : vector<2x192xf32>
    %1715 = tpu.matmul %1712, %1649, %cst_318 {dimension_numbers = #tpu.dot_dimension_numbers<[1], [0], [0], [1], [0, 0, 1, 1], [], []>} : vector<2x64xf32>, vector<64x192xf32>, vector<2x192xf32> -> vector<2x192xf32>
    %1716 = vector.extract_strided_slice %1636 {offsets = [2, 0], sizes = [2, 96], strides = [1, 1]} : vector<16x96xf32> to vector<2x96xf32>
    %1717 = vector.extract_strided_slice %1715 {offsets = [0, 0], sizes = [2, 96], strides = [1, 1]} : vector<2x192xf32> to vector<2x96xf32>
    %1718 = vector.extract_strided_slice %1712 {offsets = [0, 0], sizes = [2, 32], strides = [1, 1]} : vector<2x64xf32> to vector<2x32xf32>
    %1719 = vector.extract_strided_slice %0 {offsets = [2, 0], sizes = [2, 1], strides = [1, 1]} : vector<16x1xf32> to vector<2x1xf32>
    %1720 = vector.extract_strided_slice %2 {offsets = [2, 0], sizes = [2, 1], strides = [1, 1]} : vector<16x1xf32> to vector<2x1xf32>
    %1721 = vector.extract_strided_slice %1716 {offsets = [0, 0], sizes = [2, 64], strides = [1, 1]} : vector<2x96xf32> to vector<2x64xf32>
    %1722 = vector.extract_strided_slice %1717 {offsets = [0, 0], sizes = [2, 64], strides = [1, 1]} : vector<2x96xf32> to vector<2x64xf32>
    %1723 = arith.addf %1721, %1722 : vector<2x64xf32>
    %1724 = arith.negf %1723 : vector<2x64xf32>
    %1725 = math.exp %1724 : vector<2x64xf32>
    %cst_319 = arith.constant 1.000000e+00 : f32
    %1726 = vector.broadcast %cst_319 : f32 to vector<2x64xf32>
    %1727 = arith.addf %1726, %1725 : vector<2x64xf32>
    %1728 = arith.divf %1726, %1727 : vector<2x64xf32>
    %1729 = vector.extract_strided_slice %1728 {offsets = [0, 0], sizes = [2, 32], strides = [1, 1]} : vector<2x64xf32> to vector<2x32xf32>
    %1730 = vector.extract_strided_slice %1728 {offsets = [0, 32], sizes = [2, 32], strides = [1, 1]} : vector<2x64xf32> to vector<2x32xf32>
    %1731 = vector.extract_strided_slice %1716 {offsets = [0, 64], sizes = [2, 32], strides = [1, 1]} : vector<2x96xf32> to vector<2x32xf32>
    %1732 = vector.extract_strided_slice %1717 {offsets = [0, 64], sizes = [2, 32], strides = [1, 1]} : vector<2x96xf32> to vector<2x32xf32>
    %1733 = vector.broadcast %1645 : vector<1x32xf32> to vector<2x32xf32>
    %1734 = arith.addf %1732, %1733 : vector<2x32xf32>
    %1735 = arith.mulf %1729, %1734 : vector<2x32xf32>
    %1736 = arith.addf %1731, %1735 : vector<2x32xf32>
    %1737 = math.tanh %1736 : vector<2x32xf32>
    %1738 = arith.subf %1718, %1737 : vector<2x32xf32>
    %1739 = arith.mulf %1730, %1738 : vector<2x32xf32>
    %1740 = arith.addf %1737, %1739 : vector<2x32xf32>
    %1741 = vector.broadcast %1719 : vector<2x1xf32> to vector<2x32xf32>
    %1742 = arith.mulf %1741, %1740 : vector<2x32xf32>
    %1743 = vector.broadcast %1720 : vector<2x1xf32> to vector<2x32xf32>
    %1744 = arith.mulf %1743, %1718 : vector<2x32xf32>
    %1745 = arith.addf %1742, %1744 : vector<2x32xf32>
    %1746 = vector.extract_strided_slice %1643 {offsets = [12, 0], sizes = [2, 96], strides = [1, 1]} : vector<16x96xf32> to vector<2x96xf32>
    %1747 = vector.extract_strided_slice %1715 {offsets = [0, 96], sizes = [2, 96], strides = [1, 1]} : vector<2x192xf32> to vector<2x96xf32>
    %1748 = vector.extract_strided_slice %1712 {offsets = [0, 32], sizes = [2, 32], strides = [1, 1]} : vector<2x64xf32> to vector<2x32xf32>
    %1749 = vector.extract_strided_slice %0 {offsets = [12, 0], sizes = [2, 1], strides = [1, 1]} : vector<16x1xf32> to vector<2x1xf32>
    %1750 = vector.extract_strided_slice %2 {offsets = [12, 0], sizes = [2, 1], strides = [1, 1]} : vector<16x1xf32> to vector<2x1xf32>
    %1751 = vector.extract_strided_slice %1746 {offsets = [0, 0], sizes = [2, 64], strides = [1, 1]} : vector<2x96xf32> to vector<2x64xf32>
    %1752 = vector.extract_strided_slice %1747 {offsets = [0, 0], sizes = [2, 64], strides = [1, 1]} : vector<2x96xf32> to vector<2x64xf32>
    %1753 = arith.addf %1751, %1752 : vector<2x64xf32>
    %1754 = arith.negf %1753 : vector<2x64xf32>
    %1755 = math.exp %1754 : vector<2x64xf32>
    %cst_320 = arith.constant 1.000000e+00 : f32
    %1756 = vector.broadcast %cst_320 : f32 to vector<2x64xf32>
    %1757 = arith.addf %1756, %1755 : vector<2x64xf32>
    %1758 = arith.divf %1756, %1757 : vector<2x64xf32>
    %1759 = vector.extract_strided_slice %1758 {offsets = [0, 0], sizes = [2, 32], strides = [1, 1]} : vector<2x64xf32> to vector<2x32xf32>
    %1760 = vector.extract_strided_slice %1758 {offsets = [0, 32], sizes = [2, 32], strides = [1, 1]} : vector<2x64xf32> to vector<2x32xf32>
    %1761 = vector.extract_strided_slice %1746 {offsets = [0, 64], sizes = [2, 32], strides = [1, 1]} : vector<2x96xf32> to vector<2x32xf32>
    %1762 = vector.extract_strided_slice %1747 {offsets = [0, 64], sizes = [2, 32], strides = [1, 1]} : vector<2x96xf32> to vector<2x32xf32>
    %1763 = vector.broadcast %1647 : vector<1x32xf32> to vector<2x32xf32>
    %1764 = arith.addf %1762, %1763 : vector<2x32xf32>
    %1765 = arith.mulf %1759, %1764 : vector<2x32xf32>
    %1766 = arith.addf %1761, %1765 : vector<2x32xf32>
    %1767 = math.tanh %1766 : vector<2x32xf32>
    %1768 = arith.subf %1748, %1767 : vector<2x32xf32>
    %1769 = arith.mulf %1760, %1768 : vector<2x32xf32>
    %1770 = arith.addf %1767, %1769 : vector<2x32xf32>
    %1771 = vector.broadcast %1749 : vector<2x1xf32> to vector<2x32xf32>
    %1772 = arith.mulf %1771, %1770 : vector<2x32xf32>
    %1773 = vector.broadcast %1750 : vector<2x1xf32> to vector<2x32xf32>
    %1774 = arith.mulf %1773, %1748 : vector<2x32xf32>
    %1775 = arith.addf %1772, %1774 : vector<2x32xf32>
    %1776 = tpu.concatenate %1745, %1775 in 1 : vector<2x32xf32>, vector<2x32xf32> -> vector<2x64xf32>
    %c2_321 = arith.constant 2 : index
    %c0_322 = arith.constant 0 : index
    %1777 = vector.load %arg7[%c2_321, %c0_322] : memref<16x64xf32, #tpu.memory_space<vmem>>, vector<2x32xf32>
    tpu.vector_store %arg7[%c2_321, %c0_322], %1742 {strides = array<i32>} : memref<16x64xf32, #tpu.memory_space<vmem>>, vector<2x32xf32>,
    %c12_323 = arith.constant 12 : index
    %c32_324 = arith.constant 32 : index
    %1778 = vector.load %arg7[%c12_323, %c32_324] : memref<16x64xf32, #tpu.memory_space<vmem>>, vector<2x32xf32>
    tpu.vector_store %arg7[%c12_323, %c32_324], %1772 {strides = array<i32>} : memref<16x64xf32, #tpu.memory_space<vmem>>, vector<2x32xf32>,
    %cst_325 = arith.constant dense<0.000000e+00> : vector<2x192xf32>
    %1779 = tpu.matmul %1776, %1649, %cst_325 {dimension_numbers = #tpu.dot_dimension_numbers<[1], [0], [0], [1], [0, 0, 1, 1], [], []>} : vector<2x64xf32>, vector<64x192xf32>, vector<2x192xf32> -> vector<2x192xf32>
    %1780 = vector.extract_strided_slice %1636 {offsets = [4, 0], sizes = [2, 96], strides = [1, 1]} : vector<16x96xf32> to vector<2x96xf32>
    %1781 = vector.extract_strided_slice %1779 {offsets = [0, 0], sizes = [2, 96], strides = [1, 1]} : vector<2x192xf32> to vector<2x96xf32>
    %1782 = vector.extract_strided_slice %1776 {offsets = [0, 0], sizes = [2, 32], strides = [1, 1]} : vector<2x64xf32> to vector<2x32xf32>
    %1783 = vector.extract_strided_slice %0 {offsets = [4, 0], sizes = [2, 1], strides = [1, 1]} : vector<16x1xf32> to vector<2x1xf32>
    %1784 = vector.extract_strided_slice %2 {offsets = [4, 0], sizes = [2, 1], strides = [1, 1]} : vector<16x1xf32> to vector<2x1xf32>
    %1785 = vector.extract_strided_slice %1780 {offsets = [0, 0], sizes = [2, 64], strides = [1, 1]} : vector<2x96xf32> to vector<2x64xf32>
    %1786 = vector.extract_strided_slice %1781 {offsets = [0, 0], sizes = [2, 64], strides = [1, 1]} : vector<2x96xf32> to vector<2x64xf32>
    %1787 = arith.addf %1785, %1786 : vector<2x64xf32>
    %1788 = arith.negf %1787 : vector<2x64xf32>
    %1789 = math.exp %1788 : vector<2x64xf32>
    %cst_326 = arith.constant 1.000000e+00 : f32
    %1790 = vector.broadcast %cst_326 : f32 to vector<2x64xf32>
    %1791 = arith.addf %1790, %1789 : vector<2x64xf32>
    %1792 = arith.divf %1790, %1791 : vector<2x64xf32>
    %1793 = vector.extract_strided_slice %1792 {offsets = [0, 0], sizes = [2, 32], strides = [1, 1]} : vector<2x64xf32> to vector<2x32xf32>
    %1794 = vector.extract_strided_slice %1792 {offsets = [0, 32], sizes = [2, 32], strides = [1, 1]} : vector<2x64xf32> to vector<2x32xf32>
    %1795 = vector.extract_strided_slice %1780 {offsets = [0, 64], sizes = [2, 32], strides = [1, 1]} : vector<2x96xf32> to vector<2x32xf32>
    %1796 = vector.extract_strided_slice %1781 {offsets = [0, 64], sizes = [2, 32], strides = [1, 1]} : vector<2x96xf32> to vector<2x32xf32>
    %1797 = vector.broadcast %1645 : vector<1x32xf32> to vector<2x32xf32>
    %1798 = arith.addf %1796, %1797 : vector<2x32xf32>
    %1799 = arith.mulf %1793, %1798 : vector<2x32xf32>
    %1800 = arith.addf %1795, %1799 : vector<2x32xf32>
    %1801 = math.tanh %1800 : vector<2x32xf32>
    %1802 = arith.subf %1782, %1801 : vector<2x32xf32>
    %1803 = arith.mulf %1794, %1802 : vector<2x32xf32>
    %1804 = arith.addf %1801, %1803 : vector<2x32xf32>
    %1805 = vector.broadcast %1783 : vector<2x1xf32> to vector<2x32xf32>
    %1806 = arith.mulf %1805, %1804 : vector<2x32xf32>
    %1807 = vector.broadcast %1784 : vector<2x1xf32> to vector<2x32xf32>
    %1808 = arith.mulf %1807, %1782 : vector<2x32xf32>
    %1809 = arith.addf %1806, %1808 : vector<2x32xf32>
    %1810 = vector.extract_strided_slice %1643 {offsets = [10, 0], sizes = [2, 96], strides = [1, 1]} : vector<16x96xf32> to vector<2x96xf32>
    %1811 = vector.extract_strided_slice %1779 {offsets = [0, 96], sizes = [2, 96], strides = [1, 1]} : vector<2x192xf32> to vector<2x96xf32>
    %1812 = vector.extract_strided_slice %1776 {offsets = [0, 32], sizes = [2, 32], strides = [1, 1]} : vector<2x64xf32> to vector<2x32xf32>
    %1813 = vector.extract_strided_slice %0 {offsets = [10, 0], sizes = [2, 1], strides = [1, 1]} : vector<16x1xf32> to vector<2x1xf32>
    %1814 = vector.extract_strided_slice %2 {offsets = [10, 0], sizes = [2, 1], strides = [1, 1]} : vector<16x1xf32> to vector<2x1xf32>
    %1815 = vector.extract_strided_slice %1810 {offsets = [0, 0], sizes = [2, 64], strides = [1, 1]} : vector<2x96xf32> to vector<2x64xf32>
    %1816 = vector.extract_strided_slice %1811 {offsets = [0, 0], sizes = [2, 64], strides = [1, 1]} : vector<2x96xf32> to vector<2x64xf32>
    %1817 = arith.addf %1815, %1816 : vector<2x64xf32>
    %1818 = arith.negf %1817 : vector<2x64xf32>
    %1819 = math.exp %1818 : vector<2x64xf32>
    %cst_327 = arith.constant 1.000000e+00 : f32
    %1820 = vector.broadcast %cst_327 : f32 to vector<2x64xf32>
    %1821 = arith.addf %1820, %1819 : vector<2x64xf32>
    %1822 = arith.divf %1820, %1821 : vector<2x64xf32>
    %1823 = vector.extract_strided_slice %1822 {offsets = [0, 0], sizes = [2, 32], strides = [1, 1]} : vector<2x64xf32> to vector<2x32xf32>
    %1824 = vector.extract_strided_slice %1822 {offsets = [0, 32], sizes = [2, 32], strides = [1, 1]} : vector<2x64xf32> to vector<2x32xf32>
    %1825 = vector.extract_strided_slice %1810 {offsets = [0, 64], sizes = [2, 32], strides = [1, 1]} : vector<2x96xf32> to vector<2x32xf32>
    %1826 = vector.extract_strided_slice %1811 {offsets = [0, 64], sizes = [2, 32], strides = [1, 1]} : vector<2x96xf32> to vector<2x32xf32>
    %1827 = vector.broadcast %1647 : vector<1x32xf32> to vector<2x32xf32>
    %1828 = arith.addf %1826, %1827 : vector<2x32xf32>
    %1829 = arith.mulf %1823, %1828 : vector<2x32xf32>
    %1830 = arith.addf %1825, %1829 : vector<2x32xf32>
    %1831 = math.tanh %1830 : vector<2x32xf32>
    %1832 = arith.subf %1812, %1831 : vector<2x32xf32>
    %1833 = arith.mulf %1824, %1832 : vector<2x32xf32>
    %1834 = arith.addf %1831, %1833 : vector<2x32xf32>
    %1835 = vector.broadcast %1813 : vector<2x1xf32> to vector<2x32xf32>
    %1836 = arith.mulf %1835, %1834 : vector<2x32xf32>
    %1837 = vector.broadcast %1814 : vector<2x1xf32> to vector<2x32xf32>
    %1838 = arith.mulf %1837, %1812 : vector<2x32xf32>
    %1839 = arith.addf %1836, %1838 : vector<2x32xf32>
    %1840 = tpu.concatenate %1809, %1839 in 1 : vector<2x32xf32>, vector<2x32xf32> -> vector<2x64xf32>
    %c4_328 = arith.constant 4 : index
    %c0_329 = arith.constant 0 : index
    %1841 = vector.load %arg7[%c4_328, %c0_329] : memref<16x64xf32, #tpu.memory_space<vmem>>, vector<2x32xf32>
    tpu.vector_store %arg7[%c4_328, %c0_329], %1806 {strides = array<i32>} : memref<16x64xf32, #tpu.memory_space<vmem>>, vector<2x32xf32>,
    %c10_330 = arith.constant 10 : index
    %c32_331 = arith.constant 32 : index
    %1842 = vector.load %arg7[%c10_330, %c32_331] : memref<16x64xf32, #tpu.memory_space<vmem>>, vector<2x32xf32>
    tpu.vector_store %arg7[%c10_330, %c32_331], %1836 {strides = array<i32>} : memref<16x64xf32, #tpu.memory_space<vmem>>, vector<2x32xf32>,
    %cst_332 = arith.constant dense<0.000000e+00> : vector<2x192xf32>
    %1843 = tpu.matmul %1840, %1649, %cst_332 {dimension_numbers = #tpu.dot_dimension_numbers<[1], [0], [0], [1], [0, 0, 1, 1], [], []>} : vector<2x64xf32>, vector<64x192xf32>, vector<2x192xf32> -> vector<2x192xf32>
    %1844 = vector.extract_strided_slice %1636 {offsets = [6, 0], sizes = [2, 96], strides = [1, 1]} : vector<16x96xf32> to vector<2x96xf32>
    %1845 = vector.extract_strided_slice %1843 {offsets = [0, 0], sizes = [2, 96], strides = [1, 1]} : vector<2x192xf32> to vector<2x96xf32>
    %1846 = vector.extract_strided_slice %1840 {offsets = [0, 0], sizes = [2, 32], strides = [1, 1]} : vector<2x64xf32> to vector<2x32xf32>
    %1847 = vector.extract_strided_slice %0 {offsets = [6, 0], sizes = [2, 1], strides = [1, 1]} : vector<16x1xf32> to vector<2x1xf32>
    %1848 = vector.extract_strided_slice %2 {offsets = [6, 0], sizes = [2, 1], strides = [1, 1]} : vector<16x1xf32> to vector<2x1xf32>
    %1849 = vector.extract_strided_slice %1844 {offsets = [0, 0], sizes = [2, 64], strides = [1, 1]} : vector<2x96xf32> to vector<2x64xf32>
    %1850 = vector.extract_strided_slice %1845 {offsets = [0, 0], sizes = [2, 64], strides = [1, 1]} : vector<2x96xf32> to vector<2x64xf32>
    %1851 = arith.addf %1849, %1850 : vector<2x64xf32>
    %1852 = arith.negf %1851 : vector<2x64xf32>
    %1853 = math.exp %1852 : vector<2x64xf32>
    %cst_333 = arith.constant 1.000000e+00 : f32
    %1854 = vector.broadcast %cst_333 : f32 to vector<2x64xf32>
    %1855 = arith.addf %1854, %1853 : vector<2x64xf32>
    %1856 = arith.divf %1854, %1855 : vector<2x64xf32>
    %1857 = vector.extract_strided_slice %1856 {offsets = [0, 0], sizes = [2, 32], strides = [1, 1]} : vector<2x64xf32> to vector<2x32xf32>
    %1858 = vector.extract_strided_slice %1856 {offsets = [0, 32], sizes = [2, 32], strides = [1, 1]} : vector<2x64xf32> to vector<2x32xf32>
    %1859 = vector.extract_strided_slice %1844 {offsets = [0, 64], sizes = [2, 32], strides = [1, 1]} : vector<2x96xf32> to vector<2x32xf32>
    %1860 = vector.extract_strided_slice %1845 {offsets = [0, 64], sizes = [2, 32], strides = [1, 1]} : vector<2x96xf32> to vector<2x32xf32>
    %1861 = vector.broadcast %1645 : vector<1x32xf32> to vector<2x32xf32>
    %1862 = arith.addf %1860, %1861 : vector<2x32xf32>
    %1863 = arith.mulf %1857, %1862 : vector<2x32xf32>
    %1864 = arith.addf %1859, %1863 : vector<2x32xf32>
    %1865 = math.tanh %1864 : vector<2x32xf32>
    %1866 = arith.subf %1846, %1865 : vector<2x32xf32>
    %1867 = arith.mulf %1858, %1866 : vector<2x32xf32>
    %1868 = arith.addf %1865, %1867 : vector<2x32xf32>
    %1869 = vector.broadcast %1847 : vector<2x1xf32> to vector<2x32xf32>
    %1870 = arith.mulf %1869, %1868 : vector<2x32xf32>
    %1871 = vector.broadcast %1848 : vector<2x1xf32> to vector<2x32xf32>
    %1872 = arith.mulf %1871, %1846 : vector<2x32xf32>
    %1873 = arith.addf %1870, %1872 : vector<2x32xf32>
    %1874 = vector.extract_strided_slice %1643 {offsets = [8, 0], sizes = [2, 96], strides = [1, 1]} : vector<16x96xf32> to vector<2x96xf32>
    %1875 = vector.extract_strided_slice %1843 {offsets = [0, 96], sizes = [2, 96], strides = [1, 1]} : vector<2x192xf32> to vector<2x96xf32>
    %1876 = vector.extract_strided_slice %1840 {offsets = [0, 32], sizes = [2, 32], strides = [1, 1]} : vector<2x64xf32> to vector<2x32xf32>
    %1877 = vector.extract_strided_slice %0 {offsets = [8, 0], sizes = [2, 1], strides = [1, 1]} : vector<16x1xf32> to vector<2x1xf32>
    %1878 = vector.extract_strided_slice %2 {offsets = [8, 0], sizes = [2, 1], strides = [1, 1]} : vector<16x1xf32> to vector<2x1xf32>
    %1879 = vector.extract_strided_slice %1874 {offsets = [0, 0], sizes = [2, 64], strides = [1, 1]} : vector<2x96xf32> to vector<2x64xf32>
    %1880 = vector.extract_strided_slice %1875 {offsets = [0, 0], sizes = [2, 64], strides = [1, 1]} : vector<2x96xf32> to vector<2x64xf32>
    %1881 = arith.addf %1879, %1880 : vector<2x64xf32>
    %1882 = arith.negf %1881 : vector<2x64xf32>
    %1883 = math.exp %1882 : vector<2x64xf32>
    %cst_334 = arith.constant 1.000000e+00 : f32
    %1884 = vector.broadcast %cst_334 : f32 to vector<2x64xf32>
    %1885 = arith.addf %1884, %1883 : vector<2x64xf32>
    %1886 = arith.divf %1884, %1885 : vector<2x64xf32>
    %1887 = vector.extract_strided_slice %1886 {offsets = [0, 0], sizes = [2, 32], strides = [1, 1]} : vector<2x64xf32> to vector<2x32xf32>
    %1888 = vector.extract_strided_slice %1886 {offsets = [0, 32], sizes = [2, 32], strides = [1, 1]} : vector<2x64xf32> to vector<2x32xf32>
    %1889 = vector.extract_strided_slice %1874 {offsets = [0, 64], sizes = [2, 32], strides = [1, 1]} : vector<2x96xf32> to vector<2x32xf32>
    %1890 = vector.extract_strided_slice %1875 {offsets = [0, 64], sizes = [2, 32], strides = [1, 1]} : vector<2x96xf32> to vector<2x32xf32>
    %1891 = vector.broadcast %1647 : vector<1x32xf32> to vector<2x32xf32>
    %1892 = arith.addf %1890, %1891 : vector<2x32xf32>
    %1893 = arith.mulf %1887, %1892 : vector<2x32xf32>
    %1894 = arith.addf %1889, %1893 : vector<2x32xf32>
    %1895 = math.tanh %1894 : vector<2x32xf32>
    %1896 = arith.subf %1876, %1895 : vector<2x32xf32>
    %1897 = arith.mulf %1888, %1896 : vector<2x32xf32>
    %1898 = arith.addf %1895, %1897 : vector<2x32xf32>
    %1899 = vector.broadcast %1877 : vector<2x1xf32> to vector<2x32xf32>
    %1900 = arith.mulf %1899, %1898 : vector<2x32xf32>
    %1901 = vector.broadcast %1878 : vector<2x1xf32> to vector<2x32xf32>
    %1902 = arith.mulf %1901, %1876 : vector<2x32xf32>
    %1903 = arith.addf %1900, %1902 : vector<2x32xf32>
    %1904 = tpu.concatenate %1873, %1903 in 1 : vector<2x32xf32>, vector<2x32xf32> -> vector<2x64xf32>
    %c6_335 = arith.constant 6 : index
    %c0_336 = arith.constant 0 : index
    %1905 = vector.load %arg7[%c6_335, %c0_336] : memref<16x64xf32, #tpu.memory_space<vmem>>, vector<2x32xf32>
    tpu.vector_store %arg7[%c6_335, %c0_336], %1870 {strides = array<i32>} : memref<16x64xf32, #tpu.memory_space<vmem>>, vector<2x32xf32>,
    %c8_337 = arith.constant 8 : index
    %c32_338 = arith.constant 32 : index
    %1906 = vector.load %arg7[%c8_337, %c32_338] : memref<16x64xf32, #tpu.memory_space<vmem>>, vector<2x32xf32>
    tpu.vector_store %arg7[%c8_337, %c32_338], %1900 {strides = array<i32>} : memref<16x64xf32, #tpu.memory_space<vmem>>, vector<2x32xf32>,
    %cst_339 = arith.constant dense<0.000000e+00> : vector<2x192xf32>
    %1907 = tpu.matmul %1904, %1649, %cst_339 {dimension_numbers = #tpu.dot_dimension_numbers<[1], [0], [0], [1], [0, 0, 1, 1], [], []>} : vector<2x64xf32>, vector<64x192xf32>, vector<2x192xf32> -> vector<2x192xf32>
    %1908 = vector.extract_strided_slice %1636 {offsets = [8, 0], sizes = [2, 96], strides = [1, 1]} : vector<16x96xf32> to vector<2x96xf32>
    %1909 = vector.extract_strided_slice %1907 {offsets = [0, 0], sizes = [2, 96], strides = [1, 1]} : vector<2x192xf32> to vector<2x96xf32>
    %1910 = vector.extract_strided_slice %1904 {offsets = [0, 0], sizes = [2, 32], strides = [1, 1]} : vector<2x64xf32> to vector<2x32xf32>
    %1911 = vector.extract_strided_slice %0 {offsets = [8, 0], sizes = [2, 1], strides = [1, 1]} : vector<16x1xf32> to vector<2x1xf32>
    %1912 = vector.extract_strided_slice %2 {offsets = [8, 0], sizes = [2, 1], strides = [1, 1]} : vector<16x1xf32> to vector<2x1xf32>
    %1913 = vector.extract_strided_slice %1908 {offsets = [0, 0], sizes = [2, 64], strides = [1, 1]} : vector<2x96xf32> to vector<2x64xf32>
    %1914 = vector.extract_strided_slice %1909 {offsets = [0, 0], sizes = [2, 64], strides = [1, 1]} : vector<2x96xf32> to vector<2x64xf32>
    %1915 = arith.addf %1913, %1914 : vector<2x64xf32>
    %1916 = arith.negf %1915 : vector<2x64xf32>
    %1917 = math.exp %1916 : vector<2x64xf32>
    %cst_340 = arith.constant 1.000000e+00 : f32
    %1918 = vector.broadcast %cst_340 : f32 to vector<2x64xf32>
    %1919 = arith.addf %1918, %1917 : vector<2x64xf32>
    %1920 = arith.divf %1918, %1919 : vector<2x64xf32>
    %1921 = vector.extract_strided_slice %1920 {offsets = [0, 0], sizes = [2, 32], strides = [1, 1]} : vector<2x64xf32> to vector<2x32xf32>
    %1922 = vector.extract_strided_slice %1920 {offsets = [0, 32], sizes = [2, 32], strides = [1, 1]} : vector<2x64xf32> to vector<2x32xf32>
    %1923 = vector.extract_strided_slice %1908 {offsets = [0, 64], sizes = [2, 32], strides = [1, 1]} : vector<2x96xf32> to vector<2x32xf32>
    %1924 = vector.extract_strided_slice %1909 {offsets = [0, 64], sizes = [2, 32], strides = [1, 1]} : vector<2x96xf32> to vector<2x32xf32>
    %1925 = vector.broadcast %1645 : vector<1x32xf32> to vector<2x32xf32>
    %1926 = arith.addf %1924, %1925 : vector<2x32xf32>
    %1927 = arith.mulf %1921, %1926 : vector<2x32xf32>
    %1928 = arith.addf %1923, %1927 : vector<2x32xf32>
    %1929 = math.tanh %1928 : vector<2x32xf32>
    %1930 = arith.subf %1910, %1929 : vector<2x32xf32>
    %1931 = arith.mulf %1922, %1930 : vector<2x32xf32>
    %1932 = arith.addf %1929, %1931 : vector<2x32xf32>
    %1933 = vector.broadcast %1911 : vector<2x1xf32> to vector<2x32xf32>
    %1934 = arith.mulf %1933, %1932 : vector<2x32xf32>
    %1935 = vector.broadcast %1912 : vector<2x1xf32> to vector<2x32xf32>
    %1936 = arith.mulf %1935, %1910 : vector<2x32xf32>
    %1937 = arith.addf %1934, %1936 : vector<2x32xf32>
    %1938 = vector.extract_strided_slice %1643 {offsets = [6, 0], sizes = [2, 96], strides = [1, 1]} : vector<16x96xf32> to vector<2x96xf32>
    %1939 = vector.extract_strided_slice %1907 {offsets = [0, 96], sizes = [2, 96], strides = [1, 1]} : vector<2x192xf32> to vector<2x96xf32>
    %1940 = vector.extract_strided_slice %1904 {offsets = [0, 32], sizes = [2, 32], strides = [1, 1]} : vector<2x64xf32> to vector<2x32xf32>
    %1941 = vector.extract_strided_slice %0 {offsets = [6, 0], sizes = [2, 1], strides = [1, 1]} : vector<16x1xf32> to vector<2x1xf32>
    %1942 = vector.extract_strided_slice %2 {offsets = [6, 0], sizes = [2, 1], strides = [1, 1]} : vector<16x1xf32> to vector<2x1xf32>
    %1943 = vector.extract_strided_slice %1938 {offsets = [0, 0], sizes = [2, 64], strides = [1, 1]} : vector<2x96xf32> to vector<2x64xf32>
    %1944 = vector.extract_strided_slice %1939 {offsets = [0, 0], sizes = [2, 64], strides = [1, 1]} : vector<2x96xf32> to vector<2x64xf32>
    %1945 = arith.addf %1943, %1944 : vector<2x64xf32>
    %1946 = arith.negf %1945 : vector<2x64xf32>
    %1947 = math.exp %1946 : vector<2x64xf32>
    %cst_341 = arith.constant 1.000000e+00 : f32
    %1948 = vector.broadcast %cst_341 : f32 to vector<2x64xf32>
    %1949 = arith.addf %1948, %1947 : vector<2x64xf32>
    %1950 = arith.divf %1948, %1949 : vector<2x64xf32>
    %1951 = vector.extract_strided_slice %1950 {offsets = [0, 0], sizes = [2, 32], strides = [1, 1]} : vector<2x64xf32> to vector<2x32xf32>
    %1952 = vector.extract_strided_slice %1950 {offsets = [0, 32], sizes = [2, 32], strides = [1, 1]} : vector<2x64xf32> to vector<2x32xf32>
    %1953 = vector.extract_strided_slice %1938 {offsets = [0, 64], sizes = [2, 32], strides = [1, 1]} : vector<2x96xf32> to vector<2x32xf32>
    %1954 = vector.extract_strided_slice %1939 {offsets = [0, 64], sizes = [2, 32], strides = [1, 1]} : vector<2x96xf32> to vector<2x32xf32>
    %1955 = vector.broadcast %1647 : vector<1x32xf32> to vector<2x32xf32>
    %1956 = arith.addf %1954, %1955 : vector<2x32xf32>
    %1957 = arith.mulf %1951, %1956 : vector<2x32xf32>
    %1958 = arith.addf %1953, %1957 : vector<2x32xf32>
    %1959 = math.tanh %1958 : vector<2x32xf32>
    %1960 = arith.subf %1940, %1959 : vector<2x32xf32>
    %1961 = arith.mulf %1952, %1960 : vector<2x32xf32>
    %1962 = arith.addf %1959, %1961 : vector<2x32xf32>
    %1963 = vector.broadcast %1941 : vector<2x1xf32> to vector<2x32xf32>
    %1964 = arith.mulf %1963, %1962 : vector<2x32xf32>
    %1965 = vector.broadcast %1942 : vector<2x1xf32> to vector<2x32xf32>
    %1966 = arith.mulf %1965, %1940 : vector<2x32xf32>
    %1967 = arith.addf %1964, %1966 : vector<2x32xf32>
    %1968 = tpu.concatenate %1937, %1967 in 1 : vector<2x32xf32>, vector<2x32xf32> -> vector<2x64xf32>
    %c8_342 = arith.constant 8 : index
    %c0_343 = arith.constant 0 : index
    %1969 = vector.load %arg7[%c8_342, %c0_343] : memref<16x64xf32, #tpu.memory_space<vmem>>, vector<2x32xf32>
    tpu.vector_store %arg7[%c8_342, %c0_343], %1934 {strides = array<i32>} : memref<16x64xf32, #tpu.memory_space<vmem>>, vector<2x32xf32>,
    %c6_344 = arith.constant 6 : index
    %c32_345 = arith.constant 32 : index
    %1970 = vector.load %arg7[%c6_344, %c32_345] : memref<16x64xf32, #tpu.memory_space<vmem>>, vector<2x32xf32>
    tpu.vector_store %arg7[%c6_344, %c32_345], %1964 {strides = array<i32>} : memref<16x64xf32, #tpu.memory_space<vmem>>, vector<2x32xf32>,
    %cst_346 = arith.constant dense<0.000000e+00> : vector<2x192xf32>
    %1971 = tpu.matmul %1968, %1649, %cst_346 {dimension_numbers = #tpu.dot_dimension_numbers<[1], [0], [0], [1], [0, 0, 1, 1], [], []>} : vector<2x64xf32>, vector<64x192xf32>, vector<2x192xf32> -> vector<2x192xf32>
    %1972 = vector.extract_strided_slice %1636 {offsets = [10, 0], sizes = [2, 96], strides = [1, 1]} : vector<16x96xf32> to vector<2x96xf32>
    %1973 = vector.extract_strided_slice %1971 {offsets = [0, 0], sizes = [2, 96], strides = [1, 1]} : vector<2x192xf32> to vector<2x96xf32>
    %1974 = vector.extract_strided_slice %1968 {offsets = [0, 0], sizes = [2, 32], strides = [1, 1]} : vector<2x64xf32> to vector<2x32xf32>
    %1975 = vector.extract_strided_slice %0 {offsets = [10, 0], sizes = [2, 1], strides = [1, 1]} : vector<16x1xf32> to vector<2x1xf32>
    %1976 = vector.extract_strided_slice %2 {offsets = [10, 0], sizes = [2, 1], strides = [1, 1]} : vector<16x1xf32> to vector<2x1xf32>
    %1977 = vector.extract_strided_slice %1972 {offsets = [0, 0], sizes = [2, 64], strides = [1, 1]} : vector<2x96xf32> to vector<2x64xf32>
    %1978 = vector.extract_strided_slice %1973 {offsets = [0, 0], sizes = [2, 64], strides = [1, 1]} : vector<2x96xf32> to vector<2x64xf32>
    %1979 = arith.addf %1977, %1978 : vector<2x64xf32>
    %1980 = arith.negf %1979 : vector<2x64xf32>
    %1981 = math.exp %1980 : vector<2x64xf32>
    %cst_347 = arith.constant 1.000000e+00 : f32
    %1982 = vector.broadcast %cst_347 : f32 to vector<2x64xf32>
    %1983 = arith.addf %1982, %1981 : vector<2x64xf32>
    %1984 = arith.divf %1982, %1983 : vector<2x64xf32>
    %1985 = vector.extract_strided_slice %1984 {offsets = [0, 0], sizes = [2, 32], strides = [1, 1]} : vector<2x64xf32> to vector<2x32xf32>
    %1986 = vector.extract_strided_slice %1984 {offsets = [0, 32], sizes = [2, 32], strides = [1, 1]} : vector<2x64xf32> to vector<2x32xf32>
    %1987 = vector.extract_strided_slice %1972 {offsets = [0, 64], sizes = [2, 32], strides = [1, 1]} : vector<2x96xf32> to vector<2x32xf32>
    %1988 = vector.extract_strided_slice %1973 {offsets = [0, 64], sizes = [2, 32], strides = [1, 1]} : vector<2x96xf32> to vector<2x32xf32>
    %1989 = vector.broadcast %1645 : vector<1x32xf32> to vector<2x32xf32>
    %1990 = arith.addf %1988, %1989 : vector<2x32xf32>
    %1991 = arith.mulf %1985, %1990 : vector<2x32xf32>
    %1992 = arith.addf %1987, %1991 : vector<2x32xf32>
    %1993 = math.tanh %1992 : vector<2x32xf32>
    %1994 = arith.subf %1974, %1993 : vector<2x32xf32>
    %1995 = arith.mulf %1986, %1994 : vector<2x32xf32>
    %1996 = arith.addf %1993, %1995 : vector<2x32xf32>
    %1997 = vector.broadcast %1975 : vector<2x1xf32> to vector<2x32xf32>
    %1998 = arith.mulf %1997, %1996 : vector<2x32xf32>
    %1999 = vector.broadcast %1976 : vector<2x1xf32> to vector<2x32xf32>
    %2000 = arith.mulf %1999, %1974 : vector<2x32xf32>
    %2001 = arith.addf %1998, %2000 : vector<2x32xf32>
    %2002 = vector.extract_strided_slice %1643 {offsets = [4, 0], sizes = [2, 96], strides = [1, 1]} : vector<16x96xf32> to vector<2x96xf32>
    %2003 = vector.extract_strided_slice %1971 {offsets = [0, 96], sizes = [2, 96], strides = [1, 1]} : vector<2x192xf32> to vector<2x96xf32>
    %2004 = vector.extract_strided_slice %1968 {offsets = [0, 32], sizes = [2, 32], strides = [1, 1]} : vector<2x64xf32> to vector<2x32xf32>
    %2005 = vector.extract_strided_slice %0 {offsets = [4, 0], sizes = [2, 1], strides = [1, 1]} : vector<16x1xf32> to vector<2x1xf32>
    %2006 = vector.extract_strided_slice %2 {offsets = [4, 0], sizes = [2, 1], strides = [1, 1]} : vector<16x1xf32> to vector<2x1xf32>
    %2007 = vector.extract_strided_slice %2002 {offsets = [0, 0], sizes = [2, 64], strides = [1, 1]} : vector<2x96xf32> to vector<2x64xf32>
    %2008 = vector.extract_strided_slice %2003 {offsets = [0, 0], sizes = [2, 64], strides = [1, 1]} : vector<2x96xf32> to vector<2x64xf32>
    %2009 = arith.addf %2007, %2008 : vector<2x64xf32>
    %2010 = arith.negf %2009 : vector<2x64xf32>
    %2011 = math.exp %2010 : vector<2x64xf32>
    %cst_348 = arith.constant 1.000000e+00 : f32
    %2012 = vector.broadcast %cst_348 : f32 to vector<2x64xf32>
    %2013 = arith.addf %2012, %2011 : vector<2x64xf32>
    %2014 = arith.divf %2012, %2013 : vector<2x64xf32>
    %2015 = vector.extract_strided_slice %2014 {offsets = [0, 0], sizes = [2, 32], strides = [1, 1]} : vector<2x64xf32> to vector<2x32xf32>
    %2016 = vector.extract_strided_slice %2014 {offsets = [0, 32], sizes = [2, 32], strides = [1, 1]} : vector<2x64xf32> to vector<2x32xf32>
    %2017 = vector.extract_strided_slice %2002 {offsets = [0, 64], sizes = [2, 32], strides = [1, 1]} : vector<2x96xf32> to vector<2x32xf32>
    %2018 = vector.extract_strided_slice %2003 {offsets = [0, 64], sizes = [2, 32], strides = [1, 1]} : vector<2x96xf32> to vector<2x32xf32>
    %2019 = vector.broadcast %1647 : vector<1x32xf32> to vector<2x32xf32>
    %2020 = arith.addf %2018, %2019 : vector<2x32xf32>
    %2021 = arith.mulf %2015, %2020 : vector<2x32xf32>
    %2022 = arith.addf %2017, %2021 : vector<2x32xf32>
    %2023 = math.tanh %2022 : vector<2x32xf32>
    %2024 = arith.subf %2004, %2023 : vector<2x32xf32>
    %2025 = arith.mulf %2016, %2024 : vector<2x32xf32>
    %2026 = arith.addf %2023, %2025 : vector<2x32xf32>
    %2027 = vector.broadcast %2005 : vector<2x1xf32> to vector<2x32xf32>
    %2028 = arith.mulf %2027, %2026 : vector<2x32xf32>
    %2029 = vector.broadcast %2006 : vector<2x1xf32> to vector<2x32xf32>
    %2030 = arith.mulf %2029, %2004 : vector<2x32xf32>
    %2031 = arith.addf %2028, %2030 : vector<2x32xf32>
    %2032 = tpu.concatenate %2001, %2031 in 1 : vector<2x32xf32>, vector<2x32xf32> -> vector<2x64xf32>
    %c10_349 = arith.constant 10 : index
    %c0_350 = arith.constant 0 : index
    %2033 = vector.load %arg7[%c10_349, %c0_350] : memref<16x64xf32, #tpu.memory_space<vmem>>, vector<2x32xf32>
    tpu.vector_store %arg7[%c10_349, %c0_350], %1998 {strides = array<i32>} : memref<16x64xf32, #tpu.memory_space<vmem>>, vector<2x32xf32>,
    %c4_351 = arith.constant 4 : index
    %c32_352 = arith.constant 32 : index
    %2034 = vector.load %arg7[%c4_351, %c32_352] : memref<16x64xf32, #tpu.memory_space<vmem>>, vector<2x32xf32>
    tpu.vector_store %arg7[%c4_351, %c32_352], %2028 {strides = array<i32>} : memref<16x64xf32, #tpu.memory_space<vmem>>, vector<2x32xf32>,
    %cst_353 = arith.constant dense<0.000000e+00> : vector<2x192xf32>
    %2035 = tpu.matmul %2032, %1649, %cst_353 {dimension_numbers = #tpu.dot_dimension_numbers<[1], [0], [0], [1], [0, 0, 1, 1], [], []>} : vector<2x64xf32>, vector<64x192xf32>, vector<2x192xf32> -> vector<2x192xf32>
    %2036 = vector.extract_strided_slice %1636 {offsets = [12, 0], sizes = [2, 96], strides = [1, 1]} : vector<16x96xf32> to vector<2x96xf32>
    %2037 = vector.extract_strided_slice %2035 {offsets = [0, 0], sizes = [2, 96], strides = [1, 1]} : vector<2x192xf32> to vector<2x96xf32>
    %2038 = vector.extract_strided_slice %2032 {offsets = [0, 0], sizes = [2, 32], strides = [1, 1]} : vector<2x64xf32> to vector<2x32xf32>
    %2039 = vector.extract_strided_slice %0 {offsets = [12, 0], sizes = [2, 1], strides = [1, 1]} : vector<16x1xf32> to vector<2x1xf32>
    %2040 = vector.extract_strided_slice %2 {offsets = [12, 0], sizes = [2, 1], strides = [1, 1]} : vector<16x1xf32> to vector<2x1xf32>
    %2041 = vector.extract_strided_slice %2036 {offsets = [0, 0], sizes = [2, 64], strides = [1, 1]} : vector<2x96xf32> to vector<2x64xf32>
    %2042 = vector.extract_strided_slice %2037 {offsets = [0, 0], sizes = [2, 64], strides = [1, 1]} : vector<2x96xf32> to vector<2x64xf32>
    %2043 = arith.addf %2041, %2042 : vector<2x64xf32>
    %2044 = arith.negf %2043 : vector<2x64xf32>
    %2045 = math.exp %2044 : vector<2x64xf32>
    %cst_354 = arith.constant 1.000000e+00 : f32
    %2046 = vector.broadcast %cst_354 : f32 to vector<2x64xf32>
    %2047 = arith.addf %2046, %2045 : vector<2x64xf32>
    %2048 = arith.divf %2046, %2047 : vector<2x64xf32>
    %2049 = vector.extract_strided_slice %2048 {offsets = [0, 0], sizes = [2, 32], strides = [1, 1]} : vector<2x64xf32> to vector<2x32xf32>
    %2050 = vector.extract_strided_slice %2048 {offsets = [0, 32], sizes = [2, 32], strides = [1, 1]} : vector<2x64xf32> to vector<2x32xf32>
    %2051 = vector.extract_strided_slice %2036 {offsets = [0, 64], sizes = [2, 32], strides = [1, 1]} : vector<2x96xf32> to vector<2x32xf32>
    %2052 = vector.extract_strided_slice %2037 {offsets = [0, 64], sizes = [2, 32], strides = [1, 1]} : vector<2x96xf32> to vector<2x32xf32>
    %2053 = vector.broadcast %1645 : vector<1x32xf32> to vector<2x32xf32>
    %2054 = arith.addf %2052, %2053 : vector<2x32xf32>
    %2055 = arith.mulf %2049, %2054 : vector<2x32xf32>
    %2056 = arith.addf %2051, %2055 : vector<2x32xf32>
    %2057 = math.tanh %2056 : vector<2x32xf32>
    %2058 = arith.subf %2038, %2057 : vector<2x32xf32>
    %2059 = arith.mulf %2050, %2058 : vector<2x32xf32>
    %2060 = arith.addf %2057, %2059 : vector<2x32xf32>
    %2061 = vector.broadcast %2039 : vector<2x1xf32> to vector<2x32xf32>
    %2062 = arith.mulf %2061, %2060 : vector<2x32xf32>
    %2063 = vector.broadcast %2040 : vector<2x1xf32> to vector<2x32xf32>
    %2064 = arith.mulf %2063, %2038 : vector<2x32xf32>
    %2065 = arith.addf %2062, %2064 : vector<2x32xf32>
    %2066 = vector.extract_strided_slice %1643 {offsets = [2, 0], sizes = [2, 96], strides = [1, 1]} : vector<16x96xf32> to vector<2x96xf32>
    %2067 = vector.extract_strided_slice %2035 {offsets = [0, 96], sizes = [2, 96], strides = [1, 1]} : vector<2x192xf32> to vector<2x96xf32>
    %2068 = vector.extract_strided_slice %2032 {offsets = [0, 32], sizes = [2, 32], strides = [1, 1]} : vector<2x64xf32> to vector<2x32xf32>
    %2069 = vector.extract_strided_slice %0 {offsets = [2, 0], sizes = [2, 1], strides = [1, 1]} : vector<16x1xf32> to vector<2x1xf32>
    %2070 = vector.extract_strided_slice %2 {offsets = [2, 0], sizes = [2, 1], strides = [1, 1]} : vector<16x1xf32> to vector<2x1xf32>
    %2071 = vector.extract_strided_slice %2066 {offsets = [0, 0], sizes = [2, 64], strides = [1, 1]} : vector<2x96xf32> to vector<2x64xf32>
    %2072 = vector.extract_strided_slice %2067 {offsets = [0, 0], sizes = [2, 64], strides = [1, 1]} : vector<2x96xf32> to vector<2x64xf32>
    %2073 = arith.addf %2071, %2072 : vector<2x64xf32>
    %2074 = arith.negf %2073 : vector<2x64xf32>
    %2075 = math.exp %2074 : vector<2x64xf32>
    %cst_355 = arith.constant 1.000000e+00 : f32
    %2076 = vector.broadcast %cst_355 : f32 to vector<2x64xf32>
    %2077 = arith.addf %2076, %2075 : vector<2x64xf32>
    %2078 = arith.divf %2076, %2077 : vector<2x64xf32>
    %2079 = vector.extract_strided_slice %2078 {offsets = [0, 0], sizes = [2, 32], strides = [1, 1]} : vector<2x64xf32> to vector<2x32xf32>
    %2080 = vector.extract_strided_slice %2078 {offsets = [0, 32], sizes = [2, 32], strides = [1, 1]} : vector<2x64xf32> to vector<2x32xf32>
    %2081 = vector.extract_strided_slice %2066 {offsets = [0, 64], sizes = [2, 32], strides = [1, 1]} : vector<2x96xf32> to vector<2x32xf32>
    %2082 = vector.extract_strided_slice %2067 {offsets = [0, 64], sizes = [2, 32], strides = [1, 1]} : vector<2x96xf32> to vector<2x32xf32>
    %2083 = vector.broadcast %1647 : vector<1x32xf32> to vector<2x32xf32>
    %2084 = arith.addf %2082, %2083 : vector<2x32xf32>
    %2085 = arith.mulf %2079, %2084 : vector<2x32xf32>
    %2086 = arith.addf %2081, %2085 : vector<2x32xf32>
    %2087 = math.tanh %2086 : vector<2x32xf32>
    %2088 = arith.subf %2068, %2087 : vector<2x32xf32>
    %2089 = arith.mulf %2080, %2088 : vector<2x32xf32>
    %2090 = arith.addf %2087, %2089 : vector<2x32xf32>
    %2091 = vector.broadcast %2069 : vector<2x1xf32> to vector<2x32xf32>
    %2092 = arith.mulf %2091, %2090 : vector<2x32xf32>
    %2093 = vector.broadcast %2070 : vector<2x1xf32> to vector<2x32xf32>
    %2094 = arith.mulf %2093, %2068 : vector<2x32xf32>
    %2095 = arith.addf %2092, %2094 : vector<2x32xf32>
    %2096 = tpu.concatenate %2065, %2095 in 1 : vector<2x32xf32>, vector<2x32xf32> -> vector<2x64xf32>
    %c12_356 = arith.constant 12 : index
    %c0_357 = arith.constant 0 : index
    %2097 = vector.load %arg7[%c12_356, %c0_357] : memref<16x64xf32, #tpu.memory_space<vmem>>, vector<2x32xf32>
    tpu.vector_store %arg7[%c12_356, %c0_357], %2062 {strides = array<i32>} : memref<16x64xf32, #tpu.memory_space<vmem>>, vector<2x32xf32>,
    %c2_358 = arith.constant 2 : index
    %c32_359 = arith.constant 32 : index
    %2098 = vector.load %arg7[%c2_358, %c32_359] : memref<16x64xf32, #tpu.memory_space<vmem>>, vector<2x32xf32>
    tpu.vector_store %arg7[%c2_358, %c32_359], %2092 {strides = array<i32>} : memref<16x64xf32, #tpu.memory_space<vmem>>, vector<2x32xf32>,
    %cst_360 = arith.constant dense<0.000000e+00> : vector<2x192xf32>
    %2099 = tpu.matmul %2096, %1649, %cst_360 {dimension_numbers = #tpu.dot_dimension_numbers<[1], [0], [0], [1], [0, 0, 1, 1], [], []>} : vector<2x64xf32>, vector<64x192xf32>, vector<2x192xf32> -> vector<2x192xf32>
    %2100 = vector.extract_strided_slice %1636 {offsets = [14, 0], sizes = [2, 96], strides = [1, 1]} : vector<16x96xf32> to vector<2x96xf32>
    %2101 = vector.extract_strided_slice %2099 {offsets = [0, 0], sizes = [2, 96], strides = [1, 1]} : vector<2x192xf32> to vector<2x96xf32>
    %2102 = vector.extract_strided_slice %2096 {offsets = [0, 0], sizes = [2, 32], strides = [1, 1]} : vector<2x64xf32> to vector<2x32xf32>
    %2103 = vector.extract_strided_slice %0 {offsets = [14, 0], sizes = [2, 1], strides = [1, 1]} : vector<16x1xf32> to vector<2x1xf32>
    %2104 = vector.extract_strided_slice %2 {offsets = [14, 0], sizes = [2, 1], strides = [1, 1]} : vector<16x1xf32> to vector<2x1xf32>
    %2105 = vector.extract_strided_slice %2100 {offsets = [0, 0], sizes = [2, 64], strides = [1, 1]} : vector<2x96xf32> to vector<2x64xf32>
    %2106 = vector.extract_strided_slice %2101 {offsets = [0, 0], sizes = [2, 64], strides = [1, 1]} : vector<2x96xf32> to vector<2x64xf32>
    %2107 = arith.addf %2105, %2106 : vector<2x64xf32>
    %2108 = arith.negf %2107 : vector<2x64xf32>
    %2109 = math.exp %2108 : vector<2x64xf32>
    %cst_361 = arith.constant 1.000000e+00 : f32
    %2110 = vector.broadcast %cst_361 : f32 to vector<2x64xf32>
    %2111 = arith.addf %2110, %2109 : vector<2x64xf32>
    %2112 = arith.divf %2110, %2111 : vector<2x64xf32>
    %2113 = vector.extract_strided_slice %2112 {offsets = [0, 0], sizes = [2, 32], strides = [1, 1]} : vector<2x64xf32> to vector<2x32xf32>
    %2114 = vector.extract_strided_slice %2112 {offsets = [0, 32], sizes = [2, 32], strides = [1, 1]} : vector<2x64xf32> to vector<2x32xf32>
    %2115 = vector.extract_strided_slice %2100 {offsets = [0, 64], sizes = [2, 32], strides = [1, 1]} : vector<2x96xf32> to vector<2x32xf32>
    %2116 = vector.extract_strided_slice %2101 {offsets = [0, 64], sizes = [2, 32], strides = [1, 1]} : vector<2x96xf32> to vector<2x32xf32>
    %2117 = vector.broadcast %1645 : vector<1x32xf32> to vector<2x32xf32>
    %2118 = arith.addf %2116, %2117 : vector<2x32xf32>
    %2119 = arith.mulf %2113, %2118 : vector<2x32xf32>
    %2120 = arith.addf %2115, %2119 : vector<2x32xf32>
    %2121 = math.tanh %2120 : vector<2x32xf32>
    %2122 = arith.subf %2102, %2121 : vector<2x32xf32>
    %2123 = arith.mulf %2114, %2122 : vector<2x32xf32>
    %2124 = arith.addf %2121, %2123 : vector<2x32xf32>
    %2125 = vector.broadcast %2103 : vector<2x1xf32> to vector<2x32xf32>
    %2126 = arith.mulf %2125, %2124 : vector<2x32xf32>
    %2127 = vector.broadcast %2104 : vector<2x1xf32> to vector<2x32xf32>
    %2128 = arith.mulf %2127, %2102 : vector<2x32xf32>
    %2129 = arith.addf %2126, %2128 : vector<2x32xf32>
    %2130 = vector.extract_strided_slice %1643 {offsets = [0, 0], sizes = [2, 96], strides = [1, 1]} : vector<16x96xf32> to vector<2x96xf32>
    %2131 = vector.extract_strided_slice %2099 {offsets = [0, 96], sizes = [2, 96], strides = [1, 1]} : vector<2x192xf32> to vector<2x96xf32>
    %2132 = vector.extract_strided_slice %2096 {offsets = [0, 32], sizes = [2, 32], strides = [1, 1]} : vector<2x64xf32> to vector<2x32xf32>
    %2133 = vector.extract_strided_slice %0 {offsets = [0, 0], sizes = [2, 1], strides = [1, 1]} : vector<16x1xf32> to vector<2x1xf32>
    %2134 = vector.extract_strided_slice %2 {offsets = [0, 0], sizes = [2, 1], strides = [1, 1]} : vector<16x1xf32> to vector<2x1xf32>
    %2135 = vector.extract_strided_slice %2130 {offsets = [0, 0], sizes = [2, 64], strides = [1, 1]} : vector<2x96xf32> to vector<2x64xf32>
    %2136 = vector.extract_strided_slice %2131 {offsets = [0, 0], sizes = [2, 64], strides = [1, 1]} : vector<2x96xf32> to vector<2x64xf32>
    %2137 = arith.addf %2135, %2136 : vector<2x64xf32>
    %2138 = arith.negf %2137 : vector<2x64xf32>
    %2139 = math.exp %2138 : vector<2x64xf32>
    %cst_362 = arith.constant 1.000000e+00 : f32
    %2140 = vector.broadcast %cst_362 : f32 to vector<2x64xf32>
    %2141 = arith.addf %2140, %2139 : vector<2x64xf32>
    %2142 = arith.divf %2140, %2141 : vector<2x64xf32>
    %2143 = vector.extract_strided_slice %2142 {offsets = [0, 0], sizes = [2, 32], strides = [1, 1]} : vector<2x64xf32> to vector<2x32xf32>
    %2144 = vector.extract_strided_slice %2142 {offsets = [0, 32], sizes = [2, 32], strides = [1, 1]} : vector<2x64xf32> to vector<2x32xf32>
    %2145 = vector.extract_strided_slice %2130 {offsets = [0, 64], sizes = [2, 32], strides = [1, 1]} : vector<2x96xf32> to vector<2x32xf32>
    %2146 = vector.extract_strided_slice %2131 {offsets = [0, 64], sizes = [2, 32], strides = [1, 1]} : vector<2x96xf32> to vector<2x32xf32>
    %2147 = vector.broadcast %1647 : vector<1x32xf32> to vector<2x32xf32>
    %2148 = arith.addf %2146, %2147 : vector<2x32xf32>
    %2149 = arith.mulf %2143, %2148 : vector<2x32xf32>
    %2150 = arith.addf %2145, %2149 : vector<2x32xf32>
    %2151 = math.tanh %2150 : vector<2x32xf32>
    %2152 = arith.subf %2132, %2151 : vector<2x32xf32>
    %2153 = arith.mulf %2144, %2152 : vector<2x32xf32>
    %2154 = arith.addf %2151, %2153 : vector<2x32xf32>
    %2155 = vector.broadcast %2133 : vector<2x1xf32> to vector<2x32xf32>
    %2156 = arith.mulf %2155, %2154 : vector<2x32xf32>
    %2157 = vector.broadcast %2134 : vector<2x1xf32> to vector<2x32xf32>
    %2158 = arith.mulf %2157, %2132 : vector<2x32xf32>
    %2159 = arith.addf %2156, %2158 : vector<2x32xf32>
    %2160 = tpu.concatenate %2129, %2159 in 1 : vector<2x32xf32>, vector<2x32xf32> -> vector<2x64xf32>
    %c14_363 = arith.constant 14 : index
    %c0_364 = arith.constant 0 : index
    %2161 = vector.load %arg7[%c14_363, %c0_364] : memref<16x64xf32, #tpu.memory_space<vmem>>, vector<2x32xf32>
    tpu.vector_store %arg7[%c14_363, %c0_364], %2126 {strides = array<i32>} : memref<16x64xf32, #tpu.memory_space<vmem>>, vector<2x32xf32>,
    %c0_365 = arith.constant 0 : index
    %c32_366 = arith.constant 32 : index
    %2162 = vector.load %arg7[%c0_365, %c32_366] : memref<16x64xf32, #tpu.memory_space<vmem>>, vector<2x32xf32>
    tpu.vector_store %arg7[%c0_365, %c32_366], %2156 {strides = array<i32>} : memref<16x64xf32, #tpu.memory_space<vmem>>, vector<2x32xf32>,
    %2163 = vector.extract_strided_slice %2160 {offsets = [0, 0], sizes = [2, 32], strides = [1, 1]} : vector<2x64xf32> to vector<2x32xf32>
    %c3_367 = arith.constant 3 : index
    %c0_368 = arith.constant 0 : index
    %c0_369 = arith.constant 0 : index
    %c0_370 = arith.constant 0 : index
    %2164 = vector.load %arg8[%c3_367, %c0_368, %c0_369, %c0_370] : memref<4x2x2x32xf32, #tpu.memory_space<vmem>>, vector<1x1x2x32xf32>
    %2165 = vector.shape_cast %2164 : vector<1x1x2x32xf32> to vector<2x32xf32>
    %2166 = vector.shape_cast %2163 : vector<2x32xf32> to vector<1x1x2x32xf32>
    tpu.vector_store %arg8[%c3_367, %c0_368, %c0_369, %c0_370], %2166 {strides = array<i32>} : memref<4x2x2x32xf32, #tpu.memory_space<vmem>>, vector<1x1x2x32xf32>,
    %2167 = vector.extract_strided_slice %2160 {offsets = [0, 32], sizes = [2, 32], strides = [1, 1]} : vector<2x64xf32> to vector<2x32xf32>
    %c3_371 = arith.constant 3 : index
    %c1_372 = arith.constant 1 : index
    %c0_373 = arith.constant 0 : index
    %c0_374 = arith.constant 0 : index
    %2168 = vector.load %arg8[%c3_371, %c1_372, %c0_373, %c0_374] : memref<4x2x2x32xf32, #tpu.memory_space<vmem>>, vector<1x1x2x32xf32>
    %2169 = vector.shape_cast %2168 : vector<1x1x2x32xf32> to vector<2x32xf32>
    %2170 = vector.shape_cast %2167 : vector<2x32xf32> to vector<1x1x2x32xf32>
    tpu.vector_store %arg8[%c3_371, %c1_372, %c0_373, %c0_374], %2170 {strides = array<i32>} : memref<4x2x2x32xf32, #tpu.memory_space<vmem>>, vector<1x1x2x32xf32>,
    return
  }
  func.func @transform_0(%arg0: i32) -> (i32, i32) {
    %c0_i32 = arith.constant 0 : i32
    %c0_i32_0 = arith.constant 0 : i32
    %c0_i32_1 = arith.constant 0 : i32
    return %c0_i32, %c0_i32_0 : i32, i32
  }
  func.func @transform_1(%arg0: i32) -> (i32, i32) {
    %c0_i32 = arith.constant 0 : i32
    %c0_i32_0 = arith.constant 0 : i32
    %c0_i32_1 = arith.constant 0 : i32
    return %c0_i32, %c0_i32_0 : i32, i32
  }
  func.func @transform_2(%arg0: i32) -> (i32, i32, i32, i32) {
    %c0_i32 = arith.constant 0 : i32
    %c0_i32_0 = arith.constant 0 : i32
    %c0_i32_1 = arith.constant 0 : i32
    %c0_i32_2 = arith.constant 0 : i32
    %c0_i32_3 = arith.constant 0 : i32
    return %c0_i32, %c0_i32_0, %c0_i32_1, %c0_i32_2 : i32, i32, i32, i32
  }
  func.func @transform_3(%arg0: i32) -> (i32, i32, i32) {
    %c0_i32 = arith.constant 0 : i32
    %c0_i32_0 = arith.constant 0 : i32
    %c0_i32_1 = arith.constant 0 : i32
    %c0_i32_2 = arith.constant 0 : i32
    return %c0_i32, %c0_i32_0, %c0_i32_1 : i32, i32, i32
  }
  func.func @transform_4(%arg0: i32) -> (i32, i32, i32, i32) {
    %c0_i32 = arith.constant 0 : i32
    %c0_i32_0 = arith.constant 0 : i32
    %c0_i32_1 = arith.constant 0 : i32
    %c0_i32_2 = arith.constant 0 : i32
    %c0_i32_3 = arith.constant 0 : i32
    return %c0_i32, %c0_i32_0, %c0_i32_1, %c0_i32_2 : i32, i32, i32, i32
  }
  func.func @transform_5(%arg0: i32) -> (i32, i32, i32, i32) {
    %c0_i32 = arith.constant 0 : i32
    %c0_i32_0 = arith.constant 0 : i32
    %c0_i32_1 = arith.constant 0 : i32
    %c0_i32_2 = arith.constant 0 : i32
    %c0_i32_3 = arith.constant 0 : i32
    return %c0_i32, %c0_i32_0, %c0_i32_1, %c0_i32_2 : i32, i32, i32, i32
  }
  func.func @transform_6(%arg0: i32) -> (i32, i32) {
    %c0_i32 = arith.constant 0 : i32
    %c0_i32_0 = arith.constant 0 : i32
    %c0_i32_1 = arith.constant 0 : i32
    return %c0_i32, %c0_i32_0 : i32, i32
  }
  func.func @transform_7(%arg0: i32) -> (i32, i32, i32, i32) {
    %c0_i32 = arith.constant 0 : i32
    %c0_i32_0 = arith.constant 0 : i32
    %c0_i32_1 = arith.constant 0 : i32
    %c0_i32_2 = arith.constant 0 : i32
    %c0_i32_3 = arith.constant 0 : i32
    return %c0_i32, %c0_i32_0, %c0_i32_1, %c0_i32_2 : i32, i32, i32, i32
  }
}

</mosaic_0001>

<llo_original>
// kernel: gru_encoder_forward.1
$region0: #{gru_encoder_forward.1}
  #allocation0 [shape = 'u32[]', space=smem, size = 0x4, offset = 0x4, fixed_abs, tag = 'smem constant byte address 0x4 - core index']
  #allocation1 [shape = 'u32[72,128]{1,0:T(1,128)}', space=vmem, size = 0x9000, scoped, tag = 'internal scratch']
  #allocation2 [shape = 'f32[16,64]{1,0:T(8,128)}', space=vmem, size = 0x2000, scoped, tag = 'scratch operand']
  %s0 = inlined_call_operand.vmem [shape: f32[16,64], index: 0, kind: input, shape index: {}]
  %s1 = inlined_call_operand.vmem [shape: f32[16,1], index: 1, kind: input, shape index: {}]
  %s2 = inlined_call_operand.hbm [shape: f32[4,2,64,96], index: 2, kind: input, shape index: {}]
  %s3 = inlined_call_operand.hbm [shape: f32[4,64,192], index: 3, kind: input, shape index: {}]
  %s4 = inlined_call_operand.vmem [shape: f32[4,2,1,96], index: 4, kind: input, shape index: {}]
  %s5 = inlined_call_operand.vmem [shape: f32[4,2,1,32], index: 5, kind: input, shape index: {}]
  %s6 = inlined_call_operand.vmem [shape: f32[16,64], index: 6, kind: output, shape index: {0}]
  %s7 = inlined_call_operand.hbm [shape: f32[4,2,2,32], index: 7, kind: output, shape index: {1}]
  %8 = xla_tuple %s6, %s7
  %s9 = sld [smem:[#allocation0]]
  $region50: #{gru_encoder_forward.1} parent=0
    _
  %s11 = ssub.s32 1, %s9
  %s12 = scalar_select 0, %s11, %s9
  $region1: #{gru_encoder_forward.1} parent=0
    #allocation3 [shape = 'u8[262144]{0}', space=vmem, size = 0x40000, scoped, tag = 'input window, operand 2, single buffered']
    #allocation4 [shape = 's32[1]{0}', space=sflag, size = 0x4, scoped, tag = 'scoped memory for gru_encoder_forward.1']
    #allocation5 [shape = 's32[1]{0}', space=sflag, size = 0x4, scoped, tag = 'scoped memory for gru_encoder_forward.1']
    #allocation6 [shape = 'u8[262144]{0}', space=vmem, size = 0x40000, scoped, tag = 'input window, operand 3, single buffered']
    #allocation7 [shape = 's32[1]{0}', space=sflag, size = 0x4, scoped, tag = 'scoped memory for gru_encoder_forward.1']
    #allocation8 [shape = 'u8[8192]{0}', space=vmem, size = 0x2000, scoped, tag = 'output window, operand 1, single buffered']
    %13 = vsyncpa [#allocation4], 0
    %14 = vsyncpa [#allocation7], 0
    %15 = vsyncpa [#allocation5], 0
    // Predicated region
    $region2: #{gru_encoder_forward.1} parent=1 // pred_check
      _
    $region3: #{gru_encoder_forward.1} parent=1 // pred_check_branch
      %17 = sbr.rel (0) target = $region5
    $region4: #{gru_encoder_forward.1} parent=1 // pred_region
      _
    $region5: #{gru_encoder_forward.1} parent=1 // pred_fallthru
      _
    // Predicated region
    $region6: #{gru_encoder_forward.1} parent=1 // pred_check
      _
    $region7: #{gru_encoder_forward.1} parent=1 // pred_check_branch
      %19 = sbr.rel (0) target = $region9
    $region8: #{gru_encoder_forward.1} parent=1 // pred_region
      _
    $region9: #{gru_encoder_forward.1} parent=1 // pred_fallthru
      _
    // Predicated region
    $region10: #{gru_encoder_forward.1} parent=1 // pred_check
      _
    $region11: #{gru_encoder_forward.1} parent=1 // pred_check_branch
      %21 = sbr.rel (0) target = $region13
    $region12: #{gru_encoder_forward.1} parent=1 // pred_region
      %23 = vsyncadd [#allocation4], 0
      %s24 = sshll.u32 %s2, 4
      %s25 = int_to_ptr.hbm [resolvable:$true] %s24
      %s26 = sshll.u32 [#allocation3], 4
      %s27 = int_to_ptr.vmem [resolvable:$true] %s26
      %32 = dma.hbm_to_vmem [thread:$0]  %s25, 8192, %s27, [#allocation4], 128, 128, 8
    $region13: #{gru_encoder_forward.1} parent=1 // pred_fallthru
      _
    // Predicated region
    $region14: #{gru_encoder_forward.1} parent=1 // pred_check
      _
    $region15: #{gru_encoder_forward.1} parent=1 // pred_check_branch
      %34 = sbr.rel (0) target = $region17
    $region16: #{gru_encoder_forward.1} parent=1 // pred_region
      %36 = vsyncadd [#allocation7], 0
      %s37 = sshll.u32 %s3, 4
      %s38 = int_to_ptr.hbm [resolvable:$true] %s37
      %s39 = sshll.u32 [#allocation6], 4
      %s40 = int_to_ptr.vmem [resolvable:$true] %s39
      %45 = dma.hbm_to_vmem [thread:$0]  %s38, 8192, %s40, [#allocation7], 256, 256, 16
    $region17: #{gru_encoder_forward.1} parent=1 // pred_fallthru
      _
    // Predicated region
    $region18: #{gru_encoder_forward.1} parent=1 // pred_check
      _
    $region19: #{gru_encoder_forward.1} parent=1 // pred_check_branch
      %47 = sbr.rel (0) target = $region21
    $region20: #{gru_encoder_forward.1} parent=1 // pred_region
      _
    $region21: #{gru_encoder_forward.1} parent=1 // pred_fallthru
      _
    // Predicated region
    $region22: #{gru_encoder_forward.1} parent=1 // pred_check
      _
    $region23: #{gru_encoder_forward.1} parent=1 // pred_check_branch
      %49 = sbr.rel (0) target = $region25
    $region24: #{gru_encoder_forward.1} parent=1 // pred_region
      _
    $region25: #{gru_encoder_forward.1} parent=1 // pred_fallthru
      _
    // Predicated region
    $region26: #{gru_encoder_forward.1} parent=1 // pred_check
      _
    $region27: #{gru_encoder_forward.1} parent=1 // pred_check_branch
      %51 = sbr.rel (0) target = $region29
    $region28: #{gru_encoder_forward.1} parent=1 // pred_region
      %53 = dma.done [#allocation4], 8192
    $region29: #{gru_encoder_forward.1} parent=1 // pred_fallthru
      _
    // Predicated region
    $region30: #{gru_encoder_forward.1} parent=1 // pred_check
      _
    $region31: #{gru_encoder_forward.1} parent=1 // pred_check_branch
      %55 = sbr.rel (0) target = $region33
    $region32: #{gru_encoder_forward.1} parent=1 // pred_region
      %57 = dma.done [#allocation7], 8192
    $region33: #{gru_encoder_forward.1} parent=1 // pred_fallthru
      _
    %v58 = vld [vmem:[%s1] sm:$0xff]
    %v59 = vld [vmem:[%s1 + $0x8] sm:$0xff]
    %v60 = vsub.f32 1.0, %v58
    %v61 = vsub.f32 1.0, %v59
    %v62 = vld [vmem:[%s0] sm:$0xff]
    %v63 = vld [vmem:[%s0 + $0x8] sm:$0xff]
    %v64 = vld [vmem:[#allocation3] sm:$0xff]
    %v65 = vld [vmem:[#allocation3 + $0x8] sm:$0xff]
    %v66 = vld [vmem:[#allocation3 + $0x10] sm:$0xff]
    %v67 = vld [vmem:[#allocation3 + $0x18] sm:$0xff]
    %v68 = vld [vmem:[#allocation3 + $0x20] sm:$0xff]
    %v69 = vld [vmem:[#allocation3 + $0x28] sm:$0xff]
    %v70 = vld [vmem:[#allocation3 + $0x30] sm:$0xff]
    %v71 = vld [vmem:[#allocation3 + $0x38] sm:$0xff]
    %v72 = vld [vmem:[%s4] sm:$0x1]
    %v74 = vperm.slane %v72, 0
    %vm76 = vcmask 523264
    %v78 = vsel %vm76, %v62, 0
    %v81 = vsel %vm76, %v63, 0
    %83 = vmatpush.msra.mxu0 0.0
    %84 = vmatpush.msra.mxu0 0.0
    %85 = vmatpush.msra.mxu0 0.0
    %86 = vmatpush.msra.mxu0 0.0
    %87 = vmatpush.msra.mxu0 0.0
    %88 = vmatpush.msra.mxu0 0.0
    %89 = vmatpush.msra.mxu0 0.0
    %90 = vmatpush.msra.mxu0 0.0
    %91 = vmatpush.msra.mxu0 %v71
    %92 = vmatpush.msra.mxu0 %v70
    %93 = vmatpush.msra.mxu0 %v69
    %94 = vmatpush.msra.mxu0 %v68
    %95 = vmatpush.msra.mxu0 %v67
    %96 = vmatpush.msra.mxu0 %v66
    %97 = vmatpush.msra.mxu0 %v65
    %98 = vmatpush.msra.mxu0 %v64
    %99 = vmatmul.f32.gmra.mxu0 %v78
    %v100 = vpop.f32.mrf.mxu0
    %v101 = vadd.f32 %v74, %v100
    %102 = vmatmul.f32.gmra.mxu0 %v81
    %v103 = vpop.f32.mrf.mxu0
    %v104 = vadd.f32 %v74, %v103
    %105 = vdwg.mxu0
    %s106 = scalar_lea.vmem [#allocation3], 64
    %v107 = vld [vmem:[%s106] sm:$0xff]
    %v108 = vld [vmem:[%s106 + $0x8] sm:$0xff]
    %v109 = vld [vmem:[%s106 + $0x10] sm:$0xff]
    %v110 = vld [vmem:[%s106 + $0x18] sm:$0xff]
    %v111 = vld [vmem:[%s106 + $0x20] sm:$0xff]
    %v112 = vld [vmem:[%s106 + $0x28] sm:$0xff]
    %v113 = vld [vmem:[%s106 + $0x30] sm:$0xff]
    %v114 = vld [vmem:[%s106 + $0x38] sm:$0xff]
    %s115 = scalar_lea.vmem %s4, 1
    %v116 = vld [vmem:[%s115] sm:$0x1]
    %v118 = vperm.slane %v116, 0
    %120 = vmatpush.msra.mxu0 0.0
    %121 = vmatpush.msra.mxu0 0.0
    %122 = vmatpush.msra.mxu0 0.0
    %123 = vmatpush.msra.mxu0 0.0
    %124 = vmatpush.msra.mxu0 0.0
    %125 = vmatpush.msra.mxu0 0.0
    %126 = vmatpush.msra.mxu0 0.0
    %127 = vmatpush.msra.mxu0 0.0
    %128 = vmatpush.msra.mxu0 %v114
    %129 = vmatpush.msra.mxu0 %v113
    %130 = vmatpush.msra.mxu0 %v112
    %131 = vmatpush.msra.mxu0 %v111
    %132 = vmatpush.msra.mxu0 %v110
    %133 = vmatpush.msra.mxu0 %v109
    %134 = vmatpush.msra.mxu0 %v108
    %135 = vmatpush.msra.mxu0 %v107
    %136 = vmatmul.f32.gmra.mxu0 %v78
    %v137 = vpop.f32.mrf.mxu0
    %v138 = vadd.f32 %v118, %v137
    %139 = vmatmul.f32.gmra.mxu0 %v81
    %v140 = vpop.f32.mrf.mxu0
    %v141 = vadd.f32 %v118, %v140
    %142 = vdwg.mxu0
    %v143 = vld [vmem:[%s5] sm:$0x1]
    %s144 = scalar_lea.vmem %s5, 1
    %v145 = vld [vmem:[%s144] sm:$0x1]
    %v146 = vld [vmem:[#allocation6] sm:$0xff]
    %v147 = vld [vmem:[#allocation6 + $0x8] sm:$0xff]
    %v148 = vld [vmem:[#allocation6 + $0x10] sm:$0xff]
    %v149 = vld [vmem:[#allocation6 + $0x18] sm:$0xff]
    %v150 = vld [vmem:[#allocation6 + $0x20] sm:$0xff]
    %v151 = vld [vmem:[#allocation6 + $0x28] sm:$0xff]
    %v152 = vld [vmem:[#allocation6 + $0x30] sm:$0xff]
    %v153 = vld [vmem:[#allocation6 + $0x38] sm:$0xff]
    %v154 = vld [vmem:[#allocation6 + $0x40] sm:$0xff]
    %v155 = vld [vmem:[#allocation6 + $0x48] sm:$0xff]
    %v156 = vld [vmem:[#allocation6 + $0x50] sm:$0xff]
    %v157 = vld [vmem:[#allocation6 + $0x58] sm:$0xff]
    %v158 = vld [vmem:[#allocation6 + $0x60] sm:$0xff]
    %v159 = vld [vmem:[#allocation6 + $0x68] sm:$0xff]
    %v160 = vld [vmem:[#allocation6 + $0x70] sm:$0xff]
    %v161 = vld [vmem:[#allocation6 + $0x78] sm:$0xff]
    %v163 = vsel %vm76, 0.0, 0
    %165 = vmatpush.msra.mxu0 0.0
    %166 = vmatpush.msra.mxu0 0.0
    %167 = vmatpush.msra.mxu0 0.0
    %168 = vmatpush.msra.mxu0 0.0
    %169 = vmatpush.msra.mxu0 0.0
    %170 = vmatpush.msra.mxu0 0.0
    %171 = vmatpush.msra.mxu0 0.0
    %172 = vmatpush.msra.mxu0 0.0
    %173 = vmatpush.msra.mxu0 %v160
    %174 = vmatpush.msra.mxu0 %v158
    %175 = vmatpush.msra.mxu0 %v156
    %176 = vmatpush.msra.mxu0 %v154
    %177 = vmatpush.msra.mxu0 %v152
    %178 = vmatpush.msra.mxu0 %v150
    %179 = vmatpush.msra.mxu0 %v148
    %180 = vmatpush.msra.mxu0 %v146
    %181 = vmatmul.f32.gmra.mxu0 %v163
    %v182 = vpop.f32.mrf.mxu0
    %v183 = vadd.f32 0.0, %v182
    %184 = vdwg.mxu0
    %185 = vmatpush.msra.mxu0 0.0
    %186 = vmatpush.msra.mxu0 0.0
    %187 = vmatpush.msra.mxu0 0.0
    %188 = vmatpush.msra.mxu0 0.0
    %189 = vmatpush.msra.mxu0 0.0
    %190 = vmatpush.msra.mxu0 0.0
    %191 = vmatpush.msra.mxu0 0.0
    %192 = vmatpush.msra.mxu0 0.0
    %193 = vmatpush.msra.mxu0 %v161
    %194 = vmatpush.msra.mxu0 %v159
    %195 = vmatpush.msra.mxu0 %v157
    %196 = vmatpush.msra.mxu0 %v155
    %197 = vmatpush.msra.mxu0 %v153
    %198 = vmatpush.msra.mxu0 %v151
    %199 = vmatpush.msra.mxu0 %v149
    %200 = vmatpush.msra.mxu0 %v147
    %201 = vmatmul.f32.gmra.mxu0 %v163
    %v202 = vpop.f32.mrf.mxu0
    %v203 = vadd.f32 0.0, %v202
    %204 = vdwg.mxu0
    %v205 = vadd.f32 %v101, %v183
    %v206 = vxor.u32 %v205, 2147483648
    %v207 = vmul.f32 %v206, 1.442695
    %v208 = vpow.pop %v207
    %v209 = vadd.f32 %v208, 1.0
    %v210 = vrcp.pop %v209
    %v211 = vmul.f32 %v209, %v210
    %v212 = vsub.f32 1.0, %v211
    %v213 = vmul.f32 %v210, %v212
    %v214 = vadd.f32 %v210, %v213
    %vm215 = vweird.f32 %v209
    %vm216 = vweird.f32 %v210
    %vm217 = vmor %vm215, %vm216
    %v218 = vsel %vm217, %v210, %v214
    %v219 = vand.u32 2147483647, %v209
    %vm220 = vcmp.eq.f32.partialorder %v219, 8.507059e+37
    %v221 = vand.u32 %v209, 2147483648
    %v222 = vor.u32 1.1754944e-38, %v221
    %v223 = vsel %vm220, %v222, %v218
    %v224 = vmul.f32 1.0, %v223
    %v226 = vperm.slane %v143, 0
    %227 = vrot.lane.b32.xlu0 %v226, 64
    %v228 = vpop.permute.xlu0 %227
    %v230 = vadd.f32 %v183, %v228
    %232 = vrot.lane.b32.xlu0 %v230, 64
    %v233 = vpop.permute.xlu0 %232
    %v235 = vmul.f32 %v224, %v233
    %237 = vrot.lane.b32.xlu0 %v235, 64
    %v238 = vpop.permute.xlu0 %237
    %v240 = vadd.f32 %v101, %v238
    %v241 = vtanh.pop %v240
    %v242 = vsub.f32 0.0, %v241
    %244 = vrot.lane.b32.xlu0 %v242, 96
    %v245 = vpop.permute.xlu0 %244
    %v247 = vmul.f32 %v224, %v245
    %249 = vrot.lane.b32.xlu0 %v247, 32
    %v250 = vpop.permute.xlu0 %249
    %v252 = vadd.f32 %v241, %v250
    %254 = vset.pattern.permute.xlu0 0
    %255 = vperm.xlu0 %254, %v58
    %v256 = vpop.permute.xlu0 %255
    %v258 = vmul.f32 %v256, %v252
    %260 = vset.pattern.permute.xlu0 0
    %261 = vperm.xlu0 %260, %v60
    %v262 = vpop.permute.xlu0 %261
    %v264 = vmul.f32 %v262, 0.0
    %v265 = vadd.f32 %v258, %v264
    %v268 = vrot.slane %v183, 2
    %v269 = vrot.slane %v203, 2
    %270 = vrot.lane.b32.xlu0 %v268, 32
    %v271 = vpop.permute.xlu0 %270
    %272 = vrot.lane.b32.xlu0 %v269, 32
    %v273 = vpop.permute.xlu0 %272
    %vm274 = vcmask 261120
    %v275 = vsel %vm274, %v271, %v273
    %v277 = vadd.f32 %v141, %v275
    %v278 = vxor.u32 %v277, 2147483648
    %v279 = vmul.f32 %v278, 1.442695
    %v280 = vpow.pop %v279
    %v281 = vadd.f32 %v280, 1.0
    %v282 = vrcp.pop %v281
    %v283 = vmul.f32 %v281, %v282
    %v284 = vsub.f32 1.0, %v283
    %v285 = vmul.f32 %v282, %v284
    %v286 = vadd.f32 %v282, %v285
    %vm287 = vweird.f32 %v281
    %vm288 = vweird.f32 %v282
    %vm289 = vmor %vm287, %vm288
    %v290 = vsel %vm289, %v282, %v286
    %v291 = vand.u32 2147483647, %v281
    %vm292 = vcmp.eq.f32.partialorder %v291, 8.507059e+37
    %v293 = vand.u32 %v281, 2147483648
    %v294 = vor.u32 1.1754944e-38, %v293
    %v295 = vsel %vm292, %v294, %v290
    %v296 = vmul.f32 1.0, %v295
    %v298 = vperm.slane %v145, 0
    %299 = vrot.lane.b32.xlu0 %v298, 32
    %v300 = vpop.permute.xlu0 %299
    %v302 = vadd.f32 %v203, %v300
    %v304 = vrot.slane %v302, 2
    %305 = vrot.lane.b32.xlu0 %v304, 96
    %v306 = vpop.permute.xlu0 %305
    %v308 = vmul.f32 %v296, %v306
    %310 = vrot.lane.b32.xlu0 %v308, 64
    %v311 = vpop.permute.xlu0 %310
    %v313 = vadd.f32 %v141, %v311
    %v314 = vtanh.pop %v313
    %v315 = vsub.f32 0.0, %v314
    %317 = vrot.lane.b32.xlu0 %v315, 96
    %v318 = vpop.permute.xlu0 %317
    %v320 = vmul.f32 %v296, %v318
    %322 = vrot.lane.b32.xlu0 %v320, 32
    %v323 = vpop.permute.xlu0 %322
    %v325 = vadd.f32 %v314, %v323
    %327 = vset.pattern.permute.xlu0 0
    %328 = vperm.xlu0 %327, %v59
    %v329 = vpop.permute.xlu0 %328
    %v331 = vmul.f32 %v329, %v325
    %333 = vset.pattern.permute.xlu0 0
    %334 = vperm.xlu0 %333, %v61
    %v335 = vpop.permute.xlu0 %334
    %v337 = vmul.f32 %v335, 0.0
    %v338 = vadd.f32 %v331, %v337
    %340 = vrot.lane.b32.xlu0 %v265, 64
    %v341 = vpop.permute.xlu0 %340
    %v344 = vrot.slane %v338, 6
    %345 = vrot.lane.b32.xlu0 %v344, 96
    %v346 = vpop.permute.xlu0 %345
    %v348 = vsel %vm274, %v341, %v346
    %350 = vrot.lane.b32.xlu0 %v258, 64
    %v351 = vpop.permute.xlu0 %350
    %vm353 = vcmask 254976
    %354 = vst.msk [vmem:[#allocation2] sm:$0x3] %vm353, %v351
    %356 = vrot.lane.b32.xlu0 %v331, 96
    %v357 = vpop.permute.xlu0 %356
    %vm359 = vcmask 523526
    %360 = vst.msk [vmem:[#allocation2 + $0x8] sm:$0xc0] %vm359, %v357
    %v362 = vsel %vm76, %v348, 0
    %364 = vmatpush.msra.mxu0 0.0
    %365 = vmatpush.msra.mxu0 0.0
    %366 = vmatpush.msra.mxu0 0.0
    %367 = vmatpush.msra.mxu0 0.0
    %368 = vmatpush.msra.mxu0 0.0
    %369 = vmatpush.msra.mxu0 0.0
    %370 = vmatpush.msra.mxu0 0.0
    %371 = vmatpush.msra.mxu0 0.0
    %372 = vmatpush.msra.mxu0 %v160
    %373 = vmatpush.msra.mxu0 %v158
    %374 = vmatpush.msra.mxu0 %v156
    %375 = vmatpush.msra.mxu0 %v154
    %376 = vmatpush.msra.mxu0 %v152
    %377 = vmatpush.msra.mxu0 %v150
    %378 = vmatpush.msra.mxu0 %v148
    %379 = vmatpush.msra.mxu0 %v146
    %380 = vmatmul.f32.gmra.mxu0 %v362
    %v381 = vpop.f32.mrf.mxu0
    %v382 = vadd.f32 0.0, %v381
    %383 = vdwg.mxu0
    %384 = vmatpush.msra.mxu0 0.0
    %385 = vmatpush.msra.mxu0 0.0
    %386 = vmatpush.msra.mxu0 0.0
    %387 = vmatpush.msra.mxu0 0.0
    %388 = vmatpush.msra.mxu0 0.0
    %389 = vmatpush.msra.mxu0 0.0
    %390 = vmatpush.msra.mxu0 0.0
    %391 = vmatpush.msra.mxu0 0.0
    %392 = vmatpush.msra.mxu0 %v161
    %393 = vmatpush.msra.mxu0 %v159
    %394 = vmatpush.msra.mxu0 %v157
    %395 = vmatpush.msra.mxu0 %v155
    %396 = vmatpush.msra.mxu0 %v153
    %397 = vmatpush.msra.mxu0 %v151
    %398 = vmatpush.msra.mxu0 %v149
    %399 = vmatpush.msra.mxu0 %v147
    %400 = vmatmul.f32.gmra.mxu0 %v362
    %v401 = vpop.f32.mrf.mxu0
    %v402 = vadd.f32 0.0, %v401
    %403 = vdwg.mxu0
    %v405 = vrot.slane %v382, 6
    %v407 = vadd.f32 %v101, %v405
    %v408 = vxor.u32 %v407, 2147483648
    %v409 = vmul.f32 %v408, 1.442695
    %v410 = vpow.pop %v409
    %v411 = vadd.f32 %v410, 1.0
    %v412 = vrcp.pop %v411
    %v413 = vmul.f32 %v411, %v412
    %v414 = vsub.f32 1.0, %v413
    %v415 = vmul.f32 %v412, %v414
    %v416 = vadd.f32 %v412, %v415
    %vm417 = vweird.f32 %v411
    %vm418 = vweird.f32 %v412
    %vm419 = vmor %vm417, %vm418
    %v420 = vsel %vm419, %v412, %v416
    %v421 = vand.u32 2147483647, %v411
    %vm422 = vcmp.eq.f32.partialorder %v421, 8.507059e+37
    %v423 = vand.u32 %v411, 2147483648
    %v424 = vor.u32 1.1754944e-38, %v423
    %v425 = vsel %vm422, %v424, %v420
    %v426 = vmul.f32 1.0, %v425
    %v427 = vadd.f32 %v382, %v228
    %v429 = vrot.slane %v427, 6
    %430 = vrot.lane.b32.xlu0 %v429, 64
    %v431 = vpop.permute.xlu0 %430
    %v433 = vmul.f32 %v426, %v431
    %435 = vrot.lane.b32.xlu0 %v433, 64
    %v436 = vpop.permute.xlu0 %435
    %v438 = vadd.f32 %v101, %v436
    %v439 = vtanh.pop %v438
    %v441 = vrot.slane %v439, 2
    %442 = vrot.lane.b32.xlu0 %v441, 64
    %v443 = vpop.permute.xlu0 %442
    %v445 = vsub.f32 %v348, %v443
    %v447 = vrot.slane %v445, 6
    %448 = vrot.lane.b32.xlu0 %v447, 32
    %v449 = vpop.permute.xlu0 %448
    %v451 = vmul.f32 %v426, %v449
    %453 = vrot.lane.b32.xlu0 %v451, 32
    %v454 = vpop.permute.xlu0 %453
    %v456 = vadd.f32 %v439, %v454
    %v457 = vmul.f32 %v256, %v456
    %v458 = vrot.slane %v348, 6
    %v460 = vmul.f32 %v262, %v458
    %462 = vrot.lane.b32.xlu0 %v460, 64
    %v463 = vpop.permute.xlu0 %462
    %v465 = vadd.f32 %v457, %v463
    %v467 = vrot.slane %v382, 4
    %v468 = vrot.slane %v402, 4
    %469 = vrot.lane.b32.xlu0 %v467, 32
    %v470 = vpop.permute.xlu0 %469
    %471 = vrot.lane.b32.xlu0 %v468, 32
    %v472 = vpop.permute.xlu0 %471
    %v473 = vsel %vm274, %v470, %v472
    %v475 = vadd.f32 %v141, %v473
    %v476 = vxor.u32 %v475, 2147483648
    %v477 = vmul.f32 %v476, 1.442695
    %v478 = vpow.pop %v477
    %v479 = vadd.f32 %v478, 1.0
    %v480 = vrcp.pop %v479
    %v481 = vmul.f32 %v479, %v480
    %v482 = vsub.f32 1.0, %v481
    %v483 = vmul.f32 %v480, %v482
    %v484 = vadd.f32 %v480, %v483
    %vm485 = vweird.f32 %v479
    %vm486 = vweird.f32 %v480
    %vm487 = vmor %vm485, %vm486
    %v488 = vsel %vm487, %v480, %v484
    %v489 = vand.u32 2147483647, %v479
    %vm490 = vcmp.eq.f32.partialorder %v489, 8.507059e+37
    %v491 = vand.u32 %v479, 2147483648
    %v492 = vor.u32 1.1754944e-38, %v491
    %v493 = vsel %vm490, %v492, %v488
    %v494 = vmul.f32 1.0, %v493
    %v495 = vadd.f32 %v402, %v300
    %v497 = vrot.slane %v495, 4
    %498 = vrot.lane.b32.xlu0 %v497, 96
    %v499 = vpop.permute.xlu0 %498
    %v501 = vmul.f32 %v494, %v499
    %503 = vrot.lane.b32.xlu0 %v501, 64
    %v504 = vpop.permute.xlu0 %503
    %v506 = vadd.f32 %v141, %v504
    %v507 = vtanh.pop %v506
    %v509 = vrot.slane %v507, 4
    %510 = vrot.lane.b32.xlu0 %v509, 96
    %v511 = vpop.permute.xlu0 %510
    %v513 = vsub.f32 %v348, %v511
    %v515 = vrot.slane %v513, 4
    %v517 = vmul.f32 %v494, %v515
    %519 = vrot.lane.b32.xlu0 %v517, 32
    %v520 = vpop.permute.xlu0 %519
    %v522 = vadd.f32 %v507, %v520
    %v523 = vmul.f32 %v329, %v522
    %v524 = vrot.slane %v348, 4
    %525 = vrot.lane.b32.xlu0 %v524, 96
    %v526 = vpop.permute.xlu0 %525
    %v528 = vmul.f32 %v335, %v526
    %530 = vrot.lane.b32.xlu0 %v528, 64
    %v531 = vpop.permute.xlu0 %530
    %v533 = vadd.f32 %v523, %v531
    %535 = vrot.lane.b32.xlu0 %v465, 64
    %v536 = vpop.permute.xlu0 %535
    %v539 = vrot.slane %v533, 2
    %540 = vrot.lane.b32.xlu0 %v539, 96
    %v541 = vpop.permute.xlu0 %540
    %v543 = vsel %vm274, %v536, %v541
    %545 = vrot.lane.b32.xlu0 %v457, 64
    %v546 = vpop.permute.xlu0 %545
    %vm548 = vcmask 257026
    %549 = vst.msk [vmem:[#allocation2] sm:$0xc] %vm548, %v546
    %551 = vrot.lane.b32.xlu0 %v523, 96
    %v552 = vpop.permute.xlu0 %551
    %vm554 = vcmask 521476
    %555 = vst.msk [vmem:[#allocation2 + $0x8] sm:$0x30] %vm554, %v552
    %v557 = vrot.slane %v543, 2
    %v558 = vsel %vm76, %v557, 0
    %560 = vmatpush.msra.mxu0 0.0
    %561 = vmatpush.msra.mxu0 0.0
    %562 = vmatpush.msra.mxu0 0.0
    %563 = vmatpush.msra.mxu0 0.0
    %564 = vmatpush.msra.mxu0 0.0
    %565 = vmatpush.msra.mxu0 0.0
    %566 = vmatpush.msra.mxu0 0.0
    %567 = vmatpush.msra.mxu0 0.0
    %568 = vmatpush.msra.mxu0 %v160
    %569 = vmatpush.msra.mxu0 %v158
    %570 = vmatpush.msra.mxu0 %v156
    %571 = vmatpush.msra.mxu0 %v154
    %572 = vmatpush.msra.mxu0 %v152
    %573 = vmatpush.msra.mxu0 %v150
    %574 = vmatpush.msra.mxu0 %v148
    %575 = vmatpush.msra.mxu0 %v146
    %576 = vmatmul.f32.gmra.mxu0 %v558
    %v577 = vpop.f32.mrf.mxu0
    %v578 = vadd.f32 0.0, %v577
    %579 = vdwg.mxu0
    %580 = vmatpush.msra.mxu0 0.0
    %581 = vmatpush.msra.mxu0 0.0
    %582 = vmatpush.msra.mxu0 0.0
    %583 = vmatpush.msra.mxu0 0.0
    %584 = vmatpush.msra.mxu0 0.0
    %585 = vmatpush.msra.mxu0 0.0
    %586 = vmatpush.msra.mxu0 0.0
    %587 = vmatpush.msra.mxu0 0.0
    %588 = vmatpush.msra.mxu0 %v161
    %589 = vmatpush.msra.mxu0 %v159
    %590 = vmatpush.msra.mxu0 %v157
    %591 = vmatpush.msra.mxu0 %v155
    %592 = vmatpush.msra.mxu0 %v153
    %593 = vmatpush.msra.mxu0 %v151
    %594 = vmatpush.msra.mxu0 %v149
    %595 = vmatpush.msra.mxu0 %v147
    %596 = vmatmul.f32.gmra.mxu0 %v558
    %v597 = vpop.f32.mrf.mxu0
    %v598 = vadd.f32 0.0, %v597
    %599 = vdwg.mxu0
    %v601 = vrot.slane %v578, 4
    %v603 = vadd.f32 %v101, %v601
    %v604 = vxor.u32 %v603, 2147483648
    %v605 = vmul.f32 %v604, 1.442695
    %v606 = vpow.pop %v605
    %v607 = vadd.f32 %v606, 1.0
    %v608 = vrcp.pop %v607
    %v609 = vmul.f32 %v607, %v608
    %v610 = vsub.f32 1.0, %v609
    %v611 = vmul.f32 %v608, %v610
    %v612 = vadd.f32 %v608, %v611
    %vm613 = vweird.f32 %v607
    %vm614 = vweird.f32 %v608
    %vm615 = vmor %vm613, %vm614
    %v616 = vsel %vm615, %v608, %v612
    %v617 = vand.u32 2147483647, %v607
    %vm618 = vcmp.eq.f32.partialorder %v617, 8.507059e+37
    %v619 = vand.u32 %v607, 2147483648
    %v620 = vor.u32 1.1754944e-38, %v619
    %v621 = vsel %vm618, %v620, %v616
    %v622 = vmul.f32 1.0, %v621
    %v623 = vadd.f32 %v578, %v228
    %v625 = vrot.slane %v623, 4
    %626 = vrot.lane.b32.xlu0 %v625, 64
    %v627 = vpop.permute.xlu0 %626
    %v629 = vmul.f32 %v622, %v627
    %631 = vrot.lane.b32.xlu0 %v629, 64
    %v632 = vpop.permute.xlu0 %631
    %v634 = vadd.f32 %v101, %v632
    %v635 = vtanh.pop %v634
    %v637 = vrot.slane %v635, 2
    %638 = vrot.lane.b32.xlu0 %v637, 64
    %v639 = vpop.permute.xlu0 %638
    %v641 = vsub.f32 %v543, %v639
    %v643 = vrot.slane %v641, 6
    %644 = vrot.lane.b32.xlu0 %v643, 32
    %v645 = vpop.permute.xlu0 %644
    %v647 = vmul.f32 %v622, %v645
    %649 = vrot.lane.b32.xlu0 %v647, 32
    %v650 = vpop.permute.xlu0 %649
    %v652 = vadd.f32 %v635, %v650
    %v653 = vmul.f32 %v256, %v652
    %v654 = vrot.slane %v543, 6
    %v656 = vmul.f32 %v262, %v654
    %658 = vrot.lane.b32.xlu0 %v656, 64
    %v659 = vpop.permute.xlu0 %658
    %v661 = vadd.f32 %v653, %v659
    %v663 = vrot.slane %v578, 6
    %v664 = vrot.slane %v598, 6
    %665 = vrot.lane.b32.xlu0 %v663, 32
    %v666 = vpop.permute.xlu0 %665
    %667 = vrot.lane.b32.xlu0 %v664, 32
    %v668 = vpop.permute.xlu0 %667
    %v669 = vsel %vm274, %v666, %v668
    %v671 = vadd.f32 %v141, %v669
    %v672 = vxor.u32 %v671, 2147483648
    %v673 = vmul.f32 %v672, 1.442695
    %v674 = vpow.pop %v673
    %v675 = vadd.f32 %v674, 1.0
    %v676 = vrcp.pop %v675
    %v677 = vmul.f32 %v675, %v676
    %v678 = vsub.f32 1.0, %v677
    %v679 = vmul.f32 %v676, %v678
    %v680 = vadd.f32 %v676, %v679
    %vm681 = vweird.f32 %v675
    %vm682 = vweird.f32 %v676
    %vm683 = vmor %vm681, %vm682
    %v684 = vsel %vm683, %v676, %v680
    %v685 = vand.u32 2147483647, %v675
    %vm686 = vcmp.eq.f32.partialorder %v685, 8.507059e+37
    %v687 = vand.u32 %v675, 2147483648
    %v688 = vor.u32 1.1754944e-38, %v687
    %v689 = vsel %vm686, %v688, %v684
    %v690 = vmul.f32 1.0, %v689
    %v691 = vadd.f32 %v598, %v300
    %v693 = vrot.slane %v691, 6
    %694 = vrot.lane.b32.xlu0 %v693, 96
    %v695 = vpop.permute.xlu0 %694
    %v697 = vmul.f32 %v690, %v695
    %699 = vrot.lane.b32.xlu0 %v697, 64
    %v700 = vpop.permute.xlu0 %699
    %v702 = vadd.f32 %v141, %v700
    %v703 = vtanh.pop %v702
    %705 = vrot.lane.b32.xlu0 %v703, 96
    %v706 = vpop.permute.xlu0 %705
    %v708 = vsub.f32 %v543, %v706
    %v709 = vmul.f32 %v690, %v708
    %711 = vrot.lane.b32.xlu0 %v709, 32
    %v712 = vpop.permute.xlu0 %711
    %v714 = vadd.f32 %v703, %v712
    %v715 = vmul.f32 %v329, %v714
    %v716 = vmul.f32 %v335, %v543
    %718 = vrot.lane.b32.xlu0 %v716, 32
    %v719 = vpop.permute.xlu0 %718
    %v721 = vadd.f32 %v715, %v719
    %723 = vrot.lane.b32.xlu0 %v661, 64
    %v724 = vpop.permute.xlu0 %723
    %v727 = vrot.slane %v721, 6
    %728 = vrot.lane.b32.xlu0 %v727, 96
    %v729 = vpop.permute.xlu0 %728
    %v731 = vsel %vm274, %v724, %v729
    %733 = vrot.lane.b32.xlu0 %v653, 64
    %v734 = vpop.permute.xlu0 %733
    %vm736 = vcmask 259076
    %737 = vst.msk [vmem:[#allocation2] sm:$0x30] %vm736, %v734
    %739 = vrot.lane.b32.xlu0 %v715, 96
    %v740 = vpop.permute.xlu0 %739
    %vm742 = vcmask 519426
    %743 = vst.msk [vmem:[#allocation2 + $0x8] sm:$0xc] %vm742, %v740
    %v745 = vrot.slane %v731, 4
    %v746 = vsel %vm76, %v745, 0
    %748 = vmatpush.msra.mxu0 0.0
    %749 = vmatpush.msra.mxu0 0.0
    %750 = vmatpush.msra.mxu0 0.0
    %751 = vmatpush.msra.mxu0 0.0
    %752 = vmatpush.msra.mxu0 0.0
    %753 = vmatpush.msra.mxu0 0.0
    %754 = vmatpush.msra.mxu0 0.0
    %755 = vmatpush.msra.mxu0 0.0
    %756 = vmatpush.msra.mxu0 %v160
    %757 = vmatpush.msra.mxu0 %v158
    %758 = vmatpush.msra.mxu0 %v156
    %759 = vmatpush.msra.mxu0 %v154
    %760 = vmatpush.msra.mxu0 %v152
    %761 = vmatpush.msra.mxu0 %v150
    %762 = vmatpush.msra.mxu0 %v148
    %763 = vmatpush.msra.mxu0 %v146
    %764 = vmatmul.f32.gmra.mxu0 %v746
    %v765 = vpop.f32.mrf.mxu0
    %v766 = vadd.f32 0.0, %v765
    %767 = vdwg.mxu0
    %768 = vmatpush.msra.mxu0 0.0
    %769 = vmatpush.msra.mxu0 0.0
    %770 = vmatpush.msra.mxu0 0.0
    %771 = vmatpush.msra.mxu0 0.0
    %772 = vmatpush.msra.mxu0 0.0
    %773 = vmatpush.msra.mxu0 0.0
    %774 = vmatpush.msra.mxu0 0.0
    %775 = vmatpush.msra.mxu0 0.0
    %776 = vmatpush.msra.mxu0 %v161
    %777 = vmatpush.msra.mxu0 %v159
    %778 = vmatpush.msra.mxu0 %v157
    %779 = vmatpush.msra.mxu0 %v155
    %780 = vmatpush.msra.mxu0 %v153
    %781 = vmatpush.msra.mxu0 %v151
    %782 = vmatpush.msra.mxu0 %v149
    %783 = vmatpush.msra.mxu0 %v147
    %784 = vmatmul.f32.gmra.mxu0 %v746
    %v785 = vpop.f32.mrf.mxu0
    %v786 = vadd.f32 0.0, %v785
    %787 = vdwg.mxu0
    %v789 = vrot.slane %v766, 2
    %v791 = vadd.f32 %v101, %v789
    %v792 = vxor.u32 %v791, 2147483648
    %v793 = vmul.f32 %v792, 1.442695
    %v794 = vpow.pop %v793
    %v795 = vadd.f32 %v794, 1.0
    %v796 = vrcp.pop %v795
    %v797 = vmul.f32 %v795, %v796
    %v798 = vsub.f32 1.0, %v797
    %v799 = vmul.f32 %v796, %v798
    %v800 = vadd.f32 %v796, %v799
    %vm801 = vweird.f32 %v795
    %vm802 = vweird.f32 %v796
    %vm803 = vmor %vm801, %vm802
    %v804 = vsel %vm803, %v796, %v800
    %v805 = vand.u32 2147483647, %v795
    %vm806 = vcmp.eq.f32.partialorder %v805, 8.507059e+37
    %v807 = vand.u32 %v795, 2147483648
    %v808 = vor.u32 1.1754944e-38, %v807
    %v809 = vsel %vm806, %v808, %v804
    %v810 = vmul.f32 1.0, %v809
    %v811 = vadd.f32 %v766, %v228
    %v813 = vrot.slane %v811, 2
    %814 = vrot.lane.b32.xlu0 %v813, 64
    %v815 = vpop.permute.xlu0 %814
    %v817 = vmul.f32 %v810, %v815
    %819 = vrot.lane.b32.xlu0 %v817, 64
    %v820 = vpop.permute.xlu0 %819
    %v822 = vadd.f32 %v101, %v820
    %v823 = vtanh.pop %v822
    %v825 = vrot.slane %v823, 2
    %826 = vrot.lane.b32.xlu0 %v825, 64
    %v827 = vpop.permute.xlu0 %826
    %v829 = vsub.f32 %v731, %v827
    %v831 = vrot.slane %v829, 6
    %832 = vrot.lane.b32.xlu0 %v831, 32
    %v833 = vpop.permute.xlu0 %832
    %v835 = vmul.f32 %v810, %v833
    %837 = vrot.lane.b32.xlu0 %v835, 32
    %v838 = vpop.permute.xlu0 %837
    %v840 = vadd.f32 %v823, %v838
    %v841 = vmul.f32 %v256, %v840
    %v842 = vrot.slane %v731, 6
    %v844 = vmul.f32 %v262, %v842
    %846 = vrot.lane.b32.xlu0 %v844, 64
    %v847 = vpop.permute.xlu0 %846
    %v849 = vadd.f32 %v841, %v847
    %851 = vrot.lane.b32.xlu0 %v766, 32
    %v852 = vpop.permute.xlu0 %851
    %853 = vrot.lane.b32.xlu0 %v786, 32
    %v854 = vpop.permute.xlu0 %853
    %v855 = vsel %vm274, %v852, %v854
    %v857 = vadd.f32 %v141, %v855
    %v858 = vxor.u32 %v857, 2147483648
    %v859 = vmul.f32 %v858, 1.442695
    %v860 = vpow.pop %v859
    %v861 = vadd.f32 %v860, 1.0
    %v862 = vrcp.pop %v861
    %v863 = vmul.f32 %v861, %v862
    %v864 = vsub.f32 1.0, %v863
    %v865 = vmul.f32 %v862, %v864
    %v866 = vadd.f32 %v862, %v865
    %vm867 = vweird.f32 %v861
    %vm868 = vweird.f32 %v862
    %vm869 = vmor %vm867, %vm868
    %v870 = vsel %vm869, %v862, %v866
    %v871 = vand.u32 2147483647, %v861
    %vm872 = vcmp.eq.f32.partialorder %v871, 8.507059e+37
    %v873 = vand.u32 %v861, 2147483648
    %v874 = vor.u32 1.1754944e-38, %v873
    %v875 = vsel %vm872, %v874, %v870
    %v876 = vmul.f32 1.0, %v875
    %v877 = vadd.f32 %v786, %v300
    %879 = vrot.lane.b32.xlu0 %v877, 96
    %v880 = vpop.permute.xlu0 %879
    %v882 = vmul.f32 %v876, %v880
    %884 = vrot.lane.b32.xlu0 %v882, 64
    %v885 = vpop.permute.xlu0 %884
    %v887 = vadd.f32 %v141, %v885
    %v888 = vtanh.pop %v887
    %v890 = vrot.slane %v888, 4
    %891 = vrot.lane.b32.xlu0 %v890, 96
    %v892 = vpop.permute.xlu0 %891
    %v894 = vsub.f32 %v731, %v892
    %v896 = vrot.slane %v894, 4
    %v898 = vmul.f32 %v876, %v896
    %900 = vrot.lane.b32.xlu0 %v898, 32
    %v901 = vpop.permute.xlu0 %900
    %v903 = vadd.f32 %v888, %v901
    %v904 = vmul.f32 %v329, %v903
    %905 = vrot.lane.b32.xlu0 %v745, 96
    %v906 = vpop.permute.xlu0 %905
    %v908 = vmul.f32 %v335, %v906
    %910 = vrot.lane.b32.xlu0 %v908, 64
    %v911 = vpop.permute.xlu0 %910
    %v913 = vadd.f32 %v904, %v911
    %915 = vrot.lane.b32.xlu0 %v849, 64
    %v916 = vpop.permute.xlu0 %915
    %v919 = vrot.slane %v913, 2
    %920 = vrot.lane.b32.xlu0 %v919, 96
    %v921 = vpop.permute.xlu0 %920
    %v923 = vsel %vm274, %v916, %v921
    %925 = vrot.lane.b32.xlu0 %v841, 64
    %v926 = vpop.permute.xlu0 %925
    %vm928 = vcmask 261126
    %929 = vst.msk [vmem:[#allocation2] sm:$0xc0] %vm928, %v926
    %931 = vrot.lane.b32.xlu0 %v904, 96
    %v932 = vpop.permute.xlu0 %931
    %vm934 = vcmask 517376
    %935 = vst.msk [vmem:[#allocation2 + $0x8] sm:$0x3] %vm934, %v932
    %v937 = vrot.slane %v923, 6
    %v938 = vsel %vm76, %v937, 0
    %940 = vmatpush.msra.mxu0 0.0
    %941 = vmatpush.msra.mxu0 0.0
    %942 = vmatpush.msra.mxu0 0.0
    %943 = vmatpush.msra.mxu0 0.0
    %944 = vmatpush.msra.mxu0 0.0
    %945 = vmatpush.msra.mxu0 0.0
    %946 = vmatpush.msra.mxu0 0.0
    %947 = vmatpush.msra.mxu0 0.0
    %948 = vmatpush.msra.mxu0 %v160
    %949 = vmatpush.msra.mxu0 %v158
    %950 = vmatpush.msra.mxu0 %v156
    %951 = vmatpush.msra.mxu0 %v154
    %952 = vmatpush.msra.mxu0 %v152
    %953 = vmatpush.msra.mxu0 %v150
    %954 = vmatpush.msra.mxu0 %v148
    %955 = vmatpush.msra.mxu0 %v146
    %956 = vmatmul.f32.gmra.mxu0 %v938
    %v957 = vpop.f32.mrf.mxu0
    %v958 = vadd.f32 0.0, %v957
    %959 = vdwg.mxu0
    %960 = vmatpush.msra.mxu0 0.0
    %961 = vmatpush.msra.mxu0 0.0
    %962 = vmatpush.msra.mxu0 0.0
    %963 = vmatpush.msra.mxu0 0.0
    %964 = vmatpush.msra.mxu0 0.0
    %965 = vmatpush.msra.mxu0 0.0
    %966 = vmatpush.msra.mxu0 0.0
    %967 = vmatpush.msra.mxu0 0.0
    %968 = vmatpush.msra.mxu0 %v161
    %969 = vmatpush.msra.mxu0 %v159
    %970 = vmatpush.msra.mxu0 %v157
    %971 = vmatpush.msra.mxu0 %v155
    %972 = vmatpush.msra.mxu0 %v153
    %973 = vmatpush.msra.mxu0 %v151
    %974 = vmatpush.msra.mxu0 %v149
    %975 = vmatpush.msra.mxu0 %v147
    %976 = vmatmul.f32.gmra.mxu0 %v938
    %v977 = vpop.f32.mrf.mxu0
    %v978 = vadd.f32 0.0, %v977
    %979 = vdwg.mxu0
    %v980 = vadd.f32 %v104, %v958
    %v981 = vxor.u32 %v980, 2147483648
    %v982 = vmul.f32 %v981, 1.442695
    %v983 = vpow.pop %v982
    %v984 = vadd.f32 %v983, 1.0
    %v985 = vrcp.pop %v984
    %v986 = vmul.f32 %v984, %v985
    %v987 = vsub.f32 1.0, %v986
    %v988 = vmul.f32 %v985, %v987
    %v989 = vadd.f32 %v985, %v988
    %vm990 = vweird.f32 %v984
    %vm991 = vweird.f32 %v985
    %vm992 = vmor %vm990, %vm991
    %v993 = vsel %vm992, %v985, %v989
    %v994 = vand.u32 2147483647, %v984
    %vm995 = vcmp.eq.f32.partialorder %v994, 8.507059e+37
    %v996 = vand.u32 %v984, 2147483648
    %v997 = vor.u32 1.1754944e-38, %v996
    %v998 = vsel %vm995, %v997, %v993
    %v999 = vmul.f32 1.0, %v998
    %v1000 = vadd.f32 %v958, %v228
    %1002 = vrot.lane.b32.xlu0 %v1000, 64
    %v1003 = vpop.permute.xlu0 %1002
    %v1005 = vmul.f32 %v999, %v1003
    %1007 = vrot.lane.b32.xlu0 %v1005, 64
    %v1008 = vpop.permute.xlu0 %1007
    %v1010 = vadd.f32 %v104, %v1008
    %v1011 = vtanh.pop %v1010
    %v1013 = vrot.slane %v1011, 2
    %1014 = vrot.lane.b32.xlu0 %v1013, 64
    %v1015 = vpop.permute.xlu0 %1014
    %v1017 = vsub.f32 %v923, %v1015
    %v1019 = vrot.slane %v1017, 6
    %1020 = vrot.lane.b32.xlu0 %v1019, 32
    %v1021 = vpop.permute.xlu0 %1020
    %v1023 = vmul.f32 %v999, %v1021
    %1025 = vrot.lane.b32.xlu0 %v1023, 32
    %v1026 = vpop.permute.xlu0 %1025
    %v1028 = vadd.f32 %v1011, %v1026
    %v1029 = vmul.f32 %v329, %v1028
    %v1031 = vmul.f32 %v335, %v937
    %1033 = vrot.lane.b32.xlu0 %v1031, 64
    %v1034 = vpop.permute.xlu0 %1033
    %v1036 = vadd.f32 %v1029, %v1034
    %v1039 = vrot.slane %v958, 2
    %v1040 = vrot.slane %v978, 2
    %1041 = vrot.lane.b32.xlu0 %v1039, 32
    %v1042 = vpop.permute.xlu0 %1041
    %1043 = vrot.lane.b32.xlu0 %v1040, 32
    %v1044 = vpop.permute.xlu0 %1043
    %v1045 = vsel %vm274, %v1042, %v1044
    %v1047 = vadd.f32 %v138, %v1045
    %v1048 = vxor.u32 %v1047, 2147483648
    %v1049 = vmul.f32 %v1048, 1.442695
    %v1050 = vpow.pop %v1049
    %v1051 = vadd.f32 %v1050, 1.0
    %v1052 = vrcp.pop %v1051
    %v1053 = vmul.f32 %v1051, %v1052
    %v1054 = vsub.f32 1.0, %v1053
    %v1055 = vmul.f32 %v1052, %v1054
    %v1056 = vadd.f32 %v1052, %v1055
    %vm1057 = vweird.f32 %v1051
    %vm1058 = vweird.f32 %v1052
    %vm1059 = vmor %vm1057, %vm1058
    %v1060 = vsel %vm1059, %v1052, %v1056
    %v1061 = vand.u32 2147483647, %v1051
    %vm1062 = vcmp.eq.f32.partialorder %v1061, 8.507059e+37
    %v1063 = vand.u32 %v1051, 2147483648
    %v1064 = vor.u32 1.1754944e-38, %v1063
    %v1065 = vsel %vm1062, %v1064, %v1060
    %v1066 = vmul.f32 1.0, %v1065
    %v1067 = vadd.f32 %v978, %v300
    %v1069 = vrot.slane %v1067, 2
    %1070 = vrot.lane.b32.xlu0 %v1069, 96
    %v1071 = vpop.permute.xlu0 %1070
    %v1073 = vmul.f32 %v1066, %v1071
    %1075 = vrot.lane.b32.xlu0 %v1073, 64
    %v1076 = vpop.permute.xlu0 %1075
    %v1078 = vadd.f32 %v138, %v1076
    %v1079 = vtanh.pop %v1078
    %1081 = vrot.lane.b32.xlu0 %v1079, 96
    %v1082 = vpop.permute.xlu0 %1081
    %v1084 = vsub.f32 %v923, %v1082
    %v1085 = vmul.f32 %v1066, %v1084
    %1087 = vrot.lane.b32.xlu0 %v1085, 32
    %v1088 = vpop.permute.xlu0 %1087
    %v1090 = vadd.f32 %v1079, %v1088
    %v1091 = vmul.f32 %v256, %v1090
    %v1092 = vmul.f32 %v262, %v923
    %1094 = vrot.lane.b32.xlu0 %v1092, 32
    %v1095 = vpop.permute.xlu0 %1094
    %v1097 = vadd.f32 %v1091, %v1095
    %1099 = vrot.lane.b32.xlu0 %v1036, 64
    %v1100 = vpop.permute.xlu0 %1099
    %v1103 = vrot.slane %v1097, 6
    %1104 = vrot.lane.b32.xlu0 %v1103, 96
    %v1105 = vpop.permute.xlu0 %1104
    %v1107 = vsel %vm274, %v1100, %v1105
    %1109 = vrot.lane.b32.xlu0 %v1029, 64
    %v1110 = vpop.permute.xlu0 %1109
    %1112 = vst.msk [vmem:[#allocation2 + $0x8] sm:$0x3] %vm353, %v1110
    %1114 = vrot.lane.b32.xlu0 %v1091, 96
    %v1115 = vpop.permute.xlu0 %1114
    %1117 = vst.msk [vmem:[#allocation2] sm:$0xc0] %vm359, %v1115
    %v1119 = vsel %vm76, %v1107, 0
    %1121 = vmatpush.msra.mxu0 0.0
    %1122 = vmatpush.msra.mxu0 0.0
    %1123 = vmatpush.msra.mxu0 0.0
    %1124 = vmatpush.msra.mxu0 0.0
    %1125 = vmatpush.msra.mxu0 0.0
    %1126 = vmatpush.msra.mxu0 0.0
    %1127 = vmatpush.msra.mxu0 0.0
    %1128 = vmatpush.msra.mxu0 0.0
    %1129 = vmatpush.msra.mxu0 %v160
    %1130 = vmatpush.msra.mxu0 %v158
    %1131 = vmatpush.msra.mxu0 %v156
    %1132 = vmatpush.msra.mxu0 %v154
    %1133 = vmatpush.msra.mxu0 %v152
    %1134 = vmatpush.msra.mxu0 %v150
    %1135 = vmatpush.msra.mxu0 %v148
    %1136 = vmatpush.msra.mxu0 %v146
    %1137 = vmatmul.f32.gmra.mxu0 %v1119
    %v1138 = vpop.f32.mrf.mxu0
    %v1139 = vadd.f32 0.0, %v1138
    %1140 = vdwg.mxu0
    %1141 = vmatpush.msra.mxu0 0.0
    %1142 = vmatpush.msra.mxu0 0.0
    %1143 = vmatpush.msra.mxu0 0.0
    %1144 = vmatpush.msra.mxu0 0.0
    %1145 = vmatpush.msra.mxu0 0.0
    %1146 = vmatpush.msra.mxu0 0.0
    %1147 = vmatpush.msra.mxu0 0.0
    %1148 = vmatpush.msra.mxu0 0.0
    %1149 = vmatpush.msra.mxu0 %v161
    %1150 = vmatpush.msra.mxu0 %v159
    %1151 = vmatpush.msra.mxu0 %v157
    %1152 = vmatpush.msra.mxu0 %v155
    %1153 = vmatpush.msra.mxu0 %v153
    %1154 = vmatpush.msra.mxu0 %v151
    %1155 = vmatpush.msra.mxu0 %v149
    %1156 = vmatpush.msra.mxu0 %v147
    %1157 = vmatmul.f32.gmra.mxu0 %v1119
    %v1158 = vpop.f32.mrf.mxu0
    %v1159 = vadd.f32 0.0, %v1158
    %1160 = vdwg.mxu0
    %v1162 = vrot.slane %v1139, 6
    %v1164 = vadd.f32 %v104, %v1162
    %v1165 = vxor.u32 %v1164, 2147483648
    %v1166 = vmul.f32 %v1165, 1.442695
    %v1167 = vpow.pop %v1166
    %v1168 = vadd.f32 %v1167, 1.0
    %v1169 = vrcp.pop %v1168
    %v1170 = vmul.f32 %v1168, %v1169
    %v1171 = vsub.f32 1.0, %v1170
    %v1172 = vmul.f32 %v1169, %v1171
    %v1173 = vadd.f32 %v1169, %v1172
    %vm1174 = vweird.f32 %v1168
    %vm1175 = vweird.f32 %v1169
    %vm1176 = vmor %vm1174, %vm1175
    %v1177 = vsel %vm1176, %v1169, %v1173
    %v1178 = vand.u32 2147483647, %v1168
    %vm1179 = vcmp.eq.f32.partialorder %v1178, 8.507059e+37
    %v1180 = vand.u32 %v1168, 2147483648
    %v1181 = vor.u32 1.1754944e-38, %v1180
    %v1182 = vsel %vm1179, %v1181, %v1177
    %v1183 = vmul.f32 1.0, %v1182
    %v1184 = vadd.f32 %v1139, %v228
    %v1186 = vrot.slane %v1184, 6
    %1187 = vrot.lane.b32.xlu0 %v1186, 64
    %v1188 = vpop.permute.xlu0 %1187
    %v1190 = vmul.f32 %v1183, %v1188
    %1192 = vrot.lane.b32.xlu0 %v1190, 64
    %v1193 = vpop.permute.xlu0 %1192
    %v1195 = vadd.f32 %v104, %v1193
    %v1196 = vtanh.pop %v1195
    %v1198 = vrot.slane %v1196, 2
    %1199 = vrot.lane.b32.xlu0 %v1198, 64
    %v1200 = vpop.permute.xlu0 %1199
    %v1202 = vsub.f32 %v1107, %v1200
    %v1204 = vrot.slane %v1202, 6
    %1205 = vrot.lane.b32.xlu0 %v1204, 32
    %v1206 = vpop.permute.xlu0 %1205
    %v1208 = vmul.f32 %v1183, %v1206
    %1210 = vrot.lane.b32.xlu0 %v1208, 32
    %v1211 = vpop.permute.xlu0 %1210
    %v1213 = vadd.f32 %v1196, %v1211
    %v1214 = vmul.f32 %v329, %v1213
    %v1215 = vrot.slane %v1107, 6
    %v1217 = vmul.f32 %v335, %v1215
    %1219 = vrot.lane.b32.xlu0 %v1217, 64
    %v1220 = vpop.permute.xlu0 %1219
    %v1222 = vadd.f32 %v1214, %v1220
    %v1224 = vrot.slane %v1139, 4
    %v1225 = vrot.slane %v1159, 4
    %1226 = vrot.lane.b32.xlu0 %v1224, 32
    %v1227 = vpop.permute.xlu0 %1226
    %1228 = vrot.lane.b32.xlu0 %v1225, 32
    %v1229 = vpop.permute.xlu0 %1228
    %v1230 = vsel %vm274, %v1227, %v1229
    %v1232 = vadd.f32 %v138, %v1230
    %v1233 = vxor.u32 %v1232, 2147483648
    %v1234 = vmul.f32 %v1233, 1.442695
    %v1235 = vpow.pop %v1234
    %v1236 = vadd.f32 %v1235, 1.0
    %v1237 = vrcp.pop %v1236
    %v1238 = vmul.f32 %v1236, %v1237
    %v1239 = vsub.f32 1.0, %v1238
    %v1240 = vmul.f32 %v1237, %v1239
    %v1241 = vadd.f32 %v1237, %v1240
    %vm1242 = vweird.f32 %v1236
    %vm1243 = vweird.f32 %v1237
    %vm1244 = vmor %vm1242, %vm1243
    %v1245 = vsel %vm1244, %v1237, %v1241
    %v1246 = vand.u32 2147483647, %v1236
    %vm1247 = vcmp.eq.f32.partialorder %v1246, 8.507059e+37
    %v1248 = vand.u32 %v1236, 2147483648
    %v1249 = vor.u32 1.1754944e-38, %v1248
    %v1250 = vsel %vm1247, %v1249, %v1245
    %v1251 = vmul.f32 1.0, %v1250
    %v1252 = vadd.f32 %v1159, %v300
    %v1254 = vrot.slane %v1252, 4
    %1255 = vrot.lane.b32.xlu0 %v1254, 96
    %v1256 = vpop.permute.xlu0 %1255
    %v1258 = vmul.f32 %v1251, %v1256
    %1260 = vrot.lane.b32.xlu0 %v1258, 64
    %v1261 = vpop.permute.xlu0 %1260
    %v1263 = vadd.f32 %v138, %v1261
    %v1264 = vtanh.pop %v1263
    %v1266 = vrot.slane %v1264, 4
    %1267 = vrot.lane.b32.xlu0 %v1266, 96
    %v1268 = vpop.permute.xlu0 %1267
    %v1270 = vsub.f32 %v1107, %v1268
    %v1272 = vrot.slane %v1270, 4
    %v1274 = vmul.f32 %v1251, %v1272
    %1276 = vrot.lane.b32.xlu0 %v1274, 32
    %v1277 = vpop.permute.xlu0 %1276
    %v1279 = vadd.f32 %v1264, %v1277
    %v1280 = vmul.f32 %v256, %v1279
    %v1281 = vrot.slane %v1107, 4
    %1282 = vrot.lane.b32.xlu0 %v1281, 96
    %v1283 = vpop.permute.xlu0 %1282
    %v1285 = vmul.f32 %v262, %v1283
    %1287 = vrot.lane.b32.xlu0 %v1285, 64
    %v1288 = vpop.permute.xlu0 %1287
    %v1290 = vadd.f32 %v1280, %v1288
    %1292 = vrot.lane.b32.xlu0 %v1222, 64
    %v1293 = vpop.permute.xlu0 %1292
    %v1296 = vrot.slane %v1290, 2
    %1297 = vrot.lane.b32.xlu0 %v1296, 96
    %v1298 = vpop.permute.xlu0 %1297
    %v1300 = vsel %vm274, %v1293, %v1298
    %1302 = vrot.lane.b32.xlu0 %v1214, 64
    %v1303 = vpop.permute.xlu0 %1302
    %1305 = vst.msk [vmem:[#allocation2 + $0x8] sm:$0xc] %vm548, %v1303
    %1307 = vrot.lane.b32.xlu0 %v1280, 96
    %v1308 = vpop.permute.xlu0 %1307
    %1310 = vst.msk [vmem:[#allocation2] sm:$0x30] %vm554, %v1308
    %v1312 = vrot.slane %v1300, 2
    %v1313 = vsel %vm76, %v1312, 0
    %1315 = vmatpush.msra.mxu0 0.0
    %1316 = vmatpush.msra.mxu0 0.0
    %1317 = vmatpush.msra.mxu0 0.0
    %1318 = vmatpush.msra.mxu0 0.0
    %1319 = vmatpush.msra.mxu0 0.0
    %1320 = vmatpush.msra.mxu0 0.0
    %1321 = vmatpush.msra.mxu0 0.0
    %1322 = vmatpush.msra.mxu0 0.0
    %1323 = vmatpush.msra.mxu0 %v160
    %1324 = vmatpush.msra.mxu0 %v158
    %1325 = vmatpush.msra.mxu0 %v156
    %1326 = vmatpush.msra.mxu0 %v154
    %1327 = vmatpush.msra.mxu0 %v152
    %1328 = vmatpush.msra.mxu0 %v150
    %1329 = vmatpush.msra.mxu0 %v148
    %1330 = vmatpush.msra.mxu0 %v146
    %1331 = vmatmul.f32.gmra.mxu0 %v1313
    %v1332 = vpop.f32.mrf.mxu0
    %v1333 = vadd.f32 0.0, %v1332
    %1334 = vdwg.mxu0
    %1335 = vmatpush.msra.mxu0 0.0
    %1336 = vmatpush.msra.mxu0 0.0
    %1337 = vmatpush.msra.mxu0 0.0
    %1338 = vmatpush.msra.mxu0 0.0
    %1339 = vmatpush.msra.mxu0 0.0
    %1340 = vmatpush.msra.mxu0 0.0
    %1341 = vmatpush.msra.mxu0 0.0
    %1342 = vmatpush.msra.mxu0 0.0
    %1343 = vmatpush.msra.mxu0 %v161
    %1344 = vmatpush.msra.mxu0 %v159
    %1345 = vmatpush.msra.mxu0 %v157
    %1346 = vmatpush.msra.mxu0 %v155
    %1347 = vmatpush.msra.mxu0 %v153
    %1348 = vmatpush.msra.mxu0 %v151
    %1349 = vmatpush.msra.mxu0 %v149
    %1350 = vmatpush.msra.mxu0 %v147
    %1351 = vmatmul.f32.gmra.mxu0 %v1313
    %v1352 = vpop.f32.mrf.mxu0
    %v1353 = vadd.f32 0.0, %v1352
    %1354 = vdwg.mxu0
    %v1356 = vrot.slane %v1333, 4
    %v1358 = vadd.f32 %v104, %v1356
    %v1359 = vxor.u32 %v1358, 2147483648
    %v1360 = vmul.f32 %v1359, 1.442695
    %v1361 = vpow.pop %v1360
    %v1362 = vadd.f32 %v1361, 1.0
    %v1363 = vrcp.pop %v1362
    %v1364 = vmul.f32 %v1362, %v1363
    %v1365 = vsub.f32 1.0, %v1364
    %v1366 = vmul.f32 %v1363, %v1365
    %v1367 = vadd.f32 %v1363, %v1366
    %vm1368 = vweird.f32 %v1362
    %vm1369 = vweird.f32 %v1363
    %vm1370 = vmor %vm1368, %vm1369
    %v1371 = vsel %vm1370, %v1363, %v1367
    %v1372 = vand.u32 2147483647, %v1362
    %vm1373 = vcmp.eq.f32.partialorder %v1372, 8.507059e+37
    %v1374 = vand.u32 %v1362, 2147483648
    %v1375 = vor.u32 1.1754944e-38, %v1374
    %v1376 = vsel %vm1373, %v1375, %v1371
    %v1377 = vmul.f32 1.0, %v1376
    %v1378 = vadd.f32 %v1333, %v228
    %v1380 = vrot.slane %v1378, 4
    %1381 = vrot.lane.b32.xlu0 %v1380, 64
    %v1382 = vpop.permute.xlu0 %1381
    %v1384 = vmul.f32 %v1377, %v1382
    %1386 = vrot.lane.b32.xlu0 %v1384, 64
    %v1387 = vpop.permute.xlu0 %1386
    %v1389 = vadd.f32 %v104, %v1387
    %v1390 = vtanh.pop %v1389
    %v1392 = vrot.slane %v1390, 2
    %1393 = vrot.lane.b32.xlu0 %v1392, 64
    %v1394 = vpop.permute.xlu0 %1393
    %v1396 = vsub.f32 %v1300, %v1394
    %v1398 = vrot.slane %v1396, 6
    %1399 = vrot.lane.b32.xlu0 %v1398, 32
    %v1400 = vpop.permute.xlu0 %1399
    %v1402 = vmul.f32 %v1377, %v1400
    %1404 = vrot.lane.b32.xlu0 %v1402, 32
    %v1405 = vpop.permute.xlu0 %1404
    %v1407 = vadd.f32 %v1390, %v1405
    %v1408 = vmul.f32 %v329, %v1407
    %v1409 = vrot.slane %v1300, 6
    %v1411 = vmul.f32 %v335, %v1409
    %1413 = vrot.lane.b32.xlu0 %v1411, 64
    %v1414 = vpop.permute.xlu0 %1413
    %v1416 = vadd.f32 %v1408, %v1414
    %v1418 = vrot.slane %v1333, 6
    %v1419 = vrot.slane %v1353, 6
    %1420 = vrot.lane.b32.xlu0 %v1418, 32
    %v1421 = vpop.permute.xlu0 %1420
    %1422 = vrot.lane.b32.xlu0 %v1419, 32
    %v1423 = vpop.permute.xlu0 %1422
    %v1424 = vsel %vm274, %v1421, %v1423
    %v1426 = vadd.f32 %v138, %v1424
    %v1427 = vxor.u32 %v1426, 2147483648
    %v1428 = vmul.f32 %v1427, 1.442695
    %v1429 = vpow.pop %v1428
    %v1430 = vadd.f32 %v1429, 1.0
    %v1431 = vrcp.pop %v1430
    %v1432 = vmul.f32 %v1430, %v1431
    %v1433 = vsub.f32 1.0, %v1432
    %v1434 = vmul.f32 %v1431, %v1433
    %v1435 = vadd.f32 %v1431, %v1434
    %vm1436 = vweird.f32 %v1430
    %vm1437 = vweird.f32 %v1431
    %vm1438 = vmor %vm1436, %vm1437
    %v1439 = vsel %vm1438, %v1431, %v1435
    %v1440 = vand.u32 2147483647, %v1430
    %vm1441 = vcmp.eq.f32.partialorder %v1440, 8.507059e+37
    %v1442 = vand.u32 %v1430, 2147483648
    %v1443 = vor.u32 1.1754944e-38, %v1442
    %v1444 = vsel %vm1441, %v1443, %v1439
    %v1445 = vmul.f32 1.0, %v1444
    %v1446 = vadd.f32 %v1353, %v300
    %v1448 = vrot.slane %v1446, 6
    %1449 = vrot.lane.b32.xlu0 %v1448, 96
    %v1450 = vpop.permute.xlu0 %1449
    %v1452 = vmul.f32 %v1445, %v1450
    %1454 = vrot.lane.b32.xlu0 %v1452, 64
    %v1455 = vpop.permute.xlu0 %1454
    %v1457 = vadd.f32 %v138, %v1455
    %v1458 = vtanh.pop %v1457
    %1460 = vrot.lane.b32.xlu0 %v1458, 96
    %v1461 = vpop.permute.xlu0 %1460
    %v1463 = vsub.f32 %v1300, %v1461
    %v1464 = vmul.f32 %v1445, %v1463
    %1466 = vrot.lane.b32.xlu0 %v1464, 32
    %v1467 = vpop.permute.xlu0 %1466
    %v1469 = vadd.f32 %v1458, %v1467
    %v1470 = vmul.f32 %v256, %v1469
    %v1471 = vmul.f32 %v262, %v1300
    %1473 = vrot.lane.b32.xlu0 %v1471, 32
    %v1474 = vpop.permute.xlu0 %1473
    %v1476 = vadd.f32 %v1470, %v1474
    %1478 = vrot.lane.b32.xlu0 %v1416, 64
    %v1479 = vpop.permute.xlu0 %1478
    %v1482 = vrot.slane %v1476, 6
    %1483 = vrot.lane.b32.xlu0 %v1482, 96
    %v1484 = vpop.permute.xlu0 %1483
    %v1486 = vsel %vm274, %v1479, %v1484
    %1488 = vrot.lane.b32.xlu0 %v1408, 64
    %v1489 = vpop.permute.xlu0 %1488
    %1491 = vst.msk [vmem:[#allocation2 + $0x8] sm:$0x30] %vm736, %v1489
    %1493 = vrot.lane.b32.xlu0 %v1470, 96
    %v1494 = vpop.permute.xlu0 %1493
    %1496 = vst.msk [vmem:[#allocation2] sm:$0xc] %vm742, %v1494
    %v1498 = vrot.slane %v1486, 4
    %v1499 = vsel %vm76, %v1498, 0
    %1501 = vmatpush.msra.mxu0 0.0
    %1502 = vmatpush.msra.mxu0 0.0
    %1503 = vmatpush.msra.mxu0 0.0
    %1504 = vmatpush.msra.mxu0 0.0
    %1505 = vmatpush.msra.mxu0 0.0
    %1506 = vmatpush.msra.mxu0 0.0
    %1507 = vmatpush.msra.mxu0 0.0
    %1508 = vmatpush.msra.mxu0 0.0
    %1509 = vmatpush.msra.mxu0 %v160
    %1510 = vmatpush.msra.mxu0 %v158
    %1511 = vmatpush.msra.mxu0 %v156
    %1512 = vmatpush.msra.mxu0 %v154
    %1513 = vmatpush.msra.mxu0 %v152
    %1514 = vmatpush.msra.mxu0 %v150
    %1515 = vmatpush.msra.mxu0 %v148
    %1516 = vmatpush.msra.mxu0 %v146
    %1517 = vmatmul.f32.gmra.mxu0 %v1499
    %v1518 = vpop.f32.mrf.mxu0
    %v1519 = vadd.f32 0.0, %v1518
    %1520 = vdwg.mxu0
    %1521 = vmatpush.msra.mxu0 0.0
    %1522 = vmatpush.msra.mxu0 0.0
    %1523 = vmatpush.msra.mxu0 0.0
    %1524 = vmatpush.msra.mxu0 0.0
    %1525 = vmatpush.msra.mxu0 0.0
    %1526 = vmatpush.msra.mxu0 0.0
    %1527 = vmatpush.msra.mxu0 0.0
    %1528 = vmatpush.msra.mxu0 0.0
    %1529 = vmatpush.msra.mxu0 %v161
    %1530 = vmatpush.msra.mxu0 %v159
    %1531 = vmatpush.msra.mxu0 %v157
    %1532 = vmatpush.msra.mxu0 %v155
    %1533 = vmatpush.msra.mxu0 %v153
    %1534 = vmatpush.msra.mxu0 %v151
    %1535 = vmatpush.msra.mxu0 %v149
    %1536 = vmatpush.msra.mxu0 %v147
    %1537 = vmatmul.f32.gmra.mxu0 %v1499
    %v1538 = vpop.f32.mrf.mxu0
    %v1539 = vadd.f32 0.0, %v1538
    %1540 = vdwg.mxu0
    %v1542 = vrot.slane %v1519, 2
    %v1544 = vadd.f32 %v104, %v1542
    %v1545 = vxor.u32 %v1544, 2147483648
    %v1546 = vmul.f32 %v1545, 1.442695
    %v1547 = vpow.pop %v1546
    %v1548 = vadd.f32 %v1547, 1.0
    %v1549 = vrcp.pop %v1548
    %v1550 = vmul.f32 %v1548, %v1549
    %v1551 = vsub.f32 1.0, %v1550
    %v1552 = vmul.f32 %v1549, %v1551
    %v1553 = vadd.f32 %v1549, %v1552
    %vm1554 = vweird.f32 %v1548
    %vm1555 = vweird.f32 %v1549
    %vm1556 = vmor %vm1554, %vm1555
    %v1557 = vsel %vm1556, %v1549, %v1553
    %v1558 = vand.u32 2147483647, %v1548
    %vm1559 = vcmp.eq.f32.partialorder %v1558, 8.507059e+37
    %v1560 = vand.u32 %v1548, 2147483648
    %v1561 = vor.u32 1.1754944e-38, %v1560
    %v1562 = vsel %vm1559, %v1561, %v1557
    %v1563 = vmul.f32 1.0, %v1562
    %v1564 = vadd.f32 %v1519, %v228
    %v1566 = vrot.slane %v1564, 2
    %1567 = vrot.lane.b32.xlu0 %v1566, 64
    %v1568 = vpop.permute.xlu0 %1567
    %v1570 = vmul.f32 %v1563, %v1568
    %1572 = vrot.lane.b32.xlu0 %v1570, 64
    %v1573 = vpop.permute.xlu0 %1572
    %v1575 = vadd.f32 %v104, %v1573
    %v1576 = vtanh.pop %v1575
    %v1578 = vrot.slane %v1576, 2
    %1579 = vrot.lane.b32.xlu0 %v1578, 64
    %v1580 = vpop.permute.xlu0 %1579
    %v1582 = vsub.f32 %v1486, %v1580
    %v1584 = vrot.slane %v1582, 6
    %1585 = vrot.lane.b32.xlu0 %v1584, 32
    %v1586 = vpop.permute.xlu0 %1585
    %v1588 = vmul.f32 %v1563, %v1586
    %1590 = vrot.lane.b32.xlu0 %v1588, 32
    %v1591 = vpop.permute.xlu0 %1590
    %v1593 = vadd.f32 %v1576, %v1591
    %v1594 = vmul.f32 %v329, %v1593
    %v1595 = vrot.slane %v1486, 6
    %v1597 = vmul.f32 %v335, %v1595
    %1599 = vrot.lane.b32.xlu0 %v1597, 64
    %v1600 = vpop.permute.xlu0 %1599
    %v1602 = vadd.f32 %v1594, %v1600
    %1604 = vrot.lane.b32.xlu0 %v1519, 32
    %v1605 = vpop.permute.xlu0 %1604
    %1606 = vrot.lane.b32.xlu0 %v1539, 32
    %v1607 = vpop.permute.xlu0 %1606
    %v1608 = vsel %vm274, %v1605, %v1607
    %v1610 = vadd.f32 %v138, %v1608
    %v1611 = vxor.u32 %v1610, 2147483648
    %v1612 = vmul.f32 %v1611, 1.442695
    %v1613 = vpow.pop %v1612
    %v1614 = vadd.f32 %v1613, 1.0
    %v1615 = vrcp.pop %v1614
    %v1616 = vmul.f32 %v1614, %v1615
    %v1617 = vsub.f32 1.0, %v1616
    %v1618 = vmul.f32 %v1615, %v1617
    %v1619 = vadd.f32 %v1615, %v1618
    %vm1620 = vweird.f32 %v1614
    %vm1621 = vweird.f32 %v1615
    %vm1622 = vmor %vm1620, %vm1621
    %v1623 = vsel %vm1622, %v1615, %v1619
    %v1624 = vand.u32 2147483647, %v1614
    %vm1625 = vcmp.eq.f32.partialorder %v1624, 8.507059e+37
    %v1626 = vand.u32 %v1614, 2147483648
    %v1627 = vor.u32 1.1754944e-38, %v1626
    %v1628 = vsel %vm1625, %v1627, %v1623
    %v1629 = vmul.f32 1.0, %v1628
    %v1630 = vadd.f32 %v1539, %v300
    %1632 = vrot.lane.b32.xlu0 %v1630, 96
    %v1633 = vpop.permute.xlu0 %1632
    %v1635 = vmul.f32 %v1629, %v1633
    %1637 = vrot.lane.b32.xlu0 %v1635, 64
    %v1638 = vpop.permute.xlu0 %1637
    %v1640 = vadd.f32 %v138, %v1638
    %v1641 = vtanh.pop %v1640
    %v1643 = vrot.slane %v1641, 4
    %1644 = vrot.lane.b32.xlu0 %v1643, 96
    %v1645 = vpop.permute.xlu0 %1644
    %v1647 = vsub.f32 %v1486, %v1645
    %v1649 = vrot.slane %v1647, 4
    %v1651 = vmul.f32 %v1629, %v1649
    %1653 = vrot.lane.b32.xlu0 %v1651, 32
    %v1654 = vpop.permute.xlu0 %1653
    %v1656 = vadd.f32 %v1641, %v1654
    %v1657 = vmul.f32 %v256, %v1656
    %1658 = vrot.lane.b32.xlu0 %v1498, 96
    %v1659 = vpop.permute.xlu0 %1658
    %v1661 = vmul.f32 %v262, %v1659
    %1663 = vrot.lane.b32.xlu0 %v1661, 64
    %v1664 = vpop.permute.xlu0 %1663
    %v1666 = vadd.f32 %v1657, %v1664
    %1668 = vrot.lane.b32.xlu0 %v1602, 64
    %v1669 = vpop.permute.xlu0 %1668
    %v1672 = vrot.slane %v1666, 2
    %1673 = vrot.lane.b32.xlu0 %v1672, 96
    %v1674 = vpop.permute.xlu0 %1673
    %v1676 = vsel %vm274, %v1669, %v1674
    %1678 = vrot.lane.b32.xlu0 %v1594, 64
    %v1679 = vpop.permute.xlu0 %1678
    %1681 = vst.msk [vmem:[#allocation2 + $0x8] sm:$0xc0] %vm928, %v1679
    %1683 = vrot.lane.b32.xlu0 %v1657, 96
    %v1684 = vpop.permute.xlu0 %1683
    %1686 = vst.msk [vmem:[#allocation2] sm:$0x3] %vm934, %v1684
    %1687 = vst.msk [vmem:[#allocation8 - $0x6] sm:$0xc0] %vm928, %v1676
    %1689 = vrot.lane.b32.xlu0 %v1676, 96
    %v1690 = vpop.permute.xlu0 %1689
    %s1692 = scalar_lea.vmem [#allocation8], 2
    %1693 = vst.msk [vmem:[%s1692 - $0x6] sm:$0xc0] %vm928, %v1690
    %v1694 = vld [vmem:[#allocation2] sm:$0xff]
    %v1695 = vld [vmem:[#allocation2 + $0x8] sm:$0xff]
    %s1696 = scalar_lea.vmem [#allocation3], 128
    %v1697 = vld [vmem:[%s1696] sm:$0xff]
    %v1698 = vld [vmem:[%s1696 + $0x8] sm:$0xff]
    %v1699 = vld [vmem:[%s1696 + $0x10] sm:$0xff]
    %v1700 = vld [vmem:[%s1696 + $0x18] sm:$0xff]
    %v1701 = vld [vmem:[%s1696 + $0x20] sm:$0xff]
    %v1702 = vld [vmem:[%s1696 + $0x28] sm:$0xff]
    %v1703 = vld [vmem:[%s1696 + $0x30] sm:$0xff]
    %v1704 = vld [vmem:[%s1696 + $0x38] sm:$0xff]
    %s1705 = scalar_lea.vmem %s4, 2
    %v1706 = vld [vmem:[%s1705] sm:$0x1]
    %v1708 = vperm.slane %v1706, 0
    %v1711 = vsel %vm76, %v1694, 0
    %v1714 = vsel %vm76, %v1695, 0
    %1716 = vmatpush.msra.mxu0 0.0
    %1717 = vmatpush.msra.mxu0 0.0
    %1718 = vmatpush.msra.mxu0 0.0
    %1719 = vmatpush.msra.mxu0 0.0
    %1720 = vmatpush.msra.mxu0 0.0
    %1721 = vmatpush.msra.mxu0 0.0
    %1722 = vmatpush.msra.mxu0 0.0
    %1723 = vmatpush.msra.mxu0 0.0
    %1724 = vmatpush.msra.mxu0 %v1704
    %1725 = vmatpush.msra.mxu0 %v1703
    %1726 = vmatpush.msra.mxu0 %v1702
    %1727 = vmatpush.msra.mxu0 %v1701
    %1728 = vmatpush.msra.mxu0 %v1700
    %1729 = vmatpush.msra.mxu0 %v1699
    %1730 = vmatpush.msra.mxu0 %v1698
    %1731 = vmatpush.msra.mxu0 %v1697
    %1732 = vmatmul.f32.gmra.mxu0 %v1711
    %v1733 = vpop.f32.mrf.mxu0
    %v1734 = vadd.f32 %v1708, %v1733
    %1735 = vmatmul.f32.gmra.mxu0 %v1714
    %v1736 = vpop.f32.mrf.mxu0
    %v1737 = vadd.f32 %v1708, %v1736
    %1738 = vdwg.mxu0
    %s1739 = scalar_lea.vmem [#allocation3], 192
    %v1740 = vld [vmem:[%s1739] sm:$0xff]
    %v1741 = vld [vmem:[%s1739 + $0x8] sm:$0xff]
    %v1742 = vld [vmem:[%s1739 + $0x10] sm:$0xff]
    %v1743 = vld [vmem:[%s1739 + $0x18] sm:$0xff]
    %v1744 = vld [vmem:[%s1739 + $0x20] sm:$0xff]
    %v1745 = vld [vmem:[%s1739 + $0x28] sm:$0xff]
    %v1746 = vld [vmem:[%s1739 + $0x30] sm:$0xff]
    %v1747 = vld [vmem:[%s1739 + $0x38] sm:$0xff]
    %s1748 = scalar_lea.vmem %s4, 3
    %v1749 = vld [vmem:[%s1748] sm:$0x1]
    %v1751 = vperm.slane %v1749, 0
    %1753 = vmatpush.msra.mxu0 0.0
    %1754 = vmatpush.msra.mxu0 0.0
    %1755 = vmatpush.msra.mxu0 0.0
    %1756 = vmatpush.msra.mxu0 0.0
    %1757 = vmatpush.msra.mxu0 0.0
    %1758 = vmatpush.msra.mxu0 0.0
    %1759 = vmatpush.msra.mxu0 0.0
    %1760 = vmatpush.msra.mxu0 0.0
    %1761 = vmatpush.msra.mxu0 %v1747
    %1762 = vmatpush.msra.mxu0 %v1746
    %1763 = vmatpush.msra.mxu0 %v1745
    %1764 = vmatpush.msra.mxu0 %v1744
    %1765 = vmatpush.msra.mxu0 %v1743
    %1766 = vmatpush.msra.mxu0 %v1742
    %1767 = vmatpush.msra.mxu0 %v1741
    %1768 = vmatpush.msra.mxu0 %v1740
    %1769 = vmatmul.f32.gmra.mxu0 %v1711
    %v1770 = vpop.f32.mrf.mxu0
    %v1771 = vadd.f32 %v1751, %v1770
    %1772 = vmatmul.f32.gmra.mxu0 %v1714
    %v1773 = vpop.f32.mrf.mxu0
    %v1774 = vadd.f32 %v1751, %v1773
    %1775 = vdwg.mxu0
    %s1776 = scalar_lea.vmem %s5, 2
    %v1777 = vld [vmem:[%s1776] sm:$0x1]
    %s1778 = scalar_lea.vmem %s5, 3
    %v1779 = vld [vmem:[%s1778] sm:$0x1]
    %s1780 = scalar_lea.vmem [#allocation6], 128
    %v1781 = vld [vmem:[%s1780] sm:$0xff]
    %v1782 = vld [vmem:[%s1780 + $0x8] sm:$0xff]
    %v1783 = vld [vmem:[%s1780 + $0x10] sm:$0xff]
    %v1784 = vld [vmem:[%s1780 + $0x18] sm:$0xff]
    %v1785 = vld [vmem:[%s1780 + $0x20] sm:$0xff]
    %v1786 = vld [vmem:[%s1780 + $0x28] sm:$0xff]
    %v1787 = vld [vmem:[%s1780 + $0x30] sm:$0xff]
    %v1788 = vld [vmem:[%s1780 + $0x38] sm:$0xff]
    %v1789 = vld [vmem:[%s1780 + $0x40] sm:$0xff]
    %v1790 = vld [vmem:[%s1780 + $0x48] sm:$0xff]
    %v1791 = vld [vmem:[%s1780 + $0x50] sm:$0xff]
    %v1792 = vld [vmem:[%s1780 + $0x58] sm:$0xff]
    %v1793 = vld [vmem:[%s1780 + $0x60] sm:$0xff]
    %v1794 = vld [vmem:[%s1780 + $0x68] sm:$0xff]
    %v1795 = vld [vmem:[%s1780 + $0x70] sm:$0xff]
    %v1796 = vld [vmem:[%s1780 + $0x78] sm:$0xff]
    %1797 = vmatpush.msra.mxu0 0.0
    %1798 = vmatpush.msra.mxu0 0.0
    %1799 = vmatpush.msra.mxu0 0.0
    %1800 = vmatpush.msra.mxu0 0.0
    %1801 = vmatpush.msra.mxu0 0.0
    %1802 = vmatpush.msra.mxu0 0.0
    %1803 = vmatpush.msra.mxu0 0.0
    %1804 = vmatpush.msra.mxu0 0.0
    %1805 = vmatpush.msra.mxu0 %v1795
    %1806 = vmatpush.msra.mxu0 %v1793
    %1807 = vmatpush.msra.mxu0 %v1791
    %1808 = vmatpush.msra.mxu0 %v1789
    %1809 = vmatpush.msra.mxu0 %v1787
    %1810 = vmatpush.msra.mxu0 %v1785
    %1811 = vmatpush.msra.mxu0 %v1783
    %1812 = vmatpush.msra.mxu0 %v1781
    %1813 = vmatmul.f32.gmra.mxu0 %v163
    %v1814 = vpop.f32.mrf.mxu0
    %v1815 = vadd.f32 0.0, %v1814
    %1816 = vdwg.mxu0
    %1817 = vmatpush.msra.mxu0 0.0
    %1818 = vmatpush.msra.mxu0 0.0
    %1819 = vmatpush.msra.mxu0 0.0
    %1820 = vmatpush.msra.mxu0 0.0
    %1821 = vmatpush.msra.mxu0 0.0
    %1822 = vmatpush.msra.mxu0 0.0
    %1823 = vmatpush.msra.mxu0 0.0
    %1824 = vmatpush.msra.mxu0 0.0
    %1825 = vmatpush.msra.mxu0 %v1796
    %1826 = vmatpush.msra.mxu0 %v1794
    %1827 = vmatpush.msra.mxu0 %v1792
    %1828 = vmatpush.msra.mxu0 %v1790
    %1829 = vmatpush.msra.mxu0 %v1788
    %1830 = vmatpush.msra.mxu0 %v1786
    %1831 = vmatpush.msra.mxu0 %v1784
    %1832 = vmatpush.msra.mxu0 %v1782
    %1833 = vmatmul.f32.gmra.mxu0 %v163
    %v1834 = vpop.f32.mrf.mxu0
    %v1835 = vadd.f32 0.0, %v1834
    %1836 = vdwg.mxu0
    %v1837 = vadd.f32 %v1734, %v1815
    %v1838 = vxor.u32 %v1837, 2147483648
    %v1839 = vmul.f32 %v1838, 1.442695
    %v1840 = vpow.pop %v1839
    %v1841 = vadd.f32 %v1840, 1.0
    %v1842 = vrcp.pop %v1841
    %v1843 = vmul.f32 %v1841, %v1842
    %v1844 = vsub.f32 1.0, %v1843
    %v1845 = vmul.f32 %v1842, %v1844
    %v1846 = vadd.f32 %v1842, %v1845
    %vm1847 = vweird.f32 %v1841
    %vm1848 = vweird.f32 %v1842
    %vm1849 = vmor %vm1847, %vm1848
    %v1850 = vsel %vm1849, %v1842, %v1846
    %v1851 = vand.u32 2147483647, %v1841
    %vm1852 = vcmp.eq.f32.partialorder %v1851, 8.507059e+37
    %v1853 = vand.u32 %v1841, 2147483648
    %v1854 = vor.u32 1.1754944e-38, %v1853
    %v1855 = vsel %vm1852, %v1854, %v1850
    %v1856 = vmul.f32 1.0, %v1855
    %v1858 = vperm.slane %v1777, 0
    %1859 = vrot.lane.b32.xlu0 %v1858, 64
    %v1860 = vpop.permute.xlu0 %1859
    %v1862 = vadd.f32 %v1815, %v1860
    %1864 = vrot.lane.b32.xlu0 %v1862, 64
    %v1865 = vpop.permute.xlu0 %1864
    %v1867 = vmul.f32 %v1856, %v1865
    %1869 = vrot.lane.b32.xlu0 %v1867, 64
    %v1870 = vpop.permute.xlu0 %1869
    %v1872 = vadd.f32 %v1734, %v1870
    %v1873 = vtanh.pop %v1872
    %v1874 = vsub.f32 0.0, %v1873
    %1876 = vrot.lane.b32.xlu0 %v1874, 96
    %v1877 = vpop.permute.xlu0 %1876
    %v1879 = vmul.f32 %v1856, %v1877
    %1881 = vrot.lane.b32.xlu0 %v1879, 32
    %v1882 = vpop.permute.xlu0 %1881
    %v1884 = vadd.f32 %v1873, %v1882
    %v1885 = vmul.f32 %v256, %v1884
    %v1886 = vadd.f32 %v1885, %v264
    %v1889 = vrot.slane %v1815, 2
    %v1890 = vrot.slane %v1835, 2
    %1891 = vrot.lane.b32.xlu0 %v1889, 32
    %v1892 = vpop.permute.xlu0 %1891
    %1893 = vrot.lane.b32.xlu0 %v1890, 32
    %v1894 = vpop.permute.xlu0 %1893
    %v1895 = vsel %vm274, %v1892, %v1894
    %v1897 = vadd.f32 %v1774, %v1895
    %v1898 = vxor.u32 %v1897, 2147483648
    %v1899 = vmul.f32 %v1898, 1.442695
    %v1900 = vpow.pop %v1899
    %v1901 = vadd.f32 %v1900, 1.0
    %v1902 = vrcp.pop %v1901
    %v1903 = vmul.f32 %v1901, %v1902
    %v1904 = vsub.f32 1.0, %v1903
    %v1905 = vmul.f32 %v1902, %v1904
    %v1906 = vadd.f32 %v1902, %v1905
    %vm1907 = vweird.f32 %v1901
    %vm1908 = vweird.f32 %v1902
    %vm1909 = vmor %vm1907, %vm1908
    %v1910 = vsel %vm1909, %v1902, %v1906
    %v1911 = vand.u32 2147483647, %v1901
    %vm1912 = vcmp.eq.f32.partialorder %v1911, 8.507059e+37
    %v1913 = vand.u32 %v1901, 2147483648
    %v1914 = vor.u32 1.1754944e-38, %v1913
    %v1915 = vsel %vm1912, %v1914, %v1910
    %v1916 = vmul.f32 1.0, %v1915
    %v1918 = vperm.slane %v1779, 0
    %1919 = vrot.lane.b32.xlu0 %v1918, 32
    %v1920 = vpop.permute.xlu0 %1919
    %v1922 = vadd.f32 %v1835, %v1920
    %v1924 = vrot.slane %v1922, 2
    %1925 = vrot.lane.b32.xlu0 %v1924, 96
    %v1926 = vpop.permute.xlu0 %1925
    %v1928 = vmul.f32 %v1916, %v1926
    %1930 = vrot.lane.b32.xlu0 %v1928, 64
    %v1931 = vpop.permute.xlu0 %1930
    %v1933 = vadd.f32 %v1774, %v1931
    %v1934 = vtanh.pop %v1933
    %v1935 = vsub.f32 0.0, %v1934
    %1937 = vrot.lane.b32.xlu0 %v1935, 96
    %v1938 = vpop.permute.xlu0 %1937
    %v1940 = vmul.f32 %v1916, %v1938
    %1942 = vrot.lane.b32.xlu0 %v1940, 32
    %v1943 = vpop.permute.xlu0 %1942
    %v1945 = vadd.f32 %v1934, %v1943
    %v1946 = vmul.f32 %v329, %v1945
    %v1947 = vadd.f32 %v1946, %v337
    %1949 = vrot.lane.b32.xlu0 %v1886, 64
    %v1950 = vpop.permute.xlu0 %1949
    %v1953 = vrot.slane %v1947, 6
    %1954 = vrot.lane.b32.xlu0 %v1953, 96
    %v1955 = vpop.permute.xlu0 %1954
    %v1957 = vsel %vm274, %v1950, %v1955
    %1959 = vrot.lane.b32.xlu0 %v1885, 64
    %v1960 = vpop.permute.xlu0 %1959
    %1962 = vst.msk [vmem:[#allocation2] sm:$0x3] %vm353, %v1960
    %1964 = vrot.lane.b32.xlu0 %v1946, 96
    %v1965 = vpop.permute.xlu0 %1964
    %1967 = vst.msk [vmem:[#allocation2 + $0x8] sm:$0xc0] %vm359, %v1965
    %v1969 = vsel %vm76, %v1957, 0
    %1971 = vmatpush.msra.mxu0 0.0
    %1972 = vmatpush.msra.mxu0 0.0
    %1973 = vmatpush.msra.mxu0 0.0
    %1974 = vmatpush.msra.mxu0 0.0
    %1975 = vmatpush.msra.mxu0 0.0
    %1976 = vmatpush.msra.mxu0 0.0
    %1977 = vmatpush.msra.mxu0 0.0
    %1978 = vmatpush.msra.mxu0 0.0
    %1979 = vmatpush.msra.mxu0 %v1795
    %1980 = vmatpush.msra.mxu0 %v1793
    %1981 = vmatpush.msra.mxu0 %v1791
    %1982 = vmatpush.msra.mxu0 %v1789
    %1983 = vmatpush.msra.mxu0 %v1787
    %1984 = vmatpush.msra.mxu0 %v1785
    %1985 = vmatpush.msra.mxu0 %v1783
    %1986 = vmatpush.msra.mxu0 %v1781
    %1987 = vmatmul.f32.gmra.mxu0 %v1969
    %v1988 = vpop.f32.mrf.mxu0
    %v1989 = vadd.f32 0.0, %v1988
    %1990 = vdwg.mxu0
    %1991 = vmatpush.msra.mxu0 0.0
    %1992 = vmatpush.msra.mxu0 0.0
    %1993 = vmatpush.msra.mxu0 0.0
    %1994 = vmatpush.msra.mxu0 0.0
    %1995 = vmatpush.msra.mxu0 0.0
    %1996 = vmatpush.msra.mxu0 0.0
    %1997 = vmatpush.msra.mxu0 0.0
    %1998 = vmatpush.msra.mxu0 0.0
    %1999 = vmatpush.msra.mxu0 %v1796
    %2000 = vmatpush.msra.mxu0 %v1794
    %2001 = vmatpush.msra.mxu0 %v1792
    %2002 = vmatpush.msra.mxu0 %v1790
    %2003 = vmatpush.msra.mxu0 %v1788
    %2004 = vmatpush.msra.mxu0 %v1786
    %2005 = vmatpush.msra.mxu0 %v1784
    %2006 = vmatpush.msra.mxu0 %v1782
    %2007 = vmatmul.f32.gmra.mxu0 %v1969
    %v2008 = vpop.f32.mrf.mxu0
    %v2009 = vadd.f32 0.0, %v2008
    %2010 = vdwg.mxu0
    %v2012 = vrot.slane %v1989, 6
    %v2014 = vadd.f32 %v1734, %v2012
    %v2015 = vxor.u32 %v2014, 2147483648
    %v2016 = vmul.f32 %v2015, 1.442695
    %v2017 = vpow.pop %v2016
    %v2018 = vadd.f32 %v2017, 1.0
    %v2019 = vrcp.pop %v2018
    %v2020 = vmul.f32 %v2018, %v2019
    %v2021 = vsub.f32 1.0, %v2020
    %v2022 = vmul.f32 %v2019, %v2021
    %v2023 = vadd.f32 %v2019, %v2022
    %vm2024 = vweird.f32 %v2018
    %vm2025 = vweird.f32 %v2019
    %vm2026 = vmor %vm2024, %vm2025
    %v2027 = vsel %vm2026, %v2019, %v2023
    %v2028 = vand.u32 2147483647, %v2018
    %vm2029 = vcmp.eq.f32.partialorder %v2028, 8.507059e+37
    %v2030 = vand.u32 %v2018, 2147483648
    %v2031 = vor.u32 1.1754944e-38, %v2030
    %v2032 = vsel %vm2029, %v2031, %v2027
    %v2033 = vmul.f32 1.0, %v2032
    %v2034 = vadd.f32 %v1989, %v1860
    %v2036 = vrot.slane %v2034, 6
    %2037 = vrot.lane.b32.xlu0 %v2036, 64
    %v2038 = vpop.permute.xlu0 %2037
    %v2040 = vmul.f32 %v2033, %v2038
    %2042 = vrot.lane.b32.xlu0 %v2040, 64
    %v2043 = vpop.permute.xlu0 %2042
    %v2045 = vadd.f32 %v1734, %v2043
    %v2046 = vtanh.pop %v2045
    %v2048 = vrot.slane %v2046, 2
    %2049 = vrot.lane.b32.xlu0 %v2048, 64
    %v2050 = vpop.permute.xlu0 %2049
    %v2052 = vsub.f32 %v1957, %v2050
    %v2054 = vrot.slane %v2052, 6
    %2055 = vrot.lane.b32.xlu0 %v2054, 32
    %v2056 = vpop.permute.xlu0 %2055
    %v2058 = vmul.f32 %v2033, %v2056
    %2060 = vrot.lane.b32.xlu0 %v2058, 32
    %v2061 = vpop.permute.xlu0 %2060
    %v2063 = vadd.f32 %v2046, %v2061
    %v2064 = vmul.f32 %v256, %v2063
    %v2065 = vrot.slane %v1957, 6
    %v2067 = vmul.f32 %v262, %v2065
    %2069 = vrot.lane.b32.xlu0 %v2067, 64
    %v2070 = vpop.permute.xlu0 %2069
    %v2072 = vadd.f32 %v2064, %v2070
    %v2074 = vrot.slane %v1989, 4
    %v2075 = vrot.slane %v2009, 4
    %2076 = vrot.lane.b32.xlu0 %v2074, 32
    %v2077 = vpop.permute.xlu0 %2076
    %2078 = vrot.lane.b32.xlu0 %v2075, 32
    %v2079 = vpop.permute.xlu0 %2078
    %v2080 = vsel %vm274, %v2077, %v2079
    %v2082 = vadd.f32 %v1774, %v2080
    %v2083 = vxor.u32 %v2082, 2147483648
    %v2084 = vmul.f32 %v2083, 1.442695
    %v2085 = vpow.pop %v2084
    %v2086 = vadd.f32 %v2085, 1.0
    %v2087 = vrcp.pop %v2086
    %v2088 = vmul.f32 %v2086, %v2087
    %v2089 = vsub.f32 1.0, %v2088
    %v2090 = vmul.f32 %v2087, %v2089
    %v2091 = vadd.f32 %v2087, %v2090
    %vm2092 = vweird.f32 %v2086
    %vm2093 = vweird.f32 %v2087
    %vm2094 = vmor %vm2092, %vm2093
    %v2095 = vsel %vm2094, %v2087, %v2091
    %v2096 = vand.u32 2147483647, %v2086
    %vm2097 = vcmp.eq.f32.partialorder %v2096, 8.507059e+37
    %v2098 = vand.u32 %v2086, 2147483648
    %v2099 = vor.u32 1.1754944e-38, %v2098
    %v2100 = vsel %vm2097, %v2099, %v2095
    %v2101 = vmul.f32 1.0, %v2100
    %v2102 = vadd.f32 %v2009, %v1920
    %v2104 = vrot.slane %v2102, 4
    %2105 = vrot.lane.b32.xlu0 %v2104, 96
    %v2106 = vpop.permute.xlu0 %2105
    %v2108 = vmul.f32 %v2101, %v2106
    %2110 = vrot.lane.b32.xlu0 %v2108, 64
    %v2111 = vpop.permute.xlu0 %2110
    %v2113 = vadd.f32 %v1774, %v2111
    %v2114 = vtanh.pop %v2113
    %v2116 = vrot.slane %v2114, 4
    %2117 = vrot.lane.b32.xlu0 %v2116, 96
    %v2118 = vpop.permute.xlu0 %2117
    %v2120 = vsub.f32 %v1957, %v2118
    %v2122 = vrot.slane %v2120, 4
    %v2124 = vmul.f32 %v2101, %v2122
    %2126 = vrot.lane.b32.xlu0 %v2124, 32
    %v2127 = vpop.permute.xlu0 %2126
    %v2129 = vadd.f32 %v2114, %v2127
    %v2130 = vmul.f32 %v329, %v2129
    %v2131 = vrot.slane %v1957, 4
    %2132 = vrot.lane.b32.xlu0 %v2131, 96
    %v2133 = vpop.permute.xlu0 %2132
    %v2135 = vmul.f32 %v335, %v2133
    %2137 = vrot.lane.b32.xlu0 %v2135, 64
    %v2138 = vpop.permute.xlu0 %2137
    %v2140 = vadd.f32 %v2130, %v2138
    %2142 = vrot.lane.b32.xlu0 %v2072, 64
    %v2143 = vpop.permute.xlu0 %2142
    %v2146 = vrot.slane %v2140, 2
    %2147 = vrot.lane.b32.xlu0 %v2146, 96
    %v2148 = vpop.permute.xlu0 %2147
    %v2150 = vsel %vm274, %v2143, %v2148
    %2152 = vrot.lane.b32.xlu0 %v2064, 64
    %v2153 = vpop.permute.xlu0 %2152
    %2155 = vst.msk [vmem:[#allocation2] sm:$0xc] %vm548, %v2153
    %2157 = vrot.lane.b32.xlu0 %v2130, 96
    %v2158 = vpop.permute.xlu0 %2157
    %2160 = vst.msk [vmem:[#allocation2 + $0x8] sm:$0x30] %vm554, %v2158
    %v2162 = vrot.slane %v2150, 2
    %v2163 = vsel %vm76, %v2162, 0
    %2165 = vmatpush.msra.mxu0 0.0
    %2166 = vmatpush.msra.mxu0 0.0
    %2167 = vmatpush.msra.mxu0 0.0
    %2168 = vmatpush.msra.mxu0 0.0
    %2169 = vmatpush.msra.mxu0 0.0
    %2170 = vmatpush.msra.mxu0 0.0
    %2171 = vmatpush.msra.mxu0 0.0
    %2172 = vmatpush.msra.mxu0 0.0
    %2173 = vmatpush.msra.mxu0 %v1795
    %2174 = vmatpush.msra.mxu0 %v1793
    %2175 = vmatpush.msra.mxu0 %v1791
    %2176 = vmatpush.msra.mxu0 %v1789
    %2177 = vmatpush.msra.mxu0 %v1787
    %2178 = vmatpush.msra.mxu0 %v1785
    %2179 = vmatpush.msra.mxu0 %v1783
    %2180 = vmatpush.msra.mxu0 %v1781
    %2181 = vmatmul.f32.gmra.mxu0 %v2163
    %v2182 = vpop.f32.mrf.mxu0
    %v2183 = vadd.f32 0.0, %v2182
    %2184 = vdwg.mxu0
    %2185 = vmatpush.msra.mxu0 0.0
    %2186 = vmatpush.msra.mxu0 0.0
    %2187 = vmatpush.msra.mxu0 0.0
    %2188 = vmatpush.msra.mxu0 0.0
    %2189 = vmatpush.msra.mxu0 0.0
    %2190 = vmatpush.msra.mxu0 0.0
    %2191 = vmatpush.msra.mxu0 0.0
    %2192 = vmatpush.msra.mxu0 0.0
    %2193 = vmatpush.msra.mxu0 %v1796
    %2194 = vmatpush.msra.mxu0 %v1794
    %2195 = vmatpush.msra.mxu0 %v1792
    %2196 = vmatpush.msra.mxu0 %v1790
    %2197 = vmatpush.msra.mxu0 %v1788
    %2198 = vmatpush.msra.mxu0 %v1786
    %2199 = vmatpush.msra.mxu0 %v1784
    %2200 = vmatpush.msra.mxu0 %v1782
    %2201 = vmatmul.f32.gmra.mxu0 %v2163
    %v2202 = vpop.f32.mrf.mxu0
    %v2203 = vadd.f32 0.0, %v2202
    %2204 = vdwg.mxu0
    %v2206 = vrot.slane %v2183, 4
    %v2208 = vadd.f32 %v1734, %v2206
    %v2209 = vxor.u32 %v2208, 2147483648
    %v2210 = vmul.f32 %v2209, 1.442695
    %v2211 = vpow.pop %v2210
    %v2212 = vadd.f32 %v2211, 1.0
    %v2213 = vrcp.pop %v2212
    %v2214 = vmul.f32 %v2212, %v2213
    %v2215 = vsub.f32 1.0, %v2214
    %v2216 = vmul.f32 %v2213, %v2215
    %v2217 = vadd.f32 %v2213, %v2216
    %vm2218 = vweird.f32 %v2212
    %vm2219 = vweird.f32 %v2213
    %vm2220 = vmor %vm2218, %vm2219
    %v2221 = vsel %vm2220, %v2213, %v2217
    %v2222 = vand.u32 2147483647, %v2212
    %vm2223 = vcmp.eq.f32.partialorder %v2222, 8.507059e+37
    %v2224 = vand.u32 %v2212, 2147483648
    %v2225 = vor.u32 1.1754944e-38, %v2224
    %v2226 = vsel %vm2223, %v2225, %v2221
    %v2227 = vmul.f32 1.0, %v2226
    %v2228 = vadd.f32 %v2183, %v1860
    %v2230 = vrot.slane %v2228, 4
    %2231 = vrot.lane.b32.xlu0 %v2230, 64
    %v2232 = vpop.permute.xlu0 %2231
    %v2234 = vmul.f32 %v2227, %v2232
    %2236 = vrot.lane.b32.xlu0 %v2234, 64
    %v2237 = vpop.permute.xlu0 %2236
    %v2239 = vadd.f32 %v1734, %v2237
    %v2240 = vtanh.pop %v2239
    %v2242 = vrot.slane %v2240, 2
    %2243 = vrot.lane.b32.xlu0 %v2242, 64
    %v2244 = vpop.permute.xlu0 %2243
    %v2246 = vsub.f32 %v2150, %v2244
    %v2248 = vrot.slane %v2246, 6
    %2249 = vrot.lane.b32.xlu0 %v2248, 32
    %v2250 = vpop.permute.xlu0 %2249
    %v2252 = vmul.f32 %v2227, %v2250
    %2254 = vrot.lane.b32.xlu0 %v2252, 32
    %v2255 = vpop.permute.xlu0 %2254
    %v2257 = vadd.f32 %v2240, %v2255
    %v2258 = vmul.f32 %v256, %v2257
    %v2259 = vrot.slane %v2150, 6
    %v2261 = vmul.f32 %v262, %v2259
    %2263 = vrot.lane.b32.xlu0 %v2261, 64
    %v2264 = vpop.permute.xlu0 %2263
    %v2266 = vadd.f32 %v2258, %v2264
    %v2268 = vrot.slane %v2183, 6
    %v2269 = vrot.slane %v2203, 6
    %2270 = vrot.lane.b32.xlu0 %v2268, 32
    %v2271 = vpop.permute.xlu0 %2270
    %2272 = vrot.lane.b32.xlu0 %v2269, 32
    %v2273 = vpop.permute.xlu0 %2272
    %v2274 = vsel %vm274, %v2271, %v2273
    %v2276 = vadd.f32 %v1774, %v2274
    %v2277 = vxor.u32 %v2276, 2147483648
    %v2278 = vmul.f32 %v2277, 1.442695
    %v2279 = vpow.pop %v2278
    %v2280 = vadd.f32 %v2279, 1.0
    %v2281 = vrcp.pop %v2280
    %v2282 = vmul.f32 %v2280, %v2281
    %v2283 = vsub.f32 1.0, %v2282
    %v2284 = vmul.f32 %v2281, %v2283
    %v2285 = vadd.f32 %v2281, %v2284
    %vm2286 = vweird.f32 %v2280
    %vm2287 = vweird.f32 %v2281
    %vm2288 = vmor %vm2286, %vm2287
    %v2289 = vsel %vm2288, %v2281, %v2285
    %v2290 = vand.u32 2147483647, %v2280
    %vm2291 = vcmp.eq.f32.partialorder %v2290, 8.507059e+37
    %v2292 = vand.u32 %v2280, 2147483648
    %v2293 = vor.u32 1.1754944e-38, %v2292
    %v2294 = vsel %vm2291, %v2293, %v2289
    %v2295 = vmul.f32 1.0, %v2294
    %v2296 = vadd.f32 %v2203, %v1920
    %v2298 = vrot.slane %v2296, 6
    %2299 = vrot.lane.b32.xlu0 %v2298, 96
    %v2300 = vpop.permute.xlu0 %2299
    %v2302 = vmul.f32 %v2295, %v2300
    %2304 = vrot.lane.b32.xlu0 %v2302, 64
    %v2305 = vpop.permute.xlu0 %2304
    %v2307 = vadd.f32 %v1774, %v2305
    %v2308 = vtanh.pop %v2307
    %2310 = vrot.lane.b32.xlu0 %v2308, 96
    %v2311 = vpop.permute.xlu0 %2310
    %v2313 = vsub.f32 %v2150, %v2311
    %v2314 = vmul.f32 %v2295, %v2313
    %2316 = vrot.lane.b32.xlu0 %v2314, 32
    %v2317 = vpop.permute.xlu0 %2316
    %v2319 = vadd.f32 %v2308, %v2317
    %v2320 = vmul.f32 %v329, %v2319
    %v2321 = vmul.f32 %v335, %v2150
    %2323 = vrot.lane.b32.xlu0 %v2321, 32
    %v2324 = vpop.permute.xlu0 %2323
    %v2326 = vadd.f32 %v2320, %v2324
    %2328 = vrot.lane.b32.xlu0 %v2266, 64
    %v2329 = vpop.permute.xlu0 %2328
    %v2332 = vrot.slane %v2326, 6
    %2333 = vrot.lane.b32.xlu0 %v2332, 96
    %v2334 = vpop.permute.xlu0 %2333
    %v2336 = vsel %vm274, %v2329, %v2334
    %2338 = vrot.lane.b32.xlu0 %v2258, 64
    %v2339 = vpop.permute.xlu0 %2338
    %2341 = vst.msk [vmem:[#allocation2] sm:$0x30] %vm736, %v2339
    %2343 = vrot.lane.b32.xlu0 %v2320, 96
    %v2344 = vpop.permute.xlu0 %2343
    %2346 = vst.msk [vmem:[#allocation2 + $0x8] sm:$0xc] %vm742, %v2344
    %v2348 = vrot.slane %v2336, 4
    %v2349 = vsel %vm76, %v2348, 0
    %2351 = vmatpush.msra.mxu0 0.0
    %2352 = vmatpush.msra.mxu0 0.0
    %2353 = vmatpush.msra.mxu0 0.0
    %2354 = vmatpush.msra.mxu0 0.0
    %2355 = vmatpush.msra.mxu0 0.0
    %2356 = vmatpush.msra.mxu0 0.0
    %2357 = vmatpush.msra.mxu0 0.0
    %2358 = vmatpush.msra.mxu0 0.0
    %2359 = vmatpush.msra.mxu0 %v1795
    %2360 = vmatpush.msra.mxu0 %v1793
    %2361 = vmatpush.msra.mxu0 %v1791
    %2362 = vmatpush.msra.mxu0 %v1789
    %2363 = vmatpush.msra.mxu0 %v1787
    %2364 = vmatpush.msra.mxu0 %v1785
    %2365 = vmatpush.msra.mxu0 %v1783
    %2366 = vmatpush.msra.mxu0 %v1781
    %2367 = vmatmul.f32.gmra.mxu0 %v2349
    %v2368 = vpop.f32.mrf.mxu0
    %v2369 = vadd.f32 0.0, %v2368
    %2370 = vdwg.mxu0
    %2371 = vmatpush.msra.mxu0 0.0
    %2372 = vmatpush.msra.mxu0 0.0
    %2373 = vmatpush.msra.mxu0 0.0
    %2374 = vmatpush.msra.mxu0 0.0
    %2375 = vmatpush.msra.mxu0 0.0
    %2376 = vmatpush.msra.mxu0 0.0
    %2377 = vmatpush.msra.mxu0 0.0
    %2378 = vmatpush.msra.mxu0 0.0
    %2379 = vmatpush.msra.mxu0 %v1796
    %2380 = vmatpush.msra.mxu0 %v1794
    %2381 = vmatpush.msra.mxu0 %v1792
    %2382 = vmatpush.msra.mxu0 %v1790
    %2383 = vmatpush.msra.mxu0 %v1788
    %2384 = vmatpush.msra.mxu0 %v1786
    %2385 = vmatpush.msra.mxu0 %v1784
    %2386 = vmatpush.msra.mxu0 %v1782
    %2387 = vmatmul.f32.gmra.mxu0 %v2349
    %v2388 = vpop.f32.mrf.mxu0
    %v2389 = vadd.f32 0.0, %v2388
    %2390 = vdwg.mxu0
    %v2392 = vrot.slane %v2369, 2
    %v2394 = vadd.f32 %v1734, %v2392
    %v2395 = vxor.u32 %v2394, 2147483648
    %v2396 = vmul.f32 %v2395, 1.442695
    %v2397 = vpow.pop %v2396
    %v2398 = vadd.f32 %v2397, 1.0
    %v2399 = vrcp.pop %v2398
    %v2400 = vmul.f32 %v2398, %v2399
    %v2401 = vsub.f32 1.0, %v2400
    %v2402 = vmul.f32 %v2399, %v2401
    %v2403 = vadd.f32 %v2399, %v2402
    %vm2404 = vweird.f32 %v2398
    %vm2405 = vweird.f32 %v2399
    %vm2406 = vmor %vm2404, %vm2405
    %v2407 = vsel %vm2406, %v2399, %v2403
    %v2408 = vand.u32 2147483647, %v2398
    %vm2409 = vcmp.eq.f32.partialorder %v2408, 8.507059e+37
    %v2410 = vand.u32 %v2398, 2147483648
    %v2411 = vor.u32 1.1754944e-38, %v2410
    %v2412 = vsel %vm2409, %v2411, %v2407
    %v2413 = vmul.f32 1.0, %v2412
    %v2414 = vadd.f32 %v2369, %v1860
    %v2416 = vrot.slane %v2414, 2
    %2417 = vrot.lane.b32.xlu0 %v2416, 64
    %v2418 = vpop.permute.xlu0 %2417
    %v2420 = vmul.f32 %v2413, %v2418
    %2422 = vrot.lane.b32.xlu0 %v2420, 64
    %v2423 = vpop.permute.xlu0 %2422
    %v2425 = vadd.f32 %v1734, %v2423
    %v2426 = vtanh.pop %v2425
    %v2428 = vrot.slane %v2426, 2
    %2429 = vrot.lane.b32.xlu0 %v2428, 64
    %v2430 = vpop.permute.xlu0 %2429
    %v2432 = vsub.f32 %v2336, %v2430
    %v2434 = vrot.slane %v2432, 6
    %2435 = vrot.lane.b32.xlu0 %v2434, 32
    %v2436 = vpop.permute.xlu0 %2435
    %v2438 = vmul.f32 %v2413, %v2436
    %2440 = vrot.lane.b32.xlu0 %v2438, 32
    %v2441 = vpop.permute.xlu0 %2440
    %v2443 = vadd.f32 %v2426, %v2441
    %v2444 = vmul.f32 %v256, %v2443
    %v2445 = vrot.slane %v2336, 6
    %v2447 = vmul.f32 %v262, %v2445
    %2449 = vrot.lane.b32.xlu0 %v2447, 64
    %v2450 = vpop.permute.xlu0 %2449
    %v2452 = vadd.f32 %v2444, %v2450
    %2454 = vrot.lane.b32.xlu0 %v2369, 32
    %v2455 = vpop.permute.xlu0 %2454
    %2456 = vrot.lane.b32.xlu0 %v2389, 32
    %v2457 = vpop.permute.xlu0 %2456
    %v2458 = vsel %vm274, %v2455, %v2457
    %v2460 = vadd.f32 %v1774, %v2458
    %v2461 = vxor.u32 %v2460, 2147483648
    %v2462 = vmul.f32 %v2461, 1.442695
    %v2463 = vpow.pop %v2462
    %v2464 = vadd.f32 %v2463, 1.0
    %v2465 = vrcp.pop %v2464
    %v2466 = vmul.f32 %v2464, %v2465
    %v2467 = vsub.f32 1.0, %v2466
    %v2468 = vmul.f32 %v2465, %v2467
    %v2469 = vadd.f32 %v2465, %v2468
    %vm2470 = vweird.f32 %v2464
    %vm2471 = vweird.f32 %v2465
    %vm2472 = vmor %vm2470, %vm2471
    %v2473 = vsel %vm2472, %v2465, %v2469
    %v2474 = vand.u32 2147483647, %v2464
    %vm2475 = vcmp.eq.f32.partialorder %v2474, 8.507059e+37
    %v2476 = vand.u32 %v2464, 2147483648
    %v2477 = vor.u32 1.1754944e-38, %v2476
    %v2478 = vsel %vm2475, %v2477, %v2473
    %v2479 = vmul.f32 1.0, %v2478
    %v2480 = vadd.f32 %v2389, %v1920
    %2482 = vrot.lane.b32.xlu0 %v2480, 96
    %v2483 = vpop.permute.xlu0 %2482
    %v2485 = vmul.f32 %v2479, %v2483
    %2487 = vrot.lane.b32.xlu0 %v2485, 64
    %v2488 = vpop.permute.xlu0 %2487
    %v2490 = vadd.f32 %v1774, %v2488
    %v2491 = vtanh.pop %v2490
    %v2493 = vrot.slane %v2491, 4
    %2494 = vrot.lane.b32.xlu0 %v2493, 96
    %v2495 = vpop.permute.xlu0 %2494
    %v2497 = vsub.f32 %v2336, %v2495
    %v2499 = vrot.slane %v2497, 4
    %v2501 = vmul.f32 %v2479, %v2499
    %2503 = vrot.lane.b32.xlu0 %v2501, 32
    %v2504 = vpop.permute.xlu0 %2503
    %v2506 = vadd.f32 %v2491, %v2504
    %v2507 = vmul.f32 %v329, %v2506
    %2508 = vrot.lane.b32.xlu0 %v2348, 96
    %v2509 = vpop.permute.xlu0 %2508
    %v2511 = vmul.f32 %v335, %v2509
    %2513 = vrot.lane.b32.xlu0 %v2511, 64
    %v2514 = vpop.permute.xlu0 %2513
    %v2516 = vadd.f32 %v2507, %v2514
    %2518 = vrot.lane.b32.xlu0 %v2452, 64
    %v2519 = vpop.permute.xlu0 %2518
    %v2522 = vrot.slane %v2516, 2
    %2523 = vrot.lane.b32.xlu0 %v2522, 96
    %v2524 = vpop.permute.xlu0 %2523
    %v2526 = vsel %vm274, %v2519, %v2524
    %2528 = vrot.lane.b32.xlu0 %v2444, 64
    %v2529 = vpop.permute.xlu0 %2528
    %2531 = vst.msk [vmem:[#allocation2] sm:$0xc0] %vm928, %v2529
    %2533 = vrot.lane.b32.xlu0 %v2507, 96
    %v2534 = vpop.permute.xlu0 %2533
    %2536 = vst.msk [vmem:[#allocation2 + $0x8] sm:$0x3] %vm934, %v2534
    %v2538 = vrot.slane %v2526, 6
    %v2539 = vsel %vm76, %v2538, 0
    %2541 = vmatpush.msra.mxu0 0.0
    %2542 = vmatpush.msra.mxu0 0.0
    %2543 = vmatpush.msra.mxu0 0.0
    %2544 = vmatpush.msra.mxu0 0.0
    %2545 = vmatpush.msra.mxu0 0.0
    %2546 = vmatpush.msra.mxu0 0.0
    %2547 = vmatpush.msra.mxu0 0.0
    %2548 = vmatpush.msra.mxu0 0.0
    %2549 = vmatpush.msra.mxu0 %v1795
    %2550 = vmatpush.msra.mxu0 %v1793
    %2551 = vmatpush.msra.mxu0 %v1791
    %2552 = vmatpush.msra.mxu0 %v1789
    %2553 = vmatpush.msra.mxu0 %v1787
    %2554 = vmatpush.msra.mxu0 %v1785
    %2555 = vmatpush.msra.mxu0 %v1783
    %2556 = vmatpush.msra.mxu0 %v1781
    %2557 = vmatmul.f32.gmra.mxu0 %v2539
    %v2558 = vpop.f32.mrf.mxu0
    %v2559 = vadd.f32 0.0, %v2558
    %2560 = vdwg.mxu0
    %2561 = vmatpush.msra.mxu0 0.0
    %2562 = vmatpush.msra.mxu0 0.0
    %2563 = vmatpush.msra.mxu0 0.0
    %2564 = vmatpush.msra.mxu0 0.0
    %2565 = vmatpush.msra.mxu0 0.0
    %2566 = vmatpush.msra.mxu0 0.0
    %2567 = vmatpush.msra.mxu0 0.0
    %2568 = vmatpush.msra.mxu0 0.0
    %2569 = vmatpush.msra.mxu0 %v1796
    %2570 = vmatpush.msra.mxu0 %v1794
    %2571 = vmatpush.msra.mxu0 %v1792
    %2572 = vmatpush.msra.mxu0 %v1790
    %2573 = vmatpush.msra.mxu0 %v1788
    %2574 = vmatpush.msra.mxu0 %v1786
    %2575 = vmatpush.msra.mxu0 %v1784
    %2576 = vmatpush.msra.mxu0 %v1782
    %2577 = vmatmul.f32.gmra.mxu0 %v2539
    %v2578 = vpop.f32.mrf.mxu0
    %v2579 = vadd.f32 0.0, %v2578
    %2580 = vdwg.mxu0
    %v2581 = vadd.f32 %v1737, %v2559
    %v2582 = vxor.u32 %v2581, 2147483648
    %v2583 = vmul.f32 %v2582, 1.442695
    %v2584 = vpow.pop %v2583
    %v2585 = vadd.f32 %v2584, 1.0
    %v2586 = vrcp.pop %v2585
    %v2587 = vmul.f32 %v2585, %v2586
    %v2588 = vsub.f32 1.0, %v2587
    %v2589 = vmul.f32 %v2586, %v2588
    %v2590 = vadd.f32 %v2586, %v2589
    %vm2591 = vweird.f32 %v2585
    %vm2592 = vweird.f32 %v2586
    %vm2593 = vmor %vm2591, %vm2592
    %v2594 = vsel %vm2593, %v2586, %v2590
    %v2595 = vand.u32 2147483647, %v2585
    %vm2596 = vcmp.eq.f32.partialorder %v2595, 8.507059e+37
    %v2597 = vand.u32 %v2585, 2147483648
    %v2598 = vor.u32 1.1754944e-38, %v2597
    %v2599 = vsel %vm2596, %v2598, %v2594
    %v2600 = vmul.f32 1.0, %v2599
    %v2601 = vadd.f32 %v2559, %v1860
    %2603 = vrot.lane.b32.xlu0 %v2601, 64
    %v2604 = vpop.permute.xlu0 %2603
    %v2606 = vmul.f32 %v2600, %v2604
    %2608 = vrot.lane.b32.xlu0 %v2606, 64
    %v2609 = vpop.permute.xlu0 %2608
    %v2611 = vadd.f32 %v1737, %v2609
    %v2612 = vtanh.pop %v2611
    %v2614 = vrot.slane %v2612, 2
    %2615 = vrot.lane.b32.xlu0 %v2614, 64
    %v2616 = vpop.permute.xlu0 %2615
    %v2618 = vsub.f32 %v2526, %v2616
    %v2620 = vrot.slane %v2618, 6
    %2621 = vrot.lane.b32.xlu0 %v2620, 32
    %v2622 = vpop.permute.xlu0 %2621
    %v2624 = vmul.f32 %v2600, %v2622
    %2626 = vrot.lane.b32.xlu0 %v2624, 32
    %v2627 = vpop.permute.xlu0 %2626
    %v2629 = vadd.f32 %v2612, %v2627
    %v2630 = vmul.f32 %v329, %v2629
    %v2632 = vmul.f32 %v335, %v2538
    %2634 = vrot.lane.b32.xlu0 %v2632, 64
    %v2635 = vpop.permute.xlu0 %2634
    %v2637 = vadd.f32 %v2630, %v2635
    %v2640 = vrot.slane %v2559, 2
    %v2641 = vrot.slane %v2579, 2
    %2642 = vrot.lane.b32.xlu0 %v2640, 32
    %v2643 = vpop.permute.xlu0 %2642
    %2644 = vrot.lane.b32.xlu0 %v2641, 32
    %v2645 = vpop.permute.xlu0 %2644
    %v2646 = vsel %vm274, %v2643, %v2645
    %v2648 = vadd.f32 %v1771, %v2646
    %v2649 = vxor.u32 %v2648, 2147483648
    %v2650 = vmul.f32 %v2649, 1.442695
    %v2651 = vpow.pop %v2650
    %v2652 = vadd.f32 %v2651, 1.0
    %v2653 = vrcp.pop %v2652
    %v2654 = vmul.f32 %v2652, %v2653
    %v2655 = vsub.f32 1.0, %v2654
    %v2656 = vmul.f32 %v2653, %v2655
    %v2657 = vadd.f32 %v2653, %v2656
    %vm2658 = vweird.f32 %v2652
    %vm2659 = vweird.f32 %v2653
    %vm2660 = vmor %vm2658, %vm2659
    %v2661 = vsel %vm2660, %v2653, %v2657
    %v2662 = vand.u32 2147483647, %v2652
    %vm2663 = vcmp.eq.f32.partialorder %v2662, 8.507059e+37
    %v2664 = vand.u32 %v2652, 2147483648
    %v2665 = vor.u32 1.1754944e-38, %v2664
    %v2666 = vsel %vm2663, %v2665, %v2661
    %v2667 = vmul.f32 1.0, %v2666
    %v2668 = vadd.f32 %v2579, %v1920
    %v2670 = vrot.slane %v2668, 2
    %2671 = vrot.lane.b32.xlu0 %v2670, 96
    %v2672 = vpop.permute.xlu0 %2671
    %v2674 = vmul.f32 %v2667, %v2672
    %2676 = vrot.lane.b32.xlu0 %v2674, 64
    %v2677 = vpop.permute.xlu0 %2676
    %v2679 = vadd.f32 %v1771, %v2677
    %v2680 = vtanh.pop %v2679
    %2682 = vrot.lane.b32.xlu0 %v2680, 96
    %v2683 = vpop.permute.xlu0 %2682
    %v2685 = vsub.f32 %v2526, %v2683
    %v2686 = vmul.f32 %v2667, %v2685
    %2688 = vrot.lane.b32.xlu0 %v2686, 32
    %v2689 = vpop.permute.xlu0 %2688
    %v2691 = vadd.f32 %v2680, %v2689
    %v2692 = vmul.f32 %v256, %v2691
    %v2693 = vmul.f32 %v262, %v2526
    %2695 = vrot.lane.b32.xlu0 %v2693, 32
    %v2696 = vpop.permute.xlu0 %2695
    %v2698 = vadd.f32 %v2692, %v2696
    %2700 = vrot.lane.b32.xlu0 %v2637, 64
    %v2701 = vpop.permute.xlu0 %2700
    %v2704 = vrot.slane %v2698, 6
    %2705 = vrot.lane.b32.xlu0 %v2704, 96
    %v2706 = vpop.permute.xlu0 %2705
    %v2708 = vsel %vm274, %v2701, %v2706
    %2710 = vrot.lane.b32.xlu0 %v2630, 64
    %v2711 = vpop.permute.xlu0 %2710
    %2713 = vst.msk [vmem:[#allocation2 + $0x8] sm:$0x3] %vm353, %v2711
    %2715 = vrot.lane.b32.xlu0 %v2692, 96
    %v2716 = vpop.permute.xlu0 %2715
    %2718 = vst.msk [vmem:[#allocation2] sm:$0xc0] %vm359, %v2716
    %v2720 = vsel %vm76, %v2708, 0
    %2722 = vmatpush.msra.mxu0 0.0
    %2723 = vmatpush.msra.mxu0 0.0
    %2724 = vmatpush.msra.mxu0 0.0
    %2725 = vmatpush.msra.mxu0 0.0
    %2726 = vmatpush.msra.mxu0 0.0
    %2727 = vmatpush.msra.mxu0 0.0
    %2728 = vmatpush.msra.mxu0 0.0
    %2729 = vmatpush.msra.mxu0 0.0
    %2730 = vmatpush.msra.mxu0 %v1795
    %2731 = vmatpush.msra.mxu0 %v1793
    %2732 = vmatpush.msra.mxu0 %v1791
    %2733 = vmatpush.msra.mxu0 %v1789
    %2734 = vmatpush.msra.mxu0 %v1787
    %2735 = vmatpush.msra.mxu0 %v1785
    %2736 = vmatpush.msra.mxu0 %v1783
    %2737 = vmatpush.msra.mxu0 %v1781
    %2738 = vmatmul.f32.gmra.mxu0 %v2720
    %v2739 = vpop.f32.mrf.mxu0
    %v2740 = vadd.f32 0.0, %v2739
    %2741 = vdwg.mxu0
    %2742 = vmatpush.msra.mxu0 0.0
    %2743 = vmatpush.msra.mxu0 0.0
    %2744 = vmatpush.msra.mxu0 0.0
    %2745 = vmatpush.msra.mxu0 0.0
    %2746 = vmatpush.msra.mxu0 0.0
    %2747 = vmatpush.msra.mxu0 0.0
    %2748 = vmatpush.msra.mxu0 0.0
    %2749 = vmatpush.msra.mxu0 0.0
    %2750 = vmatpush.msra.mxu0 %v1796
    %2751 = vmatpush.msra.mxu0 %v1794
    %2752 = vmatpush.msra.mxu0 %v1792
    %2753 = vmatpush.msra.mxu0 %v1790
    %2754 = vmatpush.msra.mxu0 %v1788
    %2755 = vmatpush.msra.mxu0 %v1786
    %2756 = vmatpush.msra.mxu0 %v1784
    %2757 = vmatpush.msra.mxu0 %v1782
    %2758 = vmatmul.f32.gmra.mxu0 %v2720
    %v2759 = vpop.f32.mrf.mxu0
    %v2760 = vadd.f32 0.0, %v2759
    %2761 = vdwg.mxu0
    %v2763 = vrot.slane %v2740, 6
    %v2765 = vadd.f32 %v1737, %v2763
    %v2766 = vxor.u32 %v2765, 2147483648
    %v2767 = vmul.f32 %v2766, 1.442695
    %v2768 = vpow.pop %v2767
    %v2769 = vadd.f32 %v2768, 1.0
    %v2770 = vrcp.pop %v2769
    %v2771 = vmul.f32 %v2769, %v2770
    %v2772 = vsub.f32 1.0, %v2771
    %v2773 = vmul.f32 %v2770, %v2772
    %v2774 = vadd.f32 %v2770, %v2773
    %vm2775 = vweird.f32 %v2769
    %vm2776 = vweird.f32 %v2770
    %vm2777 = vmor %vm2775, %vm2776
    %v2778 = vsel %vm2777, %v2770, %v2774
    %v2779 = vand.u32 2147483647, %v2769
    %vm2780 = vcmp.eq.f32.partialorder %v2779, 8.507059e+37
    %v2781 = vand.u32 %v2769, 2147483648
    %v2782 = vor.u32 1.1754944e-38, %v2781
    %v2783 = vsel %vm2780, %v2782, %v2778
    %v2784 = vmul.f32 1.0, %v2783
    %v2785 = vadd.f32 %v2740, %v1860
    %v2787 = vrot.slane %v2785, 6
    %2788 = vrot.lane.b32.xlu0 %v2787, 64
    %v2789 = vpop.permute.xlu0 %2788
    %v2791 = vmul.f32 %v2784, %v2789
    %2793 = vrot.lane.b32.xlu0 %v2791, 64
    %v2794 = vpop.permute.xlu0 %2793
    %v2796 = vadd.f32 %v1737, %v2794
    %v2797 = vtanh.pop %v2796
    %v2799 = vrot.slane %v2797, 2
    %2800 = vrot.lane.b32.xlu0 %v2799, 64
    %v2801 = vpop.permute.xlu0 %2800
    %v2803 = vsub.f32 %v2708, %v2801
    %v2805 = vrot.slane %v2803, 6
    %2806 = vrot.lane.b32.xlu0 %v2805, 32
    %v2807 = vpop.permute.xlu0 %2806
    %v2809 = vmul.f32 %v2784, %v2807
    %2811 = vrot.lane.b32.xlu0 %v2809, 32
    %v2812 = vpop.permute.xlu0 %2811
    %v2814 = vadd.f32 %v2797, %v2812
    %v2815 = vmul.f32 %v329, %v2814
    %v2816 = vrot.slane %v2708, 6
    %v2818 = vmul.f32 %v335, %v2816
    %2820 = vrot.lane.b32.xlu0 %v2818, 64
    %v2821 = vpop.permute.xlu0 %2820
    %v2823 = vadd.f32 %v2815, %v2821
    %v2825 = vrot.slane %v2740, 4
    %v2826 = vrot.slane %v2760, 4
    %2827 = vrot.lane.b32.xlu0 %v2825, 32
    %v2828 = vpop.permute.xlu0 %2827
    %2829 = vrot.lane.b32.xlu0 %v2826, 32
    %v2830 = vpop.permute.xlu0 %2829
    %v2831 = vsel %vm274, %v2828, %v2830
    %v2833 = vadd.f32 %v1771, %v2831
    %v2834 = vxor.u32 %v2833, 2147483648
    %v2835 = vmul.f32 %v2834, 1.442695
    %v2836 = vpow.pop %v2835
    %v2837 = vadd.f32 %v2836, 1.0
    %v2838 = vrcp.pop %v2837
    %v2839 = vmul.f32 %v2837, %v2838
    %v2840 = vsub.f32 1.0, %v2839
    %v2841 = vmul.f32 %v2838, %v2840
    %v2842 = vadd.f32 %v2838, %v2841
    %vm2843 = vweird.f32 %v2837
    %vm2844 = vweird.f32 %v2838
    %vm2845 = vmor %vm2843, %vm2844
    %v2846 = vsel %vm2845, %v2838, %v2842
    %v2847 = vand.u32 2147483647, %v2837
    %vm2848 = vcmp.eq.f32.partialorder %v2847, 8.507059e+37
    %v2849 = vand.u32 %v2837, 2147483648
    %v2850 = vor.u32 1.1754944e-38, %v2849
    %v2851 = vsel %vm2848, %v2850, %v2846
    %v2852 = vmul.f32 1.0, %v2851
    %v2853 = vadd.f32 %v2760, %v1920
    %v2855 = vrot.slane %v2853, 4
    %2856 = vrot.lane.b32.xlu0 %v2855, 96
    %v2857 = vpop.permute.xlu0 %2856
    %v2859 = vmul.f32 %v2852, %v2857
    %2861 = vrot.lane.b32.xlu0 %v2859, 64
    %v2862 = vpop.permute.xlu0 %2861
    %v2864 = vadd.f32 %v1771, %v2862
    %v2865 = vtanh.pop %v2864
    %v2867 = vrot.slane %v2865, 4
    %2868 = vrot.lane.b32.xlu0 %v2867, 96
    %v2869 = vpop.permute.xlu0 %2868
    %v2871 = vsub.f32 %v2708, %v2869
    %v2873 = vrot.slane %v2871, 4
    %v2875 = vmul.f32 %v2852, %v2873
    %2877 = vrot.lane.b32.xlu0 %v2875, 32
    %v2878 = vpop.permute.xlu0 %2877
    %v2880 = vadd.f32 %v2865, %v2878
    %v2881 = vmul.f32 %v256, %v2880
    %v2882 = vrot.slane %v2708, 4
    %2883 = vrot.lane.b32.xlu0 %v2882, 96
    %v2884 = vpop.permute.xlu0 %2883
    %v2886 = vmul.f32 %v262, %v2884
    %2888 = vrot.lane.b32.xlu0 %v2886, 64
    %v2889 = vpop.permute.xlu0 %2888
    %v2891 = vadd.f32 %v2881, %v2889
    %2893 = vrot.lane.b32.xlu0 %v2823, 64
    %v2894 = vpop.permute.xlu0 %2893
    %v2897 = vrot.slane %v2891, 2
    %2898 = vrot.lane.b32.xlu0 %v2897, 96
    %v2899 = vpop.permute.xlu0 %2898
    %v2901 = vsel %vm274, %v2894, %v2899
    %2903 = vrot.lane.b32.xlu0 %v2815, 64
    %v2904 = vpop.permute.xlu0 %2903
    %2906 = vst.msk [vmem:[#allocation2 + $0x8] sm:$0xc] %vm548, %v2904
    %2908 = vrot.lane.b32.xlu0 %v2881, 96
    %v2909 = vpop.permute.xlu0 %2908
    %2911 = vst.msk [vmem:[#allocation2] sm:$0x30] %vm554, %v2909
    %v2913 = vrot.slane %v2901, 2
    %v2914 = vsel %vm76, %v2913, 0
    %2916 = vmatpush.msra.mxu0 0.0
    %2917 = vmatpush.msra.mxu0 0.0
    %2918 = vmatpush.msra.mxu0 0.0
    %2919 = vmatpush.msra.mxu0 0.0
    %2920 = vmatpush.msra.mxu0 0.0
    %2921 = vmatpush.msra.mxu0 0.0
    %2922 = vmatpush.msra.mxu0 0.0
    %2923 = vmatpush.msra.mxu0 0.0
    %2924 = vmatpush.msra.mxu0 %v1795
    %2925 = vmatpush.msra.mxu0 %v1793
    %2926 = vmatpush.msra.mxu0 %v1791
    %2927 = vmatpush.msra.mxu0 %v1789
    %2928 = vmatpush.msra.mxu0 %v1787
    %2929 = vmatpush.msra.mxu0 %v1785
    %2930 = vmatpush.msra.mxu0 %v1783
    %2931 = vmatpush.msra.mxu0 %v1781
    %2932 = vmatmul.f32.gmra.mxu0 %v2914
    %v2933 = vpop.f32.mrf.mxu0
    %v2934 = vadd.f32 0.0, %v2933
    %2935 = vdwg.mxu0
    %2936 = vmatpush.msra.mxu0 0.0
    %2937 = vmatpush.msra.mxu0 0.0
    %2938 = vmatpush.msra.mxu0 0.0
    %2939 = vmatpush.msra.mxu0 0.0
    %2940 = vmatpush.msra.mxu0 0.0
    %2941 = vmatpush.msra.mxu0 0.0
    %2942 = vmatpush.msra.mxu0 0.0
    %2943 = vmatpush.msra.mxu0 0.0
    %2944 = vmatpush.msra.mxu0 %v1796
    %2945 = vmatpush.msra.mxu0 %v1794
    %2946 = vmatpush.msra.mxu0 %v1792
    %2947 = vmatpush.msra.mxu0 %v1790
    %2948 = vmatpush.msra.mxu0 %v1788
    %2949 = vmatpush.msra.mxu0 %v1786
    %2950 = vmatpush.msra.mxu0 %v1784
    %2951 = vmatpush.msra.mxu0 %v1782
    %2952 = vmatmul.f32.gmra.mxu0 %v2914
    %v2953 = vpop.f32.mrf.mxu0
    %v2954 = vadd.f32 0.0, %v2953
    %2955 = vdwg.mxu0
    %v2957 = vrot.slane %v2934, 4
    %v2959 = vadd.f32 %v1737, %v2957
    %v2960 = vxor.u32 %v2959, 2147483648
    %v2961 = vmul.f32 %v2960, 1.442695
    %v2962 = vpow.pop %v2961
    %v2963 = vadd.f32 %v2962, 1.0
    %v2964 = vrcp.pop %v2963
    %v2965 = vmul.f32 %v2963, %v2964
    %v2966 = vsub.f32 1.0, %v2965
    %v2967 = vmul.f32 %v2964, %v2966
    %v2968 = vadd.f32 %v2964, %v2967
    %vm2969 = vweird.f32 %v2963
    %vm2970 = vweird.f32 %v2964
    %vm2971 = vmor %vm2969, %vm2970
    %v2972 = vsel %vm2971, %v2964, %v2968
    %v2973 = vand.u32 2147483647, %v2963
    %vm2974 = vcmp.eq.f32.partialorder %v2973, 8.507059e+37
    %v2975 = vand.u32 %v2963, 2147483648
    %v2976 = vor.u32 1.1754944e-38, %v2975
    %v2977 = vsel %vm2974, %v2976, %v2972
    %v2978 = vmul.f32 1.0, %v2977
    %v2979 = vadd.f32 %v2934, %v1860
    %v2981 = vrot.slane %v2979, 4
    %2982 = vrot.lane.b32.xlu0 %v2981, 64
    %v2983 = vpop.permute.xlu0 %2982
    %v2985 = vmul.f32 %v2978, %v2983
    %2987 = vrot.lane.b32.xlu0 %v2985, 64
    %v2988 = vpop.permute.xlu0 %2987
    %v2990 = vadd.f32 %v1737, %v2988
    %v2991 = vtanh.pop %v2990
    %v2993 = vrot.slane %v2991, 2
    %2994 = vrot.lane.b32.xlu0 %v2993, 64
    %v2995 = vpop.permute.xlu0 %2994
    %v2997 = vsub.f32 %v2901, %v2995
    %v2999 = vrot.slane %v2997, 6
    %3000 = vrot.lane.b32.xlu0 %v2999, 32
    %v3001 = vpop.permute.xlu0 %3000
    %v3003 = vmul.f32 %v2978, %v3001
    %3005 = vrot.lane.b32.xlu0 %v3003, 32
    %v3006 = vpop.permute.xlu0 %3005
    %v3008 = vadd.f32 %v2991, %v3006
    %v3009 = vmul.f32 %v329, %v3008
    %v3010 = vrot.slane %v2901, 6
    %v3012 = vmul.f32 %v335, %v3010
    %3014 = vrot.lane.b32.xlu0 %v3012, 64
    %v3015 = vpop.permute.xlu0 %3014
    %v3017 = vadd.f32 %v3009, %v3015
    %v3019 = vrot.slane %v2934, 6
    %v3020 = vrot.slane %v2954, 6
    %3021 = vrot.lane.b32.xlu0 %v3019, 32
    %v3022 = vpop.permute.xlu0 %3021
    %3023 = vrot.lane.b32.xlu0 %v3020, 32
    %v3024 = vpop.permute.xlu0 %3023
    %v3025 = vsel %vm274, %v3022, %v3024
    %v3027 = vadd.f32 %v1771, %v3025
    %v3028 = vxor.u32 %v3027, 2147483648
    %v3029 = vmul.f32 %v3028, 1.442695
    %v3030 = vpow.pop %v3029
    %v3031 = vadd.f32 %v3030, 1.0
    %v3032 = vrcp.pop %v3031
    %v3033 = vmul.f32 %v3031, %v3032
    %v3034 = vsub.f32 1.0, %v3033
    %v3035 = vmul.f32 %v3032, %v3034
    %v3036 = vadd.f32 %v3032, %v3035
    %vm3037 = vweird.f32 %v3031
    %vm3038 = vweird.f32 %v3032
    %vm3039 = vmor %vm3037, %vm3038
    %v3040 = vsel %vm3039, %v3032, %v3036
    %v3041 = vand.u32 2147483647, %v3031
    %vm3042 = vcmp.eq.f32.partialorder %v3041, 8.507059e+37
    %v3043 = vand.u32 %v3031, 2147483648
    %v3044 = vor.u32 1.1754944e-38, %v3043
    %v3045 = vsel %vm3042, %v3044, %v3040
    %v3046 = vmul.f32 1.0, %v3045
    %v3047 = vadd.f32 %v2954, %v1920
    %v3049 = vrot.slane %v3047, 6
    %3050 = vrot.lane.b32.xlu0 %v3049, 96
    %v3051 = vpop.permute.xlu0 %3050
    %v3053 = vmul.f32 %v3046, %v3051
    %3055 = vrot.lane.b32.xlu0 %v3053, 64
    %v3056 = vpop.permute.xlu0 %3055
    %v3058 = vadd.f32 %v1771, %v3056
    %v3059 = vtanh.pop %v3058
    %3061 = vrot.lane.b32.xlu0 %v3059, 96
    %v3062 = vpop.permute.xlu0 %3061
    %v3064 = vsub.f32 %v2901, %v3062
    %v3065 = vmul.f32 %v3046, %v3064
    %3067 = vrot.lane.b32.xlu0 %v3065, 32
    %v3068 = vpop.permute.xlu0 %3067
    %v3070 = vadd.f32 %v3059, %v3068
    %v3071 = vmul.f32 %v256, %v3070
    %v3072 = vmul.f32 %v262, %v2901
    %3074 = vrot.lane.b32.xlu0 %v3072, 32
    %v3075 = vpop.permute.xlu0 %3074
    %v3077 = vadd.f32 %v3071, %v3075
    %3079 = vrot.lane.b32.xlu0 %v3017, 64
    %v3080 = vpop.permute.xlu0 %3079
    %v3083 = vrot.slane %v3077, 6
    %3084 = vrot.lane.b32.xlu0 %v3083, 96
    %v3085 = vpop.permute.xlu0 %3084
    %v3087 = vsel %vm274, %v3080, %v3085
    %3089 = vrot.lane.b32.xlu0 %v3009, 64
    %v3090 = vpop.permute.xlu0 %3089
    %3092 = vst.msk [vmem:[#allocation2 + $0x8] sm:$0x30] %vm736, %v3090
    %3094 = vrot.lane.b32.xlu0 %v3071, 96
    %v3095 = vpop.permute.xlu0 %3094
    %3097 = vst.msk [vmem:[#allocation2] sm:$0xc] %vm742, %v3095
    %v3099 = vrot.slane %v3087, 4
    %v3100 = vsel %vm76, %v3099, 0
    %3102 = vmatpush.msra.mxu0 0.0
    %3103 = vmatpush.msra.mxu0 0.0
    %3104 = vmatpush.msra.mxu0 0.0
    %3105 = vmatpush.msra.mxu0 0.0
    %3106 = vmatpush.msra.mxu0 0.0
    %3107 = vmatpush.msra.mxu0 0.0
    %3108 = vmatpush.msra.mxu0 0.0
    %3109 = vmatpush.msra.mxu0 0.0
    %3110 = vmatpush.msra.mxu0 %v1795
    %3111 = vmatpush.msra.mxu0 %v1793
    %3112 = vmatpush.msra.mxu0 %v1791
    %3113 = vmatpush.msra.mxu0 %v1789
    %3114 = vmatpush.msra.mxu0 %v1787
    %3115 = vmatpush.msra.mxu0 %v1785
    %3116 = vmatpush.msra.mxu0 %v1783
    %3117 = vmatpush.msra.mxu0 %v1781
    %3118 = vmatmul.f32.gmra.mxu0 %v3100
    %v3119 = vpop.f32.mrf.mxu0
    %v3120 = vadd.f32 0.0, %v3119
    %3121 = vdwg.mxu0
    %3122 = vmatpush.msra.mxu0 0.0
    %3123 = vmatpush.msra.mxu0 0.0
    %3124 = vmatpush.msra.mxu0 0.0
    %3125 = vmatpush.msra.mxu0 0.0
    %3126 = vmatpush.msra.mxu0 0.0
    %3127 = vmatpush.msra.mxu0 0.0
    %3128 = vmatpush.msra.mxu0 0.0
    %3129 = vmatpush.msra.mxu0 0.0
    %3130 = vmatpush.msra.mxu0 %v1796
    %3131 = vmatpush.msra.mxu0 %v1794
    %3132 = vmatpush.msra.mxu0 %v1792
    %3133 = vmatpush.msra.mxu0 %v1790
    %3134 = vmatpush.msra.mxu0 %v1788
    %3135 = vmatpush.msra.mxu0 %v1786
    %3136 = vmatpush.msra.mxu0 %v1784
    %3137 = vmatpush.msra.mxu0 %v1782
    %3138 = vmatmul.f32.gmra.mxu0 %v3100
    %v3139 = vpop.f32.mrf.mxu0
    %v3140 = vadd.f32 0.0, %v3139
    %3141 = vdwg.mxu0
    %v3143 = vrot.slane %v3120, 2
    %v3145 = vadd.f32 %v1737, %v3143
    %v3146 = vxor.u32 %v3145, 2147483648
    %v3147 = vmul.f32 %v3146, 1.442695
    %v3148 = vpow.pop %v3147
    %v3149 = vadd.f32 %v3148, 1.0
    %v3150 = vrcp.pop %v3149
    %v3151 = vmul.f32 %v3149, %v3150
    %v3152 = vsub.f32 1.0, %v3151
    %v3153 = vmul.f32 %v3150, %v3152
    %v3154 = vadd.f32 %v3150, %v3153
    %vm3155 = vweird.f32 %v3149
    %vm3156 = vweird.f32 %v3150
    %vm3157 = vmor %vm3155, %vm3156
    %v3158 = vsel %vm3157, %v3150, %v3154
    %v3159 = vand.u32 2147483647, %v3149
    %vm3160 = vcmp.eq.f32.partialorder %v3159, 8.507059e+37
    %v3161 = vand.u32 %v3149, 2147483648
    %v3162 = vor.u32 1.1754944e-38, %v3161
    %v3163 = vsel %vm3160, %v3162, %v3158
    %v3164 = vmul.f32 1.0, %v3163
    %v3165 = vadd.f32 %v3120, %v1860
    %v3167 = vrot.slane %v3165, 2
    %3168 = vrot.lane.b32.xlu0 %v3167, 64
    %v3169 = vpop.permute.xlu0 %3168
    %v3171 = vmul.f32 %v3164, %v3169
    %3173 = vrot.lane.b32.xlu0 %v3171, 64
    %v3174 = vpop.permute.xlu0 %3173
    %v3176 = vadd.f32 %v1737, %v3174
    %v3177 = vtanh.pop %v3176
    %v3179 = vrot.slane %v3177, 2
    %3180 = vrot.lane.b32.xlu0 %v3179, 64
    %v3181 = vpop.permute.xlu0 %3180
    %v3183 = vsub.f32 %v3087, %v3181
    %v3185 = vrot.slane %v3183, 6
    %3186 = vrot.lane.b32.xlu0 %v3185, 32
    %v3187 = vpop.permute.xlu0 %3186
    %v3189 = vmul.f32 %v3164, %v3187
    %3191 = vrot.lane.b32.xlu0 %v3189, 32
    %v3192 = vpop.permute.xlu0 %3191
    %v3194 = vadd.f32 %v3177, %v3192
    %v3195 = vmul.f32 %v329, %v3194
    %v3196 = vrot.slane %v3087, 6
    %v3198 = vmul.f32 %v335, %v3196
    %3200 = vrot.lane.b32.xlu0 %v3198, 64
    %v3201 = vpop.permute.xlu0 %3200
    %v3203 = vadd.f32 %v3195, %v3201
    %3205 = vrot.lane.b32.xlu0 %v3120, 32
    %v3206 = vpop.permute.xlu0 %3205
    %3207 = vrot.lane.b32.xlu0 %v3140, 32
    %v3208 = vpop.permute.xlu0 %3207
    %v3209 = vsel %vm274, %v3206, %v3208
    %v3211 = vadd.f32 %v1771, %v3209
    %v3212 = vxor.u32 %v3211, 2147483648
    %v3213 = vmul.f32 %v3212, 1.442695
    %v3214 = vpow.pop %v3213
    %v3215 = vadd.f32 %v3214, 1.0
    %v3216 = vrcp.pop %v3215
    %v3217 = vmul.f32 %v3215, %v3216
    %v3218 = vsub.f32 1.0, %v3217
    %v3219 = vmul.f32 %v3216, %v3218
    %v3220 = vadd.f32 %v3216, %v3219
    %vm3221 = vweird.f32 %v3215
    %vm3222 = vweird.f32 %v3216
    %vm3223 = vmor %vm3221, %vm3222
    %v3224 = vsel %vm3223, %v3216, %v3220
    %v3225 = vand.u32 2147483647, %v3215
    %vm3226 = vcmp.eq.f32.partialorder %v3225, 8.507059e+37
    %v3227 = vand.u32 %v3215, 2147483648
    %v3228 = vor.u32 1.1754944e-38, %v3227
    %v3229 = vsel %vm3226, %v3228, %v3224
    %v3230 = vmul.f32 1.0, %v3229
    %v3231 = vadd.f32 %v3140, %v1920
    %3233 = vrot.lane.b32.xlu0 %v3231, 96
    %v3234 = vpop.permute.xlu0 %3233
    %v3236 = vmul.f32 %v3230, %v3234
    %3238 = vrot.lane.b32.xlu0 %v3236, 64
    %v3239 = vpop.permute.xlu0 %3238
    %v3241 = vadd.f32 %v1771, %v3239
    %v3242 = vtanh.pop %v3241
    %v3244 = vrot.slane %v3242, 4
    %3245 = vrot.lane.b32.xlu0 %v3244, 96
    %v3246 = vpop.permute.xlu0 %3245
    %v3248 = vsub.f32 %v3087, %v3246
    %v3250 = vrot.slane %v3248, 4
    %v3252 = vmul.f32 %v3230, %v3250
    %3254 = vrot.lane.b32.xlu0 %v3252, 32
    %v3255 = vpop.permute.xlu0 %3254
    %v3257 = vadd.f32 %v3242, %v3255
    %v3258 = vmul.f32 %v256, %v3257
    %3259 = vrot.lane.b32.xlu0 %v3099, 96
    %v3260 = vpop.permute.xlu0 %3259
    %v3262 = vmul.f32 %v262, %v3260
    %3264 = vrot.lane.b32.xlu0 %v3262, 64
    %v3265 = vpop.permute.xlu0 %3264
    %v3267 = vadd.f32 %v3258, %v3265
    %3269 = vrot.lane.b32.xlu0 %v3203, 64
    %v3270 = vpop.permute.xlu0 %3269
    %v3273 = vrot.slane %v3267, 2
    %3274 = vrot.lane.b32.xlu0 %v3273, 96
    %v3275 = vpop.permute.xlu0 %3274
    %v3277 = vsel %vm274, %v3270, %v3275
    %3279 = vrot.lane.b32.xlu0 %v3195, 64
    %v3280 = vpop.permute.xlu0 %3279
    %3282 = vst.msk [vmem:[#allocation2 + $0x8] sm:$0xc0] %vm928, %v3280
    %3284 = vrot.lane.b32.xlu0 %v3258, 96
    %v3285 = vpop.permute.xlu0 %3284
    %3287 = vst.msk [vmem:[#allocation2] sm:$0x3] %vm934, %v3285
    %s3288 = scalar_lea.vmem [#allocation8], 4
    %3289 = vst.msk [vmem:[%s3288 - $0x6] sm:$0xc0] %vm928, %v3277
    %3291 = vrot.lane.b32.xlu0 %v3277, 96
    %v3292 = vpop.permute.xlu0 %3291
    %s3294 = scalar_lea.vmem [#allocation8], 6
    %3295 = vst.msk [vmem:[%s3294 - $0x6] sm:$0xc0] %vm928, %v3292
    %v3296 = vld [vmem:[#allocation2] sm:$0xff]
    %v3297 = vld [vmem:[#allocation2 + $0x8] sm:$0xff]
    %s3298 = scalar_lea.vmem [#allocation3], 256
    %v3299 = vld [vmem:[%s3298] sm:$0xff]
    %v3300 = vld [vmem:[%s3298 + $0x8] sm:$0xff]
    %v3301 = vld [vmem:[%s3298 + $0x10] sm:$0xff]
    %v3302 = vld [vmem:[%s3298 + $0x18] sm:$0xff]
    %v3303 = vld [vmem:[%s3298 + $0x20] sm:$0xff]
    %v3304 = vld [vmem:[%s3298 + $0x28] sm:$0xff]
    %v3305 = vld [vmem:[%s3298 + $0x30] sm:$0xff]
    %v3306 = vld [vmem:[%s3298 + $0x38] sm:$0xff]
    %s3307 = scalar_lea.vmem %s4, 4
    %v3308 = vld [vmem:[%s3307] sm:$0x1]
    %v3310 = vperm.slane %v3308, 0
    %v3313 = vsel %vm76, %v3296, 0
    %v3316 = vsel %vm76, %v3297, 0
    %3318 = vmatpush.msra.mxu0 0.0
    %3319 = vmatpush.msra.mxu0 0.0
    %3320 = vmatpush.msra.mxu0 0.0
    %3321 = vmatpush.msra.mxu0 0.0
    %3322 = vmatpush.msra.mxu0 0.0
    %3323 = vmatpush.msra.mxu0 0.0
    %3324 = vmatpush.msra.mxu0 0.0
    %3325 = vmatpush.msra.mxu0 0.0
    %3326 = vmatpush.msra.mxu0 %v3306
    %3327 = vmatpush.msra.mxu0 %v3305
    %3328 = vmatpush.msra.mxu0 %v3304
    %3329 = vmatpush.msra.mxu0 %v3303
    %3330 = vmatpush.msra.mxu0 %v3302
    %3331 = vmatpush.msra.mxu0 %v3301
    %3332 = vmatpush.msra.mxu0 %v3300
    %3333 = vmatpush.msra.mxu0 %v3299
    %3334 = vmatmul.f32.gmra.mxu0 %v3313
    %v3335 = vpop.f32.mrf.mxu0
    %v3336 = vadd.f32 %v3310, %v3335
    %3337 = vmatmul.f32.gmra.mxu0 %v3316
    %v3338 = vpop.f32.mrf.mxu0
    %v3339 = vadd.f32 %v3310, %v3338
    %3340 = vdwg.mxu0
    %s3341 = scalar_lea.vmem [#allocation3], 320
    %v3342 = vld [vmem:[%s3341] sm:$0xff]
    %v3343 = vld [vmem:[%s3341 + $0x8] sm:$0xff]
    %v3344 = vld [vmem:[%s3341 + $0x10] sm:$0xff]
    %v3345 = vld [vmem:[%s3341 + $0x18] sm:$0xff]
    %v3346 = vld [vmem:[%s3341 + $0x20] sm:$0xff]
    %v3347 = vld [vmem:[%s3341 + $0x28] sm:$0xff]
    %v3348 = vld [vmem:[%s3341 + $0x30] sm:$0xff]
    %v3349 = vld [vmem:[%s3341 + $0x38] sm:$0xff]
    %s3350 = scalar_lea.vmem %s4, 5
    %v3351 = vld [vmem:[%s3350] sm:$0x1]
    %v3353 = vperm.slane %v3351, 0
    %3355 = vmatpush.msra.mxu0 0.0
    %3356 = vmatpush.msra.mxu0 0.0
    %3357 = vmatpush.msra.mxu0 0.0
    %3358 = vmatpush.msra.mxu0 0.0
    %3359 = vmatpush.msra.mxu0 0.0
    %3360 = vmatpush.msra.mxu0 0.0
    %3361 = vmatpush.msra.mxu0 0.0
    %3362 = vmatpush.msra.mxu0 0.0
    %3363 = vmatpush.msra.mxu0 %v3349
    %3364 = vmatpush.msra.mxu0 %v3348
    %3365 = vmatpush.msra.mxu0 %v3347
    %3366 = vmatpush.msra.mxu0 %v3346
    %3367 = vmatpush.msra.mxu0 %v3345
    %3368 = vmatpush.msra.mxu0 %v3344
    %3369 = vmatpush.msra.mxu0 %v3343
    %3370 = vmatpush.msra.mxu0 %v3342
    %3371 = vmatmul.f32.gmra.mxu0 %v3313
    %v3372 = vpop.f32.mrf.mxu0
    %v3373 = vadd.f32 %v3353, %v3372
    %3374 = vmatmul.f32.gmra.mxu0 %v3316
    %v3375 = vpop.f32.mrf.mxu0
    %v3376 = vadd.f32 %v3353, %v3375
    %3377 = vdwg.mxu0
    %s3378 = scalar_lea.vmem %s5, 4
    %v3379 = vld [vmem:[%s3378] sm:$0x1]
    %s3380 = scalar_lea.vmem %s5, 5
    %v3381 = vld [vmem:[%s3380] sm:$0x1]
    %s3382 = scalar_lea.vmem [#allocation6], 256
    %v3383 = vld [vmem:[%s3382] sm:$0xff]
    %v3384 = vld [vmem:[%s3382 + $0x8] sm:$0xff]
    %v3385 = vld [vmem:[%s3382 + $0x10] sm:$0xff]
    %v3386 = vld [vmem:[%s3382 + $0x18] sm:$0xff]
    %v3387 = vld [vmem:[%s3382 + $0x20] sm:$0xff]
    %v3388 = vld [vmem:[%s3382 + $0x28] sm:$0xff]
    %v3389 = vld [vmem:[%s3382 + $0x30] sm:$0xff]
    %v3390 = vld [vmem:[%s3382 + $0x38] sm:$0xff]
    %v3391 = vld [vmem:[%s3382 + $0x40] sm:$0xff]
    %v3392 = vld [vmem:[%s3382 + $0x48] sm:$0xff]
    %v3393 = vld [vmem:[%s3382 + $0x50] sm:$0xff]
    %v3394 = vld [vmem:[%s3382 + $0x58] sm:$0xff]
    %v3395 = vld [vmem:[%s3382 + $0x60] sm:$0xff]
    %v3396 = vld [vmem:[%s3382 + $0x68] sm:$0xff]
    %v3397 = vld [vmem:[%s3382 + $0x70] sm:$0xff]
    %v3398 = vld [vmem:[%s3382 + $0x78] sm:$0xff]
    %3399 = vmatpush.msra.mxu0 0.0
    %3400 = vmatpush.msra.mxu0 0.0
    %3401 = vmatpush.msra.mxu0 0.0
    %3402 = vmatpush.msra.mxu0 0.0
    %3403 = vmatpush.msra.mxu0 0.0
    %3404 = vmatpush.msra.mxu0 0.0
    %3405 = vmatpush.msra.mxu0 0.0
    %3406 = vmatpush.msra.mxu0 0.0
    %3407 = vmatpush.msra.mxu0 %v3397
    %3408 = vmatpush.msra.mxu0 %v3395
    %3409 = vmatpush.msra.mxu0 %v3393
    %3410 = vmatpush.msra.mxu0 %v3391
    %3411 = vmatpush.msra.mxu0 %v3389
    %3412 = vmatpush.msra.mxu0 %v3387
    %3413 = vmatpush.msra.mxu0 %v3385
    %3414 = vmatpush.msra.mxu0 %v3383
    %3415 = vmatmul.f32.gmra.mxu0 %v163
    %v3416 = vpop.f32.mrf.mxu0
    %v3417 = vadd.f32 0.0, %v3416
    %3418 = vdwg.mxu0
    %3419 = vmatpush.msra.mxu0 0.0
    %3420 = vmatpush.msra.mxu0 0.0
    %3421 = vmatpush.msra.mxu0 0.0
    %3422 = vmatpush.msra.mxu0 0.0
    %3423 = vmatpush.msra.mxu0 0.0
    %3424 = vmatpush.msra.mxu0 0.0
    %3425 = vmatpush.msra.mxu0 0.0
    %3426 = vmatpush.msra.mxu0 0.0
    %3427 = vmatpush.msra.mxu0 %v3398
    %3428 = vmatpush.msra.mxu0 %v3396
    %3429 = vmatpush.msra.mxu0 %v3394
    %3430 = vmatpush.msra.mxu0 %v3392
    %3431 = vmatpush.msra.mxu0 %v3390
    %3432 = vmatpush.msra.mxu0 %v3388
    %3433 = vmatpush.msra.mxu0 %v3386
    %3434 = vmatpush.msra.mxu0 %v3384
    %3435 = vmatmul.f32.gmra.mxu0 %v163
    %v3436 = vpop.f32.mrf.mxu0
    %v3437 = vadd.f32 0.0, %v3436
    %3438 = vdwg.mxu0
    %v3439 = vadd.f32 %v3336, %v3417
    %v3440 = vxor.u32 %v3439, 2147483648
    %v3441 = vmul.f32 %v3440, 1.442695
    %v3442 = vpow.pop %v3441
    %v3443 = vadd.f32 %v3442, 1.0
    %v3444 = vrcp.pop %v3443
    %v3445 = vmul.f32 %v3443, %v3444
    %v3446 = vsub.f32 1.0, %v3445
    %v3447 = vmul.f32 %v3444, %v3446
    %v3448 = vadd.f32 %v3444, %v3447
    %vm3449 = vweird.f32 %v3443
    %vm3450 = vweird.f32 %v3444
    %vm3451 = vmor %vm3449, %vm3450
    %v3452 = vsel %vm3451, %v3444, %v3448
    %v3453 = vand.u32 2147483647, %v3443
    %vm3454 = vcmp.eq.f32.partialorder %v3453, 8.507059e+37
    %v3455 = vand.u32 %v3443, 2147483648
    %v3456 = vor.u32 1.1754944e-38, %v3455
    %v3457 = vsel %vm3454, %v3456, %v3452
    %v3458 = vmul.f32 1.0, %v3457
    %v3460 = vperm.slane %v3379, 0
    %3461 = vrot.lane.b32.xlu0 %v3460, 64
    %v3462 = vpop.permute.xlu0 %3461
    %v3464 = vadd.f32 %v3417, %v3462
    %3466 = vrot.lane.b32.xlu0 %v3464, 64
    %v3467 = vpop.permute.xlu0 %3466
    %v3469 = vmul.f32 %v3458, %v3467
    %3471 = vrot.lane.b32.xlu0 %v3469, 64
    %v3472 = vpop.permute.xlu0 %3471
    %v3474 = vadd.f32 %v3336, %v3472
    %v3475 = vtanh.pop %v3474
    %v3476 = vsub.f32 0.0, %v3475
    %3478 = vrot.lane.b32.xlu0 %v3476, 96
    %v3479 = vpop.permute.xlu0 %3478
    %v3481 = vmul.f32 %v3458, %v3479
    %3483 = vrot.lane.b32.xlu0 %v3481, 32
    %v3484 = vpop.permute.xlu0 %3483
    %v3486 = vadd.f32 %v3475, %v3484
    %v3487 = vmul.f32 %v256, %v3486
    %v3488 = vadd.f32 %v3487, %v264
    %v3491 = vrot.slane %v3417, 2
    %v3492 = vrot.slane %v3437, 2
    %3493 = vrot.lane.b32.xlu0 %v3491, 32
    %v3494 = vpop.permute.xlu0 %3493
    %3495 = vrot.lane.b32.xlu0 %v3492, 32
    %v3496 = vpop.permute.xlu0 %3495
    %v3497 = vsel %vm274, %v3494, %v3496
    %v3499 = vadd.f32 %v3376, %v3497
    %v3500 = vxor.u32 %v3499, 2147483648
    %v3501 = vmul.f32 %v3500, 1.442695
    %v3502 = vpow.pop %v3501
    %v3503 = vadd.f32 %v3502, 1.0
    %v3504 = vrcp.pop %v3503
    %v3505 = vmul.f32 %v3503, %v3504
    %v3506 = vsub.f32 1.0, %v3505
    %v3507 = vmul.f32 %v3504, %v3506
    %v3508 = vadd.f32 %v3504, %v3507
    %vm3509 = vweird.f32 %v3503
    %vm3510 = vweird.f32 %v3504
    %vm3511 = vmor %vm3509, %vm3510
    %v3512 = vsel %vm3511, %v3504, %v3508
    %v3513 = vand.u32 2147483647, %v3503
    %vm3514 = vcmp.eq.f32.partialorder %v3513, 8.507059e+37
    %v3515 = vand.u32 %v3503, 2147483648
    %v3516 = vor.u32 1.1754944e-38, %v3515
    %v3517 = vsel %vm3514, %v3516, %v3512
    %v3518 = vmul.f32 1.0, %v3517
    %v3520 = vperm.slane %v3381, 0
    %3521 = vrot.lane.b32.xlu0 %v3520, 32
    %v3522 = vpop.permute.xlu0 %3521
    %v3524 = vadd.f32 %v3437, %v3522
    %v3526 = vrot.slane %v3524, 2
    %3527 = vrot.lane.b32.xlu0 %v3526, 96
    %v3528 = vpop.permute.xlu0 %3527
    %v3530 = vmul.f32 %v3518, %v3528
    %3532 = vrot.lane.b32.xlu0 %v3530, 64
    %v3533 = vpop.permute.xlu0 %3532
    %v3535 = vadd.f32 %v3376, %v3533
    %v3536 = vtanh.pop %v3535
    %v3537 = vsub.f32 0.0, %v3536
    %3539 = vrot.lane.b32.xlu0 %v3537, 96
    %v3540 = vpop.permute.xlu0 %3539
    %v3542 = vmul.f32 %v3518, %v3540
    %3544 = vrot.lane.b32.xlu0 %v3542, 32
    %v3545 = vpop.permute.xlu0 %3544
    %v3547 = vadd.f32 %v3536, %v3545
    %v3548 = vmul.f32 %v329, %v3547
    %v3549 = vadd.f32 %v3548, %v337
    %3551 = vrot.lane.b32.xlu0 %v3488, 64
    %v3552 = vpop.permute.xlu0 %3551
    %v3555 = vrot.slane %v3549, 6
    %3556 = vrot.lane.b32.xlu0 %v3555, 96
    %v3557 = vpop.permute.xlu0 %3556
    %v3559 = vsel %vm274, %v3552, %v3557
    %3561 = vrot.lane.b32.xlu0 %v3487, 64
    %v3562 = vpop.permute.xlu0 %3561
    %3564 = vst.msk [vmem:[#allocation2] sm:$0x3] %vm353, %v3562
    %3566 = vrot.lane.b32.xlu0 %v3548, 96
    %v3567 = vpop.permute.xlu0 %3566
    %3569 = vst.msk [vmem:[#allocation2 + $0x8] sm:$0xc0] %vm359, %v3567
    %v3571 = vsel %vm76, %v3559, 0
    %3573 = vmatpush.msra.mxu0 0.0
    %3574 = vmatpush.msra.mxu0 0.0
    %3575 = vmatpush.msra.mxu0 0.0
    %3576 = vmatpush.msra.mxu0 0.0
    %3577 = vmatpush.msra.mxu0 0.0
    %3578 = vmatpush.msra.mxu0 0.0
    %3579 = vmatpush.msra.mxu0 0.0
    %3580 = vmatpush.msra.mxu0 0.0
    %3581 = vmatpush.msra.mxu0 %v3397
    %3582 = vmatpush.msra.mxu0 %v3395
    %3583 = vmatpush.msra.mxu0 %v3393
    %3584 = vmatpush.msra.mxu0 %v3391
    %3585 = vmatpush.msra.mxu0 %v3389
    %3586 = vmatpush.msra.mxu0 %v3387
    %3587 = vmatpush.msra.mxu0 %v3385
    %3588 = vmatpush.msra.mxu0 %v3383
    %3589 = vmatmul.f32.gmra.mxu0 %v3571
    %v3590 = vpop.f32.mrf.mxu0
    %v3591 = vadd.f32 0.0, %v3590
    %3592 = vdwg.mxu0
    %3593 = vmatpush.msra.mxu0 0.0
    %3594 = vmatpush.msra.mxu0 0.0
    %3595 = vmatpush.msra.mxu0 0.0
    %3596 = vmatpush.msra.mxu0 0.0
    %3597 = vmatpush.msra.mxu0 0.0
    %3598 = vmatpush.msra.mxu0 0.0
    %3599 = vmatpush.msra.mxu0 0.0
    %3600 = vmatpush.msra.mxu0 0.0
    %3601 = vmatpush.msra.mxu0 %v3398
    %3602 = vmatpush.msra.mxu0 %v3396
    %3603 = vmatpush.msra.mxu0 %v3394
    %3604 = vmatpush.msra.mxu0 %v3392
    %3605 = vmatpush.msra.mxu0 %v3390
    %3606 = vmatpush.msra.mxu0 %v3388
    %3607 = vmatpush.msra.mxu0 %v3386
    %3608 = vmatpush.msra.mxu0 %v3384
    %3609 = vmatmul.f32.gmra.mxu0 %v3571
    %v3610 = vpop.f32.mrf.mxu0
    %v3611 = vadd.f32 0.0, %v3610
    %3612 = vdwg.mxu0
    %v3614 = vrot.slane %v3591, 6
    %v3616 = vadd.f32 %v3336, %v3614
    %v3617 = vxor.u32 %v3616, 2147483648
    %v3618 = vmul.f32 %v3617, 1.442695
    %v3619 = vpow.pop %v3618
    %v3620 = vadd.f32 %v3619, 1.0
    %v3621 = vrcp.pop %v3620
    %v3622 = vmul.f32 %v3620, %v3621
    %v3623 = vsub.f32 1.0, %v3622
    %v3624 = vmul.f32 %v3621, %v3623
    %v3625 = vadd.f32 %v3621, %v3624
    %vm3626 = vweird.f32 %v3620
    %vm3627 = vweird.f32 %v3621
    %vm3628 = vmor %vm3626, %vm3627
    %v3629 = vsel %vm3628, %v3621, %v3625
    %v3630 = vand.u32 2147483647, %v3620
    %vm3631 = vcmp.eq.f32.partialorder %v3630, 8.507059e+37
    %v3632 = vand.u32 %v3620, 2147483648
    %v3633 = vor.u32 1.1754944e-38, %v3632
    %v3634 = vsel %vm3631, %v3633, %v3629
    %v3635 = vmul.f32 1.0, %v3634
    %v3636 = vadd.f32 %v3591, %v3462
    %v3638 = vrot.slane %v3636, 6
    %3639 = vrot.lane.b32.xlu0 %v3638, 64
    %v3640 = vpop.permute.xlu0 %3639
    %v3642 = vmul.f32 %v3635, %v3640
    %3644 = vrot.lane.b32.xlu0 %v3642, 64
    %v3645 = vpop.permute.xlu0 %3644
    %v3647 = vadd.f32 %v3336, %v3645
    %v3648 = vtanh.pop %v3647
    %v3650 = vrot.slane %v3648, 2
    %3651 = vrot.lane.b32.xlu0 %v3650, 64
    %v3652 = vpop.permute.xlu0 %3651
    %v3654 = vsub.f32 %v3559, %v3652
    %v3656 = vrot.slane %v3654, 6
    %3657 = vrot.lane.b32.xlu0 %v3656, 32
    %v3658 = vpop.permute.xlu0 %3657
    %v3660 = vmul.f32 %v3635, %v3658
    %3662 = vrot.lane.b32.xlu0 %v3660, 32
    %v3663 = vpop.permute.xlu0 %3662
    %v3665 = vadd.f32 %v3648, %v3663
    %v3666 = vmul.f32 %v256, %v3665
    %v3667 = vrot.slane %v3559, 6
    %v3669 = vmul.f32 %v262, %v3667
    %3671 = vrot.lane.b32.xlu0 %v3669, 64
    %v3672 = vpop.permute.xlu0 %3671
    %v3674 = vadd.f32 %v3666, %v3672
    %v3676 = vrot.slane %v3591, 4
    %v3677 = vrot.slane %v3611, 4
    %3678 = vrot.lane.b32.xlu0 %v3676, 32
    %v3679 = vpop.permute.xlu0 %3678
    %3680 = vrot.lane.b32.xlu0 %v3677, 32
    %v3681 = vpop.permute.xlu0 %3680
    %v3682 = vsel %vm274, %v3679, %v3681
    %v3684 = vadd.f32 %v3376, %v3682
    %v3685 = vxor.u32 %v3684, 2147483648
    %v3686 = vmul.f32 %v3685, 1.442695
    %v3687 = vpow.pop %v3686
    %v3688 = vadd.f32 %v3687, 1.0
    %v3689 = vrcp.pop %v3688
    %v3690 = vmul.f32 %v3688, %v3689
    %v3691 = vsub.f32 1.0, %v3690
    %v3692 = vmul.f32 %v3689, %v3691
    %v3693 = vadd.f32 %v3689, %v3692
    %vm3694 = vweird.f32 %v3688
    %vm3695 = vweird.f32 %v3689
    %vm3696 = vmor %vm3694, %vm3695
    %v3697 = vsel %vm3696, %v3689, %v3693
    %v3698 = vand.u32 2147483647, %v3688
    %vm3699 = vcmp.eq.f32.partialorder %v3698, 8.507059e+37
    %v3700 = vand.u32 %v3688, 2147483648
    %v3701 = vor.u32 1.1754944e-38, %v3700
    %v3702 = vsel %vm3699, %v3701, %v3697
    %v3703 = vmul.f32 1.0, %v3702
    %v3704 = vadd.f32 %v3611, %v3522
    %v3706 = vrot.slane %v3704, 4
    %3707 = vrot.lane.b32.xlu0 %v3706, 96
    %v3708 = vpop.permute.xlu0 %3707
    %v3710 = vmul.f32 %v3703, %v3708
    %3712 = vrot.lane.b32.xlu0 %v3710, 64
    %v3713 = vpop.permute.xlu0 %3712
    %v3715 = vadd.f32 %v3376, %v3713
    %v3716 = vtanh.pop %v3715
    %v3718 = vrot.slane %v3716, 4
    %3719 = vrot.lane.b32.xlu0 %v3718, 96
    %v3720 = vpop.permute.xlu0 %3719
    %v3722 = vsub.f32 %v3559, %v3720
    %v3724 = vrot.slane %v3722, 4
    %v3726 = vmul.f32 %v3703, %v3724
    %3728 = vrot.lane.b32.xlu0 %v3726, 32
    %v3729 = vpop.permute.xlu0 %3728
    %v3731 = vadd.f32 %v3716, %v3729
    %v3732 = vmul.f32 %v329, %v3731
    %v3733 = vrot.slane %v3559, 4
    %3734 = vrot.lane.b32.xlu0 %v3733, 96
    %v3735 = vpop.permute.xlu0 %3734
    %v3737 = vmul.f32 %v335, %v3735
    %3739 = vrot.lane.b32.xlu0 %v3737, 64
    %v3740 = vpop.permute.xlu0 %3739
    %v3742 = vadd.f32 %v3732, %v3740
    %3744 = vrot.lane.b32.xlu0 %v3674, 64
    %v3745 = vpop.permute.xlu0 %3744
    %v3748 = vrot.slane %v3742, 2
    %3749 = vrot.lane.b32.xlu0 %v3748, 96
    %v3750 = vpop.permute.xlu0 %3749
    %v3752 = vsel %vm274, %v3745, %v3750
    %3754 = vrot.lane.b32.xlu0 %v3666, 64
    %v3755 = vpop.permute.xlu0 %3754
    %3757 = vst.msk [vmem:[#allocation2] sm:$0xc] %vm548, %v3755
    %3759 = vrot.lane.b32.xlu0 %v3732, 96
    %v3760 = vpop.permute.xlu0 %3759
    %3762 = vst.msk [vmem:[#allocation2 + $0x8] sm:$0x30] %vm554, %v3760
    %v3764 = vrot.slane %v3752, 2
    %v3765 = vsel %vm76, %v3764, 0
    %3767 = vmatpush.msra.mxu0 0.0
    %3768 = vmatpush.msra.mxu0 0.0
    %3769 = vmatpush.msra.mxu0 0.0
    %3770 = vmatpush.msra.mxu0 0.0
    %3771 = vmatpush.msra.mxu0 0.0
    %3772 = vmatpush.msra.mxu0 0.0
    %3773 = vmatpush.msra.mxu0 0.0
    %3774 = vmatpush.msra.mxu0 0.0
    %3775 = vmatpush.msra.mxu0 %v3397
    %3776 = vmatpush.msra.mxu0 %v3395
    %3777 = vmatpush.msra.mxu0 %v3393
    %3778 = vmatpush.msra.mxu0 %v3391
    %3779 = vmatpush.msra.mxu0 %v3389
    %3780 = vmatpush.msra.mxu0 %v3387
    %3781 = vmatpush.msra.mxu0 %v3385
    %3782 = vmatpush.msra.mxu0 %v3383
    %3783 = vmatmul.f32.gmra.mxu0 %v3765
    %v3784 = vpop.f32.mrf.mxu0
    %v3785 = vadd.f32 0.0, %v3784
    %3786 = vdwg.mxu0
    %3787 = vmatpush.msra.mxu0 0.0
    %3788 = vmatpush.msra.mxu0 0.0
    %3789 = vmatpush.msra.mxu0 0.0
    %3790 = vmatpush.msra.mxu0 0.0
    %3791 = vmatpush.msra.mxu0 0.0
    %3792 = vmatpush.msra.mxu0 0.0
    %3793 = vmatpush.msra.mxu0 0.0
    %3794 = vmatpush.msra.mxu0 0.0
    %3795 = vmatpush.msra.mxu0 %v3398
    %3796 = vmatpush.msra.mxu0 %v3396
    %3797 = vmatpush.msra.mxu0 %v3394
    %3798 = vmatpush.msra.mxu0 %v3392
    %3799 = vmatpush.msra.mxu0 %v3390
    %3800 = vmatpush.msra.mxu0 %v3388
    %3801 = vmatpush.msra.mxu0 %v3386
    %3802 = vmatpush.msra.mxu0 %v3384
    %3803 = vmatmul.f32.gmra.mxu0 %v3765
    %v3804 = vpop.f32.mrf.mxu0
    %v3805 = vadd.f32 0.0, %v3804
    %3806 = vdwg.mxu0
    %v3808 = vrot.slane %v3785, 4
    %v3810 = vadd.f32 %v3336, %v3808
    %v3811 = vxor.u32 %v3810, 2147483648
    %v3812 = vmul.f32 %v3811, 1.442695
    %v3813 = vpow.pop %v3812
    %v3814 = vadd.f32 %v3813, 1.0
    %v3815 = vrcp.pop %v3814
    %v3816 = vmul.f32 %v3814, %v3815
    %v3817 = vsub.f32 1.0, %v3816
    %v3818 = vmul.f32 %v3815, %v3817
    %v3819 = vadd.f32 %v3815, %v3818
    %vm3820 = vweird.f32 %v3814
    %vm3821 = vweird.f32 %v3815
    %vm3822 = vmor %vm3820, %vm3821
    %v3823 = vsel %vm3822, %v3815, %v3819
    %v3824 = vand.u32 2147483647, %v3814
    %vm3825 = vcmp.eq.f32.partialorder %v3824, 8.507059e+37
    %v3826 = vand.u32 %v3814, 2147483648
    %v3827 = vor.u32 1.1754944e-38, %v3826
    %v3828 = vsel %vm3825, %v3827, %v3823
    %v3829 = vmul.f32 1.0, %v3828
    %v3830 = vadd.f32 %v3785, %v3462
    %v3832 = vrot.slane %v3830, 4
    %3833 = vrot.lane.b32.xlu0 %v3832, 64
    %v3834 = vpop.permute.xlu0 %3833
    %v3836 = vmul.f32 %v3829, %v3834
    %3838 = vrot.lane.b32.xlu0 %v3836, 64
    %v3839 = vpop.permute.xlu0 %3838
    %v3841 = vadd.f32 %v3336, %v3839
    %v3842 = vtanh.pop %v3841
    %v3844 = vrot.slane %v3842, 2
    %3845 = vrot.lane.b32.xlu0 %v3844, 64
    %v3846 = vpop.permute.xlu0 %3845
    %v3848 = vsub.f32 %v3752, %v3846
    %v3850 = vrot.slane %v3848, 6
    %3851 = vrot.lane.b32.xlu0 %v3850, 32
    %v3852 = vpop.permute.xlu0 %3851
    %v3854 = vmul.f32 %v3829, %v3852
    %3856 = vrot.lane.b32.xlu0 %v3854, 32
    %v3857 = vpop.permute.xlu0 %3856
    %v3859 = vadd.f32 %v3842, %v3857
    %v3860 = vmul.f32 %v256, %v3859
    %v3861 = vrot.slane %v3752, 6
    %v3863 = vmul.f32 %v262, %v3861
    %3865 = vrot.lane.b32.xlu0 %v3863, 64
    %v3866 = vpop.permute.xlu0 %3865
    %v3868 = vadd.f32 %v3860, %v3866
    %v3870 = vrot.slane %v3785, 6
    %v3871 = vrot.slane %v3805, 6
    %3872 = vrot.lane.b32.xlu0 %v3870, 32
    %v3873 = vpop.permute.xlu0 %3872
    %3874 = vrot.lane.b32.xlu0 %v3871, 32
    %v3875 = vpop.permute.xlu0 %3874
    %v3876 = vsel %vm274, %v3873, %v3875
    %v3878 = vadd.f32 %v3376, %v3876
    %v3879 = vxor.u32 %v3878, 2147483648
    %v3880 = vmul.f32 %v3879, 1.442695
    %v3881 = vpow.pop %v3880
    %v3882 = vadd.f32 %v3881, 1.0
    %v3883 = vrcp.pop %v3882
    %v3884 = vmul.f32 %v3882, %v3883
    %v3885 = vsub.f32 1.0, %v3884
    %v3886 = vmul.f32 %v3883, %v3885
    %v3887 = vadd.f32 %v3883, %v3886
    %vm3888 = vweird.f32 %v3882
    %vm3889 = vweird.f32 %v3883
    %vm3890 = vmor %vm3888, %vm3889
    %v3891 = vsel %vm3890, %v3883, %v3887
    %v3892 = vand.u32 2147483647, %v3882
    %vm3893 = vcmp.eq.f32.partialorder %v3892, 8.507059e+37
    %v3894 = vand.u32 %v3882, 2147483648
    %v3895 = vor.u32 1.1754944e-38, %v3894
    %v3896 = vsel %vm3893, %v3895, %v3891
    %v3897 = vmul.f32 1.0, %v3896
    %v3898 = vadd.f32 %v3805, %v3522
    %v3900 = vrot.slane %v3898, 6
    %3901 = vrot.lane.b32.xlu0 %v3900, 96
    %v3902 = vpop.permute.xlu0 %3901
    %v3904 = vmul.f32 %v3897, %v3902
    %3906 = vrot.lane.b32.xlu0 %v3904, 64
    %v3907 = vpop.permute.xlu0 %3906
    %v3909 = vadd.f32 %v3376, %v3907
    %v3910 = vtanh.pop %v3909
    %3912 = vrot.lane.b32.xlu0 %v3910, 96
    %v3913 = vpop.permute.xlu0 %3912
    %v3915 = vsub.f32 %v3752, %v3913
    %v3916 = vmul.f32 %v3897, %v3915
    %3918 = vrot.lane.b32.xlu0 %v3916, 32
    %v3919 = vpop.permute.xlu0 %3918
    %v3921 = vadd.f32 %v3910, %v3919
    %v3922 = vmul.f32 %v329, %v3921
    %v3923 = vmul.f32 %v335, %v3752
    %3925 = vrot.lane.b32.xlu0 %v3923, 32
    %v3926 = vpop.permute.xlu0 %3925
    %v3928 = vadd.f32 %v3922, %v3926
    %3930 = vrot.lane.b32.xlu0 %v3868, 64
    %v3931 = vpop.permute.xlu0 %3930
    %v3934 = vrot.slane %v3928, 6
    %3935 = vrot.lane.b32.xlu0 %v3934, 96
    %v3936 = vpop.permute.xlu0 %3935
    %v3938 = vsel %vm274, %v3931, %v3936
    %3940 = vrot.lane.b32.xlu0 %v3860, 64
    %v3941 = vpop.permute.xlu0 %3940
    %3943 = vst.msk [vmem:[#allocation2] sm:$0x30] %vm736, %v3941
    %3945 = vrot.lane.b32.xlu0 %v3922, 96
    %v3946 = vpop.permute.xlu0 %3945
    %3948 = vst.msk [vmem:[#allocation2 + $0x8] sm:$0xc] %vm742, %v3946
    %v3950 = vrot.slane %v3938, 4
    %v3951 = vsel %vm76, %v3950, 0
    %3953 = vmatpush.msra.mxu0 0.0
    %3954 = vmatpush.msra.mxu0 0.0
    %3955 = vmatpush.msra.mxu0 0.0
    %3956 = vmatpush.msra.mxu0 0.0
    %3957 = vmatpush.msra.mxu0 0.0
    %3958 = vmatpush.msra.mxu0 0.0
    %3959 = vmatpush.msra.mxu0 0.0
    %3960 = vmatpush.msra.mxu0 0.0
    %3961 = vmatpush.msra.mxu0 %v3397
    %3962 = vmatpush.msra.mxu0 %v3395
    %3963 = vmatpush.msra.mxu0 %v3393
    %3964 = vmatpush.msra.mxu0 %v3391
    %3965 = vmatpush.msra.mxu0 %v3389
    %3966 = vmatpush.msra.mxu0 %v3387
    %3967 = vmatpush.msra.mxu0 %v3385
    %3968 = vmatpush.msra.mxu0 %v3383
    %3969 = vmatmul.f32.gmra.mxu0 %v3951
    %v3970 = vpop.f32.mrf.mxu0
    %v3971 = vadd.f32 0.0, %v3970
    %3972 = vdwg.mxu0
    %3973 = vmatpush.msra.mxu0 0.0
    %3974 = vmatpush.msra.mxu0 0.0
    %3975 = vmatpush.msra.mxu0 0.0
    %3976 = vmatpush.msra.mxu0 0.0
    %3977 = vmatpush.msra.mxu0 0.0
    %3978 = vmatpush.msra.mxu0 0.0
    %3979 = vmatpush.msra.mxu0 0.0
    %3980 = vmatpush.msra.mxu0 0.0
    %3981 = vmatpush.msra.mxu0 %v3398
    %3982 = vmatpush.msra.mxu0 %v3396
    %3983 = vmatpush.msra.mxu0 %v3394
    %3984 = vmatpush.msra.mxu0 %v3392
    %3985 = vmatpush.msra.mxu0 %v3390
    %3986 = vmatpush.msra.mxu0 %v3388
    %3987 = vmatpush.msra.mxu0 %v3386
    %3988 = vmatpush.msra.mxu0 %v3384
    %3989 = vmatmul.f32.gmra.mxu0 %v3951
    %v3990 = vpop.f32.mrf.mxu0
    %v3991 = vadd.f32 0.0, %v3990
    %3992 = vdwg.mxu0
    %v3994 = vrot.slane %v3971, 2
    %v3996 = vadd.f32 %v3336, %v3994
    %v3997 = vxor.u32 %v3996, 2147483648
    %v3998 = vmul.f32 %v3997, 1.442695
    %v3999 = vpow.pop %v3998
    %v4000 = vadd.f32 %v3999, 1.0
    %v4001 = vrcp.pop %v4000
    %v4002 = vmul.f32 %v4000, %v4001
    %v4003 = vsub.f32 1.0, %v4002
    %v4004 = vmul.f32 %v4001, %v4003
    %v4005 = vadd.f32 %v4001, %v4004
    %vm4006 = vweird.f32 %v4000
    %vm4007 = vweird.f32 %v4001
    %vm4008 = vmor %vm4006, %vm4007
    %v4009 = vsel %vm4008, %v4001, %v4005
    %v4010 = vand.u32 2147483647, %v4000
    %vm4011 = vcmp.eq.f32.partialorder %v4010, 8.507059e+37
    %v4012 = vand.u32 %v4000, 2147483648
    %v4013 = vor.u32 1.1754944e-38, %v4012
    %v4014 = vsel %vm4011, %v4013, %v4009
    %v4015 = vmul.f32 1.0, %v4014
    %v4016 = vadd.f32 %v3971, %v3462
    %v4018 = vrot.slane %v4016, 2
    %4019 = vrot.lane.b32.xlu0 %v4018, 64
    %v4020 = vpop.permute.xlu0 %4019
    %v4022 = vmul.f32 %v4015, %v4020
    %4024 = vrot.lane.b32.xlu0 %v4022, 64
    %v4025 = vpop.permute.xlu0 %4024
    %v4027 = vadd.f32 %v3336, %v4025
    %v4028 = vtanh.pop %v4027
    %v4030 = vrot.slane %v4028, 2
    %4031 = vrot.lane.b32.xlu0 %v4030, 64
    %v4032 = vpop.permute.xlu0 %4031
    %v4034 = vsub.f32 %v3938, %v4032
    %v4036 = vrot.slane %v4034, 6
    %4037 = vrot.lane.b32.xlu0 %v4036, 32
    %v4038 = vpop.permute.xlu0 %4037
    %v4040 = vmul.f32 %v4015, %v4038
    %4042 = vrot.lane.b32.xlu0 %v4040, 32
    %v4043 = vpop.permute.xlu0 %4042
    %v4045 = vadd.f32 %v4028, %v4043
    %v4046 = vmul.f32 %v256, %v4045
    %v4047 = vrot.slane %v3938, 6
    %v4049 = vmul.f32 %v262, %v4047
    %4051 = vrot.lane.b32.xlu0 %v4049, 64
    %v4052 = vpop.permute.xlu0 %4051
    %v4054 = vadd.f32 %v4046, %v4052
    %4056 = vrot.lane.b32.xlu0 %v3971, 32
    %v4057 = vpop.permute.xlu0 %4056
    %4058 = vrot.lane.b32.xlu0 %v3991, 32
    %v4059 = vpop.permute.xlu0 %4058
    %v4060 = vsel %vm274, %v4057, %v4059
    %v4062 = vadd.f32 %v3376, %v4060
    %v4063 = vxor.u32 %v4062, 2147483648
    %v4064 = vmul.f32 %v4063, 1.442695
    %v4065 = vpow.pop %v4064
    %v4066 = vadd.f32 %v4065, 1.0
    %v4067 = vrcp.pop %v4066
    %v4068 = vmul.f32 %v4066, %v4067
    %v4069 = vsub.f32 1.0, %v4068
    %v4070 = vmul.f32 %v4067, %v4069
    %v4071 = vadd.f32 %v4067, %v4070
    %vm4072 = vweird.f32 %v4066
    %vm4073 = vweird.f32 %v4067
    %vm4074 = vmor %vm4072, %vm4073
    %v4075 = vsel %vm4074, %v4067, %v4071
    %v4076 = vand.u32 2147483647, %v4066
    %vm4077 = vcmp.eq.f32.partialorder %v4076, 8.507059e+37
    %v4078 = vand.u32 %v4066, 2147483648
    %v4079 = vor.u32 1.1754944e-38, %v4078
    %v4080 = vsel %vm4077, %v4079, %v4075
    %v4081 = vmul.f32 1.0, %v4080
    %v4082 = vadd.f32 %v3991, %v3522
    %4084 = vrot.lane.b32.xlu0 %v4082, 96
    %v4085 = vpop.permute.xlu0 %4084
    %v4087 = vmul.f32 %v4081, %v4085
    %4089 = vrot.lane.b32.xlu0 %v4087, 64
    %v4090 = vpop.permute.xlu0 %4089
    %v4092 = vadd.f32 %v3376, %v4090
    %v4093 = vtanh.pop %v4092
    %v4095 = vrot.slane %v4093, 4
    %4096 = vrot.lane.b32.xlu0 %v4095, 96
    %v4097 = vpop.permute.xlu0 %4096
    %v4099 = vsub.f32 %v3938, %v4097
    %v4101 = vrot.slane %v4099, 4
    %v4103 = vmul.f32 %v4081, %v4101
    %4105 = vrot.lane.b32.xlu0 %v4103, 32
    %v4106 = vpop.permute.xlu0 %4105
    %v4108 = vadd.f32 %v4093, %v4106
    %v4109 = vmul.f32 %v329, %v4108
    %4110 = vrot.lane.b32.xlu0 %v3950, 96
    %v4111 = vpop.permute.xlu0 %4110
    %v4113 = vmul.f32 %v335, %v4111
    %4115 = vrot.lane.b32.xlu0 %v4113, 64
    %v4116 = vpop.permute.xlu0 %4115
    %v4118 = vadd.f32 %v4109, %v4116
    %4120 = vrot.lane.b32.xlu0 %v4054, 64
    %v4121 = vpop.permute.xlu0 %4120
    %v4124 = vrot.slane %v4118, 2
    %4125 = vrot.lane.b32.xlu0 %v4124, 96
    %v4126 = vpop.permute.xlu0 %4125
    %v4128 = vsel %vm274, %v4121, %v4126
    %4130 = vrot.lane.b32.xlu0 %v4046, 64
    %v4131 = vpop.permute.xlu0 %4130
    %4133 = vst.msk [vmem:[#allocation2] sm:$0xc0] %vm928, %v4131
    %4135 = vrot.lane.b32.xlu0 %v4109, 96
    %v4136 = vpop.permute.xlu0 %4135
    %4138 = vst.msk [vmem:[#allocation2 + $0x8] sm:$0x3] %vm934, %v4136
    %v4140 = vrot.slane %v4128, 6
    %v4141 = vsel %vm76, %v4140, 0
    %4143 = vmatpush.msra.mxu0 0.0
    %4144 = vmatpush.msra.mxu0 0.0
    %4145 = vmatpush.msra.mxu0 0.0
    %4146 = vmatpush.msra.mxu0 0.0
    %4147 = vmatpush.msra.mxu0 0.0
    %4148 = vmatpush.msra.mxu0 0.0
    %4149 = vmatpush.msra.mxu0 0.0
    %4150 = vmatpush.msra.mxu0 0.0
    %4151 = vmatpush.msra.mxu0 %v3397
    %4152 = vmatpush.msra.mxu0 %v3395
    %4153 = vmatpush.msra.mxu0 %v3393
    %4154 = vmatpush.msra.mxu0 %v3391
    %4155 = vmatpush.msra.mxu0 %v3389
    %4156 = vmatpush.msra.mxu0 %v3387
    %4157 = vmatpush.msra.mxu0 %v3385
    %4158 = vmatpush.msra.mxu0 %v3383
    %4159 = vmatmul.f32.gmra.mxu0 %v4141
    %v4160 = vpop.f32.mrf.mxu0
    %v4161 = vadd.f32 0.0, %v4160
    %4162 = vdwg.mxu0
    %4163 = vmatpush.msra.mxu0 0.0
    %4164 = vmatpush.msra.mxu0 0.0
    %4165 = vmatpush.msra.mxu0 0.0
    %4166 = vmatpush.msra.mxu0 0.0
    %4167 = vmatpush.msra.mxu0 0.0
    %4168 = vmatpush.msra.mxu0 0.0
    %4169 = vmatpush.msra.mxu0 0.0
    %4170 = vmatpush.msra.mxu0 0.0
    %4171 = vmatpush.msra.mxu0 %v3398
    %4172 = vmatpush.msra.mxu0 %v3396
    %4173 = vmatpush.msra.mxu0 %v3394
    %4174 = vmatpush.msra.mxu0 %v3392
    %4175 = vmatpush.msra.mxu0 %v3390
    %4176 = vmatpush.msra.mxu0 %v3388
    %4177 = vmatpush.msra.mxu0 %v3386
    %4178 = vmatpush.msra.mxu0 %v3384
    %4179 = vmatmul.f32.gmra.mxu0 %v4141
    %v4180 = vpop.f32.mrf.mxu0
    %v4181 = vadd.f32 0.0, %v4180
    %4182 = vdwg.mxu0
    %v4183 = vadd.f32 %v3339, %v4161
    %v4184 = vxor.u32 %v4183, 2147483648
    %v4185 = vmul.f32 %v4184, 1.442695
    %v4186 = vpow.pop %v4185
    %v4187 = vadd.f32 %v4186, 1.0
    %v4188 = vrcp.pop %v4187
    %v4189 = vmul.f32 %v4187, %v4188
    %v4190 = vsub.f32 1.0, %v4189
    %v4191 = vmul.f32 %v4188, %v4190
    %v4192 = vadd.f32 %v4188, %v4191
    %vm4193 = vweird.f32 %v4187
    %vm4194 = vweird.f32 %v4188
    %vm4195 = vmor %vm4193, %vm4194
    %v4196 = vsel %vm4195, %v4188, %v4192
    %v4197 = vand.u32 2147483647, %v4187
    %vm4198 = vcmp.eq.f32.partialorder %v4197, 8.507059e+37
    %v4199 = vand.u32 %v4187, 2147483648
    %v4200 = vor.u32 1.1754944e-38, %v4199
    %v4201 = vsel %vm4198, %v4200, %v4196
    %v4202 = vmul.f32 1.0, %v4201
    %v4203 = vadd.f32 %v4161, %v3462
    %4205 = vrot.lane.b32.xlu0 %v4203, 64
    %v4206 = vpop.permute.xlu0 %4205
    %v4208 = vmul.f32 %v4202, %v4206
    %4210 = vrot.lane.b32.xlu0 %v4208, 64
    %v4211 = vpop.permute.xlu0 %4210
    %v4213 = vadd.f32 %v3339, %v4211
    %v4214 = vtanh.pop %v4213
    %v4216 = vrot.slane %v4214, 2
    %4217 = vrot.lane.b32.xlu0 %v4216, 64
    %v4218 = vpop.permute.xlu0 %4217
    %v4220 = vsub.f32 %v4128, %v4218
    %v4222 = vrot.slane %v4220, 6
    %4223 = vrot.lane.b32.xlu0 %v4222, 32
    %v4224 = vpop.permute.xlu0 %4223
    %v4226 = vmul.f32 %v4202, %v4224
    %4228 = vrot.lane.b32.xlu0 %v4226, 32
    %v4229 = vpop.permute.xlu0 %4228
    %v4231 = vadd.f32 %v4214, %v4229
    %v4232 = vmul.f32 %v329, %v4231
    %v4234 = vmul.f32 %v335, %v4140
    %4236 = vrot.lane.b32.xlu0 %v4234, 64
    %v4237 = vpop.permute.xlu0 %4236
    %v4239 = vadd.f32 %v4232, %v4237
    %v4242 = vrot.slane %v4161, 2
    %v4243 = vrot.slane %v4181, 2
    %4244 = vrot.lane.b32.xlu0 %v4242, 32
    %v4245 = vpop.permute.xlu0 %4244
    %4246 = vrot.lane.b32.xlu0 %v4243, 32
    %v4247 = vpop.permute.xlu0 %4246
    %v4248 = vsel %vm274, %v4245, %v4247
    %v4250 = vadd.f32 %v3373, %v4248
    %v4251 = vxor.u32 %v4250, 2147483648
    %v4252 = vmul.f32 %v4251, 1.442695
    %v4253 = vpow.pop %v4252
    %v4254 = vadd.f32 %v4253, 1.0
    %v4255 = vrcp.pop %v4254
    %v4256 = vmul.f32 %v4254, %v4255
    %v4257 = vsub.f32 1.0, %v4256
    %v4258 = vmul.f32 %v4255, %v4257
    %v4259 = vadd.f32 %v4255, %v4258
    %vm4260 = vweird.f32 %v4254
    %vm4261 = vweird.f32 %v4255
    %vm4262 = vmor %vm4260, %vm4261
    %v4263 = vsel %vm4262, %v4255, %v4259
    %v4264 = vand.u32 2147483647, %v4254
    %vm4265 = vcmp.eq.f32.partialorder %v4264, 8.507059e+37
    %v4266 = vand.u32 %v4254, 2147483648
    %v4267 = vor.u32 1.1754944e-38, %v4266
    %v4268 = vsel %vm4265, %v4267, %v4263
    %v4269 = vmul.f32 1.0, %v4268
    %v4270 = vadd.f32 %v4181, %v3522
    %v4272 = vrot.slane %v4270, 2
    %4273 = vrot.lane.b32.xlu0 %v4272, 96
    %v4274 = vpop.permute.xlu0 %4273
    %v4276 = vmul.f32 %v4269, %v4274
    %4278 = vrot.lane.b32.xlu0 %v4276, 64
    %v4279 = vpop.permute.xlu0 %4278
    %v4281 = vadd.f32 %v3373, %v4279
    %v4282 = vtanh.pop %v4281
    %4284 = vrot.lane.b32.xlu0 %v4282, 96
    %v4285 = vpop.permute.xlu0 %4284
    %v4287 = vsub.f32 %v4128, %v4285
    %v4288 = vmul.f32 %v4269, %v4287
    %4290 = vrot.lane.b32.xlu0 %v4288, 32
    %v4291 = vpop.permute.xlu0 %4290
    %v4293 = vadd.f32 %v4282, %v4291
    %v4294 = vmul.f32 %v256, %v4293
    %v4295 = vmul.f32 %v262, %v4128
    %4297 = vrot.lane.b32.xlu0 %v4295, 32
    %v4298 = vpop.permute.xlu0 %4297
    %v4300 = vadd.f32 %v4294, %v4298
    %4302 = vrot.lane.b32.xlu0 %v4239, 64
    %v4303 = vpop.permute.xlu0 %4302
    %v4306 = vrot.slane %v4300, 6
    %4307 = vrot.lane.b32.xlu0 %v4306, 96
    %v4308 = vpop.permute.xlu0 %4307
    %v4310 = vsel %vm274, %v4303, %v4308
    %4312 = vrot.lane.b32.xlu0 %v4232, 64
    %v4313 = vpop.permute.xlu0 %4312
    %4315 = vst.msk [vmem:[#allocation2 + $0x8] sm:$0x3] %vm353, %v4313
    %4317 = vrot.lane.b32.xlu0 %v4294, 96
    %v4318 = vpop.permute.xlu0 %4317
    %4320 = vst.msk [vmem:[#allocation2] sm:$0xc0] %vm359, %v4318
    %v4322 = vsel %vm76, %v4310, 0
    %4324 = vmatpush.msra.mxu0 0.0
    %4325 = vmatpush.msra.mxu0 0.0
    %4326 = vmatpush.msra.mxu0 0.0
    %4327 = vmatpush.msra.mxu0 0.0
    %4328 = vmatpush.msra.mxu0 0.0
    %4329 = vmatpush.msra.mxu0 0.0
    %4330 = vmatpush.msra.mxu0 0.0
    %4331 = vmatpush.msra.mxu0 0.0
    %4332 = vmatpush.msra.mxu0 %v3397
    %4333 = vmatpush.msra.mxu0 %v3395
    %4334 = vmatpush.msra.mxu0 %v3393
    %4335 = vmatpush.msra.mxu0 %v3391
    %4336 = vmatpush.msra.mxu0 %v3389
    %4337 = vmatpush.msra.mxu0 %v3387
    %4338 = vmatpush.msra.mxu0 %v3385
    %4339 = vmatpush.msra.mxu0 %v3383
    %4340 = vmatmul.f32.gmra.mxu0 %v4322
    %v4341 = vpop.f32.mrf.mxu0
    %v4342 = vadd.f32 0.0, %v4341
    %4343 = vdwg.mxu0
    %4344 = vmatpush.msra.mxu0 0.0
    %4345 = vmatpush.msra.mxu0 0.0
    %4346 = vmatpush.msra.mxu0 0.0
    %4347 = vmatpush.msra.mxu0 0.0
    %4348 = vmatpush.msra.mxu0 0.0
    %4349 = vmatpush.msra.mxu0 0.0
    %4350 = vmatpush.msra.mxu0 0.0
    %4351 = vmatpush.msra.mxu0 0.0
    %4352 = vmatpush.msra.mxu0 %v3398
    %4353 = vmatpush.msra.mxu0 %v3396
    %4354 = vmatpush.msra.mxu0 %v3394
    %4355 = vmatpush.msra.mxu0 %v3392
    %4356 = vmatpush.msra.mxu0 %v3390
    %4357 = vmatpush.msra.mxu0 %v3388
    %4358 = vmatpush.msra.mxu0 %v3386
    %4359 = vmatpush.msra.mxu0 %v3384
    %4360 = vmatmul.f32.gmra.mxu0 %v4322
    %v4361 = vpop.f32.mrf.mxu0
    %v4362 = vadd.f32 0.0, %v4361
    %4363 = vdwg.mxu0
    %v4365 = vrot.slane %v4342, 6
    %v4367 = vadd.f32 %v3339, %v4365
    %v4368 = vxor.u32 %v4367, 2147483648
    %v4369 = vmul.f32 %v4368, 1.442695
    %v4370 = vpow.pop %v4369
    %v4371 = vadd.f32 %v4370, 1.0
    %v4372 = vrcp.pop %v4371
    %v4373 = vmul.f32 %v4371, %v4372
    %v4374 = vsub.f32 1.0, %v4373
    %v4375 = vmul.f32 %v4372, %v4374
    %v4376 = vadd.f32 %v4372, %v4375
    %vm4377 = vweird.f32 %v4371
    %vm4378 = vweird.f32 %v4372
    %vm4379 = vmor %vm4377, %vm4378
    %v4380 = vsel %vm4379, %v4372, %v4376
    %v4381 = vand.u32 2147483647, %v4371
    %vm4382 = vcmp.eq.f32.partialorder %v4381, 8.507059e+37
    %v4383 = vand.u32 %v4371, 2147483648
    %v4384 = vor.u32 1.1754944e-38, %v4383
    %v4385 = vsel %vm4382, %v4384, %v4380
    %v4386 = vmul.f32 1.0, %v4385
    %v4387 = vadd.f32 %v4342, %v3462
    %v4389 = vrot.slane %v4387, 6
    %4390 = vrot.lane.b32.xlu0 %v4389, 64
    %v4391 = vpop.permute.xlu0 %4390
    %v4393 = vmul.f32 %v4386, %v4391
    %4395 = vrot.lane.b32.xlu0 %v4393, 64
    %v4396 = vpop.permute.xlu0 %4395
    %v4398 = vadd.f32 %v3339, %v4396
    %v4399 = vtanh.pop %v4398
    %v4401 = vrot.slane %v4399, 2
    %4402 = vrot.lane.b32.xlu0 %v4401, 64
    %v4403 = vpop.permute.xlu0 %4402
    %v4405 = vsub.f32 %v4310, %v4403
    %v4407 = vrot.slane %v4405, 6
    %4408 = vrot.lane.b32.xlu0 %v4407, 32
    %v4409 = vpop.permute.xlu0 %4408
    %v4411 = vmul.f32 %v4386, %v4409
    %4413 = vrot.lane.b32.xlu0 %v4411, 32
    %v4414 = vpop.permute.xlu0 %4413
    %v4416 = vadd.f32 %v4399, %v4414
    %v4417 = vmul.f32 %v329, %v4416
    %v4418 = vrot.slane %v4310, 6
    %v4420 = vmul.f32 %v335, %v4418
    %4422 = vrot.lane.b32.xlu0 %v4420, 64
    %v4423 = vpop.permute.xlu0 %4422
    %v4425 = vadd.f32 %v4417, %v4423
    %v4427 = vrot.slane %v4342, 4
    %v4428 = vrot.slane %v4362, 4
    %4429 = vrot.lane.b32.xlu0 %v4427, 32
    %v4430 = vpop.permute.xlu0 %4429
    %4431 = vrot.lane.b32.xlu0 %v4428, 32
    %v4432 = vpop.permute.xlu0 %4431
    %v4433 = vsel %vm274, %v4430, %v4432
    %v4435 = vadd.f32 %v3373, %v4433
    %v4436 = vxor.u32 %v4435, 2147483648
    %v4437 = vmul.f32 %v4436, 1.442695
    %v4438 = vpow.pop %v4437
    %v4439 = vadd.f32 %v4438, 1.0
    %v4440 = vrcp.pop %v4439
    %v4441 = vmul.f32 %v4439, %v4440
    %v4442 = vsub.f32 1.0, %v4441
    %v4443 = vmul.f32 %v4440, %v4442
    %v4444 = vadd.f32 %v4440, %v4443
    %vm4445 = vweird.f32 %v4439
    %vm4446 = vweird.f32 %v4440
    %vm4447 = vmor %vm4445, %vm4446
    %v4448 = vsel %vm4447, %v4440, %v4444
    %v4449 = vand.u32 2147483647, %v4439
    %vm4450 = vcmp.eq.f32.partialorder %v4449, 8.507059e+37
    %v4451 = vand.u32 %v4439, 2147483648
    %v4452 = vor.u32 1.1754944e-38, %v4451
    %v4453 = vsel %vm4450, %v4452, %v4448
    %v4454 = vmul.f32 1.0, %v4453
    %v4455 = vadd.f32 %v4362, %v3522
    %v4457 = vrot.slane %v4455, 4
    %4458 = vrot.lane.b32.xlu0 %v4457, 96
    %v4459 = vpop.permute.xlu0 %4458
    %v4461 = vmul.f32 %v4454, %v4459
    %4463 = vrot.lane.b32.xlu0 %v4461, 64
    %v4464 = vpop.permute.xlu0 %4463
    %v4466 = vadd.f32 %v3373, %v4464
    %v4467 = vtanh.pop %v4466
    %v4469 = vrot.slane %v4467, 4
    %4470 = vrot.lane.b32.xlu0 %v4469, 96
    %v4471 = vpop.permute.xlu0 %4470
    %v4473 = vsub.f32 %v4310, %v4471
    %v4475 = vrot.slane %v4473, 4
    %v4477 = vmul.f32 %v4454, %v4475
    %4479 = vrot.lane.b32.xlu0 %v4477, 32
    %v4480 = vpop.permute.xlu0 %4479
    %v4482 = vadd.f32 %v4467, %v4480
    %v4483 = vmul.f32 %v256, %v4482
    %v4484 = vrot.slane %v4310, 4
    %4485 = vrot.lane.b32.xlu0 %v4484, 96
    %v4486 = vpop.permute.xlu0 %4485
    %v4488 = vmul.f32 %v262, %v4486
    %4490 = vrot.lane.b32.xlu0 %v4488, 64
    %v4491 = vpop.permute.xlu0 %4490
    %v4493 = vadd.f32 %v4483, %v4491
    %4495 = vrot.lane.b32.xlu0 %v4425, 64
    %v4496 = vpop.permute.xlu0 %4495
    %v4499 = vrot.slane %v4493, 2
    %4500 = vrot.lane.b32.xlu0 %v4499, 96
    %v4501 = vpop.permute.xlu0 %4500
    %v4503 = vsel %vm274, %v4496, %v4501
    %4505 = vrot.lane.b32.xlu0 %v4417, 64
    %v4506 = vpop.permute.xlu0 %4505
    %4508 = vst.msk [vmem:[#allocation2 + $0x8] sm:$0xc] %vm548, %v4506
    %4510 = vrot.lane.b32.xlu0 %v4483, 96
    %v4511 = vpop.permute.xlu0 %4510
    %4513 = vst.msk [vmem:[#allocation2] sm:$0x30] %vm554, %v4511
    %v4515 = vrot.slane %v4503, 2
    %v4516 = vsel %vm76, %v4515, 0
    %4518 = vmatpush.msra.mxu0 0.0
    %4519 = vmatpush.msra.mxu0 0.0
    %4520 = vmatpush.msra.mxu0 0.0
    %4521 = vmatpush.msra.mxu0 0.0
    %4522 = vmatpush.msra.mxu0 0.0
    %4523 = vmatpush.msra.mxu0 0.0
    %4524 = vmatpush.msra.mxu0 0.0
    %4525 = vmatpush.msra.mxu0 0.0
    %4526 = vmatpush.msra.mxu0 %v3397
    %4527 = vmatpush.msra.mxu0 %v3395
    %4528 = vmatpush.msra.mxu0 %v3393
    %4529 = vmatpush.msra.mxu0 %v3391
    %4530 = vmatpush.msra.mxu0 %v3389
    %4531 = vmatpush.msra.mxu0 %v3387
    %4532 = vmatpush.msra.mxu0 %v3385
    %4533 = vmatpush.msra.mxu0 %v3383
    %4534 = vmatmul.f32.gmra.mxu0 %v4516
    %v4535 = vpop.f32.mrf.mxu0
    %v4536 = vadd.f32 0.0, %v4535
    %4537 = vdwg.mxu0
    %4538 = vmatpush.msra.mxu0 0.0
    %4539 = vmatpush.msra.mxu0 0.0
    %4540 = vmatpush.msra.mxu0 0.0
    %4541 = vmatpush.msra.mxu0 0.0
    %4542 = vmatpush.msra.mxu0 0.0
    %4543 = vmatpush.msra.mxu0 0.0
    %4544 = vmatpush.msra.mxu0 0.0
    %4545 = vmatpush.msra.mxu0 0.0
    %4546 = vmatpush.msra.mxu0 %v3398
    %4547 = vmatpush.msra.mxu0 %v3396
    %4548 = vmatpush.msra.mxu0 %v3394
    %4549 = vmatpush.msra.mxu0 %v3392
    %4550 = vmatpush.msra.mxu0 %v3390
    %4551 = vmatpush.msra.mxu0 %v3388
    %4552 = vmatpush.msra.mxu0 %v3386
    %4553 = vmatpush.msra.mxu0 %v3384
    %4554 = vmatmul.f32.gmra.mxu0 %v4516
    %v4555 = vpop.f32.mrf.mxu0
    %v4556 = vadd.f32 0.0, %v4555
    %4557 = vdwg.mxu0
    %v4559 = vrot.slane %v4536, 4
    %v4561 = vadd.f32 %v3339, %v4559
    %v4562 = vxor.u32 %v4561, 2147483648
    %v4563 = vmul.f32 %v4562, 1.442695
    %v4564 = vpow.pop %v4563
    %v4565 = vadd.f32 %v4564, 1.0
    %v4566 = vrcp.pop %v4565
    %v4567 = vmul.f32 %v4565, %v4566
    %v4568 = vsub.f32 1.0, %v4567
    %v4569 = vmul.f32 %v4566, %v4568
    %v4570 = vadd.f32 %v4566, %v4569
    %vm4571 = vweird.f32 %v4565
    %vm4572 = vweird.f32 %v4566
    %vm4573 = vmor %vm4571, %vm4572
    %v4574 = vsel %vm4573, %v4566, %v4570
    %v4575 = vand.u32 2147483647, %v4565
    %vm4576 = vcmp.eq.f32.partialorder %v4575, 8.507059e+37
    %v4577 = vand.u32 %v4565, 2147483648
    %v4578 = vor.u32 1.1754944e-38, %v4577
    %v4579 = vsel %vm4576, %v4578, %v4574
    %v4580 = vmul.f32 1.0, %v4579
    %v4581 = vadd.f32 %v4536, %v3462
    %v4583 = vrot.slane %v4581, 4
    %4584 = vrot.lane.b32.xlu0 %v4583, 64
    %v4585 = vpop.permute.xlu0 %4584
    %v4587 = vmul.f32 %v4580, %v4585
    %4589 = vrot.lane.b32.xlu0 %v4587, 64
    %v4590 = vpop.permute.xlu0 %4589
    %v4592 = vadd.f32 %v3339, %v4590
    %v4593 = vtanh.pop %v4592
    %v4595 = vrot.slane %v4593, 2
    %4596 = vrot.lane.b32.xlu0 %v4595, 64
    %v4597 = vpop.permute.xlu0 %4596
    %v4599 = vsub.f32 %v4503, %v4597
    %v4601 = vrot.slane %v4599, 6
    %4602 = vrot.lane.b32.xlu0 %v4601, 32
    %v4603 = vpop.permute.xlu0 %4602
    %v4605 = vmul.f32 %v4580, %v4603
    %4607 = vrot.lane.b32.xlu0 %v4605, 32
    %v4608 = vpop.permute.xlu0 %4607
    %v4610 = vadd.f32 %v4593, %v4608
    %v4611 = vmul.f32 %v329, %v4610
    %v4612 = vrot.slane %v4503, 6
    %v4614 = vmul.f32 %v335, %v4612
    %4616 = vrot.lane.b32.xlu0 %v4614, 64
    %v4617 = vpop.permute.xlu0 %4616
    %v4619 = vadd.f32 %v4611, %v4617
    %v4621 = vrot.slane %v4536, 6
    %v4622 = vrot.slane %v4556, 6
    %4623 = vrot.lane.b32.xlu0 %v4621, 32
    %v4624 = vpop.permute.xlu0 %4623
    %4625 = vrot.lane.b32.xlu0 %v4622, 32
    %v4626 = vpop.permute.xlu0 %4625
    %v4627 = vsel %vm274, %v4624, %v4626
    %v4629 = vadd.f32 %v3373, %v4627
    %v4630 = vxor.u32 %v4629, 2147483648
    %v4631 = vmul.f32 %v4630, 1.442695
    %v4632 = vpow.pop %v4631
    %v4633 = vadd.f32 %v4632, 1.0
    %v4634 = vrcp.pop %v4633
    %v4635 = vmul.f32 %v4633, %v4634
    %v4636 = vsub.f32 1.0, %v4635
    %v4637 = vmul.f32 %v4634, %v4636
    %v4638 = vadd.f32 %v4634, %v4637
    %vm4639 = vweird.f32 %v4633
    %vm4640 = vweird.f32 %v4634
    %vm4641 = vmor %vm4639, %vm4640
    %v4642 = vsel %vm4641, %v4634, %v4638
    %v4643 = vand.u32 2147483647, %v4633
    %vm4644 = vcmp.eq.f32.partialorder %v4643, 8.507059e+37
    %v4645 = vand.u32 %v4633, 2147483648
    %v4646 = vor.u32 1.1754944e-38, %v4645
    %v4647 = vsel %vm4644, %v4646, %v4642
    %v4648 = vmul.f32 1.0, %v4647
    %v4649 = vadd.f32 %v4556, %v3522
    %v4651 = vrot.slane %v4649, 6
    %4652 = vrot.lane.b32.xlu0 %v4651, 96
    %v4653 = vpop.permute.xlu0 %4652
    %v4655 = vmul.f32 %v4648, %v4653
    %4657 = vrot.lane.b32.xlu0 %v4655, 64
    %v4658 = vpop.permute.xlu0 %4657
    %v4660 = vadd.f32 %v3373, %v4658
    %v4661 = vtanh.pop %v4660
    %4663 = vrot.lane.b32.xlu0 %v4661, 96
    %v4664 = vpop.permute.xlu0 %4663
    %v4666 = vsub.f32 %v4503, %v4664
    %v4667 = vmul.f32 %v4648, %v4666
    %4669 = vrot.lane.b32.xlu0 %v4667, 32
    %v4670 = vpop.permute.xlu0 %4669
    %v4672 = vadd.f32 %v4661, %v4670
    %v4673 = vmul.f32 %v256, %v4672
    %v4674 = vmul.f32 %v262, %v4503
    %4676 = vrot.lane.b32.xlu0 %v4674, 32
    %v4677 = vpop.permute.xlu0 %4676
    %v4679 = vadd.f32 %v4673, %v4677
    %4681 = vrot.lane.b32.xlu0 %v4619, 64
    %v4682 = vpop.permute.xlu0 %4681
    %v4685 = vrot.slane %v4679, 6
    %4686 = vrot.lane.b32.xlu0 %v4685, 96
    %v4687 = vpop.permute.xlu0 %4686
    %v4689 = vsel %vm274, %v4682, %v4687
    %4691 = vrot.lane.b32.xlu0 %v4611, 64
    %v4692 = vpop.permute.xlu0 %4691
    %4694 = vst.msk [vmem:[#allocation2 + $0x8] sm:$0x30] %vm736, %v4692
    %4696 = vrot.lane.b32.xlu0 %v4673, 96
    %v4697 = vpop.permute.xlu0 %4696
    %4699 = vst.msk [vmem:[#allocation2] sm:$0xc] %vm742, %v4697
    %v4701 = vrot.slane %v4689, 4
    %v4702 = vsel %vm76, %v4701, 0
    %4704 = vmatpush.msra.mxu0 0.0
    %4705 = vmatpush.msra.mxu0 0.0
    %4706 = vmatpush.msra.mxu0 0.0
    %4707 = vmatpush.msra.mxu0 0.0
    %4708 = vmatpush.msra.mxu0 0.0
    %4709 = vmatpush.msra.mxu0 0.0
    %4710 = vmatpush.msra.mxu0 0.0
    %4711 = vmatpush.msra.mxu0 0.0
    %4712 = vmatpush.msra.mxu0 %v3397
    %4713 = vmatpush.msra.mxu0 %v3395
    %4714 = vmatpush.msra.mxu0 %v3393
    %4715 = vmatpush.msra.mxu0 %v3391
    %4716 = vmatpush.msra.mxu0 %v3389
    %4717 = vmatpush.msra.mxu0 %v3387
    %4718 = vmatpush.msra.mxu0 %v3385
    %4719 = vmatpush.msra.mxu0 %v3383
    %4720 = vmatmul.f32.gmra.mxu0 %v4702
    %v4721 = vpop.f32.mrf.mxu0
    %v4722 = vadd.f32 0.0, %v4721
    %4723 = vdwg.mxu0
    %4724 = vmatpush.msra.mxu0 0.0
    %4725 = vmatpush.msra.mxu0 0.0
    %4726 = vmatpush.msra.mxu0 0.0
    %4727 = vmatpush.msra.mxu0 0.0
    %4728 = vmatpush.msra.mxu0 0.0
    %4729 = vmatpush.msra.mxu0 0.0
    %4730 = vmatpush.msra.mxu0 0.0
    %4731 = vmatpush.msra.mxu0 0.0
    %4732 = vmatpush.msra.mxu0 %v3398
    %4733 = vmatpush.msra.mxu0 %v3396
    %4734 = vmatpush.msra.mxu0 %v3394
    %4735 = vmatpush.msra.mxu0 %v3392
    %4736 = vmatpush.msra.mxu0 %v3390
    %4737 = vmatpush.msra.mxu0 %v3388
    %4738 = vmatpush.msra.mxu0 %v3386
    %4739 = vmatpush.msra.mxu0 %v3384
    %4740 = vmatmul.f32.gmra.mxu0 %v4702
    %v4741 = vpop.f32.mrf.mxu0
    %v4742 = vadd.f32 0.0, %v4741
    %4743 = vdwg.mxu0
    %v4745 = vrot.slane %v4722, 2
    %v4747 = vadd.f32 %v3339, %v4745
    %v4748 = vxor.u32 %v4747, 2147483648
    %v4749 = vmul.f32 %v4748, 1.442695
    %v4750 = vpow.pop %v4749
    %v4751 = vadd.f32 %v4750, 1.0
    %v4752 = vrcp.pop %v4751
    %v4753 = vmul.f32 %v4751, %v4752
    %v4754 = vsub.f32 1.0, %v4753
    %v4755 = vmul.f32 %v4752, %v4754
    %v4756 = vadd.f32 %v4752, %v4755
    %vm4757 = vweird.f32 %v4751
    %vm4758 = vweird.f32 %v4752
    %vm4759 = vmor %vm4757, %vm4758
    %v4760 = vsel %vm4759, %v4752, %v4756
    %v4761 = vand.u32 2147483647, %v4751
    %vm4762 = vcmp.eq.f32.partialorder %v4761, 8.507059e+37
    %v4763 = vand.u32 %v4751, 2147483648
    %v4764 = vor.u32 1.1754944e-38, %v4763
    %v4765 = vsel %vm4762, %v4764, %v4760
    %v4766 = vmul.f32 1.0, %v4765
    %v4767 = vadd.f32 %v4722, %v3462
    %v4769 = vrot.slane %v4767, 2
    %4770 = vrot.lane.b32.xlu0 %v4769, 64
    %v4771 = vpop.permute.xlu0 %4770
    %v4773 = vmul.f32 %v4766, %v4771
    %4775 = vrot.lane.b32.xlu0 %v4773, 64
    %v4776 = vpop.permute.xlu0 %4775
    %v4778 = vadd.f32 %v3339, %v4776
    %v4779 = vtanh.pop %v4778
    %v4781 = vrot.slane %v4779, 2
    %4782 = vrot.lane.b32.xlu0 %v4781, 64
    %v4783 = vpop.permute.xlu0 %4782
    %v4785 = vsub.f32 %v4689, %v4783
    %v4787 = vrot.slane %v4785, 6
    %4788 = vrot.lane.b32.xlu0 %v4787, 32
    %v4789 = vpop.permute.xlu0 %4788
    %v4791 = vmul.f32 %v4766, %v4789
    %4793 = vrot.lane.b32.xlu0 %v4791, 32
    %v4794 = vpop.permute.xlu0 %4793
    %v4796 = vadd.f32 %v4779, %v4794
    %v4797 = vmul.f32 %v329, %v4796
    %v4798 = vrot.slane %v4689, 6
    %v4800 = vmul.f32 %v335, %v4798
    %4802 = vrot.lane.b32.xlu0 %v4800, 64
    %v4803 = vpop.permute.xlu0 %4802
    %v4805 = vadd.f32 %v4797, %v4803
    %4807 = vrot.lane.b32.xlu0 %v4722, 32
    %v4808 = vpop.permute.xlu0 %4807
    %4809 = vrot.lane.b32.xlu0 %v4742, 32
    %v4810 = vpop.permute.xlu0 %4809
    %v4811 = vsel %vm274, %v4808, %v4810
    %v4813 = vadd.f32 %v3373, %v4811
    %v4814 = vxor.u32 %v4813, 2147483648
    %v4815 = vmul.f32 %v4814, 1.442695
    %v4816 = vpow.pop %v4815
    %v4817 = vadd.f32 %v4816, 1.0
    %v4818 = vrcp.pop %v4817
    %v4819 = vmul.f32 %v4817, %v4818
    %v4820 = vsub.f32 1.0, %v4819
    %v4821 = vmul.f32 %v4818, %v4820
    %v4822 = vadd.f32 %v4818, %v4821
    %vm4823 = vweird.f32 %v4817
    %vm4824 = vweird.f32 %v4818
    %vm4825 = vmor %vm4823, %vm4824
    %v4826 = vsel %vm4825, %v4818, %v4822
    %v4827 = vand.u32 2147483647, %v4817
    %vm4828 = vcmp.eq.f32.partialorder %v4827, 8.507059e+37
    %v4829 = vand.u32 %v4817, 2147483648
    %v4830 = vor.u32 1.1754944e-38, %v4829
    %v4831 = vsel %vm4828, %v4830, %v4826
    %v4832 = vmul.f32 1.0, %v4831
    %v4833 = vadd.f32 %v4742, %v3522
    %4835 = vrot.lane.b32.xlu0 %v4833, 96
    %v4836 = vpop.permute.xlu0 %4835
    %v4838 = vmul.f32 %v4832, %v4836
    %4840 = vrot.lane.b32.xlu0 %v4838, 64
    %v4841 = vpop.permute.xlu0 %4840
    %v4843 = vadd.f32 %v3373, %v4841
    %v4844 = vtanh.pop %v4843
    %v4846 = vrot.slane %v4844, 4
    %4847 = vrot.lane.b32.xlu0 %v4846, 96
    %v4848 = vpop.permute.xlu0 %4847
    %v4850 = vsub.f32 %v4689, %v4848
    %v4852 = vrot.slane %v4850, 4
    %v4854 = vmul.f32 %v4832, %v4852
    %4856 = vrot.lane.b32.xlu0 %v4854, 32
    %v4857 = vpop.permute.xlu0 %4856
    %v4859 = vadd.f32 %v4844, %v4857
    %v4860 = vmul.f32 %v256, %v4859
    %4861 = vrot.lane.b32.xlu0 %v4701, 96
    %v4862 = vpop.permute.xlu0 %4861
    %v4864 = vmul.f32 %v262, %v4862
    %4866 = vrot.lane.b32.xlu0 %v4864, 64
    %v4867 = vpop.permute.xlu0 %4866
    %v4869 = vadd.f32 %v4860, %v4867
    %4871 = vrot.lane.b32.xlu0 %v4805, 64
    %v4872 = vpop.permute.xlu0 %4871
    %v4875 = vrot.slane %v4869, 2
    %4876 = vrot.lane.b32.xlu0 %v4875, 96
    %v4877 = vpop.permute.xlu0 %4876
    %v4879 = vsel %vm274, %v4872, %v4877
    %4881 = vrot.lane.b32.xlu0 %v4797, 64
    %v4882 = vpop.permute.xlu0 %4881
    %4884 = vst.msk [vmem:[#allocation2 + $0x8] sm:$0xc0] %vm928, %v4882
    %4886 = vrot.lane.b32.xlu0 %v4860, 96
    %v4887 = vpop.permute.xlu0 %4886
    %4889 = vst.msk [vmem:[#allocation2] sm:$0x3] %vm934, %v4887
    %s4890 = scalar_lea.vmem [#allocation8], 8
    %4891 = vst.msk [vmem:[%s4890 - $0x6] sm:$0xc0] %vm928, %v4879
    %4893 = vrot.lane.b32.xlu0 %v4879, 96
    %v4894 = vpop.permute.xlu0 %4893
    %s4896 = scalar_lea.vmem [#allocation8], 10
    %4897 = vst.msk [vmem:[%s4896 - $0x6] sm:$0xc0] %vm928, %v4894
    %v4898 = vld [vmem:[#allocation2] sm:$0xff]
    %v4899 = vld [vmem:[#allocation2 + $0x8] sm:$0xff]
    %s4900 = scalar_lea.vmem [#allocation3], 384
    %v4901 = vld [vmem:[%s4900] sm:$0xff]
    %v4902 = vld [vmem:[%s4900 + $0x8] sm:$0xff]
    %v4903 = vld [vmem:[%s4900 + $0x10] sm:$0xff]
    %v4904 = vld [vmem:[%s4900 + $0x18] sm:$0xff]
    %v4905 = vld [vmem:[%s4900 + $0x20] sm:$0xff]
    %v4906 = vld [vmem:[%s4900 + $0x28] sm:$0xff]
    %v4907 = vld [vmem:[%s4900 + $0x30] sm:$0xff]
    %v4908 = vld [vmem:[%s4900 + $0x38] sm:$0xff]
    %s4909 = scalar_lea.vmem %s4, 6
    %v4910 = vld [vmem:[%s4909] sm:$0x1]
    %v4912 = vperm.slane %v4910, 0
    %v4915 = vsel %vm76, %v4898, 0
    %v4918 = vsel %vm76, %v4899, 0
    %4920 = vmatpush.msra.mxu0 0.0
    %4921 = vmatpush.msra.mxu0 0.0
    %4922 = vmatpush.msra.mxu0 0.0
    %4923 = vmatpush.msra.mxu0 0.0
    %4924 = vmatpush.msra.mxu0 0.0
    %4925 = vmatpush.msra.mxu0 0.0
    %4926 = vmatpush.msra.mxu0 0.0
    %4927 = vmatpush.msra.mxu0 0.0
    %4928 = vmatpush.msra.mxu0 %v4908
    %4929 = vmatpush.msra.mxu0 %v4907
    %4930 = vmatpush.msra.mxu0 %v4906
    %4931 = vmatpush.msra.mxu0 %v4905
    %4932 = vmatpush.msra.mxu0 %v4904
    %4933 = vmatpush.msra.mxu0 %v4903
    %4934 = vmatpush.msra.mxu0 %v4902
    %4935 = vmatpush.msra.mxu0 %v4901
    %4936 = vmatmul.f32.gmra.mxu0 %v4915
    %v4937 = vpop.f32.mrf.mxu0
    %v4938 = vadd.f32 %v4912, %v4937
    %4939 = vmatmul.f32.gmra.mxu0 %v4918
    %v4940 = vpop.f32.mrf.mxu0
    %v4941 = vadd.f32 %v4912, %v4940
    %4942 = vdwg.mxu0
    %s4943 = scalar_lea.vmem [#allocation3], 448
    %v4944 = vld [vmem:[%s4943] sm:$0xff]
    %v4945 = vld [vmem:[%s4943 + $0x8] sm:$0xff]
    %v4946 = vld [vmem:[%s4943 + $0x10] sm:$0xff]
    %v4947 = vld [vmem:[%s4943 + $0x18] sm:$0xff]
    %v4948 = vld [vmem:[%s4943 + $0x20] sm:$0xff]
    %v4949 = vld [vmem:[%s4943 + $0x28] sm:$0xff]
    %v4950 = vld [vmem:[%s4943 + $0x30] sm:$0xff]
    %v4951 = vld [vmem:[%s4943 + $0x38] sm:$0xff]
    %s4952 = scalar_lea.vmem %s4, 7
    %v4953 = vld [vmem:[%s4952] sm:$0x1]
    %v4955 = vperm.slane %v4953, 0
    %4957 = vmatpush.msra.mxu0 0.0
    %4958 = vmatpush.msra.mxu0 0.0
    %4959 = vmatpush.msra.mxu0 0.0
    %4960 = vmatpush.msra.mxu0 0.0
    %4961 = vmatpush.msra.mxu0 0.0
    %4962 = vmatpush.msra.mxu0 0.0
    %4963 = vmatpush.msra.mxu0 0.0
    %4964 = vmatpush.msra.mxu0 0.0
    %4965 = vmatpush.msra.mxu0 %v4951
    %4966 = vmatpush.msra.mxu0 %v4950
    %4967 = vmatpush.msra.mxu0 %v4949
    %4968 = vmatpush.msra.mxu0 %v4948
    %4969 = vmatpush.msra.mxu0 %v4947
    %4970 = vmatpush.msra.mxu0 %v4946
    %4971 = vmatpush.msra.mxu0 %v4945
    %4972 = vmatpush.msra.mxu0 %v4944
    %4973 = vmatmul.f32.gmra.mxu0 %v4915
    %v4974 = vpop.f32.mrf.mxu0
    %v4975 = vadd.f32 %v4955, %v4974
    %4976 = vmatmul.f32.gmra.mxu0 %v4918
    %v4977 = vpop.f32.mrf.mxu0
    %v4978 = vadd.f32 %v4955, %v4977
    %4979 = vdwg.mxu0
    %s4980 = scalar_lea.vmem %s5, 6
    %v4981 = vld [vmem:[%s4980] sm:$0x1]
    %s4982 = scalar_lea.vmem %s5, 7
    %v4983 = vld [vmem:[%s4982] sm:$0x1]
    %s4984 = scalar_lea.vmem [#allocation6], 384
    %v4985 = vld [vmem:[%s4984] sm:$0xff]
    %v4986 = vld [vmem:[%s4984 + $0x8] sm:$0xff]
    %v4987 = vld [vmem:[%s4984 + $0x10] sm:$0xff]
    %v4988 = vld [vmem:[%s4984 + $0x18] sm:$0xff]
    %v4989 = vld [vmem:[%s4984 + $0x20] sm:$0xff]
    %v4990 = vld [vmem:[%s4984 + $0x28] sm:$0xff]
    %v4991 = vld [vmem:[%s4984 + $0x30] sm:$0xff]
    %v4992 = vld [vmem:[%s4984 + $0x38] sm:$0xff]
    %v4993 = vld [vmem:[%s4984 + $0x40] sm:$0xff]
    %v4994 = vld [vmem:[%s4984 + $0x48] sm:$0xff]
    %v4995 = vld [vmem:[%s4984 + $0x50] sm:$0xff]
    %v4996 = vld [vmem:[%s4984 + $0x58] sm:$0xff]
    %v4997 = vld [vmem:[%s4984 + $0x60] sm:$0xff]
    %v4998 = vld [vmem:[%s4984 + $0x68] sm:$0xff]
    %v4999 = vld [vmem:[%s4984 + $0x70] sm:$0xff]
    %v5000 = vld [vmem:[%s4984 + $0x78] sm:$0xff]
    %5001 = vmatpush.msra.mxu0 0.0
    %5002 = vmatpush.msra.mxu0 0.0
    %5003 = vmatpush.msra.mxu0 0.0
    %5004 = vmatpush.msra.mxu0 0.0
    %5005 = vmatpush.msra.mxu0 0.0
    %5006 = vmatpush.msra.mxu0 0.0
    %5007 = vmatpush.msra.mxu0 0.0
    %5008 = vmatpush.msra.mxu0 0.0
    %5009 = vmatpush.msra.mxu0 %v4999
    %5010 = vmatpush.msra.mxu0 %v4997
    %5011 = vmatpush.msra.mxu0 %v4995
    %5012 = vmatpush.msra.mxu0 %v4993
    %5013 = vmatpush.msra.mxu0 %v4991
    %5014 = vmatpush.msra.mxu0 %v4989
    %5015 = vmatpush.msra.mxu0 %v4987
    %5016 = vmatpush.msra.mxu0 %v4985
    %5017 = vmatmul.f32.gmra.mxu0 %v163
    %v5018 = vpop.f32.mrf.mxu0
    %v5019 = vadd.f32 0.0, %v5018
    %5020 = vdwg.mxu0
    %5021 = vmatpush.msra.mxu0 0.0
    %5022 = vmatpush.msra.mxu0 0.0
    %5023 = vmatpush.msra.mxu0 0.0
    %5024 = vmatpush.msra.mxu0 0.0
    %5025 = vmatpush.msra.mxu0 0.0
    %5026 = vmatpush.msra.mxu0 0.0
    %5027 = vmatpush.msra.mxu0 0.0
    %5028 = vmatpush.msra.mxu0 0.0
    %5029 = vmatpush.msra.mxu0 %v5000
    %5030 = vmatpush.msra.mxu0 %v4998
    %5031 = vmatpush.msra.mxu0 %v4996
    %5032 = vmatpush.msra.mxu0 %v4994
    %5033 = vmatpush.msra.mxu0 %v4992
    %5034 = vmatpush.msra.mxu0 %v4990
    %5035 = vmatpush.msra.mxu0 %v4988
    %5036 = vmatpush.msra.mxu0 %v4986
    %5037 = vmatmul.f32.gmra.mxu0 %v163
    %v5038 = vpop.f32.mrf.mxu0
    %v5039 = vadd.f32 0.0, %v5038
    %5040 = vdwg.mxu0
    %v5041 = vadd.f32 %v4938, %v5019
    %v5042 = vxor.u32 %v5041, 2147483648
    %v5043 = vmul.f32 %v5042, 1.442695
    %v5044 = vpow.pop %v5043
    %v5045 = vadd.f32 %v5044, 1.0
    %v5046 = vrcp.pop %v5045
    %v5047 = vmul.f32 %v5045, %v5046
    %v5048 = vsub.f32 1.0, %v5047
    %v5049 = vmul.f32 %v5046, %v5048
    %v5050 = vadd.f32 %v5046, %v5049
    %vm5051 = vweird.f32 %v5045
    %vm5052 = vweird.f32 %v5046
    %vm5053 = vmor %vm5051, %vm5052
    %v5054 = vsel %vm5053, %v5046, %v5050
    %v5055 = vand.u32 2147483647, %v5045
    %vm5056 = vcmp.eq.f32.partialorder %v5055, 8.507059e+37
    %v5057 = vand.u32 %v5045, 2147483648
    %v5058 = vor.u32 1.1754944e-38, %v5057
    %v5059 = vsel %vm5056, %v5058, %v5054
    %v5060 = vmul.f32 1.0, %v5059
    %v5062 = vperm.slane %v4981, 0
    %5063 = vrot.lane.b32.xlu0 %v5062, 64
    %v5064 = vpop.permute.xlu0 %5063
    %v5066 = vadd.f32 %v5019, %v5064
    %5068 = vrot.lane.b32.xlu0 %v5066, 64
    %v5069 = vpop.permute.xlu0 %5068
    %v5071 = vmul.f32 %v5060, %v5069
    %5073 = vrot.lane.b32.xlu0 %v5071, 64
    %v5074 = vpop.permute.xlu0 %5073
    %v5076 = vadd.f32 %v4938, %v5074
    %v5077 = vtanh.pop %v5076
    %v5078 = vsub.f32 0.0, %v5077
    %5080 = vrot.lane.b32.xlu0 %v5078, 96
    %v5081 = vpop.permute.xlu0 %5080
    %v5083 = vmul.f32 %v5060, %v5081
    %5085 = vrot.lane.b32.xlu0 %v5083, 32
    %v5086 = vpop.permute.xlu0 %5085
    %v5088 = vadd.f32 %v5077, %v5086
    %v5089 = vmul.f32 %v256, %v5088
    %v5090 = vadd.f32 %v5089, %v264
    %v5093 = vrot.slane %v5019, 2
    %v5094 = vrot.slane %v5039, 2
    %5095 = vrot.lane.b32.xlu0 %v5093, 32
    %v5096 = vpop.permute.xlu0 %5095
    %5097 = vrot.lane.b32.xlu0 %v5094, 32
    %v5098 = vpop.permute.xlu0 %5097
    %v5099 = vsel %vm274, %v5096, %v5098
    %v5101 = vadd.f32 %v4978, %v5099
    %v5102 = vxor.u32 %v5101, 2147483648
    %v5103 = vmul.f32 %v5102, 1.442695
    %v5104 = vpow.pop %v5103
    %v5105 = vadd.f32 %v5104, 1.0
    %v5106 = vrcp.pop %v5105
    %v5107 = vmul.f32 %v5105, %v5106
    %v5108 = vsub.f32 1.0, %v5107
    %v5109 = vmul.f32 %v5106, %v5108
    %v5110 = vadd.f32 %v5106, %v5109
    %vm5111 = vweird.f32 %v5105
    %vm5112 = vweird.f32 %v5106
    %vm5113 = vmor %vm5111, %vm5112
    %v5114 = vsel %vm5113, %v5106, %v5110
    %v5115 = vand.u32 2147483647, %v5105
    %vm5116 = vcmp.eq.f32.partialorder %v5115, 8.507059e+37
    %v5117 = vand.u32 %v5105, 2147483648
    %v5118 = vor.u32 1.1754944e-38, %v5117
    %v5119 = vsel %vm5116, %v5118, %v5114
    %v5120 = vmul.f32 1.0, %v5119
    %v5122 = vperm.slane %v4983, 0
    %5123 = vrot.lane.b32.xlu0 %v5122, 32
    %v5124 = vpop.permute.xlu0 %5123
    %v5126 = vadd.f32 %v5039, %v5124
    %v5128 = vrot.slane %v5126, 2
    %5129 = vrot.lane.b32.xlu0 %v5128, 96
    %v5130 = vpop.permute.xlu0 %5129
    %v5132 = vmul.f32 %v5120, %v5130
    %5134 = vrot.lane.b32.xlu0 %v5132, 64
    %v5135 = vpop.permute.xlu0 %5134
    %v5137 = vadd.f32 %v4978, %v5135
    %v5138 = vtanh.pop %v5137
    %v5139 = vsub.f32 0.0, %v5138
    %5141 = vrot.lane.b32.xlu0 %v5139, 96
    %v5142 = vpop.permute.xlu0 %5141
    %v5144 = vmul.f32 %v5120, %v5142
    %5146 = vrot.lane.b32.xlu0 %v5144, 32
    %v5147 = vpop.permute.xlu0 %5146
    %v5149 = vadd.f32 %v5138, %v5147
    %v5150 = vmul.f32 %v329, %v5149
    %v5151 = vadd.f32 %v5150, %v337
    %5153 = vrot.lane.b32.xlu0 %v5090, 64
    %v5154 = vpop.permute.xlu0 %5153
    %v5157 = vrot.slane %v5151, 6
    %5158 = vrot.lane.b32.xlu0 %v5157, 96
    %v5159 = vpop.permute.xlu0 %5158
    %v5161 = vsel %vm274, %v5154, %v5159
    %5163 = vrot.lane.b32.xlu0 %v5089, 64
    %v5164 = vpop.permute.xlu0 %5163
    %5166 = vst.msk [vmem:[%s6] sm:$0x3] %vm353, %v5164
    %5168 = vrot.lane.b32.xlu0 %v5150, 96
    %v5169 = vpop.permute.xlu0 %5168
    %5171 = vst.msk [vmem:[%s6 + $0x8] sm:$0xc0] %vm359, %v5169
    %v5173 = vsel %vm76, %v5161, 0
    %5175 = vmatpush.msra.mxu0 0.0
    %5176 = vmatpush.msra.mxu0 0.0
    %5177 = vmatpush.msra.mxu0 0.0
    %5178 = vmatpush.msra.mxu0 0.0
    %5179 = vmatpush.msra.mxu0 0.0
    %5180 = vmatpush.msra.mxu0 0.0
    %5181 = vmatpush.msra.mxu0 0.0
    %5182 = vmatpush.msra.mxu0 0.0
    %5183 = vmatpush.msra.mxu0 %v4999
    %5184 = vmatpush.msra.mxu0 %v4997
    %5185 = vmatpush.msra.mxu0 %v4995
    %5186 = vmatpush.msra.mxu0 %v4993
    %5187 = vmatpush.msra.mxu0 %v4991
    %5188 = vmatpush.msra.mxu0 %v4989
    %5189 = vmatpush.msra.mxu0 %v4987
    %5190 = vmatpush.msra.mxu0 %v4985
    %5191 = vmatmul.f32.gmra.mxu0 %v5173
    %v5192 = vpop.f32.mrf.mxu0
    %v5193 = vadd.f32 0.0, %v5192
    %5194 = vdwg.mxu0
    %5195 = vmatpush.msra.mxu0 0.0
    %5196 = vmatpush.msra.mxu0 0.0
    %5197 = vmatpush.msra.mxu0 0.0
    %5198 = vmatpush.msra.mxu0 0.0
    %5199 = vmatpush.msra.mxu0 0.0
    %5200 = vmatpush.msra.mxu0 0.0
    %5201 = vmatpush.msra.mxu0 0.0
    %5202 = vmatpush.msra.mxu0 0.0
    %5203 = vmatpush.msra.mxu0 %v5000
    %5204 = vmatpush.msra.mxu0 %v4998
    %5205 = vmatpush.msra.mxu0 %v4996
    %5206 = vmatpush.msra.mxu0 %v4994
    %5207 = vmatpush.msra.mxu0 %v4992
    %5208 = vmatpush.msra.mxu0 %v4990
    %5209 = vmatpush.msra.mxu0 %v4988
    %5210 = vmatpush.msra.mxu0 %v4986
    %5211 = vmatmul.f32.gmra.mxu0 %v5173
    %v5212 = vpop.f32.mrf.mxu0
    %v5213 = vadd.f32 0.0, %v5212
    %5214 = vdwg.mxu0
    %v5216 = vrot.slane %v5193, 6
    %v5218 = vadd.f32 %v4938, %v5216
    %v5219 = vxor.u32 %v5218, 2147483648
    %v5220 = vmul.f32 %v5219, 1.442695
    %v5221 = vpow.pop %v5220
    %v5222 = vadd.f32 %v5221, 1.0
    %v5223 = vrcp.pop %v5222
    %v5224 = vmul.f32 %v5222, %v5223
    %v5225 = vsub.f32 1.0, %v5224
    %v5226 = vmul.f32 %v5223, %v5225
    %v5227 = vadd.f32 %v5223, %v5226
    %vm5228 = vweird.f32 %v5222
    %vm5229 = vweird.f32 %v5223
    %vm5230 = vmor %vm5228, %vm5229
    %v5231 = vsel %vm5230, %v5223, %v5227
    %v5232 = vand.u32 2147483647, %v5222
    %vm5233 = vcmp.eq.f32.partialorder %v5232, 8.507059e+37
    %v5234 = vand.u32 %v5222, 2147483648
    %v5235 = vor.u32 1.1754944e-38, %v5234
    %v5236 = vsel %vm5233, %v5235, %v5231
    %v5237 = vmul.f32 1.0, %v5236
    %v5238 = vadd.f32 %v5193, %v5064
    %v5240 = vrot.slane %v5238, 6
    %5241 = vrot.lane.b32.xlu0 %v5240, 64
    %v5242 = vpop.permute.xlu0 %5241
    %v5244 = vmul.f32 %v5237, %v5242
    %5246 = vrot.lane.b32.xlu0 %v5244, 64
    %v5247 = vpop.permute.xlu0 %5246
    %v5249 = vadd.f32 %v4938, %v5247
    %v5250 = vtanh.pop %v5249
    %v5252 = vrot.slane %v5250, 2
    %5253 = vrot.lane.b32.xlu0 %v5252, 64
    %v5254 = vpop.permute.xlu0 %5253
    %v5256 = vsub.f32 %v5161, %v5254
    %v5258 = vrot.slane %v5256, 6
    %5259 = vrot.lane.b32.xlu0 %v5258, 32
    %v5260 = vpop.permute.xlu0 %5259
    %v5262 = vmul.f32 %v5237, %v5260
    %5264 = vrot.lane.b32.xlu0 %v5262, 32
    %v5265 = vpop.permute.xlu0 %5264
    %v5267 = vadd.f32 %v5250, %v5265
    %v5268 = vmul.f32 %v256, %v5267
    %v5269 = vrot.slane %v5161, 6
    %v5271 = vmul.f32 %v262, %v5269
    %5273 = vrot.lane.b32.xlu0 %v5271, 64
    %v5274 = vpop.permute.xlu0 %5273
    %v5276 = vadd.f32 %v5268, %v5274
    %v5278 = vrot.slane %v5193, 4
    %v5279 = vrot.slane %v5213, 4
    %5280 = vrot.lane.b32.xlu0 %v5278, 32
    %v5281 = vpop.permute.xlu0 %5280
    %5282 = vrot.lane.b32.xlu0 %v5279, 32
    %v5283 = vpop.permute.xlu0 %5282
    %v5284 = vsel %vm274, %v5281, %v5283
    %v5286 = vadd.f32 %v4978, %v5284
    %v5287 = vxor.u32 %v5286, 2147483648
    %v5288 = vmul.f32 %v5287, 1.442695
    %v5289 = vpow.pop %v5288
    %v5290 = vadd.f32 %v5289, 1.0
    %v5291 = vrcp.pop %v5290
    %v5292 = vmul.f32 %v5290, %v5291
    %v5293 = vsub.f32 1.0, %v5292
    %v5294 = vmul.f32 %v5291, %v5293
    %v5295 = vadd.f32 %v5291, %v5294
    %vm5296 = vweird.f32 %v5290
    %vm5297 = vweird.f32 %v5291
    %vm5298 = vmor %vm5296, %vm5297
    %v5299 = vsel %vm5298, %v5291, %v5295
    %v5300 = vand.u32 2147483647, %v5290
    %vm5301 = vcmp.eq.f32.partialorder %v5300, 8.507059e+37
    %v5302 = vand.u32 %v5290, 2147483648
    %v5303 = vor.u32 1.1754944e-38, %v5302
    %v5304 = vsel %vm5301, %v5303, %v5299
    %v5305 = vmul.f32 1.0, %v5304
    %v5306 = vadd.f32 %v5213, %v5124
    %v5308 = vrot.slane %v5306, 4
    %5309 = vrot.lane.b32.xlu0 %v5308, 96
    %v5310 = vpop.permute.xlu0 %5309
    %v5312 = vmul.f32 %v5305, %v5310
    %5314 = vrot.lane.b32.xlu0 %v5312, 64
    %v5315 = vpop.permute.xlu0 %5314
    %v5317 = vadd.f32 %v4978, %v5315
    %v5318 = vtanh.pop %v5317
    %v5320 = vrot.slane %v5318, 4
    %5321 = vrot.lane.b32.xlu0 %v5320, 96
    %v5322 = vpop.permute.xlu0 %5321
    %v5324 = vsub.f32 %v5161, %v5322
    %v5326 = vrot.slane %v5324, 4
    %v5328 = vmul.f32 %v5305, %v5326
    %5330 = vrot.lane.b32.xlu0 %v5328, 32
    %v5331 = vpop.permute.xlu0 %5330
    %v5333 = vadd.f32 %v5318, %v5331
    %v5334 = vmul.f32 %v329, %v5333
    %v5335 = vrot.slane %v5161, 4
    %5336 = vrot.lane.b32.xlu0 %v5335, 96
    %v5337 = vpop.permute.xlu0 %5336
    %v5339 = vmul.f32 %v335, %v5337
    %5341 = vrot.lane.b32.xlu0 %v5339, 64
    %v5342 = vpop.permute.xlu0 %5341
    %v5344 = vadd.f32 %v5334, %v5342
    %5346 = vrot.lane.b32.xlu0 %v5276, 64
    %v5347 = vpop.permute.xlu0 %5346
    %v5350 = vrot.slane %v5344, 2
    %5351 = vrot.lane.b32.xlu0 %v5350, 96
    %v5352 = vpop.permute.xlu0 %5351
    %v5354 = vsel %vm274, %v5347, %v5352
    %5356 = vrot.lane.b32.xlu0 %v5268, 64
    %v5357 = vpop.permute.xlu0 %5356
    %5359 = vst.msk [vmem:[%s6] sm:$0xc] %vm548, %v5357
    %5361 = vrot.lane.b32.xlu0 %v5334, 96
    %v5362 = vpop.permute.xlu0 %5361
    %5364 = vst.msk [vmem:[%s6 + $0x8] sm:$0x30] %vm554, %v5362
    %v5366 = vrot.slane %v5354, 2
    %v5367 = vsel %vm76, %v5366, 0
    %5369 = vmatpush.msra.mxu0 0.0
    %5370 = vmatpush.msra.mxu0 0.0
    %5371 = vmatpush.msra.mxu0 0.0
    %5372 = vmatpush.msra.mxu0 0.0
    %5373 = vmatpush.msra.mxu0 0.0
    %5374 = vmatpush.msra.mxu0 0.0
    %5375 = vmatpush.msra.mxu0 0.0
    %5376 = vmatpush.msra.mxu0 0.0
    %5377 = vmatpush.msra.mxu0 %v4999
    %5378 = vmatpush.msra.mxu0 %v4997
    %5379 = vmatpush.msra.mxu0 %v4995
    %5380 = vmatpush.msra.mxu0 %v4993
    %5381 = vmatpush.msra.mxu0 %v4991
    %5382 = vmatpush.msra.mxu0 %v4989
    %5383 = vmatpush.msra.mxu0 %v4987
    %5384 = vmatpush.msra.mxu0 %v4985
    %5385 = vmatmul.f32.gmra.mxu0 %v5367
    %v5386 = vpop.f32.mrf.mxu0
    %v5387 = vadd.f32 0.0, %v5386
    %5388 = vdwg.mxu0
    %5389 = vmatpush.msra.mxu0 0.0
    %5390 = vmatpush.msra.mxu0 0.0
    %5391 = vmatpush.msra.mxu0 0.0
    %5392 = vmatpush.msra.mxu0 0.0
    %5393 = vmatpush.msra.mxu0 0.0
    %5394 = vmatpush.msra.mxu0 0.0
    %5395 = vmatpush.msra.mxu0 0.0
    %5396 = vmatpush.msra.mxu0 0.0
    %5397 = vmatpush.msra.mxu0 %v5000
    %5398 = vmatpush.msra.mxu0 %v4998
    %5399 = vmatpush.msra.mxu0 %v4996
    %5400 = vmatpush.msra.mxu0 %v4994
    %5401 = vmatpush.msra.mxu0 %v4992
    %5402 = vmatpush.msra.mxu0 %v4990
    %5403 = vmatpush.msra.mxu0 %v4988
    %5404 = vmatpush.msra.mxu0 %v4986
    %5405 = vmatmul.f32.gmra.mxu0 %v5367
    %v5406 = vpop.f32.mrf.mxu0
    %v5407 = vadd.f32 0.0, %v5406
    %5408 = vdwg.mxu0
    %v5410 = vrot.slane %v5387, 4
    %v5412 = vadd.f32 %v4938, %v5410
    %v5413 = vxor.u32 %v5412, 2147483648
    %v5414 = vmul.f32 %v5413, 1.442695
    %v5415 = vpow.pop %v5414
    %v5416 = vadd.f32 %v5415, 1.0
    %v5417 = vrcp.pop %v5416
    %v5418 = vmul.f32 %v5416, %v5417
    %v5419 = vsub.f32 1.0, %v5418
    %v5420 = vmul.f32 %v5417, %v5419
    %v5421 = vadd.f32 %v5417, %v5420
    %vm5422 = vweird.f32 %v5416
    %vm5423 = vweird.f32 %v5417
    %vm5424 = vmor %vm5422, %vm5423
    %v5425 = vsel %vm5424, %v5417, %v5421
    %v5426 = vand.u32 2147483647, %v5416
    %vm5427 = vcmp.eq.f32.partialorder %v5426, 8.507059e+37
    %v5428 = vand.u32 %v5416, 2147483648
    %v5429 = vor.u32 1.1754944e-38, %v5428
    %v5430 = vsel %vm5427, %v5429, %v5425
    %v5431 = vmul.f32 1.0, %v5430
    %v5432 = vadd.f32 %v5387, %v5064
    %v5434 = vrot.slane %v5432, 4
    %5435 = vrot.lane.b32.xlu0 %v5434, 64
    %v5436 = vpop.permute.xlu0 %5435
    %v5438 = vmul.f32 %v5431, %v5436
    %5440 = vrot.lane.b32.xlu0 %v5438, 64
    %v5441 = vpop.permute.xlu0 %5440
    %v5443 = vadd.f32 %v4938, %v5441
    %v5444 = vtanh.pop %v5443
    %v5446 = vrot.slane %v5444, 2
    %5447 = vrot.lane.b32.xlu0 %v5446, 64
    %v5448 = vpop.permute.xlu0 %5447
    %v5450 = vsub.f32 %v5354, %v5448
    %v5452 = vrot.slane %v5450, 6
    %5453 = vrot.lane.b32.xlu0 %v5452, 32
    %v5454 = vpop.permute.xlu0 %5453
    %v5456 = vmul.f32 %v5431, %v5454
    %5458 = vrot.lane.b32.xlu0 %v5456, 32
    %v5459 = vpop.permute.xlu0 %5458
    %v5461 = vadd.f32 %v5444, %v5459
    %v5462 = vmul.f32 %v256, %v5461
    %v5463 = vrot.slane %v5354, 6
    %v5465 = vmul.f32 %v262, %v5463
    %5467 = vrot.lane.b32.xlu0 %v5465, 64
    %v5468 = vpop.permute.xlu0 %5467
    %v5470 = vadd.f32 %v5462, %v5468
    %v5472 = vrot.slane %v5387, 6
    %v5473 = vrot.slane %v5407, 6
    %5474 = vrot.lane.b32.xlu0 %v5472, 32
    %v5475 = vpop.permute.xlu0 %5474
    %5476 = vrot.lane.b32.xlu0 %v5473, 32
    %v5477 = vpop.permute.xlu0 %5476
    %v5478 = vsel %vm274, %v5475, %v5477
    %v5480 = vadd.f32 %v4978, %v5478
    %v5481 = vxor.u32 %v5480, 2147483648
    %v5482 = vmul.f32 %v5481, 1.442695
    %v5483 = vpow.pop %v5482
    %v5484 = vadd.f32 %v5483, 1.0
    %v5485 = vrcp.pop %v5484
    %v5486 = vmul.f32 %v5484, %v5485
    %v5487 = vsub.f32 1.0, %v5486
    %v5488 = vmul.f32 %v5485, %v5487
    %v5489 = vadd.f32 %v5485, %v5488
    %vm5490 = vweird.f32 %v5484
    %vm5491 = vweird.f32 %v5485
    %vm5492 = vmor %vm5490, %vm5491
    %v5493 = vsel %vm5492, %v5485, %v5489
    %v5494 = vand.u32 2147483647, %v5484
    %vm5495 = vcmp.eq.f32.partialorder %v5494, 8.507059e+37
    %v5496 = vand.u32 %v5484, 2147483648
    %v5497 = vor.u32 1.1754944e-38, %v5496
    %v5498 = vsel %vm5495, %v5497, %v5493
    %v5499 = vmul.f32 1.0, %v5498
    %v5500 = vadd.f32 %v5407, %v5124
    %v5502 = vrot.slane %v5500, 6
    %5503 = vrot.lane.b32.xlu0 %v5502, 96
    %v5504 = vpop.permute.xlu0 %5503
    %v5506 = vmul.f32 %v5499, %v5504
    %5508 = vrot.lane.b32.xlu0 %v5506, 64
    %v5509 = vpop.permute.xlu0 %5508
    %v5511 = vadd.f32 %v4978, %v5509
    %v5512 = vtanh.pop %v5511
    %5514 = vrot.lane.b32.xlu0 %v5512, 96
    %v5515 = vpop.permute.xlu0 %5514
    %v5517 = vsub.f32 %v5354, %v5515
    %v5518 = vmul.f32 %v5499, %v5517
    %5520 = vrot.lane.b32.xlu0 %v5518, 32
    %v5521 = vpop.permute.xlu0 %5520
    %v5523 = vadd.f32 %v5512, %v5521
    %v5524 = vmul.f32 %v329, %v5523
    %v5525 = vmul.f32 %v335, %v5354
    %5527 = vrot.lane.b32.xlu0 %v5525, 32
    %v5528 = vpop.permute.xlu0 %5527
    %v5530 = vadd.f32 %v5524, %v5528
    %5532 = vrot.lane.b32.xlu0 %v5470, 64
    %v5533 = vpop.permute.xlu0 %5532
    %v5536 = vrot.slane %v5530, 6
    %5537 = vrot.lane.b32.xlu0 %v5536, 96
    %v5538 = vpop.permute.xlu0 %5537
    %v5540 = vsel %vm274, %v5533, %v5538
    %5542 = vrot.lane.b32.xlu0 %v5462, 64
    %v5543 = vpop.permute.xlu0 %5542
    %5545 = vst.msk [vmem:[%s6] sm:$0x30] %vm736, %v5543
    %5547 = vrot.lane.b32.xlu0 %v5524, 96
    %v5548 = vpop.permute.xlu0 %5547
    %5550 = vst.msk [vmem:[%s6 + $0x8] sm:$0xc] %vm742, %v5548
    %v5552 = vrot.slane %v5540, 4
    %v5553 = vsel %vm76, %v5552, 0
    %5555 = vmatpush.msra.mxu0 0.0
    %5556 = vmatpush.msra.mxu0 0.0
    %5557 = vmatpush.msra.mxu0 0.0
    %5558 = vmatpush.msra.mxu0 0.0
    %5559 = vmatpush.msra.mxu0 0.0
    %5560 = vmatpush.msra.mxu0 0.0
    %5561 = vmatpush.msra.mxu0 0.0
    %5562 = vmatpush.msra.mxu0 0.0
    %5563 = vmatpush.msra.mxu0 %v4999
    %5564 = vmatpush.msra.mxu0 %v4997
    %5565 = vmatpush.msra.mxu0 %v4995
    %5566 = vmatpush.msra.mxu0 %v4993
    %5567 = vmatpush.msra.mxu0 %v4991
    %5568 = vmatpush.msra.mxu0 %v4989
    %5569 = vmatpush.msra.mxu0 %v4987
    %5570 = vmatpush.msra.mxu0 %v4985
    %5571 = vmatmul.f32.gmra.mxu0 %v5553
    %v5572 = vpop.f32.mrf.mxu0
    %v5573 = vadd.f32 0.0, %v5572
    %5574 = vdwg.mxu0
    %5575 = vmatpush.msra.mxu0 0.0
    %5576 = vmatpush.msra.mxu0 0.0
    %5577 = vmatpush.msra.mxu0 0.0
    %5578 = vmatpush.msra.mxu0 0.0
    %5579 = vmatpush.msra.mxu0 0.0
    %5580 = vmatpush.msra.mxu0 0.0
    %5581 = vmatpush.msra.mxu0 0.0
    %5582 = vmatpush.msra.mxu0 0.0
    %5583 = vmatpush.msra.mxu0 %v5000
    %5584 = vmatpush.msra.mxu0 %v4998
    %5585 = vmatpush.msra.mxu0 %v4996
    %5586 = vmatpush.msra.mxu0 %v4994
    %5587 = vmatpush.msra.mxu0 %v4992
    %5588 = vmatpush.msra.mxu0 %v4990
    %5589 = vmatpush.msra.mxu0 %v4988
    %5590 = vmatpush.msra.mxu0 %v4986
    %5591 = vmatmul.f32.gmra.mxu0 %v5553
    %v5592 = vpop.f32.mrf.mxu0
    %v5593 = vadd.f32 0.0, %v5592
    %5594 = vdwg.mxu0
    %v5596 = vrot.slane %v5573, 2
    %v5598 = vadd.f32 %v4938, %v5596
    %v5599 = vxor.u32 %v5598, 2147483648
    %v5600 = vmul.f32 %v5599, 1.442695
    %v5601 = vpow.pop %v5600
    %v5602 = vadd.f32 %v5601, 1.0
    %v5603 = vrcp.pop %v5602
    %v5604 = vmul.f32 %v5602, %v5603
    %v5605 = vsub.f32 1.0, %v5604
    %v5606 = vmul.f32 %v5603, %v5605
    %v5607 = vadd.f32 %v5603, %v5606
    %vm5608 = vweird.f32 %v5602
    %vm5609 = vweird.f32 %v5603
    %vm5610 = vmor %vm5608, %vm5609
    %v5611 = vsel %vm5610, %v5603, %v5607
    %v5612 = vand.u32 2147483647, %v5602
    %vm5613 = vcmp.eq.f32.partialorder %v5612, 8.507059e+37
    %v5614 = vand.u32 %v5602, 2147483648
    %v5615 = vor.u32 1.1754944e-38, %v5614
    %v5616 = vsel %vm5613, %v5615, %v5611
    %v5617 = vmul.f32 1.0, %v5616
    %v5618 = vadd.f32 %v5573, %v5064
    %v5620 = vrot.slane %v5618, 2
    %5621 = vrot.lane.b32.xlu0 %v5620, 64
    %v5622 = vpop.permute.xlu0 %5621
    %v5624 = vmul.f32 %v5617, %v5622
    %5626 = vrot.lane.b32.xlu0 %v5624, 64
    %v5627 = vpop.permute.xlu0 %5626
    %v5629 = vadd.f32 %v4938, %v5627
    %v5630 = vtanh.pop %v5629
    %v5632 = vrot.slane %v5630, 2
    %5633 = vrot.lane.b32.xlu0 %v5632, 64
    %v5634 = vpop.permute.xlu0 %5633
    %v5636 = vsub.f32 %v5540, %v5634
    %v5638 = vrot.slane %v5636, 6
    %5639 = vrot.lane.b32.xlu0 %v5638, 32
    %v5640 = vpop.permute.xlu0 %5639
    %v5642 = vmul.f32 %v5617, %v5640
    %5644 = vrot.lane.b32.xlu0 %v5642, 32
    %v5645 = vpop.permute.xlu0 %5644
    %v5647 = vadd.f32 %v5630, %v5645
    %v5648 = vmul.f32 %v256, %v5647
    %v5649 = vrot.slane %v5540, 6
    %v5651 = vmul.f32 %v262, %v5649
    %5653 = vrot.lane.b32.xlu0 %v5651, 64
    %v5654 = vpop.permute.xlu0 %5653
    %v5656 = vadd.f32 %v5648, %v5654
    %5658 = vrot.lane.b32.xlu0 %v5573, 32
    %v5659 = vpop.permute.xlu0 %5658
    %5660 = vrot.lane.b32.xlu0 %v5593, 32
    %v5661 = vpop.permute.xlu0 %5660
    %v5662 = vsel %vm274, %v5659, %v5661
    %v5664 = vadd.f32 %v4978, %v5662
    %v5665 = vxor.u32 %v5664, 2147483648
    %v5666 = vmul.f32 %v5665, 1.442695
    %v5667 = vpow.pop %v5666
    %v5668 = vadd.f32 %v5667, 1.0
    %v5669 = vrcp.pop %v5668
    %v5670 = vmul.f32 %v5668, %v5669
    %v5671 = vsub.f32 1.0, %v5670
    %v5672 = vmul.f32 %v5669, %v5671
    %v5673 = vadd.f32 %v5669, %v5672
    %vm5674 = vweird.f32 %v5668
    %vm5675 = vweird.f32 %v5669
    %vm5676 = vmor %vm5674, %vm5675
    %v5677 = vsel %vm5676, %v5669, %v5673
    %v5678 = vand.u32 2147483647, %v5668
    %vm5679 = vcmp.eq.f32.partialorder %v5678, 8.507059e+37
    %v5680 = vand.u32 %v5668, 2147483648
    %v5681 = vor.u32 1.1754944e-38, %v5680
    %v5682 = vsel %vm5679, %v5681, %v5677
    %v5683 = vmul.f32 1.0, %v5682
    %v5684 = vadd.f32 %v5593, %v5124
    %5686 = vrot.lane.b32.xlu0 %v5684, 96
    %v5687 = vpop.permute.xlu0 %5686
    %v5689 = vmul.f32 %v5683, %v5687
    %5691 = vrot.lane.b32.xlu0 %v5689, 64
    %v5692 = vpop.permute.xlu0 %5691
    %v5694 = vadd.f32 %v4978, %v5692
    %v5695 = vtanh.pop %v5694
    %v5697 = vrot.slane %v5695, 4
    %5698 = vrot.lane.b32.xlu0 %v5697, 96
    %v5699 = vpop.permute.xlu0 %5698
    %v5701 = vsub.f32 %v5540, %v5699
    %v5703 = vrot.slane %v5701, 4
    %v5705 = vmul.f32 %v5683, %v5703
    %5707 = vrot.lane.b32.xlu0 %v5705, 32
    %v5708 = vpop.permute.xlu0 %5707
    %v5710 = vadd.f32 %v5695, %v5708
    %v5711 = vmul.f32 %v329, %v5710
    %5712 = vrot.lane.b32.xlu0 %v5552, 96
    %v5713 = vpop.permute.xlu0 %5712
    %v5715 = vmul.f32 %v335, %v5713
    %5717 = vrot.lane.b32.xlu0 %v5715, 64
    %v5718 = vpop.permute.xlu0 %5717
    %v5720 = vadd.f32 %v5711, %v5718
    %5722 = vrot.lane.b32.xlu0 %v5656, 64
    %v5723 = vpop.permute.xlu0 %5722
    %v5726 = vrot.slane %v5720, 2
    %5727 = vrot.lane.b32.xlu0 %v5726, 96
    %v5728 = vpop.permute.xlu0 %5727
    %v5730 = vsel %vm274, %v5723, %v5728
    %5732 = vrot.lane.b32.xlu0 %v5648, 64
    %v5733 = vpop.permute.xlu0 %5732
    %5735 = vst.msk [vmem:[%s6] sm:$0xc0] %vm928, %v5733
    %5737 = vrot.lane.b32.xlu0 %v5711, 96
    %v5738 = vpop.permute.xlu0 %5737
    %5740 = vst.msk [vmem:[%s6 + $0x8] sm:$0x3] %vm934, %v5738
    %v5742 = vrot.slane %v5730, 6
    %v5743 = vsel %vm76, %v5742, 0
    %5745 = vmatpush.msra.mxu0 0.0
    %5746 = vmatpush.msra.mxu0 0.0
    %5747 = vmatpush.msra.mxu0 0.0
    %5748 = vmatpush.msra.mxu0 0.0
    %5749 = vmatpush.msra.mxu0 0.0
    %5750 = vmatpush.msra.mxu0 0.0
    %5751 = vmatpush.msra.mxu0 0.0
    %5752 = vmatpush.msra.mxu0 0.0
    %5753 = vmatpush.msra.mxu0 %v4999
    %5754 = vmatpush.msra.mxu0 %v4997
    %5755 = vmatpush.msra.mxu0 %v4995
    %5756 = vmatpush.msra.mxu0 %v4993
    %5757 = vmatpush.msra.mxu0 %v4991
    %5758 = vmatpush.msra.mxu0 %v4989
    %5759 = vmatpush.msra.mxu0 %v4987
    %5760 = vmatpush.msra.mxu0 %v4985
    %5761 = vmatmul.f32.gmra.mxu0 %v5743
    %v5762 = vpop.f32.mrf.mxu0
    %v5763 = vadd.f32 0.0, %v5762
    %5764 = vdwg.mxu0
    %5765 = vmatpush.msra.mxu0 0.0
    %5766 = vmatpush.msra.mxu0 0.0
    %5767 = vmatpush.msra.mxu0 0.0
    %5768 = vmatpush.msra.mxu0 0.0
    %5769 = vmatpush.msra.mxu0 0.0
    %5770 = vmatpush.msra.mxu0 0.0
    %5771 = vmatpush.msra.mxu0 0.0
    %5772 = vmatpush.msra.mxu0 0.0
    %5773 = vmatpush.msra.mxu0 %v5000
    %5774 = vmatpush.msra.mxu0 %v4998
    %5775 = vmatpush.msra.mxu0 %v4996
    %5776 = vmatpush.msra.mxu0 %v4994
    %5777 = vmatpush.msra.mxu0 %v4992
    %5778 = vmatpush.msra.mxu0 %v4990
    %5779 = vmatpush.msra.mxu0 %v4988
    %5780 = vmatpush.msra.mxu0 %v4986
    %5781 = vmatmul.f32.gmra.mxu0 %v5743
    %v5782 = vpop.f32.mrf.mxu0
    %v5783 = vadd.f32 0.0, %v5782
    %5784 = vdwg.mxu0
    %v5785 = vadd.f32 %v4941, %v5763
    %v5786 = vxor.u32 %v5785, 2147483648
    %v5787 = vmul.f32 %v5786, 1.442695
    %v5788 = vpow.pop %v5787
    %v5789 = vadd.f32 %v5788, 1.0
    %v5790 = vrcp.pop %v5789
    %v5791 = vmul.f32 %v5789, %v5790
    %v5792 = vsub.f32 1.0, %v5791
    %v5793 = vmul.f32 %v5790, %v5792
    %v5794 = vadd.f32 %v5790, %v5793
    %vm5795 = vweird.f32 %v5789
    %vm5796 = vweird.f32 %v5790
    %vm5797 = vmor %vm5795, %vm5796
    %v5798 = vsel %vm5797, %v5790, %v5794
    %v5799 = vand.u32 2147483647, %v5789
    %vm5800 = vcmp.eq.f32.partialorder %v5799, 8.507059e+37
    %v5801 = vand.u32 %v5789, 2147483648
    %v5802 = vor.u32 1.1754944e-38, %v5801
    %v5803 = vsel %vm5800, %v5802, %v5798
    %v5804 = vmul.f32 1.0, %v5803
    %v5805 = vadd.f32 %v5763, %v5064
    %5807 = vrot.lane.b32.xlu0 %v5805, 64
    %v5808 = vpop.permute.xlu0 %5807
    %v5810 = vmul.f32 %v5804, %v5808
    %5812 = vrot.lane.b32.xlu0 %v5810, 64
    %v5813 = vpop.permute.xlu0 %5812
    %v5815 = vadd.f32 %v4941, %v5813
    %v5816 = vtanh.pop %v5815
    %v5818 = vrot.slane %v5816, 2
    %5819 = vrot.lane.b32.xlu0 %v5818, 64
    %v5820 = vpop.permute.xlu0 %5819
    %v5822 = vsub.f32 %v5730, %v5820
    %v5824 = vrot.slane %v5822, 6
    %5825 = vrot.lane.b32.xlu0 %v5824, 32
    %v5826 = vpop.permute.xlu0 %5825
    %v5828 = vmul.f32 %v5804, %v5826
    %5830 = vrot.lane.b32.xlu0 %v5828, 32
    %v5831 = vpop.permute.xlu0 %5830
    %v5833 = vadd.f32 %v5816, %v5831
    %v5834 = vmul.f32 %v329, %v5833
    %v5836 = vmul.f32 %v335, %v5742
    %5838 = vrot.lane.b32.xlu0 %v5836, 64
    %v5839 = vpop.permute.xlu0 %5838
    %v5841 = vadd.f32 %v5834, %v5839
    %v5844 = vrot.slane %v5763, 2
    %v5845 = vrot.slane %v5783, 2
    %5846 = vrot.lane.b32.xlu0 %v5844, 32
    %v5847 = vpop.permute.xlu0 %5846
    %5848 = vrot.lane.b32.xlu0 %v5845, 32
    %v5849 = vpop.permute.xlu0 %5848
    %v5850 = vsel %vm274, %v5847, %v5849
    %v5852 = vadd.f32 %v4975, %v5850
    %v5853 = vxor.u32 %v5852, 2147483648
    %v5854 = vmul.f32 %v5853, 1.442695
    %v5855 = vpow.pop %v5854
    %v5856 = vadd.f32 %v5855, 1.0
    %v5857 = vrcp.pop %v5856
    %v5858 = vmul.f32 %v5856, %v5857
    %v5859 = vsub.f32 1.0, %v5858
    %v5860 = vmul.f32 %v5857, %v5859
    %v5861 = vadd.f32 %v5857, %v5860
    %vm5862 = vweird.f32 %v5856
    %vm5863 = vweird.f32 %v5857
    %vm5864 = vmor %vm5862, %vm5863
    %v5865 = vsel %vm5864, %v5857, %v5861
    %v5866 = vand.u32 2147483647, %v5856
    %vm5867 = vcmp.eq.f32.partialorder %v5866, 8.507059e+37
    %v5868 = vand.u32 %v5856, 2147483648
    %v5869 = vor.u32 1.1754944e-38, %v5868
    %v5870 = vsel %vm5867, %v5869, %v5865
    %v5871 = vmul.f32 1.0, %v5870
    %v5872 = vadd.f32 %v5783, %v5124
    %v5874 = vrot.slane %v5872, 2
    %5875 = vrot.lane.b32.xlu0 %v5874, 96
    %v5876 = vpop.permute.xlu0 %5875
    %v5878 = vmul.f32 %v5871, %v5876
    %5880 = vrot.lane.b32.xlu0 %v5878, 64
    %v5881 = vpop.permute.xlu0 %5880
    %v5883 = vadd.f32 %v4975, %v5881
    %v5884 = vtanh.pop %v5883
    %5886 = vrot.lane.b32.xlu0 %v5884, 96
    %v5887 = vpop.permute.xlu0 %5886
    %v5889 = vsub.f32 %v5730, %v5887
    %v5890 = vmul.f32 %v5871, %v5889
    %5892 = vrot.lane.b32.xlu0 %v5890, 32
    %v5893 = vpop.permute.xlu0 %5892
    %v5895 = vadd.f32 %v5884, %v5893
    %v5896 = vmul.f32 %v256, %v5895
    %v5897 = vmul.f32 %v262, %v5730
    %5899 = vrot.lane.b32.xlu0 %v5897, 32
    %v5900 = vpop.permute.xlu0 %5899
    %v5902 = vadd.f32 %v5896, %v5900
    %5904 = vrot.lane.b32.xlu0 %v5841, 64
    %v5905 = vpop.permute.xlu0 %5904
    %v5908 = vrot.slane %v5902, 6
    %5909 = vrot.lane.b32.xlu0 %v5908, 96
    %v5910 = vpop.permute.xlu0 %5909
    %v5912 = vsel %vm274, %v5905, %v5910
    %5914 = vrot.lane.b32.xlu0 %v5834, 64
    %v5915 = vpop.permute.xlu0 %5914
    %5917 = vst.msk [vmem:[%s6 + $0x8] sm:$0x3] %vm353, %v5915
    %5919 = vrot.lane.b32.xlu0 %v5896, 96
    %v5920 = vpop.permute.xlu0 %5919
    %5922 = vst.msk [vmem:[%s6] sm:$0xc0] %vm359, %v5920
    %v5924 = vsel %vm76, %v5912, 0
    %5926 = vmatpush.msra.mxu0 0.0
    %5927 = vmatpush.msra.mxu0 0.0
    %5928 = vmatpush.msra.mxu0 0.0
    %5929 = vmatpush.msra.mxu0 0.0
    %5930 = vmatpush.msra.mxu0 0.0
    %5931 = vmatpush.msra.mxu0 0.0
    %5932 = vmatpush.msra.mxu0 0.0
    %5933 = vmatpush.msra.mxu0 0.0
    %5934 = vmatpush.msra.mxu0 %v4999
    %5935 = vmatpush.msra.mxu0 %v4997
    %5936 = vmatpush.msra.mxu0 %v4995
    %5937 = vmatpush.msra.mxu0 %v4993
    %5938 = vmatpush.msra.mxu0 %v4991
    %5939 = vmatpush.msra.mxu0 %v4989
    %5940 = vmatpush.msra.mxu0 %v4987
    %5941 = vmatpush.msra.mxu0 %v4985
    %5942 = vmatmul.f32.gmra.mxu0 %v5924
    %v5943 = vpop.f32.mrf.mxu0
    %v5944 = vadd.f32 0.0, %v5943
    %5945 = vdwg.mxu0
    %5946 = vmatpush.msra.mxu0 0.0
    %5947 = vmatpush.msra.mxu0 0.0
    %5948 = vmatpush.msra.mxu0 0.0
    %5949 = vmatpush.msra.mxu0 0.0
    %5950 = vmatpush.msra.mxu0 0.0
    %5951 = vmatpush.msra.mxu0 0.0
    %5952 = vmatpush.msra.mxu0 0.0
    %5953 = vmatpush.msra.mxu0 0.0
    %5954 = vmatpush.msra.mxu0 %v5000
    %5955 = vmatpush.msra.mxu0 %v4998
    %5956 = vmatpush.msra.mxu0 %v4996
    %5957 = vmatpush.msra.mxu0 %v4994
    %5958 = vmatpush.msra.mxu0 %v4992
    %5959 = vmatpush.msra.mxu0 %v4990
    %5960 = vmatpush.msra.mxu0 %v4988
    %5961 = vmatpush.msra.mxu0 %v4986
    %5962 = vmatmul.f32.gmra.mxu0 %v5924
    %v5963 = vpop.f32.mrf.mxu0
    %v5964 = vadd.f32 0.0, %v5963
    %5965 = vdwg.mxu0
    %v5967 = vrot.slane %v5944, 6
    %v5969 = vadd.f32 %v4941, %v5967
    %v5970 = vxor.u32 %v5969, 2147483648
    %v5971 = vmul.f32 %v5970, 1.442695
    %v5972 = vpow.pop %v5971
    %v5973 = vadd.f32 %v5972, 1.0
    %v5974 = vrcp.pop %v5973
    %v5975 = vmul.f32 %v5973, %v5974
    %v5976 = vsub.f32 1.0, %v5975
    %v5977 = vmul.f32 %v5974, %v5976
    %v5978 = vadd.f32 %v5974, %v5977
    %vm5979 = vweird.f32 %v5973
    %vm5980 = vweird.f32 %v5974
    %vm5981 = vmor %vm5979, %vm5980
    %v5982 = vsel %vm5981, %v5974, %v5978
    %v5983 = vand.u32 2147483647, %v5973
    %vm5984 = vcmp.eq.f32.partialorder %v5983, 8.507059e+37
    %v5985 = vand.u32 %v5973, 2147483648
    %v5986 = vor.u32 1.1754944e-38, %v5985
    %v5987 = vsel %vm5984, %v5986, %v5982
    %v5988 = vmul.f32 1.0, %v5987
    %v5989 = vadd.f32 %v5944, %v5064
    %v5991 = vrot.slane %v5989, 6
    %5992 = vrot.lane.b32.xlu0 %v5991, 64
    %v5993 = vpop.permute.xlu0 %5992
    %v5995 = vmul.f32 %v5988, %v5993
    %5997 = vrot.lane.b32.xlu0 %v5995, 64
    %v5998 = vpop.permute.xlu0 %5997
    %v6000 = vadd.f32 %v4941, %v5998
    %v6001 = vtanh.pop %v6000
    %v6003 = vrot.slane %v6001, 2
    %6004 = vrot.lane.b32.xlu0 %v6003, 64
    %v6005 = vpop.permute.xlu0 %6004
    %v6007 = vsub.f32 %v5912, %v6005
    %v6009 = vrot.slane %v6007, 6
    %6010 = vrot.lane.b32.xlu0 %v6009, 32
    %v6011 = vpop.permute.xlu0 %6010
    %v6013 = vmul.f32 %v5988, %v6011
    %6015 = vrot.lane.b32.xlu0 %v6013, 32
    %v6016 = vpop.permute.xlu0 %6015
    %v6018 = vadd.f32 %v6001, %v6016
    %v6019 = vmul.f32 %v329, %v6018
    %v6020 = vrot.slane %v5912, 6
    %v6022 = vmul.f32 %v335, %v6020
    %6024 = vrot.lane.b32.xlu0 %v6022, 64
    %v6025 = vpop.permute.xlu0 %6024
    %v6027 = vadd.f32 %v6019, %v6025
    %v6029 = vrot.slane %v5944, 4
    %v6030 = vrot.slane %v5964, 4
    %6031 = vrot.lane.b32.xlu0 %v6029, 32
    %v6032 = vpop.permute.xlu0 %6031
    %6033 = vrot.lane.b32.xlu0 %v6030, 32
    %v6034 = vpop.permute.xlu0 %6033
    %v6035 = vsel %vm274, %v6032, %v6034
    %v6037 = vadd.f32 %v4975, %v6035
    %v6038 = vxor.u32 %v6037, 2147483648
    %v6039 = vmul.f32 %v6038, 1.442695
    %v6040 = vpow.pop %v6039
    %v6041 = vadd.f32 %v6040, 1.0
    %v6042 = vrcp.pop %v6041
    %v6043 = vmul.f32 %v6041, %v6042
    %v6044 = vsub.f32 1.0, %v6043
    %v6045 = vmul.f32 %v6042, %v6044
    %v6046 = vadd.f32 %v6042, %v6045
    %vm6047 = vweird.f32 %v6041
    %vm6048 = vweird.f32 %v6042
    %vm6049 = vmor %vm6047, %vm6048
    %v6050 = vsel %vm6049, %v6042, %v6046
    %v6051 = vand.u32 2147483647, %v6041
    %vm6052 = vcmp.eq.f32.partialorder %v6051, 8.507059e+37
    %v6053 = vand.u32 %v6041, 2147483648
    %v6054 = vor.u32 1.1754944e-38, %v6053
    %v6055 = vsel %vm6052, %v6054, %v6050
    %v6056 = vmul.f32 1.0, %v6055
    %v6057 = vadd.f32 %v5964, %v5124
    %v6059 = vrot.slane %v6057, 4
    %6060 = vrot.lane.b32.xlu0 %v6059, 96
    %v6061 = vpop.permute.xlu0 %6060
    %v6063 = vmul.f32 %v6056, %v6061
    %6065 = vrot.lane.b32.xlu0 %v6063, 64
    %v6066 = vpop.permute.xlu0 %6065
    %v6068 = vadd.f32 %v4975, %v6066
    %v6069 = vtanh.pop %v6068
    %v6071 = vrot.slane %v6069, 4
    %6072 = vrot.lane.b32.xlu0 %v6071, 96
    %v6073 = vpop.permute.xlu0 %6072
    %v6075 = vsub.f32 %v5912, %v6073
    %v6077 = vrot.slane %v6075, 4
    %v6079 = vmul.f32 %v6056, %v6077
    %6081 = vrot.lane.b32.xlu0 %v6079, 32
    %v6082 = vpop.permute.xlu0 %6081
    %v6084 = vadd.f32 %v6069, %v6082
    %v6085 = vmul.f32 %v256, %v6084
    %v6086 = vrot.slane %v5912, 4
    %6087 = vrot.lane.b32.xlu0 %v6086, 96
    %v6088 = vpop.permute.xlu0 %6087
    %v6090 = vmul.f32 %v262, %v6088
    %6092 = vrot.lane.b32.xlu0 %v6090, 64
    %v6093 = vpop.permute.xlu0 %6092
    %v6095 = vadd.f32 %v6085, %v6093
    %6097 = vrot.lane.b32.xlu0 %v6027, 64
    %v6098 = vpop.permute.xlu0 %6097
    %v6101 = vrot.slane %v6095, 2
    %6102 = vrot.lane.b32.xlu0 %v6101, 96
    %v6103 = vpop.permute.xlu0 %6102
    %v6105 = vsel %vm274, %v6098, %v6103
    %6107 = vrot.lane.b32.xlu0 %v6019, 64
    %v6108 = vpop.permute.xlu0 %6107
    %6110 = vst.msk [vmem:[%s6 + $0x8] sm:$0xc] %vm548, %v6108
    %6112 = vrot.lane.b32.xlu0 %v6085, 96
    %v6113 = vpop.permute.xlu0 %6112
    %6115 = vst.msk [vmem:[%s6] sm:$0x30] %vm554, %v6113
    %v6117 = vrot.slane %v6105, 2
    %v6118 = vsel %vm76, %v6117, 0
    %6120 = vmatpush.msra.mxu0 0.0
    %6121 = vmatpush.msra.mxu0 0.0
    %6122 = vmatpush.msra.mxu0 0.0
    %6123 = vmatpush.msra.mxu0 0.0
    %6124 = vmatpush.msra.mxu0 0.0
    %6125 = vmatpush.msra.mxu0 0.0
    %6126 = vmatpush.msra.mxu0 0.0
    %6127 = vmatpush.msra.mxu0 0.0
    %6128 = vmatpush.msra.mxu0 %v4999
    %6129 = vmatpush.msra.mxu0 %v4997
    %6130 = vmatpush.msra.mxu0 %v4995
    %6131 = vmatpush.msra.mxu0 %v4993
    %6132 = vmatpush.msra.mxu0 %v4991
    %6133 = vmatpush.msra.mxu0 %v4989
    %6134 = vmatpush.msra.mxu0 %v4987
    %6135 = vmatpush.msra.mxu0 %v4985
    %6136 = vmatmul.f32.gmra.mxu0 %v6118
    %v6137 = vpop.f32.mrf.mxu0
    %v6138 = vadd.f32 0.0, %v6137
    %6139 = vdwg.mxu0
    %6140 = vmatpush.msra.mxu0 0.0
    %6141 = vmatpush.msra.mxu0 0.0
    %6142 = vmatpush.msra.mxu0 0.0
    %6143 = vmatpush.msra.mxu0 0.0
    %6144 = vmatpush.msra.mxu0 0.0
    %6145 = vmatpush.msra.mxu0 0.0
    %6146 = vmatpush.msra.mxu0 0.0
    %6147 = vmatpush.msra.mxu0 0.0
    %6148 = vmatpush.msra.mxu0 %v5000
    %6149 = vmatpush.msra.mxu0 %v4998
    %6150 = vmatpush.msra.mxu0 %v4996
    %6151 = vmatpush.msra.mxu0 %v4994
    %6152 = vmatpush.msra.mxu0 %v4992
    %6153 = vmatpush.msra.mxu0 %v4990
    %6154 = vmatpush.msra.mxu0 %v4988
    %6155 = vmatpush.msra.mxu0 %v4986
    %6156 = vmatmul.f32.gmra.mxu0 %v6118
    %v6157 = vpop.f32.mrf.mxu0
    %v6158 = vadd.f32 0.0, %v6157
    %6159 = vdwg.mxu0
    %v6161 = vrot.slane %v6138, 4
    %v6163 = vadd.f32 %v4941, %v6161
    %v6164 = vxor.u32 %v6163, 2147483648
    %v6165 = vmul.f32 %v6164, 1.442695
    %v6166 = vpow.pop %v6165
    %v6167 = vadd.f32 %v6166, 1.0
    %v6168 = vrcp.pop %v6167
    %v6169 = vmul.f32 %v6167, %v6168
    %v6170 = vsub.f32 1.0, %v6169
    %v6171 = vmul.f32 %v6168, %v6170
    %v6172 = vadd.f32 %v6168, %v6171
    %vm6173 = vweird.f32 %v6167
    %vm6174 = vweird.f32 %v6168
    %vm6175 = vmor %vm6173, %vm6174
    %v6176 = vsel %vm6175, %v6168, %v6172
    %v6177 = vand.u32 2147483647, %v6167
    %vm6178 = vcmp.eq.f32.partialorder %v6177, 8.507059e+37
    %v6179 = vand.u32 %v6167, 2147483648
    %v6180 = vor.u32 1.1754944e-38, %v6179
    %v6181 = vsel %vm6178, %v6180, %v6176
    %v6182 = vmul.f32 1.0, %v6181
    %v6183 = vadd.f32 %v6138, %v5064
    %v6185 = vrot.slane %v6183, 4
    %6186 = vrot.lane.b32.xlu0 %v6185, 64
    %v6187 = vpop.permute.xlu0 %6186
    %v6189 = vmul.f32 %v6182, %v6187
    %6191 = vrot.lane.b32.xlu0 %v6189, 64
    %v6192 = vpop.permute.xlu0 %6191
    %v6194 = vadd.f32 %v4941, %v6192
    %v6195 = vtanh.pop %v6194
    %v6197 = vrot.slane %v6195, 2
    %6198 = vrot.lane.b32.xlu0 %v6197, 64
    %v6199 = vpop.permute.xlu0 %6198
    %v6201 = vsub.f32 %v6105, %v6199
    %v6203 = vrot.slane %v6201, 6
    %6204 = vrot.lane.b32.xlu0 %v6203, 32
    %v6205 = vpop.permute.xlu0 %6204
    %v6207 = vmul.f32 %v6182, %v6205
    %6209 = vrot.lane.b32.xlu0 %v6207, 32
    %v6210 = vpop.permute.xlu0 %6209
    %v6212 = vadd.f32 %v6195, %v6210
    %v6213 = vmul.f32 %v329, %v6212
    %v6214 = vrot.slane %v6105, 6
    %v6216 = vmul.f32 %v335, %v6214
    %6218 = vrot.lane.b32.xlu0 %v6216, 64
    %v6219 = vpop.permute.xlu0 %6218
    %v6221 = vadd.f32 %v6213, %v6219
    %v6223 = vrot.slane %v6138, 6
    %v6224 = vrot.slane %v6158, 6
    %6225 = vrot.lane.b32.xlu0 %v6223, 32
    %v6226 = vpop.permute.xlu0 %6225
    %6227 = vrot.lane.b32.xlu0 %v6224, 32
    %v6228 = vpop.permute.xlu0 %6227
    %v6229 = vsel %vm274, %v6226, %v6228
    %v6231 = vadd.f32 %v4975, %v6229
    %v6232 = vxor.u32 %v6231, 2147483648
    %v6233 = vmul.f32 %v6232, 1.442695
    %v6234 = vpow.pop %v6233
    %v6235 = vadd.f32 %v6234, 1.0
    %v6236 = vrcp.pop %v6235
    %v6237 = vmul.f32 %v6235, %v6236
    %v6238 = vsub.f32 1.0, %v6237
    %v6239 = vmul.f32 %v6236, %v6238
    %v6240 = vadd.f32 %v6236, %v6239
    %vm6241 = vweird.f32 %v6235
    %vm6242 = vweird.f32 %v6236
    %vm6243 = vmor %vm6241, %vm6242
    %v6244 = vsel %vm6243, %v6236, %v6240
    %v6245 = vand.u32 2147483647, %v6235
    %vm6246 = vcmp.eq.f32.partialorder %v6245, 8.507059e+37
    %v6247 = vand.u32 %v6235, 2147483648
    %v6248 = vor.u32 1.1754944e-38, %v6247
    %v6249 = vsel %vm6246, %v6248, %v6244
    %v6250 = vmul.f32 1.0, %v6249
    %v6251 = vadd.f32 %v6158, %v5124
    %v6253 = vrot.slane %v6251, 6
    %6254 = vrot.lane.b32.xlu0 %v6253, 96
    %v6255 = vpop.permute.xlu0 %6254
    %v6257 = vmul.f32 %v6250, %v6255
    %6259 = vrot.lane.b32.xlu0 %v6257, 64
    %v6260 = vpop.permute.xlu0 %6259
    %v6262 = vadd.f32 %v4975, %v6260
    %v6263 = vtanh.pop %v6262
    %6265 = vrot.lane.b32.xlu0 %v6263, 96
    %v6266 = vpop.permute.xlu0 %6265
    %v6268 = vsub.f32 %v6105, %v6266
    %v6269 = vmul.f32 %v6250, %v6268
    %6271 = vrot.lane.b32.xlu0 %v6269, 32
    %v6272 = vpop.permute.xlu0 %6271
    %v6274 = vadd.f32 %v6263, %v6272
    %v6275 = vmul.f32 %v256, %v6274
    %v6276 = vmul.f32 %v262, %v6105
    %6278 = vrot.lane.b32.xlu0 %v6276, 32
    %v6279 = vpop.permute.xlu0 %6278
    %v6281 = vadd.f32 %v6275, %v6279
    %6283 = vrot.lane.b32.xlu0 %v6221, 64
    %v6284 = vpop.permute.xlu0 %6283
    %v6287 = vrot.slane %v6281, 6
    %6288 = vrot.lane.b32.xlu0 %v6287, 96
    %v6289 = vpop.permute.xlu0 %6288
    %v6291 = vsel %vm274, %v6284, %v6289
    %6293 = vrot.lane.b32.xlu0 %v6213, 64
    %v6294 = vpop.permute.xlu0 %6293
    %6296 = vst.msk [vmem:[%s6 + $0x8] sm:$0x30] %vm736, %v6294
    %6298 = vrot.lane.b32.xlu0 %v6275, 96
    %v6299 = vpop.permute.xlu0 %6298
    %6301 = vst.msk [vmem:[%s6] sm:$0xc] %vm742, %v6299
    %v6303 = vrot.slane %v6291, 4
    %v6304 = vsel %vm76, %v6303, 0
    %6306 = vmatpush.msra.mxu0 0.0
    %6307 = vmatpush.msra.mxu0 0.0
    %6308 = vmatpush.msra.mxu0 0.0
    %6309 = vmatpush.msra.mxu0 0.0
    %6310 = vmatpush.msra.mxu0 0.0
    %6311 = vmatpush.msra.mxu0 0.0
    %6312 = vmatpush.msra.mxu0 0.0
    %6313 = vmatpush.msra.mxu0 0.0
    %6314 = vmatpush.msra.mxu0 %v4999
    %6315 = vmatpush.msra.mxu0 %v4997
    %6316 = vmatpush.msra.mxu0 %v4995
    %6317 = vmatpush.msra.mxu0 %v4993
    %6318 = vmatpush.msra.mxu0 %v4991
    %6319 = vmatpush.msra.mxu0 %v4989
    %6320 = vmatpush.msra.mxu0 %v4987
    %6321 = vmatpush.msra.mxu0 %v4985
    %6322 = vmatmul.f32.gmra.mxu0 %v6304
    %v6323 = vpop.f32.mrf.mxu0
    %v6324 = vadd.f32 0.0, %v6323
    %6325 = vdwg.mxu0
    %6326 = vmatpush.msra.mxu0 0.0
    %6327 = vmatpush.msra.mxu0 0.0
    %6328 = vmatpush.msra.mxu0 0.0
    %6329 = vmatpush.msra.mxu0 0.0
    %6330 = vmatpush.msra.mxu0 0.0
    %6331 = vmatpush.msra.mxu0 0.0
    %6332 = vmatpush.msra.mxu0 0.0
    %6333 = vmatpush.msra.mxu0 0.0
    %6334 = vmatpush.msra.mxu0 %v5000
    %6335 = vmatpush.msra.mxu0 %v4998
    %6336 = vmatpush.msra.mxu0 %v4996
    %6337 = vmatpush.msra.mxu0 %v4994
    %6338 = vmatpush.msra.mxu0 %v4992
    %6339 = vmatpush.msra.mxu0 %v4990
    %6340 = vmatpush.msra.mxu0 %v4988
    %6341 = vmatpush.msra.mxu0 %v4986
    %6342 = vmatmul.f32.gmra.mxu0 %v6304
    %v6343 = vpop.f32.mrf.mxu0
    %v6344 = vadd.f32 0.0, %v6343
    %6345 = vdwg.mxu0
    %v6347 = vrot.slane %v6324, 2
    %v6349 = vadd.f32 %v4941, %v6347
    %v6350 = vxor.u32 %v6349, 2147483648
    %v6351 = vmul.f32 %v6350, 1.442695
    %v6352 = vpow.pop %v6351
    %v6353 = vadd.f32 %v6352, 1.0
    %v6354 = vrcp.pop %v6353
    %v6355 = vmul.f32 %v6353, %v6354
    %v6356 = vsub.f32 1.0, %v6355
    %v6357 = vmul.f32 %v6354, %v6356
    %v6358 = vadd.f32 %v6354, %v6357
    %vm6359 = vweird.f32 %v6353
    %vm6360 = vweird.f32 %v6354
    %vm6361 = vmor %vm6359, %vm6360
    %v6362 = vsel %vm6361, %v6354, %v6358
    %v6363 = vand.u32 2147483647, %v6353
    %vm6364 = vcmp.eq.f32.partialorder %v6363, 8.507059e+37
    %v6365 = vand.u32 %v6353, 2147483648
    %v6366 = vor.u32 1.1754944e-38, %v6365
    %v6367 = vsel %vm6364, %v6366, %v6362
    %v6368 = vmul.f32 1.0, %v6367
    %v6369 = vadd.f32 %v6324, %v5064
    %v6371 = vrot.slane %v6369, 2
    %6372 = vrot.lane.b32.xlu0 %v6371, 64
    %v6373 = vpop.permute.xlu0 %6372
    %v6375 = vmul.f32 %v6368, %v6373
    %6377 = vrot.lane.b32.xlu0 %v6375, 64
    %v6378 = vpop.permute.xlu0 %6377
    %v6380 = vadd.f32 %v4941, %v6378
    %v6381 = vtanh.pop %v6380
    %v6383 = vrot.slane %v6381, 2
    %6384 = vrot.lane.b32.xlu0 %v6383, 64
    %v6385 = vpop.permute.xlu0 %6384
    %v6387 = vsub.f32 %v6291, %v6385
    %v6389 = vrot.slane %v6387, 6
    %6390 = vrot.lane.b32.xlu0 %v6389, 32
    %v6391 = vpop.permute.xlu0 %6390
    %v6393 = vmul.f32 %v6368, %v6391
    %6395 = vrot.lane.b32.xlu0 %v6393, 32
    %v6396 = vpop.permute.xlu0 %6395
    %v6398 = vadd.f32 %v6381, %v6396
    %v6399 = vmul.f32 %v329, %v6398
    %v6400 = vrot.slane %v6291, 6
    %v6402 = vmul.f32 %v335, %v6400
    %6404 = vrot.lane.b32.xlu0 %v6402, 64
    %v6405 = vpop.permute.xlu0 %6404
    %v6407 = vadd.f32 %v6399, %v6405
    %6409 = vrot.lane.b32.xlu0 %v6324, 32
    %v6410 = vpop.permute.xlu0 %6409
    %6411 = vrot.lane.b32.xlu0 %v6344, 32
    %v6412 = vpop.permute.xlu0 %6411
    %v6413 = vsel %vm274, %v6410, %v6412
    %v6415 = vadd.f32 %v4975, %v6413
    %v6416 = vxor.u32 %v6415, 2147483648
    %v6417 = vmul.f32 %v6416, 1.442695
    %v6418 = vpow.pop %v6417
    %v6419 = vadd.f32 %v6418, 1.0
    %v6420 = vrcp.pop %v6419
    %v6421 = vmul.f32 %v6419, %v6420
    %v6422 = vsub.f32 1.0, %v6421
    %v6423 = vmul.f32 %v6420, %v6422
    %v6424 = vadd.f32 %v6420, %v6423
    %vm6425 = vweird.f32 %v6419
    %vm6426 = vweird.f32 %v6420
    %vm6427 = vmor %vm6425, %vm6426
    %v6428 = vsel %vm6427, %v6420, %v6424
    %v6429 = vand.u32 2147483647, %v6419
    %vm6430 = vcmp.eq.f32.partialorder %v6429, 8.507059e+37
    %v6431 = vand.u32 %v6419, 2147483648
    %v6432 = vor.u32 1.1754944e-38, %v6431
    %v6433 = vsel %vm6430, %v6432, %v6428
    %v6434 = vmul.f32 1.0, %v6433
    %v6435 = vadd.f32 %v6344, %v5124
    %6437 = vrot.lane.b32.xlu0 %v6435, 96
    %v6438 = vpop.permute.xlu0 %6437
    %v6440 = vmul.f32 %v6434, %v6438
    %6442 = vrot.lane.b32.xlu0 %v6440, 64
    %v6443 = vpop.permute.xlu0 %6442
    %v6445 = vadd.f32 %v4975, %v6443
    %v6446 = vtanh.pop %v6445
    %v6448 = vrot.slane %v6446, 4
    %6449 = vrot.lane.b32.xlu0 %v6448, 96
    %v6450 = vpop.permute.xlu0 %6449
    %v6452 = vsub.f32 %v6291, %v6450
    %v6454 = vrot.slane %v6452, 4
    %v6456 = vmul.f32 %v6434, %v6454
    %6458 = vrot.lane.b32.xlu0 %v6456, 32
    %v6459 = vpop.permute.xlu0 %6458
    %v6461 = vadd.f32 %v6446, %v6459
    %v6462 = vmul.f32 %v256, %v6461
    %6463 = vrot.lane.b32.xlu0 %v6303, 96
    %v6464 = vpop.permute.xlu0 %6463
    %v6466 = vmul.f32 %v262, %v6464
    %6468 = vrot.lane.b32.xlu0 %v6466, 64
    %v6469 = vpop.permute.xlu0 %6468
    %v6471 = vadd.f32 %v6462, %v6469
    %6473 = vrot.lane.b32.xlu0 %v6407, 64
    %v6474 = vpop.permute.xlu0 %6473
    %v6477 = vrot.slane %v6471, 2
    %6478 = vrot.lane.b32.xlu0 %v6477, 96
    %v6479 = vpop.permute.xlu0 %6478
    %v6481 = vsel %vm274, %v6474, %v6479
    %6483 = vrot.lane.b32.xlu0 %v6399, 64
    %v6484 = vpop.permute.xlu0 %6483
    %6486 = vst.msk [vmem:[%s6 + $0x8] sm:$0xc0] %vm928, %v6484
    %6488 = vrot.lane.b32.xlu0 %v6462, 96
    %v6489 = vpop.permute.xlu0 %6488
    %6491 = vst.msk [vmem:[%s6] sm:$0x3] %vm934, %v6489
    %s6492 = scalar_lea.vmem [#allocation8], 12
    %6493 = vst.msk [vmem:[%s6492 - $0x6] sm:$0xc0] %vm928, %v6481
    %6495 = vrot.lane.b32.xlu0 %v6481, 96
    %v6496 = vpop.permute.xlu0 %6495
    %s6498 = scalar_lea.vmem [#allocation8], 14
    %6499 = vst.msk [vmem:[%s6498 - $0x6] sm:$0xc0] %vm928, %v6496
    // Predicated region
    $region34: #{gru_encoder_forward.1} parent=1 // pred_check
      _
    $region35: #{gru_encoder_forward.1} parent=1 // pred_check_branch
      %6501 = sbr.rel (0) target = $region37
    $region36: #{gru_encoder_forward.1} parent=1 // pred_region
      _
    $region37: #{gru_encoder_forward.1} parent=1 // pred_fallthru
      _
    // Predicated region
    $region38: #{gru_encoder_forward.1} parent=1 // pred_check
      _
    $region39: #{gru_encoder_forward.1} parent=1 // pred_check_branch
      %6503 = sbr.rel (0) target = $region41
    $region40: #{gru_encoder_forward.1} parent=1 // pred_region
      %6505 = vsyncadd [#allocation5], 0
      %s6506 = sshll.u32 [#allocation8], 4
      %s6507 = int_to_ptr.vmem [resolvable:$true] %s6506
      %s6508 = sshll.u32 %s7, 4
      %s6509 = int_to_ptr.hbm [resolvable:$true] %s6508
      %6514 = dma.vmem_to_hbm [thread:$0]  %s6507, 256, %s6509, [#allocation5], 32, 32, 2
    $region41: #{gru_encoder_forward.1} parent=1 // pred_fallthru
      _
    // Predicated region
    $region42: #{gru_encoder_forward.1} parent=1 // pred_check
      _
    $region43: #{gru_encoder_forward.1} parent=1 // pred_check_branch
      %6516 = sbr.rel (0) target = $region45
    $region44: #{gru_encoder_forward.1} parent=1 // pred_region
      _
    $region45: #{gru_encoder_forward.1} parent=1 // pred_fallthru
      _
    // Predicated region
    $region46: #{gru_encoder_forward.1} parent=1 // pred_check
      _
    $region47: #{gru_encoder_forward.1} parent=1 // pred_check_branch
      %6518 = sbr.rel (0) target = $region49
    $region48: #{gru_encoder_forward.1} parent=1 // pred_region
      %6520 = dma.done [#allocation5], 256
    $region49: #{gru_encoder_forward.1} parent=1 // pred_fallthru
      _
    %6521 = vsyncpa [#allocation4], 1
    %6522 = vsyncpa [#allocation7], 1
    %6523 = vsyncpa [#allocation5], 1

</llo_original>
